<compile_context>
chip_gen: v7x
topology: tpu7x:2x2x1
jax: 0.10.0
libtpu: 0.0.40
codegen_flags: <defaults>
</compile_context>

<pallas_src>
import functools

import jax
import jax.numpy as jnp
from jax.experimental import pallas as pl
from jax.experimental.pallas import tpu as pltpu


NEG_SLOPE = 0.1
BN_EPS = 1e-5
_PAD_LEFT = 8     # left halo pad in the scratch -> sublane-aligned interior stores


def _pick_row_block(h):
    """Largest 'nice' divisor of h used as the 3x3 row-tile height."""
    for cand in (8, 16, 13, 12, 10, 7, 6, 5, 4, 14, 11, 9, 15, 3, 2):
        if cand <= h and h % cand == 0:
            return cand
    return h


def _vmem_limit_bytes():
    """~75% of physical VMEM (96 MiB on v5e/v6e, 48 MiB on v7x)."""
    try:
        cap = int(pltpu.get_tpu_info().vmem_capacity_bytes)
    except Exception:
        cap = 64 * 1024 * 1024
    return max(32 * 1024 * 1024, (cap * 3) // 4)


# ----------------------------- Pallas kernel --------------------------------

def _topdown_fused_kernel(x_ref,
                          w1_ref, b1_ref, w2_ref, b2_ref, w3_ref, b3_ref,
                          w4_ref, b4_ref, w5_ref, b5_ref,
                          o_ref, pad_a, pad_b, *, rb):
    """Fused conv1..conv5 (+folded-BN bias + LeakyReLU) for one batch image.

    x_ref:        (1, H, W, Cin)            input activations (f32)
    w1/w3/w5:     (Cin|Ce, Cm)              1x1 weights, BN scale folded, bf16
    w2/w4:        (3, 3, Cm, Ce)            3x3 weights, BN scale folded, bf16
    b1..b5:       (1, C)                    folded BN bias, f32
    o_ref:        (1, H, W, Cm)
    pad_a/pad_b:  (H+2, _PAD_LEFT+W+1, Cm)  bf16 zero-border halo buffers
    """
    H = o_ref.shape[1]
    W = o_ref.shape[2]
    Cin = x_ref.shape[3]
    Cm = w1_ref.shape[1]      # out_channels
    Ce = w2_ref.shape[3]      # out_channels * 2
    PL = _PAD_LEFT
    nblk = H // rb

    def lrelu(y):             # one vmul + one vmax, no select
        return jnp.maximum(y, NEG_SLOPE * y)

    def zero_border(pad):
        # Only the halo border needs zeros (interior is always overwritten).
        # Re-zeroed every grid step -> correct under megacore "parallel"
        # sharding (each core owns its scratch; do NOT gate on program_id==0).
        wp = pad.shape[1]
        pad[0:1, :, :] = jnp.zeros((1, wp, Cm), jnp.bfloat16)
        pad[H + 1:H + 2, :, :] = jnp.zeros((1, wp, Cm), jnp.bfloat16)
        pad[:, PL - 1:PL, :] = jnp.zeros((H + 2, 1, Cm), jnp.bfloat16)
        pad[:, PL + W:PL + W + 1, :] = jnp.zeros((H + 2, 1, Cm), jnp.bfloat16)

    zero_border(pad_a)
    zero_border(pad_b)

    # conv1: 1x1 (Cin -> Cm) as one (H*W, Cin) x (Cin, Cm) bf16 MXU matmul.
    x2d = x_ref[0].reshape(H * W, Cin).astype(jnp.bfloat16)
    y1 = lrelu(jnp.dot(x2d, w1_ref[...],
                       preferred_element_type=jnp.float32) + b1_ref[...])
    pad_a[1:H + 1, PL:PL + W, :] = y1.astype(jnp.bfloat16).reshape(H, W, Cm)

    def conv3x3_rows(pad, w_ref, b_ref, r0):
        # 3x3 "SAME" conv on rb output rows: 9 shifted bf16 matmuls with f32
        # accumulation, seeded by the first tap (no zeros + add pass).
        acc = None
        for ky in range(3):
            for kx in range(3):
                col = PL - 1 + kx
                patch = pad[pl.ds(r0 + ky, rb), col:col + W, :]   # (rb, W, Cm)
                t = jnp.dot(patch.reshape(rb * W, Cm), w_ref[ky, kx],
                            preferred_element_type=jnp.float32)
                acc = t if acc is None else acc + t
        return lrelu(acc + b_ref[...])                            # (rb*W, Ce) f32

    # conv2 -> conv3, row-tiled; y3 rows land in pad_b's interior.
    @pl.loop(0, nblk)
    def _(blk):
        r0 = blk * rb
        y2 = conv3x3_rows(pad_a, w2_ref, b2_ref, r0)
        y3 = lrelu(jnp.dot(y2.astype(jnp.bfloat16), w3_ref[...],
                           preferred_element_type=jnp.float32) + b3_ref[...])
        pad_b[pl.ds(r0 + 1, rb), PL:PL + W, :] = (
            y3.astype(jnp.bfloat16).reshape(rb, W, Cm))

    # conv4 -> conv5, row-tiled; y5 rows go straight to the output block.
    @pl.loop(0, nblk)
    def _(blk):
        r0 = blk * rb
        y4 = conv3x3_rows(pad_b, w4_ref, b4_ref, r0)
        y5 = lrelu(jnp.dot(y4.astype(jnp.bfloat16), w5_ref[...],
                           preferred_element_type=jnp.float32) + b5_ref[...])
        o_ref[0, pl.ds(r0, rb), :, :] = (
            y5.reshape(rb, W, Cm).astype(o_ref.dtype))


# ------------------------------ wrappers -------------------------------------

def topdown_layer_nhwc(x_nhwc, params):
    """Fused TopDownLayer forward with NHWC activations (preferred on TPU)."""
    N, H, W, Cin = x_nhwc.shape
    (w1, s1, b1), (w2, s2, b2), (w3, s3, b3), (w4, s4, b4), (w5, s5, b5) = params
    Cm = w1.shape[-1]
    Ce = w2.shape[-1]
    rb = _pick_row_block(H)

    # Fold BN scale into the conv weights (bf16 MXU operands); bias stays f32.
    def fold(w, s):
        return (w * s).astype(jnp.bfloat16)

    w1f = fold(w1, s1).reshape(Cin, Cm)
    w2f = fold(w2, s2)
    w3f = fold(w3, s3).reshape(Ce, Cm)
    w4f = fold(w4, s4)
    w5f = fold(w5, s5).reshape(Ce, Cm)
    b1r = b1.reshape(1, Cm).astype(jnp.float32)
    b2r = b2.reshape(1, Ce).astype(jnp.float32)
    b3r = b3.reshape(1, Cm).astype(jnp.float32)
    b4r = b4.reshape(1, Ce).astype(jnp.float32)
    b5r = b5.reshape(1, Cm).astype(jnp.float32)

    # Advisory cost estimate for the fused 5-layer chain (bf16 weights).
    macs = Cin * Cm + 9 * Cm * Ce + Ce * Cm + 9 * Cm * Ce + Ce * Cm
    w_bytes = 2 * (Cin * Cm + 2 * 9 * Cm * Ce + 2 * Ce * Cm) + 4 * (3 * Cm + 2 * Ce)
    cost = pl.CostEstimate(flops=2 * N * H * W * macs, transcendentals=0,
                           bytes_accessed=4 * N * H * W * (Cin + Cm) + w_bytes)

    kernel = functools.partial(_topdown_fused_kernel, rb=rb)

    return pl.pallas_call(
        kernel,
        out_shape=jax.ShapeDtypeStruct((N, H, W, Cm), x_nhwc.dtype),
        grid=(N,),
        in_specs=[
            pl.BlockSpec((1, H, W, Cin), lambda n: (n, 0, 0, 0)),
            pl.BlockSpec((Cin, Cm), lambda n: (0, 0)),
            pl.BlockSpec((1, Cm), lambda n: (0, 0)),
            pl.BlockSpec((3, 3, Cm, Ce), lambda n: (0, 0, 0, 0)),
            pl.BlockSpec((1, Ce), lambda n: (0, 0)),
            pl.BlockSpec((Ce, Cm), lambda n: (0, 0)),
            pl.BlockSpec((1, Cm), lambda n: (0, 0)),
            pl.BlockSpec((3, 3, Cm, Ce), lambda n: (0, 0, 0, 0)),
            pl.BlockSpec((1, Ce), lambda n: (0, 0)),
            pl.BlockSpec((Ce, Cm), lambda n: (0, 0)),
            pl.BlockSpec((1, Cm), lambda n: (0, 0)),
        ],
        out_specs=pl.BlockSpec((1, H, W, Cm), lambda n: (n, 0, 0, 0)),
        scratch_shapes=[
            pltpu.VMEM((H + 2, _PAD_LEFT + W + 1, Cm), jnp.bfloat16),
            pltpu.VMEM((H + 2, _PAD_LEFT + W + 1, Cm), jnp.bfloat16),
        ],
        compiler_params=pltpu.CompilerParams(
            dimension_semantics=("parallel",),
            vmem_limit_bytes=_vmem_limit_bytes()),
        cost_estimate=cost,
    )(x_nhwc, w1f, b1r, w2f, b2r, w3f, b3r, w4f, b4r, w5f, b5r)


@jax.jit
def topdown_layer(x_nchw, params):
    """PyTorch-layout (NCHW) entry point; matches TopDownLayer.forward.

    TODO(synk): prefer topdown_layer_nhwc end-to-end in the model — these two
    transposes are full HBM read+writes comparable to the kernel's own traffic.
    """
    x = jnp.transpose(x_nchw, (0, 2, 3, 1))            # NCHW -> NHWC (once)
    out = topdown_layer_nhwc(x, params)
    return jnp.transpose(out, (0, 3, 1, 2))            # NHWC -> NCHW (once)


# --------------------------- parameter helpers -------------------------------

def init_conv_layer(key, k, cin, cout):
    """Deterministic synthetic params for one ConvLayer (conv + eval-mode BN)."""
    kw, kg, kb, km, kv = jax.random.split(key, 5)
    w = jax.random.normal(kw, (k, k, cin, cout), jnp.float32) * 0.05
    gamma = jax.random.uniform(kg, (cout,), jnp.float32, 0.8, 1.2)
    beta = jax.random.normal(kb, (cout,), jnp.float32) * 0.1
    mean = jax.random.normal(km, (cout,), jnp.float32) * 0.1
    var = jax.random.uniform(kv, (cout,), jnp.float32, 0.5, 1.5)
    scale = gamma / jnp.sqrt(var + BN_EPS)
    bias = beta - mean * scale
    return w, scale, bias


def make_topdown_params(key, in_channels, out_channels):
    specs = [
        (1, in_channels, out_channels),       # conv1
        (3, out_channels, out_channels * 2),  # conv2
        (1, out_channels * 2, out_channels),  # conv3
        (3, out_channels, out_channels * 2),  # conv4
        (1, out_channels * 2, out_channels),  # conv5
    ]
    keys = jax.random.split(key, len(specs))
    return [init_conv_layer(kk, *s) for kk, s in zip(keys, specs)]


# ------------------------------ reference ------------------------------------

def _ref_forward(x_nchw, params, matmul_dtype=jnp.float32):
    """lax.conv reference; matmul_dtype=bf16 mirrors the kernel's MXU precision."""
    out = jnp.transpose(x_nchw, (0, 2, 3, 1)).astype(jnp.float32)
    for (w, s, b) in params:
        k = w.shape[0]
        pad = "SAME" if k == 3 else "VALID"
        y = jax.lax.conv_general_dilated(
            out.astype(matmul_dtype), (w * s).astype(matmul_dtype),
            window_strides=(1, 1), padding=pad,
            dimension_numbers=("NHWC", "HWIO", "NHWC"),
            preferred_element_type=jnp.float32)
        y = y + b.reshape(1, 1, 1, -1)
        out = jnp.maximum(y, NEG_SLOPE * y)
    return jnp.transpose(out, (0, 3, 1, 2))


# -------------------------------- main ----------------------------------------

if __name__ == "__main__":
    key = jax.random.PRNGKey(0)
    kx, kp = jax.random.split(key)

    # Small but lane-dense config: Ce = 2*out_channels = 128 (full lane width).
    batch, in_channels, out_channels, spatial = 2, 32, 64, 16
    x = jax.random.normal(kx, (batch, in_channels, spatial, spatial), jnp.float32)
    params = make_topdown_params(kp, in_channels, out_channels)

    out = jax.block_until_ready(topdown_layer(x, params))
    assert out.shape == (batch, out_channels, spatial, spatial), out.shape

    # Tight check vs. a reference using the same bf16-operand / f32-accum math.
    ref_bf16 = _ref_forward(x, params, matmul_dtype=jnp.bfloat16)
    err_bf16 = float(jnp.max(jnp.abs(out - ref_bf16)))
    assert jnp.allclose(out, ref_bf16, rtol=5e-3, atol=5e-3), err_bf16

    # Loose check vs. the full-f32 PyTorch-semantics reference (bf16 MXU drift).
    ref_f32 = _ref_forward(x, params, matmul_dtype=jnp.float32)
    err_f32 = float(jnp.max(jnp.abs(out - ref_f32)))
    assert jnp.allclose(out, ref_f32, rtol=5e-2, atol=5e-2), err_f32

    print("KERNEL_OK")
</pallas_src>

<mosaic_0001>
module attributes {stable_mosaic.version = 11 : i64} {
  func.func @_topdown_fused_kernel(%arg0: i32, %arg1: memref<1x16x16x32xf32, #tpu.memory_space<vmem>>, %arg2: memref<32x64xbf16, #tpu.memory_space<vmem>>, %arg3: memref<1x64xf32, #tpu.memory_space<vmem>>, %arg4: memref<3x3x64x128xbf16, #tpu.memory_space<vmem>>, %arg5: memref<1x128xf32, #tpu.memory_space<vmem>>, %arg6: memref<128x64xbf16, #tpu.memory_space<vmem>>, %arg7: memref<1x64xf32, #tpu.memory_space<vmem>>, %arg8: memref<3x3x64x128xbf16, #tpu.memory_space<vmem>>, %arg9: memref<1x128xf32, #tpu.memory_space<vmem>>, %arg10: memref<128x64xbf16, #tpu.memory_space<vmem>>, %arg11: memref<1x64xf32, #tpu.memory_space<vmem>>, %arg12: memref<1x16x16x64xf32, #tpu.memory_space<vmem>>, %arg13: memref<18x25x64xbf16, #tpu.memory_space<vmem>>, %arg14: memref<18x25x64xbf16, #tpu.memory_space<vmem>>) attributes {dimension_semantics = [#tpu.dimension_semantics<parallel>], iteration_bounds = array<i64: 2>, scalar_prefetch = 0 : i64, scratch_operands = 2 : i64, tpu.core_type = #tpu.core_type<tc>, window_params = [{transform_indices = @transform_0, window_bounds = array<i64: 1, 16, 16, 32>}, {pipeline_mode = #tpu.pipeline_mode<synchronous>, transform_indices = @transform_1, window_bounds = array<i64: 32, 64>}, {pipeline_mode = #tpu.pipeline_mode<synchronous>, transform_indices = @transform_2, window_bounds = array<i64: 1, 64>}, {pipeline_mode = #tpu.pipeline_mode<synchronous>, transform_indices = @transform_3, window_bounds = array<i64: 3, 3, 64, 128>}, {pipeline_mode = #tpu.pipeline_mode<synchronous>, transform_indices = @transform_4, window_bounds = array<i64: 1, 128>}, {pipeline_mode = #tpu.pipeline_mode<synchronous>, transform_indices = @transform_5, window_bounds = array<i64: 128, 64>}, {pipeline_mode = #tpu.pipeline_mode<synchronous>, transform_indices = @transform_6, window_bounds = array<i64: 1, 64>}, {pipeline_mode = #tpu.pipeline_mode<synchronous>, transform_indices = @transform_7, window_bounds = array<i64: 3, 3, 64, 128>}, {pipeline_mode = #tpu.pipeline_mode<synchronous>, transform_indices = @transform_8, window_bounds = array<i64: 1, 128>}, {pipeline_mode = #tpu.pipeline_mode<synchronous>, transform_indices = @transform_9, window_bounds = array<i64: 128, 64>}, {pipeline_mode = #tpu.pipeline_mode<synchronous>, transform_indices = @transform_10, window_bounds = array<i64: 1, 64>}, {transform_indices = @transform_11, window_bounds = array<i64: 1, 16, 16, 64>}]} {
    %cst = arith.constant 0.000000e+00 : bf16
    %0 = vector.broadcast %cst : bf16 to vector<1x25x64xbf16>
    %c0 = arith.constant 0 : index
    %c0_0 = arith.constant 0 : index
    %c0_1 = arith.constant 0 : index
    %1 = vector.load %arg13[%c0, %c0_0, %c0_1] : memref<18x25x64xbf16, #tpu.memory_space<vmem>>, vector<1x25x64xbf16>
    tpu.vector_store %arg13[%c0, %c0_0, %c0_1], %0 {strides = array<i32>} : memref<18x25x64xbf16, #tpu.memory_space<vmem>>, vector<1x25x64xbf16>,
    %cst_2 = arith.constant 0.000000e+00 : bf16
    %2 = vector.broadcast %cst_2 : bf16 to vector<1x25x64xbf16>
    %c17 = arith.constant 17 : index
    %c0_3 = arith.constant 0 : index
    %c0_4 = arith.constant 0 : index
    %3 = vector.load %arg13[%c17, %c0_3, %c0_4] : memref<18x25x64xbf16, #tpu.memory_space<vmem>>, vector<1x25x64xbf16>
    tpu.vector_store %arg13[%c17, %c0_3, %c0_4], %2 {strides = array<i32>} : memref<18x25x64xbf16, #tpu.memory_space<vmem>>, vector<1x25x64xbf16>,
    %cst_5 = arith.constant 0.000000e+00 : bf16
    %4 = vector.broadcast %cst_5 : bf16 to vector<18x1x64xbf16>
    %c0_6 = arith.constant 0 : index
    %c7 = arith.constant 7 : index
    %c0_7 = arith.constant 0 : index
    %5 = vector.load %arg13[%c0_6, %c7, %c0_7] : memref<18x25x64xbf16, #tpu.memory_space<vmem>>, vector<18x1x64xbf16>
    tpu.vector_store %arg13[%c0_6, %c7, %c0_7], %4 {strides = array<i32>} : memref<18x25x64xbf16, #tpu.memory_space<vmem>>, vector<18x1x64xbf16>,
    %cst_8 = arith.constant 0.000000e+00 : bf16
    %6 = vector.broadcast %cst_8 : bf16 to vector<18x1x64xbf16>
    %c0_9 = arith.constant 0 : index
    %c24 = arith.constant 24 : index
    %c0_10 = arith.constant 0 : index
    %7 = vector.load %arg13[%c0_9, %c24, %c0_10] : memref<18x25x64xbf16, #tpu.memory_space<vmem>>, vector<18x1x64xbf16>
    tpu.vector_store %arg13[%c0_9, %c24, %c0_10], %6 {strides = array<i32>} : memref<18x25x64xbf16, #tpu.memory_space<vmem>>, vector<18x1x64xbf16>,
    %cst_11 = arith.constant 0.000000e+00 : bf16
    %8 = vector.broadcast %cst_11 : bf16 to vector<1x25x64xbf16>
    %c0_12 = arith.constant 0 : index
    %c0_13 = arith.constant 0 : index
    %c0_14 = arith.constant 0 : index
    %9 = vector.load %arg14[%c0_12, %c0_13, %c0_14] : memref<18x25x64xbf16, #tpu.memory_space<vmem>>, vector<1x25x64xbf16>
    tpu.vector_store %arg14[%c0_12, %c0_13, %c0_14], %8 {strides = array<i32>} : memref<18x25x64xbf16, #tpu.memory_space<vmem>>, vector<1x25x64xbf16>,
    %cst_15 = arith.constant 0.000000e+00 : bf16
    %10 = vector.broadcast %cst_15 : bf16 to vector<1x25x64xbf16>
    %c17_16 = arith.constant 17 : index
    %c0_17 = arith.constant 0 : index
    %c0_18 = arith.constant 0 : index
    %11 = vector.load %arg14[%c17_16, %c0_17, %c0_18] : memref<18x25x64xbf16, #tpu.memory_space<vmem>>, vector<1x25x64xbf16>
    tpu.vector_store %arg14[%c17_16, %c0_17, %c0_18], %10 {strides = array<i32>} : memref<18x25x64xbf16, #tpu.memory_space<vmem>>, vector<1x25x64xbf16>,
    %cst_19 = arith.constant 0.000000e+00 : bf16
    %12 = vector.broadcast %cst_19 : bf16 to vector<18x1x64xbf16>
    %c0_20 = arith.constant 0 : index
    %c7_21 = arith.constant 7 : index
    %c0_22 = arith.constant 0 : index
    %13 = vector.load %arg14[%c0_20, %c7_21, %c0_22] : memref<18x25x64xbf16, #tpu.memory_space<vmem>>, vector<18x1x64xbf16>
    tpu.vector_store %arg14[%c0_20, %c7_21, %c0_22], %12 {strides = array<i32>} : memref<18x25x64xbf16, #tpu.memory_space<vmem>>, vector<18x1x64xbf16>,
    %cst_23 = arith.constant 0.000000e+00 : bf16
    %14 = vector.broadcast %cst_23 : bf16 to vector<18x1x64xbf16>
    %c0_24 = arith.constant 0 : index
    %c24_25 = arith.constant 24 : index
    %c0_26 = arith.constant 0 : index
    %15 = vector.load %arg14[%c0_24, %c24_25, %c0_26] : memref<18x25x64xbf16, #tpu.memory_space<vmem>>, vector<18x1x64xbf16>
    tpu.vector_store %arg14[%c0_24, %c24_25, %c0_26], %14 {strides = array<i32>} : memref<18x25x64xbf16, #tpu.memory_space<vmem>>, vector<18x1x64xbf16>,
    %c0_27 = arith.constant 0 : index
    %c0_28 = arith.constant 0 : index
    %c0_29 = arith.constant 0 : index
    %c0_30 = arith.constant 0 : index
    %16 = vector.load %arg1[%c0_27, %c0_28, %c0_29, %c0_30] : memref<1x16x16x32xf32, #tpu.memory_space<vmem>>, vector<1x16x16x32xf32>
    %17 = vector.shape_cast %16 : vector<1x16x16x32xf32> to vector<16x16x32xf32>
    %18 = vector.shape_cast %17 : vector<16x16x32xf32> to vector<256x32xf32>
    %19 = arith.truncf %18 : vector<256x32xf32> to vector<256x32xbf16>
    %c0_31 = arith.constant 0 : index
    %c0_32 = arith.constant 0 : index
    %20 = vector.load %arg2[%c0_31, %c0_32] : memref<32x64xbf16, #tpu.memory_space<vmem>>, vector<32x64xbf16>
    %cst_33 = arith.constant dense<0.000000e+00> : vector<256x64xf32>
    %21 = tpu.matmul %19, %20, %cst_33 {dimension_numbers = #tpu.dot_dimension_numbers<[1], [0], [0], [1], [0, 0, 1, 1], [], []>} : vector<256x32xbf16>, vector<32x64xbf16>, vector<256x64xf32> -> vector<256x64xf32>
    %c0_34 = arith.constant 0 : index
    %c0_35 = arith.constant 0 : index
    %22 = vector.load %arg3[%c0_34, %c0_35] : memref<1x64xf32, #tpu.memory_space<vmem>>, vector<1x64xf32>
    %23 = vector.broadcast %22 : vector<1x64xf32> to vector<256x64xf32>
    %24 = arith.addf %21, %23 : vector<256x64xf32>
    %cst_36 = arith.constant 1.000000e-01 : f32
    %25 = vector.broadcast %cst_36 : f32 to vector<256x64xf32>
    %26 = arith.mulf %25, %24 : vector<256x64xf32>
    %27 = arith.maximumf %24, %26 : vector<256x64xf32>
    %28 = arith.truncf %27 : vector<256x64xf32> to vector<256x64xbf16>
    %29 = vector.shape_cast %28 : vector<256x64xbf16> to vector<16x16x64xbf16>
    %c1 = arith.constant 1 : index
    %c8 = arith.constant 8 : index
    %c0_37 = arith.constant 0 : index
    %30 = vector.load %arg13[%c1, %c8, %c0_37] : memref<18x25x64xbf16, #tpu.memory_space<vmem>>, vector<16x16x64xbf16>
    tpu.vector_store %arg13[%c1, %c8, %c0_37], %29 {strides = array<i32>} : memref<18x25x64xbf16, #tpu.memory_space<vmem>>, vector<16x16x64xbf16>,
    %c0_i32 = arith.constant 0 : i32
    %c2_i32 = arith.constant 2 : i32
    %31 = arith.addi %c0_i32, %c2_i32 : i32
    %c1_i32 = arith.constant 1 : i32
    scf.for %arg15 = %c0_i32 to %31 step %c1_i32  : i32 {
      %c1_i32_43 = arith.constant 1 : i32
      %33 = arith.muli %arg15, %c1_i32_43 : i32
      %c0_i32_44 = arith.constant 0 : i32
      %34 = arith.addi %c0_i32_44, %33 : i32
      %c8_i32 = arith.constant 8 : i32
      %35 = arith.muli %34, %c8_i32 : i32
      %c0_i32_45 = arith.constant 0 : i32
      %36 = arith.addi %35, %c0_i32_45 : i32
      %37 = arith.index_cast %36 : i32 to index
      %c7_46 = arith.constant 7 : index
      %c0_47 = arith.constant 0 : index
      %38 = vector.load %arg13[%37, %c7_46, %c0_47] : memref<18x25x64xbf16, #tpu.memory_space<vmem>>, vector<8x16x64xbf16>
      %39 = vector.shape_cast %38 : vector<8x16x64xbf16> to vector<128x64xbf16>
      %c0_48 = arith.constant 0 : index
      %c0_49 = arith.constant 0 : index
      %c0_50 = arith.constant 0 : index
      %c0_51 = arith.constant 0 : index
      %40 = vector.load %arg4[%c0_48, %c0_49, %c0_50, %c0_51] : memref<3x3x64x128xbf16, #tpu.memory_space<vmem>>, vector<1x1x64x128xbf16>
      %41 = vector.shape_cast %40 : vector<1x1x64x128xbf16> to vector<64x128xbf16>
      %cst_52 = arith.constant dense<0.000000e+00> : vector<128x128xf32>
      %42 = tpu.matmul %39, %41, %cst_52 {dimension_numbers = #tpu.dot_dimension_numbers<[1], [0], [0], [1], [0, 0, 1, 1], [], []>} : vector<128x64xbf16>, vector<64x128xbf16>, vector<128x128xf32> -> vector<128x128xf32>
      %c0_i32_53 = arith.constant 0 : i32
      %43 = arith.addi %35, %c0_i32_53 : i32
      %44 = arith.index_cast %43 : i32 to index
      %c8_54 = arith.constant 8 : index
      %c0_55 = arith.constant 0 : index
      %45 = vector.load %arg13[%44, %c8_54, %c0_55] : memref<18x25x64xbf16, #tpu.memory_space<vmem>>, vector<8x16x64xbf16>
      %46 = vector.shape_cast %45 : vector<8x16x64xbf16> to vector<128x64xbf16>
      %c0_56 = arith.constant 0 : index
      %c1_57 = arith.constant 1 : index
      %c0_58 = arith.constant 0 : index
      %c0_59 = arith.constant 0 : index
      %47 = vector.load %arg4[%c0_56, %c1_57, %c0_58, %c0_59] : memref<3x3x64x128xbf16, #tpu.memory_space<vmem>>, vector<1x1x64x128xbf16>
      %48 = vector.shape_cast %47 : vector<1x1x64x128xbf16> to vector<64x128xbf16>
      %cst_60 = arith.constant dense<0.000000e+00> : vector<128x128xf32>
      %49 = tpu.matmul %46, %48, %cst_60 {dimension_numbers = #tpu.dot_dimension_numbers<[1], [0], [0], [1], [0, 0, 1, 1], [], []>} : vector<128x64xbf16>, vector<64x128xbf16>, vector<128x128xf32> -> vector<128x128xf32>
      %50 = arith.addf %42, %49 : vector<128x128xf32>
      %c0_i32_61 = arith.constant 0 : i32
      %51 = arith.addi %35, %c0_i32_61 : i32
      %52 = arith.index_cast %51 : i32 to index
      %c9 = arith.constant 9 : index
      %c0_62 = arith.constant 0 : index
      %53 = vector.load %arg13[%52, %c9, %c0_62] : memref<18x25x64xbf16, #tpu.memory_space<vmem>>, vector<8x16x64xbf16>
      %54 = vector.shape_cast %53 : vector<8x16x64xbf16> to vector<128x64xbf16>
      %c0_63 = arith.constant 0 : index
      %c2 = arith.constant 2 : index
      %c0_64 = arith.constant 0 : index
      %c0_65 = arith.constant 0 : index
      %55 = vector.load %arg4[%c0_63, %c2, %c0_64, %c0_65] : memref<3x3x64x128xbf16, #tpu.memory_space<vmem>>, vector<1x1x64x128xbf16>
      %56 = vector.shape_cast %55 : vector<1x1x64x128xbf16> to vector<64x128xbf16>
      %cst_66 = arith.constant dense<0.000000e+00> : vector<128x128xf32>
      %57 = tpu.matmul %54, %56, %cst_66 {dimension_numbers = #tpu.dot_dimension_numbers<[1], [0], [0], [1], [0, 0, 1, 1], [], []>} : vector<128x64xbf16>, vector<64x128xbf16>, vector<128x128xf32> -> vector<128x128xf32>
      %58 = arith.addf %50, %57 : vector<128x128xf32>
      %c1_i32_67 = arith.constant 1 : i32
      %59 = arith.addi %35, %c1_i32_67 : i32
      %60 = arith.index_cast %59 : i32 to index
      %c7_68 = arith.constant 7 : index
      %c0_69 = arith.constant 0 : index
      %61 = vector.load %arg13[%60, %c7_68, %c0_69] : memref<18x25x64xbf16, #tpu.memory_space<vmem>>, vector<8x16x64xbf16>
      %62 = vector.shape_cast %61 : vector<8x16x64xbf16> to vector<128x64xbf16>
      %c1_70 = arith.constant 1 : index
      %c0_71 = arith.constant 0 : index
      %c0_72 = arith.constant 0 : index
      %c0_73 = arith.constant 0 : index
      %63 = vector.load %arg4[%c1_70, %c0_71, %c0_72, %c0_73] : memref<3x3x64x128xbf16, #tpu.memory_space<vmem>>, vector<1x1x64x128xbf16>
      %64 = vector.shape_cast %63 : vector<1x1x64x128xbf16> to vector<64x128xbf16>
      %cst_74 = arith.constant dense<0.000000e+00> : vector<128x128xf32>
      %65 = tpu.matmul %62, %64, %cst_74 {dimension_numbers = #tpu.dot_dimension_numbers<[1], [0], [0], [1], [0, 0, 1, 1], [], []>} : vector<128x64xbf16>, vector<64x128xbf16>, vector<128x128xf32> -> vector<128x128xf32>
      %66 = arith.addf %58, %65 : vector<128x128xf32>
      %c1_i32_75 = arith.constant 1 : i32
      %67 = arith.addi %35, %c1_i32_75 : i32
      %68 = arith.index_cast %67 : i32 to index
      %c8_76 = arith.constant 8 : index
      %c0_77 = arith.constant 0 : index
      %69 = vector.load %arg13[%68, %c8_76, %c0_77] : memref<18x25x64xbf16, #tpu.memory_space<vmem>>, vector<8x16x64xbf16>
      %70 = vector.shape_cast %69 : vector<8x16x64xbf16> to vector<128x64xbf16>
      %c1_78 = arith.constant 1 : index
      %c1_79 = arith.constant 1 : index
      %c0_80 = arith.constant 0 : index
      %c0_81 = arith.constant 0 : index
      %71 = vector.load %arg4[%c1_78, %c1_79, %c0_80, %c0_81] : memref<3x3x64x128xbf16, #tpu.memory_space<vmem>>, vector<1x1x64x128xbf16>
      %72 = vector.shape_cast %71 : vector<1x1x64x128xbf16> to vector<64x128xbf16>
      %cst_82 = arith.constant dense<0.000000e+00> : vector<128x128xf32>
      %73 = tpu.matmul %70, %72, %cst_82 {dimension_numbers = #tpu.dot_dimension_numbers<[1], [0], [0], [1], [0, 0, 1, 1], [], []>} : vector<128x64xbf16>, vector<64x128xbf16>, vector<128x128xf32> -> vector<128x128xf32>
      %74 = arith.addf %66, %73 : vector<128x128xf32>
      %c1_i32_83 = arith.constant 1 : i32
      %75 = arith.addi %35, %c1_i32_83 : i32
      %76 = arith.index_cast %75 : i32 to index
      %c9_84 = arith.constant 9 : index
      %c0_85 = arith.constant 0 : index
      %77 = vector.load %arg13[%76, %c9_84, %c0_85] : memref<18x25x64xbf16, #tpu.memory_space<vmem>>, vector<8x16x64xbf16>
      %78 = vector.shape_cast %77 : vector<8x16x64xbf16> to vector<128x64xbf16>
      %c1_86 = arith.constant 1 : index
      %c2_87 = arith.constant 2 : index
      %c0_88 = arith.constant 0 : index
      %c0_89 = arith.constant 0 : index
      %79 = vector.load %arg4[%c1_86, %c2_87, %c0_88, %c0_89] : memref<3x3x64x128xbf16, #tpu.memory_space<vmem>>, vector<1x1x64x128xbf16>
      %80 = vector.shape_cast %79 : vector<1x1x64x128xbf16> to vector<64x128xbf16>
      %cst_90 = arith.constant dense<0.000000e+00> : vector<128x128xf32>
      %81 = tpu.matmul %78, %80, %cst_90 {dimension_numbers = #tpu.dot_dimension_numbers<[1], [0], [0], [1], [0, 0, 1, 1], [], []>} : vector<128x64xbf16>, vector<64x128xbf16>, vector<128x128xf32> -> vector<128x128xf32>
      %82 = arith.addf %74, %81 : vector<128x128xf32>
      %c2_i32_91 = arith.constant 2 : i32
      %83 = arith.addi %35, %c2_i32_91 : i32
      %84 = arith.index_cast %83 : i32 to index
      %c7_92 = arith.constant 7 : index
      %c0_93 = arith.constant 0 : index
      %85 = vector.load %arg13[%84, %c7_92, %c0_93] : memref<18x25x64xbf16, #tpu.memory_space<vmem>>, vector<8x16x64xbf16>
      %86 = vector.shape_cast %85 : vector<8x16x64xbf16> to vector<128x64xbf16>
      %c2_94 = arith.constant 2 : index
      %c0_95 = arith.constant 0 : index
      %c0_96 = arith.constant 0 : index
      %c0_97 = arith.constant 0 : index
      %87 = vector.load %arg4[%c2_94, %c0_95, %c0_96, %c0_97] : memref<3x3x64x128xbf16, #tpu.memory_space<vmem>>, vector<1x1x64x128xbf16>
      %88 = vector.shape_cast %87 : vector<1x1x64x128xbf16> to vector<64x128xbf16>
      %cst_98 = arith.constant dense<0.000000e+00> : vector<128x128xf32>
      %89 = tpu.matmul %86, %88, %cst_98 {dimension_numbers = #tpu.dot_dimension_numbers<[1], [0], [0], [1], [0, 0, 1, 1], [], []>} : vector<128x64xbf16>, vector<64x128xbf16>, vector<128x128xf32> -> vector<128x128xf32>
      %90 = arith.addf %82, %89 : vector<128x128xf32>
      %c2_i32_99 = arith.constant 2 : i32
      %91 = arith.addi %35, %c2_i32_99 : i32
      %92 = arith.index_cast %91 : i32 to index
      %c8_100 = arith.constant 8 : index
      %c0_101 = arith.constant 0 : index
      %93 = vector.load %arg13[%92, %c8_100, %c0_101] : memref<18x25x64xbf16, #tpu.memory_space<vmem>>, vector<8x16x64xbf16>
      %94 = vector.shape_cast %93 : vector<8x16x64xbf16> to vector<128x64xbf16>
      %c2_102 = arith.constant 2 : index
      %c1_103 = arith.constant 1 : index
      %c0_104 = arith.constant 0 : index
      %c0_105 = arith.constant 0 : index
      %95 = vector.load %arg4[%c2_102, %c1_103, %c0_104, %c0_105] : memref<3x3x64x128xbf16, #tpu.memory_space<vmem>>, vector<1x1x64x128xbf16>
      %96 = vector.shape_cast %95 : vector<1x1x64x128xbf16> to vector<64x128xbf16>
      %cst_106 = arith.constant dense<0.000000e+00> : vector<128x128xf32>
      %97 = tpu.matmul %94, %96, %cst_106 {dimension_numbers = #tpu.dot_dimension_numbers<[1], [0], [0], [1], [0, 0, 1, 1], [], []>} : vector<128x64xbf16>, vector<64x128xbf16>, vector<128x128xf32> -> vector<128x128xf32>
      %98 = arith.addf %90, %97 : vector<128x128xf32>
      %c2_i32_107 = arith.constant 2 : i32
      %99 = arith.addi %35, %c2_i32_107 : i32
      %100 = arith.index_cast %99 : i32 to index
      %c9_108 = arith.constant 9 : index
      %c0_109 = arith.constant 0 : index
      %101 = vector.load %arg13[%100, %c9_108, %c0_109] : memref<18x25x64xbf16, #tpu.memory_space<vmem>>, vector<8x16x64xbf16>
      %102 = vector.shape_cast %101 : vector<8x16x64xbf16> to vector<128x64xbf16>
      %c2_110 = arith.constant 2 : index
      %c2_111 = arith.constant 2 : index
      %c0_112 = arith.constant 0 : index
      %c0_113 = arith.constant 0 : index
      %103 = vector.load %arg4[%c2_110, %c2_111, %c0_112, %c0_113] : memref<3x3x64x128xbf16, #tpu.memory_space<vmem>>, vector<1x1x64x128xbf16>
      %104 = vector.shape_cast %103 : vector<1x1x64x128xbf16> to vector<64x128xbf16>
      %cst_114 = arith.constant dense<0.000000e+00> : vector<128x128xf32>
      %105 = tpu.matmul %102, %104, %cst_114 {dimension_numbers = #tpu.dot_dimension_numbers<[1], [0], [0], [1], [0, 0, 1, 1], [], []>} : vector<128x64xbf16>, vector<64x128xbf16>, vector<128x128xf32> -> vector<128x128xf32>
      %106 = arith.addf %98, %105 : vector<128x128xf32>
      %c0_115 = arith.constant 0 : index
      %c0_116 = arith.constant 0 : index
      %107 = vector.load %arg5[%c0_115, %c0_116] : memref<1x128xf32, #tpu.memory_space<vmem>>, vector<1x128xf32>
      %108 = vector.broadcast %107 : vector<1x128xf32> to vector<128x128xf32>
      %109 = arith.addf %106, %108 : vector<128x128xf32>
      %cst_117 = arith.constant 1.000000e-01 : f32
      %110 = vector.broadcast %cst_117 : f32 to vector<128x128xf32>
      %111 = arith.mulf %110, %109 : vector<128x128xf32>
      %112 = arith.maximumf %109, %111 : vector<128x128xf32>
      %113 = arith.truncf %112 : vector<128x128xf32> to vector<128x128xbf16>
      %c0_118 = arith.constant 0 : index
      %c0_119 = arith.constant 0 : index
      %114 = vector.load %arg6[%c0_118, %c0_119] : memref<128x64xbf16, #tpu.memory_space<vmem>>, vector<128x64xbf16>
      %cst_120 = arith.constant dense<0.000000e+00> : vector<128x64xf32>
      %115 = tpu.matmul %113, %114, %cst_120 {dimension_numbers = #tpu.dot_dimension_numbers<[1], [0], [0], [1], [0, 0, 1, 1], [], []>} : vector<128x128xbf16>, vector<128x64xbf16>, vector<128x64xf32> -> vector<128x64xf32>
      %c0_121 = arith.constant 0 : index
      %c0_122 = arith.constant 0 : index
      %116 = vector.load %arg7[%c0_121, %c0_122] : memref<1x64xf32, #tpu.memory_space<vmem>>, vector<1x64xf32>
      %117 = vector.broadcast %116 : vector<1x64xf32> to vector<128x64xf32>
      %118 = arith.addf %115, %117 : vector<128x64xf32>
      %cst_123 = arith.constant 1.000000e-01 : f32
      %119 = vector.broadcast %cst_123 : f32 to vector<128x64xf32>
      %120 = arith.mulf %119, %118 : vector<128x64xf32>
      %121 = arith.maximumf %118, %120 : vector<128x64xf32>
      %122 = arith.truncf %121 : vector<128x64xf32> to vector<128x64xbf16>
      %123 = vector.shape_cast %122 : vector<128x64xbf16> to vector<8x16x64xbf16>
      %c1_i32_124 = arith.constant 1 : i32
      %124 = arith.addi %35, %c1_i32_124 : i32
      %125 = arith.index_cast %124 : i32 to index
      %c8_125 = arith.constant 8 : index
      %c0_126 = arith.constant 0 : index
      %126 = vector.load %arg14[%125, %c8_125, %c0_126] : memref<18x25x64xbf16, #tpu.memory_space<vmem>>, vector<8x16x64xbf16>
      tpu.vector_store %arg14[%125, %c8_125, %c0_126], %123 {strides = array<i32>} : memref<18x25x64xbf16, #tpu.memory_space<vmem>>, vector<8x16x64xbf16>,
    }
    %c2_i32_38 = arith.constant 2 : i32
    %c0_i32_39 = arith.constant 0 : i32
    %c2_i32_40 = arith.constant 2 : i32
    %32 = arith.addi %c0_i32_39, %c2_i32_40 : i32
    %c1_i32_41 = arith.constant 1 : i32
    scf.for %arg15 = %c0_i32_39 to %32 step %c1_i32_41  : i32 {
      %c1_i32_43 = arith.constant 1 : i32
      %33 = arith.muli %arg15, %c1_i32_43 : i32
      %c0_i32_44 = arith.constant 0 : i32
      %34 = arith.addi %c0_i32_44, %33 : i32
      %c8_i32 = arith.constant 8 : i32
      %35 = arith.muli %34, %c8_i32 : i32
      %c0_i32_45 = arith.constant 0 : i32
      %36 = arith.addi %35, %c0_i32_45 : i32
      %37 = arith.index_cast %36 : i32 to index
      %c7_46 = arith.constant 7 : index
      %c0_47 = arith.constant 0 : index
      %38 = vector.load %arg14[%37, %c7_46, %c0_47] : memref<18x25x64xbf16, #tpu.memory_space<vmem>>, vector<8x16x64xbf16>
      %39 = vector.shape_cast %38 : vector<8x16x64xbf16> to vector<128x64xbf16>
      %c0_48 = arith.constant 0 : index
      %c0_49 = arith.constant 0 : index
      %c0_50 = arith.constant 0 : index
      %c0_51 = arith.constant 0 : index
      %40 = vector.load %arg8[%c0_48, %c0_49, %c0_50, %c0_51] : memref<3x3x64x128xbf16, #tpu.memory_space<vmem>>, vector<1x1x64x128xbf16>
      %41 = vector.shape_cast %40 : vector<1x1x64x128xbf16> to vector<64x128xbf16>
      %cst_52 = arith.constant dense<0.000000e+00> : vector<128x128xf32>
      %42 = tpu.matmul %39, %41, %cst_52 {dimension_numbers = #tpu.dot_dimension_numbers<[1], [0], [0], [1], [0, 0, 1, 1], [], []>} : vector<128x64xbf16>, vector<64x128xbf16>, vector<128x128xf32> -> vector<128x128xf32>
      %c0_i32_53 = arith.constant 0 : i32
      %43 = arith.addi %35, %c0_i32_53 : i32
      %44 = arith.index_cast %43 : i32 to index
      %c8_54 = arith.constant 8 : index
      %c0_55 = arith.constant 0 : index
      %45 = vector.load %arg14[%44, %c8_54, %c0_55] : memref<18x25x64xbf16, #tpu.memory_space<vmem>>, vector<8x16x64xbf16>
      %46 = vector.shape_cast %45 : vector<8x16x64xbf16> to vector<128x64xbf16>
      %c0_56 = arith.constant 0 : index
      %c1_57 = arith.constant 1 : index
      %c0_58 = arith.constant 0 : index
      %c0_59 = arith.constant 0 : index
      %47 = vector.load %arg8[%c0_56, %c1_57, %c0_58, %c0_59] : memref<3x3x64x128xbf16, #tpu.memory_space<vmem>>, vector<1x1x64x128xbf16>
      %48 = vector.shape_cast %47 : vector<1x1x64x128xbf16> to vector<64x128xbf16>
      %cst_60 = arith.constant dense<0.000000e+00> : vector<128x128xf32>
      %49 = tpu.matmul %46, %48, %cst_60 {dimension_numbers = #tpu.dot_dimension_numbers<[1], [0], [0], [1], [0, 0, 1, 1], [], []>} : vector<128x64xbf16>, vector<64x128xbf16>, vector<128x128xf32> -> vector<128x128xf32>
      %50 = arith.addf %42, %49 : vector<128x128xf32>
      %c0_i32_61 = arith.constant 0 : i32
      %51 = arith.addi %35, %c0_i32_61 : i32
      %52 = arith.index_cast %51 : i32 to index
      %c9 = arith.constant 9 : index
      %c0_62 = arith.constant 0 : index
      %53 = vector.load %arg14[%52, %c9, %c0_62] : memref<18x25x64xbf16, #tpu.memory_space<vmem>>, vector<8x16x64xbf16>
      %54 = vector.shape_cast %53 : vector<8x16x64xbf16> to vector<128x64xbf16>
      %c0_63 = arith.constant 0 : index
      %c2 = arith.constant 2 : index
      %c0_64 = arith.constant 0 : index
      %c0_65 = arith.constant 0 : index
      %55 = vector.load %arg8[%c0_63, %c2, %c0_64, %c0_65] : memref<3x3x64x128xbf16, #tpu.memory_space<vmem>>, vector<1x1x64x128xbf16>
      %56 = vector.shape_cast %55 : vector<1x1x64x128xbf16> to vector<64x128xbf16>
      %cst_66 = arith.constant dense<0.000000e+00> : vector<128x128xf32>
      %57 = tpu.matmul %54, %56, %cst_66 {dimension_numbers = #tpu.dot_dimension_numbers<[1], [0], [0], [1], [0, 0, 1, 1], [], []>} : vector<128x64xbf16>, vector<64x128xbf16>, vector<128x128xf32> -> vector<128x128xf32>
      %58 = arith.addf %50, %57 : vector<128x128xf32>
      %c1_i32_67 = arith.constant 1 : i32
      %59 = arith.addi %35, %c1_i32_67 : i32
      %60 = arith.index_cast %59 : i32 to index
      %c7_68 = arith.constant 7 : index
      %c0_69 = arith.constant 0 : index
      %61 = vector.load %arg14[%60, %c7_68, %c0_69] : memref<18x25x64xbf16, #tpu.memory_space<vmem>>, vector<8x16x64xbf16>
      %62 = vector.shape_cast %61 : vector<8x16x64xbf16> to vector<128x64xbf16>
      %c1_70 = arith.constant 1 : index
      %c0_71 = arith.constant 0 : index
      %c0_72 = arith.constant 0 : index
      %c0_73 = arith.constant 0 : index
      %63 = vector.load %arg8[%c1_70, %c0_71, %c0_72, %c0_73] : memref<3x3x64x128xbf16, #tpu.memory_space<vmem>>, vector<1x1x64x128xbf16>
      %64 = vector.shape_cast %63 : vector<1x1x64x128xbf16> to vector<64x128xbf16>
      %cst_74 = arith.constant dense<0.000000e+00> : vector<128x128xf32>
      %65 = tpu.matmul %62, %64, %cst_74 {dimension_numbers = #tpu.dot_dimension_numbers<[1], [0], [0], [1], [0, 0, 1, 1], [], []>} : vector<128x64xbf16>, vector<64x128xbf16>, vector<128x128xf32> -> vector<128x128xf32>
      %66 = arith.addf %58, %65 : vector<128x128xf32>
      %c1_i32_75 = arith.constant 1 : i32
      %67 = arith.addi %35, %c1_i32_75 : i32
      %68 = arith.index_cast %67 : i32 to index
      %c8_76 = arith.constant 8 : index
      %c0_77 = arith.constant 0 : index
      %69 = vector.load %arg14[%68, %c8_76, %c0_77] : memref<18x25x64xbf16, #tpu.memory_space<vmem>>, vector<8x16x64xbf16>
      %70 = vector.shape_cast %69 : vector<8x16x64xbf16> to vector<128x64xbf16>
      %c1_78 = arith.constant 1 : index
      %c1_79 = arith.constant 1 : index
      %c0_80 = arith.constant 0 : index
      %c0_81 = arith.constant 0 : index
      %71 = vector.load %arg8[%c1_78, %c1_79, %c0_80, %c0_81] : memref<3x3x64x128xbf16, #tpu.memory_space<vmem>>, vector<1x1x64x128xbf16>
      %72 = vector.shape_cast %71 : vector<1x1x64x128xbf16> to vector<64x128xbf16>
      %cst_82 = arith.constant dense<0.000000e+00> : vector<128x128xf32>
      %73 = tpu.matmul %70, %72, %cst_82 {dimension_numbers = #tpu.dot_dimension_numbers<[1], [0], [0], [1], [0, 0, 1, 1], [], []>} : vector<128x64xbf16>, vector<64x128xbf16>, vector<128x128xf32> -> vector<128x128xf32>
      %74 = arith.addf %66, %73 : vector<128x128xf32>
      %c1_i32_83 = arith.constant 1 : i32
      %75 = arith.addi %35, %c1_i32_83 : i32
      %76 = arith.index_cast %75 : i32 to index
      %c9_84 = arith.constant 9 : index
      %c0_85 = arith.constant 0 : index
      %77 = vector.load %arg14[%76, %c9_84, %c0_85] : memref<18x25x64xbf16, #tpu.memory_space<vmem>>, vector<8x16x64xbf16>
      %78 = vector.shape_cast %77 : vector<8x16x64xbf16> to vector<128x64xbf16>
      %c1_86 = arith.constant 1 : index
      %c2_87 = arith.constant 2 : index
      %c0_88 = arith.constant 0 : index
      %c0_89 = arith.constant 0 : index
      %79 = vector.load %arg8[%c1_86, %c2_87, %c0_88, %c0_89] : memref<3x3x64x128xbf16, #tpu.memory_space<vmem>>, vector<1x1x64x128xbf16>
      %80 = vector.shape_cast %79 : vector<1x1x64x128xbf16> to vector<64x128xbf16>
      %cst_90 = arith.constant dense<0.000000e+00> : vector<128x128xf32>
      %81 = tpu.matmul %78, %80, %cst_90 {dimension_numbers = #tpu.dot_dimension_numbers<[1], [0], [0], [1], [0, 0, 1, 1], [], []>} : vector<128x64xbf16>, vector<64x128xbf16>, vector<128x128xf32> -> vector<128x128xf32>
      %82 = arith.addf %74, %81 : vector<128x128xf32>
      %c2_i32_91 = arith.constant 2 : i32
      %83 = arith.addi %35, %c2_i32_91 : i32
      %84 = arith.index_cast %83 : i32 to index
      %c7_92 = arith.constant 7 : index
      %c0_93 = arith.constant 0 : index
      %85 = vector.load %arg14[%84, %c7_92, %c0_93] : memref<18x25x64xbf16, #tpu.memory_space<vmem>>, vector<8x16x64xbf16>
      %86 = vector.shape_cast %85 : vector<8x16x64xbf16> to vector<128x64xbf16>
      %c2_94 = arith.constant 2 : index
      %c0_95 = arith.constant 0 : index
      %c0_96 = arith.constant 0 : index
      %c0_97 = arith.constant 0 : index
      %87 = vector.load %arg8[%c2_94, %c0_95, %c0_96, %c0_97] : memref<3x3x64x128xbf16, #tpu.memory_space<vmem>>, vector<1x1x64x128xbf16>
      %88 = vector.shape_cast %87 : vector<1x1x64x128xbf16> to vector<64x128xbf16>
      %cst_98 = arith.constant dense<0.000000e+00> : vector<128x128xf32>
      %89 = tpu.matmul %86, %88, %cst_98 {dimension_numbers = #tpu.dot_dimension_numbers<[1], [0], [0], [1], [0, 0, 1, 1], [], []>} : vector<128x64xbf16>, vector<64x128xbf16>, vector<128x128xf32> -> vector<128x128xf32>
      %90 = arith.addf %82, %89 : vector<128x128xf32>
      %c2_i32_99 = arith.constant 2 : i32
      %91 = arith.addi %35, %c2_i32_99 : i32
      %92 = arith.index_cast %91 : i32 to index
      %c8_100 = arith.constant 8 : index
      %c0_101 = arith.constant 0 : index
      %93 = vector.load %arg14[%92, %c8_100, %c0_101] : memref<18x25x64xbf16, #tpu.memory_space<vmem>>, vector<8x16x64xbf16>
      %94 = vector.shape_cast %93 : vector<8x16x64xbf16> to vector<128x64xbf16>
      %c2_102 = arith.constant 2 : index
      %c1_103 = arith.constant 1 : index
      %c0_104 = arith.constant 0 : index
      %c0_105 = arith.constant 0 : index
      %95 = vector.load %arg8[%c2_102, %c1_103, %c0_104, %c0_105] : memref<3x3x64x128xbf16, #tpu.memory_space<vmem>>, vector<1x1x64x128xbf16>
      %96 = vector.shape_cast %95 : vector<1x1x64x128xbf16> to vector<64x128xbf16>
      %cst_106 = arith.constant dense<0.000000e+00> : vector<128x128xf32>
      %97 = tpu.matmul %94, %96, %cst_106 {dimension_numbers = #tpu.dot_dimension_numbers<[1], [0], [0], [1], [0, 0, 1, 1], [], []>} : vector<128x64xbf16>, vector<64x128xbf16>, vector<128x128xf32> -> vector<128x128xf32>
      %98 = arith.addf %90, %97 : vector<128x128xf32>
      %c2_i32_107 = arith.constant 2 : i32
      %99 = arith.addi %35, %c2_i32_107 : i32
      %100 = arith.index_cast %99 : i32 to index
      %c9_108 = arith.constant 9 : index
      %c0_109 = arith.constant 0 : index
      %101 = vector.load %arg14[%100, %c9_108, %c0_109] : memref<18x25x64xbf16, #tpu.memory_space<vmem>>, vector<8x16x64xbf16>
      %102 = vector.shape_cast %101 : vector<8x16x64xbf16> to vector<128x64xbf16>
      %c2_110 = arith.constant 2 : index
      %c2_111 = arith.constant 2 : index
      %c0_112 = arith.constant 0 : index
      %c0_113 = arith.constant 0 : index
      %103 = vector.load %arg8[%c2_110, %c2_111, %c0_112, %c0_113] : memref<3x3x64x128xbf16, #tpu.memory_space<vmem>>, vector<1x1x64x128xbf16>
      %104 = vector.shape_cast %103 : vector<1x1x64x128xbf16> to vector<64x128xbf16>
      %cst_114 = arith.constant dense<0.000000e+00> : vector<128x128xf32>
      %105 = tpu.matmul %102, %104, %cst_114 {dimension_numbers = #tpu.dot_dimension_numbers<[1], [0], [0], [1], [0, 0, 1, 1], [], []>} : vector<128x64xbf16>, vector<64x128xbf16>, vector<128x128xf32> -> vector<128x128xf32>
      %106 = arith.addf %98, %105 : vector<128x128xf32>
      %c0_115 = arith.constant 0 : index
      %c0_116 = arith.constant 0 : index
      %107 = vector.load %arg9[%c0_115, %c0_116] : memref<1x128xf32, #tpu.memory_space<vmem>>, vector<1x128xf32>
      %108 = vector.broadcast %107 : vector<1x128xf32> to vector<128x128xf32>
      %109 = arith.addf %106, %108 : vector<128x128xf32>
      %cst_117 = arith.constant 1.000000e-01 : f32
      %110 = vector.broadcast %cst_117 : f32 to vector<128x128xf32>
      %111 = arith.mulf %110, %109 : vector<128x128xf32>
      %112 = arith.maximumf %109, %111 : vector<128x128xf32>
      %113 = arith.truncf %112 : vector<128x128xf32> to vector<128x128xbf16>
      %c0_118 = arith.constant 0 : index
      %c0_119 = arith.constant 0 : index
      %114 = vector.load %arg10[%c0_118, %c0_119] : memref<128x64xbf16, #tpu.memory_space<vmem>>, vector<128x64xbf16>
      %cst_120 = arith.constant dense<0.000000e+00> : vector<128x64xf32>
      %115 = tpu.matmul %113, %114, %cst_120 {dimension_numbers = #tpu.dot_dimension_numbers<[1], [0], [0], [1], [0, 0, 1, 1], [], []>} : vector<128x128xbf16>, vector<128x64xbf16>, vector<128x64xf32> -> vector<128x64xf32>
      %c0_121 = arith.constant 0 : index
      %c0_122 = arith.constant 0 : index
      %116 = vector.load %arg11[%c0_121, %c0_122] : memref<1x64xf32, #tpu.memory_space<vmem>>, vector<1x64xf32>
      %117 = vector.broadcast %116 : vector<1x64xf32> to vector<128x64xf32>
      %118 = arith.addf %115, %117 : vector<128x64xf32>
      %cst_123 = arith.constant 1.000000e-01 : f32
      %119 = vector.broadcast %cst_123 : f32 to vector<128x64xf32>
      %120 = arith.mulf %119, %118 : vector<128x64xf32>
      %121 = arith.maximumf %118, %120 : vector<128x64xf32>
      %122 = vector.shape_cast %121 : vector<128x64xf32> to vector<8x16x64xf32>
      %c0_124 = arith.constant 0 : index
      %123 = arith.index_cast %35 : i32 to index
      %c0_125 = arith.constant 0 : index
      %c0_126 = arith.constant 0 : index
      %124 = vector.load %arg12[%c0_124, %123, %c0_125, %c0_126] : memref<1x16x16x64xf32, #tpu.memory_space<vmem>>, vector<1x8x16x64xf32>
      %125 = vector.shape_cast %124 : vector<1x8x16x64xf32> to vector<8x16x64xf32>
      %126 = vector.shape_cast %122 : vector<8x16x64xf32> to vector<1x8x16x64xf32>
      tpu.vector_store %arg12[%c0_124, %123, %c0_125, %c0_126], %126 {strides = array<i32>} : memref<1x16x16x64xf32, #tpu.memory_space<vmem>>, vector<1x8x16x64xf32>,
    }
    %c2_i32_42 = arith.constant 2 : i32
    return
  }
  func.func @transform_0(%arg0: i32) -> (i32, i32, i32, i32) {
    %c0_i32 = arith.constant 0 : i32
    %c0_i32_0 = arith.constant 0 : i32
    %c0_i32_1 = arith.constant 0 : i32
    %c0_i32_2 = arith.constant 0 : i32
    return %arg0, %c0_i32, %c0_i32_0, %c0_i32_1 : i32, i32, i32, i32
  }
  func.func @transform_1(%arg0: i32) -> (i32, i32) {
    %c0_i32 = arith.constant 0 : i32
    %c0_i32_0 = arith.constant 0 : i32
    %c0_i32_1 = arith.constant 0 : i32
    return %c0_i32, %c0_i32_0 : i32, i32
  }
  func.func @transform_2(%arg0: i32) -> (i32, i32) {
    %c0_i32 = arith.constant 0 : i32
    %c0_i32_0 = arith.constant 0 : i32
    %c0_i32_1 = arith.constant 0 : i32
    return %c0_i32, %c0_i32_0 : i32, i32
  }
  func.func @transform_3(%arg0: i32) -> (i32, i32, i32, i32) {
    %c0_i32 = arith.constant 0 : i32
    %c0_i32_0 = arith.constant 0 : i32
    %c0_i32_1 = arith.constant 0 : i32
    %c0_i32_2 = arith.constant 0 : i32
    %c0_i32_3 = arith.constant 0 : i32
    return %c0_i32, %c0_i32_0, %c0_i32_1, %c0_i32_2 : i32, i32, i32, i32
  }
  func.func @transform_4(%arg0: i32) -> (i32, i32) {
    %c0_i32 = arith.constant 0 : i32
    %c0_i32_0 = arith.constant 0 : i32
    %c0_i32_1 = arith.constant 0 : i32
    return %c0_i32, %c0_i32_0 : i32, i32
  }
  func.func @transform_5(%arg0: i32) -> (i32, i32) {
    %c0_i32 = arith.constant 0 : i32
    %c0_i32_0 = arith.constant 0 : i32
    %c0_i32_1 = arith.constant 0 : i32
    return %c0_i32, %c0_i32_0 : i32, i32
  }
  func.func @transform_6(%arg0: i32) -> (i32, i32) {
    %c0_i32 = arith.constant 0 : i32
    %c0_i32_0 = arith.constant 0 : i32
    %c0_i32_1 = arith.constant 0 : i32
    return %c0_i32, %c0_i32_0 : i32, i32
  }
  func.func @transform_7(%arg0: i32) -> (i32, i32, i32, i32) {
    %c0_i32 = arith.constant 0 : i32
    %c0_i32_0 = arith.constant 0 : i32
    %c0_i32_1 = arith.constant 0 : i32
    %c0_i32_2 = arith.constant 0 : i32
    %c0_i32_3 = arith.constant 0 : i32
    return %c0_i32, %c0_i32_0, %c0_i32_1, %c0_i32_2 : i32, i32, i32, i32
  }
  func.func @transform_8(%arg0: i32) -> (i32, i32) {
    %c0_i32 = arith.constant 0 : i32
    %c0_i32_0 = arith.constant 0 : i32
    %c0_i32_1 = arith.constant 0 : i32
    return %c0_i32, %c0_i32_0 : i32, i32
  }
  func.func @transform_9(%arg0: i32) -> (i32, i32) {
    %c0_i32 = arith.constant 0 : i32
    %c0_i32_0 = arith.constant 0 : i32
    %c0_i32_1 = arith.constant 0 : i32
    return %c0_i32, %c0_i32_0 : i32, i32
  }
  func.func @transform_10(%arg0: i32) -> (i32, i32) {
    %c0_i32 = arith.constant 0 : i32
    %c0_i32_0 = arith.constant 0 : i32
    %c0_i32_1 = arith.constant 0 : i32
    return %c0_i32, %c0_i32_0 : i32, i32
  }
  func.func @transform_11(%arg0: i32) -> (i32, i32, i32, i32) {
    %c0_i32 = arith.constant 0 : i32
    %c0_i32_0 = arith.constant 0 : i32
    %c0_i32_1 = arith.constant 0 : i32
    %c0_i32_2 = arith.constant 0 : i32
    return %arg0, %c0_i32, %c0_i32_0, %c0_i32_1 : i32, i32, i32, i32
  }
}

</mosaic_0001>

<llo_original>
// kernel: topdown_layer.1
$region0: #{topdown_layer.1}
  #allocation0 [shape = 'u32[]', space=smem, size = 0x4, offset = 0x4, fixed_abs, tag = 'smem constant byte address 0x4 - core index']
  #allocation1 [shape = 'u32[144,128]{1,0:T(1,128)}', space=vmem, size = 0x12000, scoped, tag = 'internal scratch']
  #allocation2 [shape = 'bf16[18,25,64]{2,1,0:T(8,128)(2,1)}', space=vmem, size = 0x24000, scoped, tag = 'scratch operand']
  #allocation3 [shape = 'bf16[18,25,64]{2,1,0:T(8,128)(2,1)}', space=vmem, size = 0x24000, scoped, tag = 'scratch operand']
  %s0 = inlined_call_operand.vmem [shape: f32[2,16,16,32], index: 0, kind: input, shape index: {}]
  %s1 = inlined_call_operand.vmem [shape: bf16[32,64], index: 1, kind: input, shape index: {}]
  %s2 = inlined_call_operand.vmem [shape: f32[1,64], index: 2, kind: input, shape index: {}]
  %s3 = inlined_call_operand.vmem [shape: bf16[3,3,64,128], index: 3, kind: input, shape index: {}]
  %s4 = inlined_call_operand.vmem [shape: f32[1,128], index: 4, kind: input, shape index: {}]
  %s5 = inlined_call_operand.vmem [shape: bf16[128,64], index: 5, kind: input, shape index: {}]
  %s6 = inlined_call_operand.vmem [shape: f32[1,64], index: 6, kind: input, shape index: {}]
  %s7 = inlined_call_operand.vmem [shape: bf16[3,3,64,128], index: 7, kind: input, shape index: {}]
  %s8 = inlined_call_operand.vmem [shape: f32[1,128], index: 8, kind: input, shape index: {}]
  %s9 = inlined_call_operand.vmem [shape: bf16[128,64], index: 9, kind: input, shape index: {}]
  %s10 = inlined_call_operand.vmem [shape: f32[1,64], index: 10, kind: input, shape index: {}]
  %s11 = inlined_call_operand.hbm [shape: f32[2,16,16,64], index: 11, kind: output, shape index: {}]
  %s12 = sld [smem:[#allocation0]]
  $region91: #{topdown_layer.1} parent=0
    _
  %s14 = ssub.s32 1, %s12
  %s15 = scalar_select 0, %s14, %s12
  $region1: #{topdown_layer.1} parent=0
    #allocation4 [shape = 'u8[262144]{0}', space=vmem, size = 0x40000, scoped, tag = 'output window, operand 0']
    #allocation5 [shape = 's32[2]{0}', space=sflag, size = 0x8, scoped, tag = 'scoped memory for topdown_layer.1']
    %16 = vsyncpa [#allocation5], 0
    %s17 = scalar_lea.sflag [#allocation5], 1
    %18 = vsyncpa %s17, 0
    loop: start=0, step=1, limit=4
    $region2: #{topdown_layer.1} parent=1 // loop_pre_header
      _
    $region3: #{topdown_layer.1} parent=1 // loop_header
      %s20 = sphi 0, %s24
      %p21 = scmp.ge.s32.totalorder %s20, 4
      %s30 = sphi 0, %s32
      %s33 = sphi 0, %s30
      %s34 = sphi 0, %s33
      %s50 = sphi 0, %s34
      %s54 = sphi 0, %s54
      %s56 = sphi 0, %s54
      %s57 = sphi 0, %s56
      %s71 = sphi 0, %s57
      %s75 = sphi 0, %s75
      %s77 = sphi 0, %s75
      %s78 = sphi 0, %s77
      %s92 = sphi 0, %s78
      %s96 = sphi 0, %s96
      %s98 = sphi 0, %s96
      %s99 = sphi 0, %s98
      %s113 = sphi 0, %s99
      %s117 = sphi 0, %s117
      %s119 = sphi 0, %s117
      %s120 = sphi 0, %s119
      %s134 = sphi 0, %s120
      %s138 = sphi 0, %s138
      %s140 = sphi 0, %s138
      %s141 = sphi 0, %s140
      %s155 = sphi 0, %s141
      %s159 = sphi 0, %s159
      %s161 = sphi 0, %s159
      %s162 = sphi 0, %s161
      %s176 = sphi 0, %s162
      %s180 = sphi 0, %s180
      %s182 = sphi 0, %s180
      %s183 = sphi 0, %s182
      %s197 = sphi 0, %s183
      %s201 = sphi 0, %s201
      %s203 = sphi 0, %s201
      %s204 = sphi 0, %s203
      %s218 = sphi 0, %s204
      %s222 = sphi 0, %s222
      %s224 = sphi 0, %s222
      %s225 = sphi 0, %s224
      %s239 = sphi 0, %s225
      %s243 = sphi 0, %s243
      %s245 = sphi 0, %s243
      %s246 = sphi 0, %s245
      %s260 = sphi 0, %s246
      %s266 = sphi 0, %s268
      %s269 = sphi 0, %s266
      %s270 = sphi 0, %s269
      %s286 = sphi 0, %s270
    $region4: #{topdown_layer.1} parent=1 // loop_header_branch
      %23 = sbr.rel (%p21) target = $region8
    $region5: #{topdown_layer.1} parent=1 // loop_body
      %s25 = ssub.s32 %s20, 1
      %s26 = ssub.s32 %s20, 2
      %s27 = sadd.s32 %s20, 1
      %s28 = ssub.s32 %s20, %s27
      %p29 = scmp.eq.s32.totalorder %s28, 0
      %s31 = sadd.s32 %s30, 1
      %s32 = scalar_select %p29, %s30, %s31
      %p35 = pneg %p29
      %p36 = scmp.eq.s32.totalorder %s20, 1
      %p37 = por %p35, %p36
      %p38 = scmp.ne.s32.totalorder %s30, %s33
      %p39 = scmp.eq.s32.totalorder %s20, 0
      %p40 = por %p38, %p39
      %p41 = scmp.ne.s32.totalorder %s30, %s33
      %p42 = scmp.eq.s32.totalorder %s25, 1
      %p43 = por %p41, %p42
      %p44 = scmp.ne.s32.totalorder %s33, %s34
      %p45 = scmp.eq.s32.totalorder %s25, 0
      %p46 = por %p44, %p45
      %p47 = scmp.ne.s32.totalorder %s33, %s34
      %p48 = scmp.eq.s32.totalorder %s26, 1
      %p49 = por %p47, %p48
      %p51 = scmp.ne.s32.totalorder %s34, %s50
      %p52 = scmp.eq.s32.totalorder %s26, 0
      %p53 = por %p51, %p52
      %s55 = sadd.s32 %s54, 1
      %p58 = scmp.eq.s32.totalorder %s20, 1
      %p59 = scmp.ne.s32.totalorder %s54, %s56
      %p60 = scmp.eq.s32.totalorder %s20, 0
      %p61 = por %p59, %p60
      %p62 = scmp.ne.s32.totalorder %s54, %s56
      %p63 = scmp.eq.s32.totalorder %s25, 1
      %p64 = por %p62, %p63
      %p65 = scmp.ne.s32.totalorder %s56, %s57
      %p66 = scmp.eq.s32.totalorder %s25, 0
      %p67 = por %p65, %p66
      %p68 = scmp.ne.s32.totalorder %s56, %s57
      %p69 = scmp.eq.s32.totalorder %s26, 1
      %p70 = por %p68, %p69
      %p72 = scmp.ne.s32.totalorder %s57, %s71
      %p73 = scmp.eq.s32.totalorder %s26, 0
      %p74 = por %p72, %p73
      %s76 = sadd.s32 %s75, 1
      %p79 = scmp.eq.s32.totalorder %s20, 1
      %p80 = scmp.ne.s32.totalorder %s75, %s77
      %p81 = scmp.eq.s32.totalorder %s20, 0
      %p82 = por %p80, %p81
      %p83 = scmp.ne.s32.totalorder %s75, %s77
      %p84 = scmp.eq.s32.totalorder %s25, 1
      %p85 = por %p83, %p84
      %p86 = scmp.ne.s32.totalorder %s77, %s78
      %p87 = scmp.eq.s32.totalorder %s25, 0
      %p88 = por %p86, %p87
      %p89 = scmp.ne.s32.totalorder %s77, %s78
      %p90 = scmp.eq.s32.totalorder %s26, 1
      %p91 = por %p89, %p90
      %p93 = scmp.ne.s32.totalorder %s78, %s92
      %p94 = scmp.eq.s32.totalorder %s26, 0
      %p95 = por %p93, %p94
      %s97 = sadd.s32 %s96, 1
      %p100 = scmp.eq.s32.totalorder %s20, 1
      %p101 = scmp.ne.s32.totalorder %s96, %s98
      %p102 = scmp.eq.s32.totalorder %s20, 0
      %p103 = por %p101, %p102
      %p104 = scmp.ne.s32.totalorder %s96, %s98
      %p105 = scmp.eq.s32.totalorder %s25, 1
      %p106 = por %p104, %p105
      %p107 = scmp.ne.s32.totalorder %s98, %s99
      %p108 = scmp.eq.s32.totalorder %s25, 0
      %p109 = por %p107, %p108
      %p110 = scmp.ne.s32.totalorder %s98, %s99
      %p111 = scmp.eq.s32.totalorder %s26, 1
      %p112 = por %p110, %p111
      %p114 = scmp.ne.s32.totalorder %s99, %s113
      %p115 = scmp.eq.s32.totalorder %s26, 0
      %p116 = por %p114, %p115
      %s118 = sadd.s32 %s117, 1
      %p121 = scmp.eq.s32.totalorder %s20, 1
      %p122 = scmp.ne.s32.totalorder %s117, %s119
      %p123 = scmp.eq.s32.totalorder %s20, 0
      %p124 = por %p122, %p123
      %p125 = scmp.ne.s32.totalorder %s117, %s119
      %p126 = scmp.eq.s32.totalorder %s25, 1
      %p127 = por %p125, %p126
      %p128 = scmp.ne.s32.totalorder %s119, %s120
      %p129 = scmp.eq.s32.totalorder %s25, 0
      %p130 = por %p128, %p129
      %p131 = scmp.ne.s32.totalorder %s119, %s120
      %p132 = scmp.eq.s32.totalorder %s26, 1
      %p133 = por %p131, %p132
      %p135 = scmp.ne.s32.totalorder %s120, %s134
      %p136 = scmp.eq.s32.totalorder %s26, 0
      %p137 = por %p135, %p136
      %s139 = sadd.s32 %s138, 1
      %p142 = scmp.eq.s32.totalorder %s20, 1
      %p143 = scmp.ne.s32.totalorder %s138, %s140
      %p144 = scmp.eq.s32.totalorder %s20, 0
      %p145 = por %p143, %p144
      %p146 = scmp.ne.s32.totalorder %s138, %s140
      %p147 = scmp.eq.s32.totalorder %s25, 1
      %p148 = por %p146, %p147
      %p149 = scmp.ne.s32.totalorder %s140, %s141
      %p150 = scmp.eq.s32.totalorder %s25, 0
      %p151 = por %p149, %p150
      %p152 = scmp.ne.s32.totalorder %s140, %s141
      %p153 = scmp.eq.s32.totalorder %s26, 1
      %p154 = por %p152, %p153
      %p156 = scmp.ne.s32.totalorder %s141, %s155
      %p157 = scmp.eq.s32.totalorder %s26, 0
      %p158 = por %p156, %p157
      %s160 = sadd.s32 %s159, 1
      %p163 = scmp.eq.s32.totalorder %s20, 1
      %p164 = scmp.ne.s32.totalorder %s159, %s161
      %p165 = scmp.eq.s32.totalorder %s20, 0
      %p166 = por %p164, %p165
      %p167 = scmp.ne.s32.totalorder %s159, %s161
      %p168 = scmp.eq.s32.totalorder %s25, 1
      %p169 = por %p167, %p168
      %p170 = scmp.ne.s32.totalorder %s161, %s162
      %p171 = scmp.eq.s32.totalorder %s25, 0
      %p172 = por %p170, %p171
      %p173 = scmp.ne.s32.totalorder %s161, %s162
      %p174 = scmp.eq.s32.totalorder %s26, 1
      %p175 = por %p173, %p174
      %p177 = scmp.ne.s32.totalorder %s162, %s176
      %p178 = scmp.eq.s32.totalorder %s26, 0
      %p179 = por %p177, %p178
      %s181 = sadd.s32 %s180, 1
      %p184 = scmp.eq.s32.totalorder %s20, 1
      %p185 = scmp.ne.s32.totalorder %s180, %s182
      %p186 = scmp.eq.s32.totalorder %s20, 0
      %p187 = por %p185, %p186
      %p188 = scmp.ne.s32.totalorder %s180, %s182
      %p189 = scmp.eq.s32.totalorder %s25, 1
      %p190 = por %p188, %p189
      %p191 = scmp.ne.s32.totalorder %s182, %s183
      %p192 = scmp.eq.s32.totalorder %s25, 0
      %p193 = por %p191, %p192
      %p194 = scmp.ne.s32.totalorder %s182, %s183
      %p195 = scmp.eq.s32.totalorder %s26, 1
      %p196 = por %p194, %p195
      %p198 = scmp.ne.s32.totalorder %s183, %s197
      %p199 = scmp.eq.s32.totalorder %s26, 0
      %p200 = por %p198, %p199
      %s202 = sadd.s32 %s201, 1
      %p205 = scmp.eq.s32.totalorder %s20, 1
      %p206 = scmp.ne.s32.totalorder %s201, %s203
      %p207 = scmp.eq.s32.totalorder %s20, 0
      %p208 = por %p206, %p207
      %p209 = scmp.ne.s32.totalorder %s201, %s203
      %p210 = scmp.eq.s32.totalorder %s25, 1
      %p211 = por %p209, %p210
      %p212 = scmp.ne.s32.totalorder %s203, %s204
      %p213 = scmp.eq.s32.totalorder %s25, 0
      %p214 = por %p212, %p213
      %p215 = scmp.ne.s32.totalorder %s203, %s204
      %p216 = scmp.eq.s32.totalorder %s26, 1
      %p217 = por %p215, %p216
      %p219 = scmp.ne.s32.totalorder %s204, %s218
      %p220 = scmp.eq.s32.totalorder %s26, 0
      %p221 = por %p219, %p220
      %s223 = sadd.s32 %s222, 1
      %p226 = scmp.eq.s32.totalorder %s20, 1
      %p227 = scmp.ne.s32.totalorder %s222, %s224
      %p228 = scmp.eq.s32.totalorder %s20, 0
      %p229 = por %p227, %p228
      %p230 = scmp.ne.s32.totalorder %s222, %s224
      %p231 = scmp.eq.s32.totalorder %s25, 1
      %p232 = por %p230, %p231
      %p233 = scmp.ne.s32.totalorder %s224, %s225
      %p234 = scmp.eq.s32.totalorder %s25, 0
      %p235 = por %p233, %p234
      %p236 = scmp.ne.s32.totalorder %s224, %s225
      %p237 = scmp.eq.s32.totalorder %s26, 1
      %p238 = por %p236, %p237
      %p240 = scmp.ne.s32.totalorder %s225, %s239
      %p241 = scmp.eq.s32.totalorder %s26, 0
      %p242 = por %p240, %p241
      %s244 = sadd.s32 %s243, 1
      %p247 = scmp.eq.s32.totalorder %s20, 1
      %p248 = scmp.ne.s32.totalorder %s243, %s245
      %p249 = scmp.eq.s32.totalorder %s20, 0
      %p250 = por %p248, %p249
      %p251 = scmp.ne.s32.totalorder %s243, %s245
      %p252 = scmp.eq.s32.totalorder %s25, 1
      %p253 = por %p251, %p252
      %p254 = scmp.ne.s32.totalorder %s245, %s246
      %p255 = scmp.eq.s32.totalorder %s25, 0
      %p256 = por %p254, %p255
      %p257 = scmp.ne.s32.totalorder %s245, %s246
      %p258 = scmp.eq.s32.totalorder %s26, 1
      %p259 = por %p257, %p258
      %p261 = scmp.ne.s32.totalorder %s246, %s260
      %p262 = scmp.eq.s32.totalorder %s26, 0
      %p263 = por %p261, %p262
      %s264 = ssub.s32 %s20, %s27
      %p265 = scmp.eq.s32.totalorder %s264, 0
      %s267 = sadd.s32 %s266, 1
      %s268 = scalar_select %p265, %s266, %s267
      %p271 = pneg %p265
      %p272 = scmp.eq.s32.totalorder %s20, 1
      %p273 = por %p271, %p272
      %p274 = scmp.ne.s32.totalorder %s266, %s269
      %p275 = scmp.eq.s32.totalorder %s20, 0
      %p276 = por %p274, %p275
      %p277 = scmp.ne.s32.totalorder %s266, %s269
      %p278 = scmp.eq.s32.totalorder %s25, 1
      %p279 = por %p277, %p278
      %p280 = scmp.ne.s32.totalorder %s269, %s270
      %p281 = scmp.eq.s32.totalorder %s25, 0
      %p282 = por %p280, %p281
      %p283 = scmp.ne.s32.totalorder %s269, %s270
      %p284 = scmp.eq.s32.totalorder %s26, 1
      %p285 = por %p283, %p284
      %p287 = scmp.ne.s32.totalorder %s270, %s286
      %p288 = scmp.eq.s32.totalorder %s26, 0
      %p289 = por %p287, %p288
      %p290 = scmp.le.s32.totalorder 1, %s20
      %p291 = scmp.lt.s32.totalorder %s20, 3
      %p292 = pnand %p290, %p291
      %p293 = pneg %p292
      // Predicated region
      $region9: #{topdown_layer.1} parent=5 // pred_check
        _
      $region10: #{topdown_layer.1} parent=5 // pred_check_branch
        %295 = sbr.rel (%p292) target = $region12
      $region11: #{topdown_layer.1} parent=5 // pred_region
        %s296 = ssub.s32 %s20, 1
        // Predicated region
        $region13: #{topdown_layer.1} parent=11 // pred_check
          %p297 = pneg %p67
        $region14: #{topdown_layer.1} parent=11 // pred_check_branch
          %299 = sbr.rel (%p297) target = $region16
        $region15: #{topdown_layer.1} parent=11 // pred_region
          _
        $region16: #{topdown_layer.1} parent=11 // pred_fallthru
          _
        // Predicated region
        $region17: #{topdown_layer.1} parent=11 // pred_check
          %p300 = pneg %p88
        $region18: #{topdown_layer.1} parent=11 // pred_check_branch
          %302 = sbr.rel (%p300) target = $region20
        $region19: #{topdown_layer.1} parent=11 // pred_region
          _
        $region20: #{topdown_layer.1} parent=11 // pred_fallthru
          _
        // Predicated region
        $region21: #{topdown_layer.1} parent=11 // pred_check
          %p303 = pneg %p109
        $region22: #{topdown_layer.1} parent=11 // pred_check_branch
          %305 = sbr.rel (%p303) target = $region24
        $region23: #{topdown_layer.1} parent=11 // pred_region
          _
        $region24: #{topdown_layer.1} parent=11 // pred_fallthru
          _
        // Predicated region
        $region25: #{topdown_layer.1} parent=11 // pred_check
          %p306 = pneg %p130
        $region26: #{topdown_layer.1} parent=11 // pred_check_branch
          %308 = sbr.rel (%p306) target = $region28
        $region27: #{topdown_layer.1} parent=11 // pred_region
          _
        $region28: #{topdown_layer.1} parent=11 // pred_fallthru
          _
        // Predicated region
        $region29: #{topdown_layer.1} parent=11 // pred_check
          %p309 = pneg %p151
        $region30: #{topdown_layer.1} parent=11 // pred_check_branch
          %311 = sbr.rel (%p309) target = $region32
        $region31: #{topdown_layer.1} parent=11 // pred_region
          _
        $region32: #{topdown_layer.1} parent=11 // pred_fallthru
          _
        // Predicated region
        $region33: #{topdown_layer.1} parent=11 // pred_check
          %p312 = pneg %p172
        $region34: #{topdown_layer.1} parent=11 // pred_check_branch
          %314 = sbr.rel (%p312) target = $region36
        $region35: #{topdown_layer.1} parent=11 // pred_region
          _
        $region36: #{topdown_layer.1} parent=11 // pred_fallthru
          _
        // Predicated region
        $region37: #{topdown_layer.1} parent=11 // pred_check
          %p315 = pneg %p193
        $region38: #{topdown_layer.1} parent=11 // pred_check_branch
          %317 = sbr.rel (%p315) target = $region40
        $region39: #{topdown_layer.1} parent=11 // pred_region
          _
        $region40: #{topdown_layer.1} parent=11 // pred_fallthru
          _
        // Predicated region
        $region41: #{topdown_layer.1} parent=11 // pred_check
          %p318 = pneg %p214
        $region42: #{topdown_layer.1} parent=11 // pred_check_branch
          %320 = sbr.rel (%p318) target = $region44
        $region43: #{topdown_layer.1} parent=11 // pred_region
          _
        $region44: #{topdown_layer.1} parent=11 // pred_fallthru
          _
        // Predicated region
        $region45: #{topdown_layer.1} parent=11 // pred_check
          %p321 = pneg %p235
        $region46: #{topdown_layer.1} parent=11 // pred_check_branch
          %323 = sbr.rel (%p321) target = $region48
        $region47: #{topdown_layer.1} parent=11 // pred_region
          _
        $region48: #{topdown_layer.1} parent=11 // pred_fallthru
          _
        // Predicated region
        $region49: #{topdown_layer.1} parent=11 // pred_check
          %p324 = pneg %p256
        $region50: #{topdown_layer.1} parent=11 // pred_check_branch
          %326 = sbr.rel (%p324) target = $region52
        $region51: #{topdown_layer.1} parent=11 // pred_region
          _
        $region52: #{topdown_layer.1} parent=11 // pred_fallthru
          _
      $region12: #{topdown_layer.1} parent=5 // pred_fallthru
        _
      %p327 = scmp.lt.s32.totalorder %s20, 2
      // Predicated region
      $region53: #{topdown_layer.1} parent=5 // pred_check
        %p328 = pneg %p327
      $region54: #{topdown_layer.1} parent=5 // pred_check_branch
        %330 = sbr.rel (%p328) target = $region56
      $region55: #{topdown_layer.1} parent=5 // pred_region
        // Predicated region
        $region57: #{topdown_layer.1} parent=55 // pred_check
          %p331 = pneg %p40
        $region58: #{topdown_layer.1} parent=55 // pred_check_branch
          %333 = sbr.rel (%p331) target = $region60
        $region59: #{topdown_layer.1} parent=55 // pred_region
          %p334 = scmp.lt.s32.totalorder %s20, 1
          %s335 = scalar_select %p334, %s20, 1
          %s336 = smul.addr %s335, 32
          %s337 = smul.addr %s336, 8
          %s338 = scalar_lea.vmem %s0, %s337
        $region60: #{topdown_layer.1} parent=55 // pred_fallthru
          _
      $region56: #{topdown_layer.1} parent=5 // pred_fallthru
        _
      %p339 = scmp.le.s32.totalorder 1, %s20
      %p340 = scmp.lt.s32.totalorder %s20, 3
      %p341 = pnand %p339, %p340
      %p342 = pneg %p341
      // Predicated region
      $region61: #{topdown_layer.1} parent=5 // pred_check
        _
      $region62: #{topdown_layer.1} parent=5 // pred_check_branch
        %344 = sbr.rel (%p341) target = $region64
      $region63: #{topdown_layer.1} parent=5 // pred_region
        %s345 = ssub.s32 %s20, 1
        %p346 = scmp.lt.s32.totalorder %s25, 1
        %s347 = scalar_select %p346, %s25, 1
        %s348 = smul.addr %s347, 32
        %s349 = smul.addr %s348, 8
        %s350 = scalar_lea.vmem %s0, %s349
        %p351 = pneg %p46
        %p352 = pneg %p43
        %p353 = pneg %p67
        %p354 = pneg %p64
        %p355 = pneg %p88
        %p356 = pneg %p85
        %p357 = pneg %p109
        %p358 = pneg %p106
        %p359 = pneg %p130
        %p360 = pneg %p127
        %p361 = pneg %p151
        %p362 = pneg %p148
        %p363 = pneg %p172
        %p364 = pneg %p169
        %p365 = pneg %p193
        %p366 = pneg %p190
        %p367 = pneg %p214
        %p368 = pneg %p211
        %p369 = pneg %p235
        %p370 = pneg %p232
        %p371 = pneg %p256
        %p372 = pneg %p253
        %p373 = pneg %p282
        %p374 = pneg %p279
        %s375 = sand.u32 %s269, 1
        %s376 = scalar_lea.sflag [#allocation5], %s375
        %s377 = sand.u32 %s269, 1
        %s378 = smul.addr %s377, 256
        %s379 = scalar_lea.vmem [#allocation4], %s378
        %p380 = scmp.lt.s32.totalorder %s25, 1
        %s381 = scalar_select %p380, %s25, 1
        %s382 = smul.addr %s381, 32
        %s383 = smul.addr %s382, 8
        %s384 = scalar_lea.vmem %s0, %s383
        %vm386 = vcmask 519168
        %387 = vst.msk [vmem:[#allocation2] sm:$0xf] %vm386, 0
        %388 = vst.msk [vmem:[#allocation2 + $0x4] sm:$0xf] %vm386, 0
        %389 = vst.msk [vmem:[#allocation2 + $0x8] sm:$0xf] %vm386, 0
        %vm390 = vcmask 516096
        %vm391 = vsmask.f32 256
        %vm392 = vmand %vm390, %vm391
        %v393 = vld [vmem:[#allocation2 + $0xc] sm:$0x1]
        %v394 = vsel %vm392, 0, %v393
        %395 = vst [vmem:[#allocation2 + $0xc] sm:$0x1] %v394
        %s396 = scalar_lea.vmem [#allocation2], 272
        %397 = vst.msk [vmem:[%s396] sm:$0xf] %vm386, 0
        %398 = vst.msk [vmem:[%s396 + $0x4] sm:$0xf] %vm386, 0
        %399 = vst.msk [vmem:[%s396 + $0x8] sm:$0xf] %vm386, 0
        %v400 = vld [vmem:[%s396 + $0xc] sm:$0x1]
        %v401 = vsel %vm392, 0, %v400
        %402 = vst [vmem:[%s396 + $0xc] sm:$0x1] %v401
        %vm403 = vcmask 519171
        %vm404 = vsmask.f32 7950
        %vm405 = vmand %vm403, %vm404
        %v406 = vld [vmem:[#allocation2] sm:$0x8]
        %v407 = vsel %vm405, 0, %v406
        %408 = vst [vmem:[#allocation2] sm:$0x8] %v407
        %v409 = vld [vmem:[#allocation2 + $0x10] sm:$0x8]
        %v410 = vsel %vm405, 0, %v409
        %411 = vst [vmem:[#allocation2 + $0x10] sm:$0x8] %v410
        %v412 = vld [vmem:[#allocation2 + $0x20] sm:$0x8]
        %v413 = vsel %vm405, 0, %v412
        %414 = vst [vmem:[#allocation2 + $0x20] sm:$0x8] %v413
        %v415 = vld [vmem:[#allocation2 + $0x30] sm:$0x8]
        %v416 = vsel %vm405, 0, %v415
        %417 = vst [vmem:[#allocation2 + $0x30] sm:$0x8] %v416
        %v418 = vld [vmem:[#allocation2 + $0x40] sm:$0x8]
        %v419 = vsel %vm405, 0, %v418
        %420 = vst [vmem:[#allocation2 + $0x40] sm:$0x8] %v419
        %v421 = vld [vmem:[#allocation2 + $0x50] sm:$0x8]
        %v422 = vsel %vm405, 0, %v421
        %423 = vst [vmem:[#allocation2 + $0x50] sm:$0x8] %v422
        %v424 = vld [vmem:[#allocation2 + $0x60] sm:$0x8]
        %v425 = vsel %vm405, 0, %v424
        %426 = vst [vmem:[#allocation2 + $0x60] sm:$0x8] %v425
        %v427 = vld [vmem:[#allocation2 + $0x70] sm:$0x8]
        %v428 = vsel %vm405, 0, %v427
        %429 = vst [vmem:[#allocation2 + $0x70] sm:$0x8] %v428
        %v430 = vld [vmem:[#allocation2 + $0x80] sm:$0x8]
        %v431 = vsel %vm405, 0, %v430
        %432 = vst [vmem:[#allocation2 + $0x80] sm:$0x8] %v431
        %v433 = vld [vmem:[#allocation2 + $0x90] sm:$0x8]
        %v434 = vsel %vm405, 0, %v433
        %435 = vst [vmem:[#allocation2 + $0x90] sm:$0x8] %v434
        %v436 = vld [vmem:[#allocation2 + $0xa0] sm:$0x8]
        %v437 = vsel %vm405, 0, %v436
        %438 = vst [vmem:[#allocation2 + $0xa0] sm:$0x8] %v437
        %v439 = vld [vmem:[#allocation2 + $0xb0] sm:$0x8]
        %v440 = vsel %vm405, 0, %v439
        %441 = vst [vmem:[#allocation2 + $0xb0] sm:$0x8] %v440
        %v442 = vld [vmem:[#allocation2 + $0xc0] sm:$0x8]
        %v443 = vsel %vm405, 0, %v442
        %444 = vst [vmem:[#allocation2 + $0xc0] sm:$0x8] %v443
        %v445 = vld [vmem:[#allocation2 + $0xd0] sm:$0x8]
        %v446 = vsel %vm405, 0, %v445
        %447 = vst [vmem:[#allocation2 + $0xd0] sm:$0x8] %v446
        %v448 = vld [vmem:[#allocation2 + $0xe0] sm:$0x8]
        %v449 = vsel %vm405, 0, %v448
        %450 = vst [vmem:[#allocation2 + $0xe0] sm:$0x8] %v449
        %v451 = vld [vmem:[#allocation2 + $0xf0] sm:$0x8]
        %v452 = vsel %vm405, 0, %v451
        %453 = vst [vmem:[#allocation2 + $0xf0] sm:$0x8] %v452
        %v454 = vld [vmem:[#allocation2 + $0x100] sm:$0x8]
        %v455 = vsel %vm405, 0, %v454
        %456 = vst [vmem:[#allocation2 + $0x100] sm:$0x8] %v455
        %v457 = vld [vmem:[#allocation2 + $0x110] sm:$0x8]
        %v458 = vsel %vm405, 0, %v457
        %459 = vst [vmem:[#allocation2 + $0x110] sm:$0x8] %v458
        %v460 = vld [vmem:[#allocation2 + $0xc] sm:$0x1]
        %v461 = vsel %vm392, 0, %v460
        %462 = vst [vmem:[#allocation2 + $0xc] sm:$0x1] %v461
        %v463 = vld [vmem:[#allocation2 + $0x1c] sm:$0x1]
        %v464 = vsel %vm392, 0, %v463
        %465 = vst [vmem:[#allocation2 + $0x1c] sm:$0x1] %v464
        %v466 = vld [vmem:[#allocation2 + $0x2c] sm:$0x1]
        %v467 = vsel %vm392, 0, %v466
        %468 = vst [vmem:[#allocation2 + $0x2c] sm:$0x1] %v467
        %v469 = vld [vmem:[#allocation2 + $0x3c] sm:$0x1]
        %v470 = vsel %vm392, 0, %v469
        %471 = vst [vmem:[#allocation2 + $0x3c] sm:$0x1] %v470
        %v472 = vld [vmem:[#allocation2 + $0x4c] sm:$0x1]
        %v473 = vsel %vm392, 0, %v472
        %474 = vst [vmem:[#allocation2 + $0x4c] sm:$0x1] %v473
        %v475 = vld [vmem:[#allocation2 + $0x5c] sm:$0x1]
        %v476 = vsel %vm392, 0, %v475
        %477 = vst [vmem:[#allocation2 + $0x5c] sm:$0x1] %v476
        %v478 = vld [vmem:[#allocation2 + $0x6c] sm:$0x1]
        %v479 = vsel %vm392, 0, %v478
        %480 = vst [vmem:[#allocation2 + $0x6c] sm:$0x1] %v479
        %v481 = vld [vmem:[#allocation2 + $0x7c] sm:$0x1]
        %v482 = vsel %vm392, 0, %v481
        %483 = vst [vmem:[#allocation2 + $0x7c] sm:$0x1] %v482
        %v484 = vld [vmem:[#allocation2 + $0x8c] sm:$0x1]
        %v485 = vsel %vm392, 0, %v484
        %486 = vst [vmem:[#allocation2 + $0x8c] sm:$0x1] %v485
        %v487 = vld [vmem:[#allocation2 + $0x9c] sm:$0x1]
        %v488 = vsel %vm392, 0, %v487
        %489 = vst [vmem:[#allocation2 + $0x9c] sm:$0x1] %v488
        %v490 = vld [vmem:[#allocation2 + $0xac] sm:$0x1]
        %v491 = vsel %vm392, 0, %v490
        %492 = vst [vmem:[#allocation2 + $0xac] sm:$0x1] %v491
        %v493 = vld [vmem:[#allocation2 + $0xbc] sm:$0x1]
        %v494 = vsel %vm392, 0, %v493
        %495 = vst [vmem:[#allocation2 + $0xbc] sm:$0x1] %v494
        %v496 = vld [vmem:[#allocation2 + $0xcc] sm:$0x1]
        %v497 = vsel %vm392, 0, %v496
        %498 = vst [vmem:[#allocation2 + $0xcc] sm:$0x1] %v497
        %v499 = vld [vmem:[#allocation2 + $0xdc] sm:$0x1]
        %v500 = vsel %vm392, 0, %v499
        %501 = vst [vmem:[#allocation2 + $0xdc] sm:$0x1] %v500
        %v502 = vld [vmem:[#allocation2 + $0xec] sm:$0x1]
        %v503 = vsel %vm392, 0, %v502
        %504 = vst [vmem:[#allocation2 + $0xec] sm:$0x1] %v503
        %v505 = vld [vmem:[#allocation2 + $0xfc] sm:$0x1]
        %v506 = vsel %vm392, 0, %v505
        %507 = vst [vmem:[#allocation2 + $0xfc] sm:$0x1] %v506
        %v508 = vld [vmem:[#allocation2 + $0x10c] sm:$0x1]
        %v509 = vsel %vm392, 0, %v508
        %510 = vst [vmem:[#allocation2 + $0x10c] sm:$0x1] %v509
        %v511 = vld [vmem:[#allocation2 + $0x11c] sm:$0x1]
        %v512 = vsel %vm392, 0, %v511
        %513 = vst [vmem:[#allocation2 + $0x11c] sm:$0x1] %v512
        %514 = vst.msk [vmem:[#allocation3] sm:$0xf] %vm386, 0
        %515 = vst.msk [vmem:[#allocation3 + $0x4] sm:$0xf] %vm386, 0
        %516 = vst.msk [vmem:[#allocation3 + $0x8] sm:$0xf] %vm386, 0
        %v517 = vld [vmem:[#allocation3 + $0xc] sm:$0x1]
        %v518 = vsel %vm392, 0, %v517
        %519 = vst [vmem:[#allocation3 + $0xc] sm:$0x1] %v518
        %s520 = scalar_lea.vmem [#allocation3], 272
        %521 = vst.msk [vmem:[%s520] sm:$0xf] %vm386, 0
        %522 = vst.msk [vmem:[%s520 + $0x4] sm:$0xf] %vm386, 0
        %523 = vst.msk [vmem:[%s520 + $0x8] sm:$0xf] %vm386, 0
        %v524 = vld [vmem:[%s520 + $0xc] sm:$0x1]
        %v525 = vsel %vm392, 0, %v524
        %526 = vst [vmem:[%s520 + $0xc] sm:$0x1] %v525
        %v527 = vld [vmem:[#allocation3] sm:$0x8]
        %v528 = vsel %vm405, 0, %v527
        %529 = vst [vmem:[#allocation3] sm:$0x8] %v528
        %v530 = vld [vmem:[#allocation3 + $0x10] sm:$0x8]
        %v531 = vsel %vm405, 0, %v530
        %532 = vst [vmem:[#allocation3 + $0x10] sm:$0x8] %v531
        %v533 = vld [vmem:[#allocation3 + $0x20] sm:$0x8]
        %v534 = vsel %vm405, 0, %v533
        %535 = vst [vmem:[#allocation3 + $0x20] sm:$0x8] %v534
        %v536 = vld [vmem:[#allocation3 + $0x30] sm:$0x8]
        %v537 = vsel %vm405, 0, %v536
        %538 = vst [vmem:[#allocation3 + $0x30] sm:$0x8] %v537
        %v539 = vld [vmem:[#allocation3 + $0x40] sm:$0x8]
        %v540 = vsel %vm405, 0, %v539
        %541 = vst [vmem:[#allocation3 + $0x40] sm:$0x8] %v540
        %v542 = vld [vmem:[#allocation3 + $0x50] sm:$0x8]
        %v543 = vsel %vm405, 0, %v542
        %544 = vst [vmem:[#allocation3 + $0x50] sm:$0x8] %v543
        %v545 = vld [vmem:[#allocation3 + $0x60] sm:$0x8]
        %v546 = vsel %vm405, 0, %v545
        %547 = vst [vmem:[#allocation3 + $0x60] sm:$0x8] %v546
        %v548 = vld [vmem:[#allocation3 + $0x70] sm:$0x8]
        %v549 = vsel %vm405, 0, %v548
        %550 = vst [vmem:[#allocation3 + $0x70] sm:$0x8] %v549
        %v551 = vld [vmem:[#allocation3 + $0x80] sm:$0x8]
        %v552 = vsel %vm405, 0, %v551
        %553 = vst [vmem:[#allocation3 + $0x80] sm:$0x8] %v552
        %v554 = vld [vmem:[#allocation3 + $0x90] sm:$0x8]
        %v555 = vsel %vm405, 0, %v554
        %556 = vst [vmem:[#allocation3 + $0x90] sm:$0x8] %v555
        %v557 = vld [vmem:[#allocation3 + $0xa0] sm:$0x8]
        %v558 = vsel %vm405, 0, %v557
        %559 = vst [vmem:[#allocation3 + $0xa0] sm:$0x8] %v558
        %v560 = vld [vmem:[#allocation3 + $0xb0] sm:$0x8]
        %v561 = vsel %vm405, 0, %v560
        %562 = vst [vmem:[#allocation3 + $0xb0] sm:$0x8] %v561
        %v563 = vld [vmem:[#allocation3 + $0xc0] sm:$0x8]
        %v564 = vsel %vm405, 0, %v563
        %565 = vst [vmem:[#allocation3 + $0xc0] sm:$0x8] %v564
        %v566 = vld [vmem:[#allocation3 + $0xd0] sm:$0x8]
        %v567 = vsel %vm405, 0, %v566
        %568 = vst [vmem:[#allocation3 + $0xd0] sm:$0x8] %v567
        %v569 = vld [vmem:[#allocation3 + $0xe0] sm:$0x8]
        %v570 = vsel %vm405, 0, %v569
        %571 = vst [vmem:[#allocation3 + $0xe0] sm:$0x8] %v570
        %v572 = vld [vmem:[#allocation3 + $0xf0] sm:$0x8]
        %v573 = vsel %vm405, 0, %v572
        %574 = vst [vmem:[#allocation3 + $0xf0] sm:$0x8] %v573
        %v575 = vld [vmem:[#allocation3 + $0x100] sm:$0x8]
        %v576 = vsel %vm405, 0, %v575
        %577 = vst [vmem:[#allocation3 + $0x100] sm:$0x8] %v576
        %v578 = vld [vmem:[#allocation3 + $0x110] sm:$0x8]
        %v579 = vsel %vm405, 0, %v578
        %580 = vst [vmem:[#allocation3 + $0x110] sm:$0x8] %v579
        %v581 = vld [vmem:[#allocation3 + $0xc] sm:$0x1]
        %v582 = vsel %vm392, 0, %v581
        %583 = vst [vmem:[#allocation3 + $0xc] sm:$0x1] %v582
        %v584 = vld [vmem:[#allocation3 + $0x1c] sm:$0x1]
        %v585 = vsel %vm392, 0, %v584
        %586 = vst [vmem:[#allocation3 + $0x1c] sm:$0x1] %v585
        %v587 = vld [vmem:[#allocation3 + $0x2c] sm:$0x1]
        %v588 = vsel %vm392, 0, %v587
        %589 = vst [vmem:[#allocation3 + $0x2c] sm:$0x1] %v588
        %v590 = vld [vmem:[#allocation3 + $0x3c] sm:$0x1]
        %v591 = vsel %vm392, 0, %v590
        %592 = vst [vmem:[#allocation3 + $0x3c] sm:$0x1] %v591
        %v593 = vld [vmem:[#allocation3 + $0x4c] sm:$0x1]
        %v594 = vsel %vm392, 0, %v593
        %595 = vst [vmem:[#allocation3 + $0x4c] sm:$0x1] %v594
        %v596 = vld [vmem:[#allocation3 + $0x5c] sm:$0x1]
        %v597 = vsel %vm392, 0, %v596
        %598 = vst [vmem:[#allocation3 + $0x5c] sm:$0x1] %v597
        %v599 = vld [vmem:[#allocation3 + $0x6c] sm:$0x1]
        %v600 = vsel %vm392, 0, %v599
        %601 = vst [vmem:[#allocation3 + $0x6c] sm:$0x1] %v600
        %v602 = vld [vmem:[#allocation3 + $0x7c] sm:$0x1]
        %v603 = vsel %vm392, 0, %v602
        %604 = vst [vmem:[#allocation3 + $0x7c] sm:$0x1] %v603
        %v605 = vld [vmem:[#allocation3 + $0x8c] sm:$0x1]
        %v606 = vsel %vm392, 0, %v605
        %607 = vst [vmem:[#allocation3 + $0x8c] sm:$0x1] %v606
        %v608 = vld [vmem:[#allocation3 + $0x9c] sm:$0x1]
        %v609 = vsel %vm392, 0, %v608
        %610 = vst [vmem:[#allocation3 + $0x9c] sm:$0x1] %v609
        %v611 = vld [vmem:[#allocation3 + $0xac] sm:$0x1]
        %v612 = vsel %vm392, 0, %v611
        %613 = vst [vmem:[#allocation3 + $0xac] sm:$0x1] %v612
        %v614 = vld [vmem:[#allocation3 + $0xbc] sm:$0x1]
        %v615 = vsel %vm392, 0, %v614
        %616 = vst [vmem:[#allocation3 + $0xbc] sm:$0x1] %v615
        %v617 = vld [vmem:[#allocation3 + $0xcc] sm:$0x1]
        %v618 = vsel %vm392, 0, %v617
        %619 = vst [vmem:[#allocation3 + $0xcc] sm:$0x1] %v618
        %v620 = vld [vmem:[#allocation3 + $0xdc] sm:$0x1]
        %v621 = vsel %vm392, 0, %v620
        %622 = vst [vmem:[#allocation3 + $0xdc] sm:$0x1] %v621
        %v623 = vld [vmem:[#allocation3 + $0xec] sm:$0x1]
        %v624 = vsel %vm392, 0, %v623
        %625 = vst [vmem:[#allocation3 + $0xec] sm:$0x1] %v624
        %v626 = vld [vmem:[#allocation3 + $0xfc] sm:$0x1]
        %v627 = vsel %vm392, 0, %v626
        %628 = vst [vmem:[#allocation3 + $0xfc] sm:$0x1] %v627
        %v629 = vld [vmem:[#allocation3 + $0x10c] sm:$0x1]
        %v630 = vsel %vm392, 0, %v629
        %631 = vst [vmem:[#allocation3 + $0x10c] sm:$0x1] %v630
        %v632 = vld [vmem:[#allocation3 + $0x11c] sm:$0x1]
        %v633 = vsel %vm392, 0, %v632
        %634 = vst [vmem:[#allocation3 + $0x11c] sm:$0x1] %v633
        %v635 = vld [vmem:[%s384] sm:$0xff]
        %v636 = vld [vmem:[%s384 + $0x8] sm:$0xff]
        %v637 = vld [vmem:[%s384 + $0x10] sm:$0xff]
        %v638 = vld [vmem:[%s384 + $0x18] sm:$0xff]
        %v639 = vld [vmem:[%s384 + $0x20] sm:$0xff]
        %v640 = vld [vmem:[%s384 + $0x28] sm:$0xff]
        %v641 = vld [vmem:[%s384 + $0x30] sm:$0xff]
        %v642 = vld [vmem:[%s384 + $0x38] sm:$0xff]
        %v643 = vld [vmem:[%s384 + $0x40] sm:$0xff]
        %v644 = vld [vmem:[%s384 + $0x48] sm:$0xff]
        %v645 = vld [vmem:[%s384 + $0x50] sm:$0xff]
        %v646 = vld [vmem:[%s384 + $0x58] sm:$0xff]
        %v647 = vld [vmem:[%s384 + $0x60] sm:$0xff]
        %v648 = vld [vmem:[%s384 + $0x68] sm:$0xff]
        %v649 = vld [vmem:[%s384 + $0x70] sm:$0xff]
        %v650 = vld [vmem:[%s384 + $0x78] sm:$0xff]
        %v651 = vld [vmem:[%s384 + $0x80] sm:$0xff]
        %v652 = vld [vmem:[%s384 + $0x88] sm:$0xff]
        %v653 = vld [vmem:[%s384 + $0x90] sm:$0xff]
        %v654 = vld [vmem:[%s384 + $0x98] sm:$0xff]
        %v655 = vld [vmem:[%s384 + $0xa0] sm:$0xff]
        %v656 = vld [vmem:[%s384 + $0xa8] sm:$0xff]
        %v657 = vld [vmem:[%s384 + $0xb0] sm:$0xff]
        %v658 = vld [vmem:[%s384 + $0xb8] sm:$0xff]
        %v659 = vld [vmem:[%s384 + $0xc0] sm:$0xff]
        %v660 = vld [vmem:[%s384 + $0xc8] sm:$0xff]
        %v661 = vld [vmem:[%s384 + $0xd0] sm:$0xff]
        %v662 = vld [vmem:[%s384 + $0xd8] sm:$0xff]
        %v663 = vld [vmem:[%s384 + $0xe0] sm:$0xff]
        %v664 = vld [vmem:[%s384 + $0xe8] sm:$0xff]
        %v665 = vld [vmem:[%s384 + $0xf0] sm:$0xff]
        %v666 = vld [vmem:[%s384 + $0xf8] sm:$0xff]
        %v667 = vpack.c.bf16 %v636, %v635
        %v668 = vpack.c.bf16 %v638, %v637
        %v669 = vpack.c.bf16 %v640, %v639
        %v670 = vpack.c.bf16 %v642, %v641
        %v671 = vpack.c.bf16 %v644, %v643
        %v672 = vpack.c.bf16 %v646, %v645
        %v673 = vpack.c.bf16 %v648, %v647
        %v674 = vpack.c.bf16 %v650, %v649
        %v675 = vpack.c.bf16 %v652, %v651
        %v676 = vpack.c.bf16 %v654, %v653
        %v677 = vpack.c.bf16 %v656, %v655
        %v678 = vpack.c.bf16 %v658, %v657
        %v679 = vpack.c.bf16 %v660, %v659
        %v680 = vpack.c.bf16 %v662, %v661
        %v681 = vpack.c.bf16 %v664, %v663
        %v682 = vpack.c.bf16 %v666, %v665
        %v683 = vld [vmem:[%s1] sm:$0xf]
        %v684 = vld [vmem:[%s1 + $0x4] sm:$0xf]
        %v685 = vld [vmem:[%s1 + $0x8] sm:$0xf]
        %v686 = vld [vmem:[%s1 + $0xc] sm:$0xf]
        %v687 = vld [vmem:[%s2] sm:$0x1]
        %v689 = vlaneseq
        %v690 = vshrl.u32 %v689, 7
        %v691 = vsub.s32 0, %v690
        %v692 = vrot.slane %v687, %v691
        %v698 = vunpack.c.l.b16 %v683
        %v699 = vunpack.c.l.b16 %v684
        %v700 = vunpack.c.l.b16 %v685
        %v701 = vunpack.c.l.b16 %v686
        %v702 = vpack.c.b16 %v699, %v698
        %v703 = vpack.c.b16 %v701, %v700
        %vm706 = vcmask 261120
        %v708 = vsel %vm706, %v667, 0
        %v711 = vsel %vm706, %v668, 0
        %v714 = vsel %vm706, %v669, 0
        %v717 = vsel %vm706, %v670, 0
        %v720 = vsel %vm706, %v671, 0
        %v723 = vsel %vm706, %v672, 0
        %v726 = vsel %vm706, %v673, 0
        %v729 = vsel %vm706, %v674, 0
        %v732 = vsel %vm706, %v675, 0
        %v735 = vsel %vm706, %v676, 0
        %v738 = vsel %vm706, %v677, 0
        %v741 = vsel %vm706, %v678, 0
        %v744 = vsel %vm706, %v679, 0
        %v747 = vsel %vm706, %v680, 0
        %v750 = vsel %vm706, %v681, 0
        %v753 = vsel %vm706, %v682, 0
        %755 = vmatprep.subr.bf16.mxu0 0
        %756 = vmatpush1.bf16.msra.mxu0 %v702
        %757 = vmatprep.subr.bf16.mxu0 0
        %758 = vmatpush1.bf16.msra.mxu0 %v703
        %759 = vmatprep.subr.bf16.mxu0 0
        %760 = vmatpush1.bf16.msra.mxu0 0
        %761 = vmatprep.subr.bf16.mxu0 0
        %762 = vmatpush1.bf16.msra.mxu0 0
        %763 = vmatprep.subr.bf16.mxu0 0
        %764 = vmatpush1.bf16.msra.mxu0 0
        %765 = vmatprep.subr.bf16.mxu0 0
        %766 = vmatpush1.bf16.msra.mxu0 0
        %767 = vmatprep.subr.bf16.mxu0 0
        %768 = vmatpush1.bf16.msra.mxu0 0
        %769 = vmatprep.subr.bf16.mxu0 0
        %770 = vmatpush1.bf16.msra.mxu0 0
        %771 = vmatprep.subr.bf16.mxu0 0
        %772 = vmatpush1.bf16.msra.mxu0 0
        %773 = vmatprep.subr.bf16.mxu0 0
        %774 = vmatpush1.bf16.msra.mxu0 0
        %775 = vmatprep.subr.bf16.mxu0 0
        %776 = vmatpush1.bf16.msra.mxu0 0
        %777 = vmatprep.subr.bf16.mxu0 0
        %778 = vmatpush1.bf16.msra.mxu0 0
        %779 = vmatprep.subr.bf16.mxu0 0
        %780 = vmatpush1.bf16.msra.mxu0 0
        %781 = vmatprep.subr.bf16.mxu0 0
        %782 = vmatpush1.bf16.msra.mxu0 0
        %783 = vmatprep.subr.bf16.mxu0 0
        %784 = vmatpush1.bf16.msra.mxu0 0
        %785 = vmatprep.subr.bf16.mxu0 0
        %786 = vmatpush1.bf16.msra.mxu0 0
        %787 = vmatprep.mubr.bf16.mxu0 0
        %788 = vmatmul.mubr.bf16.gmra.mrb[0].mxu0 %v708
        %v789 = vpop.f32.mrb[0].mxu0
        %v790 = vadd.f32 %v692, %v789
        %v791 = vpop.f32.mrb[0].mxu0
        %v792 = vpop.f32.mrb[0].mxu0
        %v793 = vadd.f32 %v692, %v792
        %v794 = vpop.f32.mrb[0].mxu0
        %795 = vmatprep.mubr.bf16.mxu0 0
        %796 = vmatmul.mubr.bf16.gmra.mrb[0].mxu0 %v711
        %v797 = vpop.f32.mrb[0].mxu0
        %v798 = vadd.f32 %v692, %v797
        %v799 = vpop.f32.mrb[0].mxu0
        %v800 = vpop.f32.mrb[0].mxu0
        %v801 = vadd.f32 %v692, %v800
        %v802 = vpop.f32.mrb[0].mxu0
        %803 = vmatprep.mubr.bf16.mxu0 0
        %804 = vmatmul.mubr.bf16.gmra.mrb[0].mxu0 %v714
        %v805 = vpop.f32.mrb[0].mxu0
        %v806 = vadd.f32 %v692, %v805
        %v807 = vpop.f32.mrb[0].mxu0
        %v808 = vpop.f32.mrb[0].mxu0
        %v809 = vadd.f32 %v692, %v808
        %v810 = vpop.f32.mrb[0].mxu0
        %811 = vmatprep.mubr.bf16.mxu0 0
        %812 = vmatmul.mubr.bf16.gmra.mrb[0].mxu0 %v717
        %v813 = vpop.f32.mrb[0].mxu0
        %v814 = vadd.f32 %v692, %v813
        %v815 = vpop.f32.mrb[0].mxu0
        %v816 = vpop.f32.mrb[0].mxu0
        %v817 = vadd.f32 %v692, %v816
        %v818 = vpop.f32.mrb[0].mxu0
        %819 = vmatprep.mubr.bf16.mxu0 0
        %820 = vmatmul.mubr.bf16.gmra.mrb[0].mxu0 %v720
        %v821 = vpop.f32.mrb[0].mxu0
        %v822 = vadd.f32 %v692, %v821
        %v823 = vpop.f32.mrb[0].mxu0
        %v824 = vpop.f32.mrb[0].mxu0
        %v825 = vadd.f32 %v692, %v824
        %v826 = vpop.f32.mrb[0].mxu0
        %827 = vmatprep.mubr.bf16.mxu0 0
        %828 = vmatmul.mubr.bf16.gmra.mrb[0].mxu0 %v723
        %v829 = vpop.f32.mrb[0].mxu0
        %v830 = vadd.f32 %v692, %v829
        %v831 = vpop.f32.mrb[0].mxu0
        %v832 = vpop.f32.mrb[0].mxu0
        %v833 = vadd.f32 %v692, %v832
        %v834 = vpop.f32.mrb[0].mxu0
        %835 = vmatprep.mubr.bf16.mxu0 0
        %836 = vmatmul.mubr.bf16.gmra.mrb[0].mxu0 %v726
        %v837 = vpop.f32.mrb[0].mxu0
        %v838 = vadd.f32 %v692, %v837
        %v839 = vpop.f32.mrb[0].mxu0
        %v840 = vpop.f32.mrb[0].mxu0
        %v841 = vadd.f32 %v692, %v840
        %v842 = vpop.f32.mrb[0].mxu0
        %843 = vmatprep.mubr.bf16.mxu0 0
        %844 = vmatmul.mubr.bf16.gmra.mrb[0].mxu0 %v729
        %v845 = vpop.f32.mrb[0].mxu0
        %v846 = vadd.f32 %v692, %v845
        %v847 = vpop.f32.mrb[0].mxu0
        %v848 = vpop.f32.mrb[0].mxu0
        %v849 = vadd.f32 %v692, %v848
        %v850 = vpop.f32.mrb[0].mxu0
        %851 = vmatprep.mubr.bf16.mxu0 0
        %852 = vmatmul.mubr.bf16.gmra.mrb[0].mxu0 %v732
        %v853 = vpop.f32.mrb[0].mxu0
        %v854 = vadd.f32 %v692, %v853
        %v855 = vpop.f32.mrb[0].mxu0
        %v856 = vpop.f32.mrb[0].mxu0
        %v857 = vadd.f32 %v692, %v856
        %v858 = vpop.f32.mrb[0].mxu0
        %859 = vmatprep.mubr.bf16.mxu0 0
        %860 = vmatmul.mubr.bf16.gmra.mrb[0].mxu0 %v735
        %v861 = vpop.f32.mrb[0].mxu0
        %v862 = vadd.f32 %v692, %v861
        %v863 = vpop.f32.mrb[0].mxu0
        %v864 = vpop.f32.mrb[0].mxu0
        %v865 = vadd.f32 %v692, %v864
        %v866 = vpop.f32.mrb[0].mxu0
        %867 = vmatprep.mubr.bf16.mxu0 0
        %868 = vmatmul.mubr.bf16.gmra.mrb[0].mxu0 %v738
        %v869 = vpop.f32.mrb[0].mxu0
        %v870 = vadd.f32 %v692, %v869
        %v871 = vpop.f32.mrb[0].mxu0
        %v872 = vpop.f32.mrb[0].mxu0
        %v873 = vadd.f32 %v692, %v872
        %v874 = vpop.f32.mrb[0].mxu0
        %875 = vmatprep.mubr.bf16.mxu0 0
        %876 = vmatmul.mubr.bf16.gmra.mrb[0].mxu0 %v741
        %v877 = vpop.f32.mrb[0].mxu0
        %v878 = vadd.f32 %v692, %v877
        %v879 = vpop.f32.mrb[0].mxu0
        %v880 = vpop.f32.mrb[0].mxu0
        %v881 = vadd.f32 %v692, %v880
        %v882 = vpop.f32.mrb[0].mxu0
        %883 = vmatprep.mubr.bf16.mxu0 0
        %884 = vmatmul.mubr.bf16.gmra.mrb[0].mxu0 %v744
        %v885 = vpop.f32.mrb[0].mxu0
        %v886 = vadd.f32 %v692, %v885
        %v887 = vpop.f32.mrb[0].mxu0
        %v888 = vpop.f32.mrb[0].mxu0
        %v889 = vadd.f32 %v692, %v888
        %v890 = vpop.f32.mrb[0].mxu0
        %891 = vmatprep.mubr.bf16.mxu0 0
        %892 = vmatmul.mubr.bf16.gmra.mrb[0].mxu0 %v747
        %v893 = vpop.f32.mrb[0].mxu0
        %v894 = vadd.f32 %v692, %v893
        %v895 = vpop.f32.mrb[0].mxu0
        %v896 = vpop.f32.mrb[0].mxu0
        %v897 = vadd.f32 %v692, %v896
        %v898 = vpop.f32.mrb[0].mxu0
        %899 = vmatprep.mubr.bf16.mxu0 0
        %900 = vmatmul.mubr.bf16.gmra.mrb[0].mxu0 %v750
        %v901 = vpop.f32.mrb[0].mxu0
        %v902 = vadd.f32 %v692, %v901
        %v903 = vpop.f32.mrb[0].mxu0
        %v904 = vpop.f32.mrb[0].mxu0
        %v905 = vadd.f32 %v692, %v904
        %v906 = vpop.f32.mrb[0].mxu0
        %907 = vmatprep.mubr.bf16.mxu0 0
        %908 = vmatmul.mubr.bf16.gmra.mrb[0].mxu0 %v753
        %v909 = vpop.f32.mrb[0].mxu0
        %v910 = vadd.f32 %v692, %v909
        %v911 = vpop.f32.mrb[0].mxu0
        %v912 = vpop.f32.mrb[0].mxu0
        %v913 = vadd.f32 %v692, %v912
        %v914 = vpop.f32.mrb[0].mxu0
        %915 = vdwg.mxu0
        %v916 = vmul.f32 %v790, 0.1
        %v917 = vmul.f32 %v793, 0.1
        %v918 = vmul.f32 %v798, 0.1
        %v919 = vmul.f32 %v801, 0.1
        %v920 = vmul.f32 %v806, 0.1
        %v921 = vmul.f32 %v809, 0.1
        %v922 = vmul.f32 %v814, 0.1
        %v923 = vmul.f32 %v817, 0.1
        %v924 = vmul.f32 %v822, 0.1
        %v925 = vmul.f32 %v825, 0.1
        %v926 = vmul.f32 %v830, 0.1
        %v927 = vmul.f32 %v833, 0.1
        %v928 = vmul.f32 %v838, 0.1
        %v929 = vmul.f32 %v841, 0.1
        %v930 = vmul.f32 %v846, 0.1
        %v931 = vmul.f32 %v849, 0.1
        %v932 = vmul.f32 %v854, 0.1
        %v933 = vmul.f32 %v857, 0.1
        %v934 = vmul.f32 %v862, 0.1
        %v935 = vmul.f32 %v865, 0.1
        %v936 = vmul.f32 %v870, 0.1
        %v937 = vmul.f32 %v873, 0.1
        %v938 = vmul.f32 %v878, 0.1
        %v939 = vmul.f32 %v881, 0.1
        %v940 = vmul.f32 %v886, 0.1
        %v941 = vmul.f32 %v889, 0.1
        %v942 = vmul.f32 %v894, 0.1
        %v943 = vmul.f32 %v897, 0.1
        %v944 = vmul.f32 %v902, 0.1
        %v945 = vmul.f32 %v905, 0.1
        %v946 = vmul.f32 %v910, 0.1
        %v947 = vmul.f32 %v913, 0.1
        %v948 = vmax.f32 %v790, %v916
        %v949 = vmax.f32 %v793, %v917
        %v950 = vmax.f32 %v798, %v918
        %v951 = vmax.f32 %v801, %v919
        %v952 = vmax.f32 %v806, %v920
        %v953 = vmax.f32 %v809, %v921
        %v954 = vmax.f32 %v814, %v922
        %v955 = vmax.f32 %v817, %v923
        %v956 = vmax.f32 %v822, %v924
        %v957 = vmax.f32 %v825, %v925
        %v958 = vmax.f32 %v830, %v926
        %v959 = vmax.f32 %v833, %v927
        %v960 = vmax.f32 %v838, %v928
        %v961 = vmax.f32 %v841, %v929
        %v962 = vmax.f32 %v846, %v930
        %v963 = vmax.f32 %v849, %v931
        %v964 = vmax.f32 %v854, %v932
        %v965 = vmax.f32 %v857, %v933
        %v966 = vmax.f32 %v862, %v934
        %v967 = vmax.f32 %v865, %v935
        %v968 = vmax.f32 %v870, %v936
        %v969 = vmax.f32 %v873, %v937
        %v970 = vmax.f32 %v878, %v938
        %v971 = vmax.f32 %v881, %v939
        %v972 = vmax.f32 %v886, %v940
        %v973 = vmax.f32 %v889, %v941
        %v974 = vmax.f32 %v894, %v942
        %v975 = vmax.f32 %v897, %v943
        %v976 = vmax.f32 %v902, %v944
        %v977 = vmax.f32 %v905, %v945
        %v978 = vmax.f32 %v910, %v946
        %v979 = vmax.f32 %v913, %v947
        %v980 = vpack.c.bf16 %v949, %v948
        %v981 = vpack.c.bf16 %v951, %v950
        %v982 = vpack.c.bf16 %v953, %v952
        %v983 = vpack.c.bf16 %v955, %v954
        %v984 = vpack.c.bf16 %v957, %v956
        %v985 = vpack.c.bf16 %v959, %v958
        %v986 = vpack.c.bf16 %v961, %v960
        %v987 = vpack.c.bf16 %v963, %v962
        %v988 = vpack.c.bf16 %v965, %v964
        %v989 = vpack.c.bf16 %v967, %v966
        %v990 = vpack.c.bf16 %v969, %v968
        %v991 = vpack.c.bf16 %v971, %v970
        %v992 = vpack.c.bf16 %v973, %v972
        %v993 = vpack.c.bf16 %v975, %v974
        %v994 = vpack.c.bf16 %v977, %v976
        %v995 = vpack.c.bf16 %v979, %v978
        %v1012 = vunpack.c.l.b16 %v980
        %v1013 = vunpack.c.h.b16 %v980
        %v1014 = vunpack.c.l.b16 %v981
        %v1015 = vunpack.c.h.b16 %v981
        %v1016 = vunpack.c.l.b16 %v982
        %v1017 = vunpack.c.h.b16 %v982
        %v1018 = vunpack.c.l.b16 %v983
        %v1019 = vunpack.c.h.b16 %v983
        %v1020 = vunpack.c.l.b16 %v984
        %v1021 = vunpack.c.h.b16 %v984
        %v1022 = vunpack.c.l.b16 %v985
        %v1023 = vunpack.c.h.b16 %v985
        %v1024 = vunpack.c.l.b16 %v986
        %v1025 = vunpack.c.h.b16 %v986
        %v1026 = vunpack.c.l.b16 %v987
        %v1027 = vunpack.c.h.b16 %v987
        %v1028 = vunpack.c.l.b16 %v988
        %v1029 = vunpack.c.h.b16 %v988
        %v1030 = vunpack.c.l.b16 %v989
        %v1031 = vunpack.c.h.b16 %v989
        %v1032 = vunpack.c.l.b16 %v990
        %v1033 = vunpack.c.h.b16 %v990
        %v1034 = vunpack.c.l.b16 %v991
        %v1035 = vunpack.c.h.b16 %v991
        %v1036 = vunpack.c.l.b16 %v992
        %v1037 = vunpack.c.h.b16 %v992
        %v1038 = vunpack.c.l.b16 %v993
        %v1039 = vunpack.c.h.b16 %v993
        %v1040 = vunpack.c.l.b16 %v994
        %v1041 = vunpack.c.h.b16 %v994
        %v1042 = vunpack.c.l.b16 %v995
        %v1043 = vunpack.c.h.b16 %v995
        %v1044 = vpack.c.b16 %v1012, %v1012
        %v1045 = vpack.c.b16 %v1013, %v1013
        %v1046 = vpack.c.b16 %v1014, %v1014
        %v1047 = vpack.c.b16 %v1015, %v1015
        %v1048 = vpack.c.b16 %v1016, %v1016
        %v1049 = vpack.c.b16 %v1017, %v1017
        %v1050 = vpack.c.b16 %v1018, %v1018
        %v1051 = vpack.c.b16 %v1019, %v1019
        %v1052 = vpack.c.b16 %v1020, %v1020
        %v1053 = vpack.c.b16 %v1021, %v1021
        %v1054 = vpack.c.b16 %v1022, %v1022
        %v1055 = vpack.c.b16 %v1023, %v1023
        %v1056 = vpack.c.b16 %v1024, %v1024
        %v1057 = vpack.c.b16 %v1025, %v1025
        %v1058 = vpack.c.b16 %v1026, %v1026
        %v1059 = vpack.c.b16 %v1027, %v1027
        %v1060 = vpack.c.b16 %v1028, %v1028
        %v1061 = vpack.c.b16 %v1029, %v1029
        %v1062 = vpack.c.b16 %v1030, %v1030
        %v1063 = vpack.c.b16 %v1031, %v1031
        %v1064 = vpack.c.b16 %v1032, %v1032
        %v1065 = vpack.c.b16 %v1033, %v1033
        %v1066 = vpack.c.b16 %v1034, %v1034
        %v1067 = vpack.c.b16 %v1035, %v1035
        %v1068 = vpack.c.b16 %v1036, %v1036
        %v1069 = vpack.c.b16 %v1037, %v1037
        %v1070 = vpack.c.b16 %v1038, %v1038
        %v1071 = vpack.c.b16 %v1039, %v1039
        %v1072 = vpack.c.b16 %v1040, %v1040
        %v1073 = vpack.c.b16 %v1041, %v1041
        %v1074 = vpack.c.b16 %v1042, %v1042
        %v1075 = vpack.c.b16 %v1043, %v1043
        %s1108 = scalar_lea.vmem [#allocation2], 16
        %1109 = vst.msk [vmem:[%s1108 + $0x4] sm:$0xf] %vm386, %v1044
        %1110 = vst.msk [vmem:[%s1108 + $0x8] sm:$0xf] %vm386, %v1045
        %1111 = vst.msk [vmem:[%s1108 + $0x14] sm:$0xf] %vm386, %v1046
        %1112 = vst.msk [vmem:[%s1108 + $0x18] sm:$0xf] %vm386, %v1047
        %1113 = vst.msk [vmem:[%s1108 + $0x24] sm:$0xf] %vm386, %v1048
        %1114 = vst.msk [vmem:[%s1108 + $0x28] sm:$0xf] %vm386, %v1049
        %1115 = vst.msk [vmem:[%s1108 + $0x34] sm:$0xf] %vm386, %v1050
        %1116 = vst.msk [vmem:[%s1108 + $0x38] sm:$0xf] %vm386, %v1051
        %1117 = vst.msk [vmem:[%s1108 + $0x44] sm:$0xf] %vm386, %v1052
        %1118 = vst.msk [vmem:[%s1108 + $0x48] sm:$0xf] %vm386, %v1053
        %1119 = vst.msk [vmem:[%s1108 + $0x54] sm:$0xf] %vm386, %v1054
        %1120 = vst.msk [vmem:[%s1108 + $0x58] sm:$0xf] %vm386, %v1055
        %1121 = vst.msk [vmem:[%s1108 + $0x64] sm:$0xf] %vm386, %v1056
        %1122 = vst.msk [vmem:[%s1108 + $0x68] sm:$0xf] %vm386, %v1057
        %1123 = vst.msk [vmem:[%s1108 + $0x74] sm:$0xf] %vm386, %v1058
        %1124 = vst.msk [vmem:[%s1108 + $0x78] sm:$0xf] %vm386, %v1059
        %1125 = vst.msk [vmem:[%s1108 + $0x84] sm:$0xf] %vm386, %v1060
        %1126 = vst.msk [vmem:[%s1108 + $0x88] sm:$0xf] %vm386, %v1061
        %1127 = vst.msk [vmem:[%s1108 + $0x94] sm:$0xf] %vm386, %v1062
        %1128 = vst.msk [vmem:[%s1108 + $0x98] sm:$0xf] %vm386, %v1063
        %1129 = vst.msk [vmem:[%s1108 + $0xa4] sm:$0xf] %vm386, %v1064
        %1130 = vst.msk [vmem:[%s1108 + $0xa8] sm:$0xf] %vm386, %v1065
        %1131 = vst.msk [vmem:[%s1108 + $0xb4] sm:$0xf] %vm386, %v1066
        %1132 = vst.msk [vmem:[%s1108 + $0xb8] sm:$0xf] %vm386, %v1067
        %1133 = vst.msk [vmem:[%s1108 + $0xc4] sm:$0xf] %vm386, %v1068
        %1134 = vst.msk [vmem:[%s1108 + $0xc8] sm:$0xf] %vm386, %v1069
        %1135 = vst.msk [vmem:[%s1108 + $0xd4] sm:$0xf] %vm386, %v1070
        %1136 = vst.msk [vmem:[%s1108 + $0xd8] sm:$0xf] %vm386, %v1071
        %1137 = vst.msk [vmem:[%s1108 + $0xe4] sm:$0xf] %vm386, %v1072
        %1138 = vst.msk [vmem:[%s1108 + $0xe8] sm:$0xf] %vm386, %v1073
        %1139 = vst.msk [vmem:[%s1108 + $0xf4] sm:$0xf] %vm386, %v1074
        %1140 = vst.msk [vmem:[%s1108 + $0xf8] sm:$0xf] %vm386, %v1075
        loop: start=0, step=1, limit=2
        $region65: #{topdown_layer.1} parent=63 // loop_pre_header
          _
        $region66: #{topdown_layer.1} parent=63 // loop_header
          %s1142 = sphi 0, %s1146
          %p1143 = scmp.ge.s32.totalorder %s1142, 2
        $region67: #{topdown_layer.1} parent=63 // loop_header_branch
          %1145 = sbr.rel (%p1143) target = $region71
        $region68: #{topdown_layer.1} parent=63 // loop_body
          %s1147 = smul.u32 %s1142, 8
          %s1148 = smul.u32 %s1147, 4
          %s1149 = smul.addr %s1148, 4
          %s1150 = scalar_lea.vmem [#allocation2], %s1149
          %v1151 = vld [vmem:[%s1150] sm:$0x8]
          %v1152 = vld [vmem:[%s1150 + $0x4] sm:$0xf]
          %v1153 = vld [vmem:[%s1150 + $0x8] sm:$0xf]
          %v1154 = vld [vmem:[%s1150 + $0x10] sm:$0x8]
          %v1155 = vld [vmem:[%s1150 + $0x14] sm:$0xf]
          %v1156 = vld [vmem:[%s1150 + $0x18] sm:$0xf]
          %v1157 = vld [vmem:[%s1150 + $0x20] sm:$0x8]
          %v1158 = vld [vmem:[%s1150 + $0x24] sm:$0xf]
          %v1159 = vld [vmem:[%s1150 + $0x28] sm:$0xf]
          %v1160 = vld [vmem:[%s1150 + $0x30] sm:$0x8]
          %v1161 = vld [vmem:[%s1150 + $0x34] sm:$0xf]
          %v1162 = vld [vmem:[%s1150 + $0x38] sm:$0xf]
          %v1163 = vld [vmem:[%s1150 + $0x40] sm:$0x8]
          %v1164 = vld [vmem:[%s1150 + $0x44] sm:$0xf]
          %v1165 = vld [vmem:[%s1150 + $0x48] sm:$0xf]
          %v1166 = vld [vmem:[%s1150 + $0x50] sm:$0x8]
          %v1167 = vld [vmem:[%s1150 + $0x54] sm:$0xf]
          %v1168 = vld [vmem:[%s1150 + $0x58] sm:$0xf]
          %v1169 = vld [vmem:[%s1150 + $0x60] sm:$0x8]
          %v1170 = vld [vmem:[%s1150 + $0x64] sm:$0xf]
          %v1171 = vld [vmem:[%s1150 + $0x68] sm:$0xf]
          %v1172 = vld [vmem:[%s1150 + $0x70] sm:$0x8]
          %v1173 = vld [vmem:[%s1150 + $0x74] sm:$0xf]
          %v1174 = vld [vmem:[%s1150 + $0x78] sm:$0xf]
          %vm1175 = vsmask.f32 4368
          %vm1176 = vmor %vm391, %vm1175
          %v1178 = vshrl.u32 %v1151, 16
          %v1180 = vrot.slane %v1178, 7
          %v1181 = vrot.slane %v1180, 4
          %v1183 = vshrl.u32 %v1152, 16
          %v1185 = vrot.slane %v1183, 7
          %v1186 = vshll.u32 %v1152, 16
          %v1188 = vor.u32 %v1185, %v1186
          %v1189 = vsel %vm1176, %v1181, %v1188
          %v1190 = vrot.slane %v1185, 4
          %v1192 = vshrl.u32 %v1153, 16
          %v1194 = vrot.slane %v1192, 7
          %v1195 = vshll.u32 %v1153, 16
          %v1197 = vor.u32 %v1194, %v1195
          %v1198 = vsel %vm1176, %v1190, %v1197
          %v1200 = vshrl.u32 %v1154, 16
          %v1202 = vrot.slane %v1200, 7
          %v1203 = vrot.slane %v1202, 4
          %v1205 = vshrl.u32 %v1155, 16
          %v1207 = vrot.slane %v1205, 7
          %v1208 = vshll.u32 %v1155, 16
          %v1210 = vor.u32 %v1207, %v1208
          %v1211 = vsel %vm1176, %v1203, %v1210
          %v1212 = vrot.slane %v1207, 4
          %v1214 = vshrl.u32 %v1156, 16
          %v1216 = vrot.slane %v1214, 7
          %v1217 = vshll.u32 %v1156, 16
          %v1219 = vor.u32 %v1216, %v1217
          %v1220 = vsel %vm1176, %v1212, %v1219
          %v1222 = vshrl.u32 %v1157, 16
          %v1224 = vrot.slane %v1222, 7
          %v1225 = vrot.slane %v1224, 4
          %v1227 = vshrl.u32 %v1158, 16
          %v1229 = vrot.slane %v1227, 7
          %v1230 = vshll.u32 %v1158, 16
          %v1232 = vor.u32 %v1229, %v1230
          %v1233 = vsel %vm1176, %v1225, %v1232
          %v1234 = vrot.slane %v1229, 4
          %v1236 = vshrl.u32 %v1159, 16
          %v1238 = vrot.slane %v1236, 7
          %v1239 = vshll.u32 %v1159, 16
          %v1241 = vor.u32 %v1238, %v1239
          %v1242 = vsel %vm1176, %v1234, %v1241
          %v1244 = vshrl.u32 %v1160, 16
          %v1246 = vrot.slane %v1244, 7
          %v1247 = vrot.slane %v1246, 4
          %v1249 = vshrl.u32 %v1161, 16
          %v1251 = vrot.slane %v1249, 7
          %v1252 = vshll.u32 %v1161, 16
          %v1254 = vor.u32 %v1251, %v1252
          %v1255 = vsel %vm1176, %v1247, %v1254
          %v1256 = vrot.slane %v1251, 4
          %v1258 = vshrl.u32 %v1162, 16
          %v1260 = vrot.slane %v1258, 7
          %v1261 = vshll.u32 %v1162, 16
          %v1263 = vor.u32 %v1260, %v1261
          %v1264 = vsel %vm1176, %v1256, %v1263
          %v1266 = vshrl.u32 %v1163, 16
          %v1268 = vrot.slane %v1266, 7
          %v1269 = vrot.slane %v1268, 4
          %v1271 = vshrl.u32 %v1164, 16
          %v1273 = vrot.slane %v1271, 7
          %v1274 = vshll.u32 %v1164, 16
          %v1276 = vor.u32 %v1273, %v1274
          %v1277 = vsel %vm1176, %v1269, %v1276
          %v1278 = vrot.slane %v1273, 4
          %v1280 = vshrl.u32 %v1165, 16
          %v1282 = vrot.slane %v1280, 7
          %v1283 = vshll.u32 %v1165, 16
          %v1285 = vor.u32 %v1282, %v1283
          %v1286 = vsel %vm1176, %v1278, %v1285
          %v1288 = vshrl.u32 %v1166, 16
          %v1290 = vrot.slane %v1288, 7
          %v1291 = vrot.slane %v1290, 4
          %v1293 = vshrl.u32 %v1167, 16
          %v1295 = vrot.slane %v1293, 7
          %v1296 = vshll.u32 %v1167, 16
          %v1298 = vor.u32 %v1295, %v1296
          %v1299 = vsel %vm1176, %v1291, %v1298
          %v1300 = vrot.slane %v1295, 4
          %v1302 = vshrl.u32 %v1168, 16
          %v1304 = vrot.slane %v1302, 7
          %v1305 = vshll.u32 %v1168, 16
          %v1307 = vor.u32 %v1304, %v1305
          %v1308 = vsel %vm1176, %v1300, %v1307
          %v1310 = vshrl.u32 %v1169, 16
          %v1312 = vrot.slane %v1310, 7
          %v1313 = vrot.slane %v1312, 4
          %v1315 = vshrl.u32 %v1170, 16
          %v1317 = vrot.slane %v1315, 7
          %v1318 = vshll.u32 %v1170, 16
          %v1320 = vor.u32 %v1317, %v1318
          %v1321 = vsel %vm1176, %v1313, %v1320
          %v1322 = vrot.slane %v1317, 4
          %v1324 = vshrl.u32 %v1171, 16
          %v1326 = vrot.slane %v1324, 7
          %v1327 = vshll.u32 %v1171, 16
          %v1329 = vor.u32 %v1326, %v1327
          %v1330 = vsel %vm1176, %v1322, %v1329
          %v1332 = vshrl.u32 %v1172, 16
          %v1334 = vrot.slane %v1332, 7
          %v1335 = vrot.slane %v1334, 4
          %v1337 = vshrl.u32 %v1173, 16
          %v1339 = vrot.slane %v1337, 7
          %v1340 = vshll.u32 %v1173, 16
          %v1342 = vor.u32 %v1339, %v1340
          %v1343 = vsel %vm1176, %v1335, %v1342
          %v1344 = vrot.slane %v1339, 4
          %v1346 = vshrl.u32 %v1174, 16
          %v1348 = vrot.slane %v1346, 7
          %v1349 = vshll.u32 %v1174, 16
          %v1351 = vor.u32 %v1348, %v1349
          %v1352 = vsel %vm1176, %v1344, %v1351
          %v1353 = vld [vmem:[%s3] sm:$0xf]
          %v1354 = vld [vmem:[%s3 + $0x4] sm:$0xf]
          %v1355 = vld [vmem:[%s3 + $0x8] sm:$0xf]
          %v1356 = vld [vmem:[%s3 + $0xc] sm:$0xf]
          %v1357 = vld [vmem:[%s3 + $0x10] sm:$0xf]
          %v1358 = vld [vmem:[%s3 + $0x14] sm:$0xf]
          %v1359 = vld [vmem:[%s3 + $0x18] sm:$0xf]
          %v1360 = vld [vmem:[%s3 + $0x1c] sm:$0xf]
          %s1361 = scalar_lea.vmem %s3, 32
          %v1362 = vld [vmem:[%s1361] sm:$0xf]
          %v1363 = vld [vmem:[%s1361 + $0x4] sm:$0xf]
          %v1364 = vld [vmem:[%s1361 + $0x8] sm:$0xf]
          %v1365 = vld [vmem:[%s1361 + $0xc] sm:$0xf]
          %v1366 = vld [vmem:[%s1361 + $0x10] sm:$0xf]
          %v1367 = vld [vmem:[%s1361 + $0x14] sm:$0xf]
          %v1368 = vld [vmem:[%s1361 + $0x18] sm:$0xf]
          %v1369 = vld [vmem:[%s1361 + $0x1c] sm:$0xf]
          %v1386 = vunpack.c.l.b16 %v1152
          %v1387 = vunpack.c.l.b16 %v1153
          %v1388 = vunpack.c.l.b16 %v1155
          %v1389 = vunpack.c.l.b16 %v1156
          %v1390 = vunpack.c.l.b16 %v1158
          %v1391 = vunpack.c.l.b16 %v1159
          %v1392 = vunpack.c.l.b16 %v1161
          %v1393 = vunpack.c.l.b16 %v1162
          %v1394 = vunpack.c.l.b16 %v1164
          %v1395 = vunpack.c.l.b16 %v1165
          %v1396 = vunpack.c.l.b16 %v1167
          %v1397 = vunpack.c.l.b16 %v1168
          %v1398 = vunpack.c.l.b16 %v1170
          %v1399 = vunpack.c.l.b16 %v1171
          %v1400 = vunpack.c.l.b16 %v1173
          %v1401 = vunpack.c.l.b16 %v1174
          %v1402 = vpack.c.b16 %v1387, %v1386
          %v1403 = vpack.c.b16 %v1389, %v1388
          %v1404 = vpack.c.b16 %v1391, %v1390
          %v1405 = vpack.c.b16 %v1393, %v1392
          %v1406 = vpack.c.b16 %v1395, %v1394
          %v1407 = vpack.c.b16 %v1397, %v1396
          %v1408 = vpack.c.b16 %v1399, %v1398
          %v1409 = vpack.c.b16 %v1401, %v1400
          %v1418 = vunpack.c.l.b16 %v1362
          %v1419 = vunpack.c.l.b16 %v1363
          %v1420 = vunpack.c.l.b16 %v1364
          %v1421 = vunpack.c.l.b16 %v1365
          %v1422 = vunpack.c.l.b16 %v1366
          %v1423 = vunpack.c.l.b16 %v1367
          %v1424 = vunpack.c.l.b16 %v1368
          %v1425 = vunpack.c.l.b16 %v1369
          %v1426 = vpack.c.b16 %v1419, %v1418
          %v1427 = vpack.c.b16 %v1421, %v1420
          %v1428 = vpack.c.b16 %v1423, %v1422
          %v1429 = vpack.c.b16 %v1425, %v1424
          %vm1434 = vcmask 523264
          %v1436 = vsel %vm1434, %v1402, 0
          %v1439 = vsel %vm1434, %v1403, 0
          %v1442 = vsel %vm1434, %v1404, 0
          %v1445 = vsel %vm1434, %v1405, 0
          %v1448 = vsel %vm1434, %v1406, 0
          %v1451 = vsel %vm1434, %v1407, 0
          %v1454 = vsel %vm1434, %v1408, 0
          %v1457 = vsel %vm1434, %v1409, 0
          %1459 = vmatprep.subr.bf16.mxu0 0
          %1460 = vmatpush1.bf16.msra.mxu0 %v1426
          %1461 = vmatprep.subr.bf16.mxu0 0
          %1462 = vmatpush1.bf16.msra.mxu0 %v1427
          %1463 = vmatprep.subr.bf16.mxu0 0
          %1464 = vmatpush1.bf16.msra.mxu0 %v1428
          %1465 = vmatprep.subr.bf16.mxu0 0
          %1466 = vmatpush1.bf16.msra.mxu0 %v1429
          %1467 = vmatprep.subr.bf16.mxu0 0
          %1468 = vmatpush1.bf16.msra.mxu0 0
          %1469 = vmatprep.subr.bf16.mxu0 0
          %1470 = vmatpush1.bf16.msra.mxu0 0
          %1471 = vmatprep.subr.bf16.mxu0 0
          %1472 = vmatpush1.bf16.msra.mxu0 0
          %1473 = vmatprep.subr.bf16.mxu0 0
          %1474 = vmatpush1.bf16.msra.mxu0 0
          %1475 = vmatprep.subr.bf16.mxu0 0
          %1476 = vmatpush1.bf16.msra.mxu0 0
          %1477 = vmatprep.subr.bf16.mxu0 0
          %1478 = vmatpush1.bf16.msra.mxu0 0
          %1479 = vmatprep.subr.bf16.mxu0 0
          %1480 = vmatpush1.bf16.msra.mxu0 0
          %1481 = vmatprep.subr.bf16.mxu0 0
          %1482 = vmatpush1.bf16.msra.mxu0 0
          %1483 = vmatprep.subr.bf16.mxu0 0
          %1484 = vmatpush1.bf16.msra.mxu0 0
          %1485 = vmatprep.subr.bf16.mxu0 0
          %1486 = vmatpush1.bf16.msra.mxu0 0
          %1487 = vmatprep.subr.bf16.mxu0 0
          %1488 = vmatpush1.bf16.msra.mxu0 0
          %1489 = vmatprep.subr.bf16.mxu0 0
          %1490 = vmatpush1.bf16.msra.mxu0 0
          %1491 = vmatprep.mubr.bf16.mxu0 0
          %1492 = vmatmul.mubr.bf16.gmra.mrb[0].mxu0 %v1436
          %v1493 = vpop.f32.mrb[0].mxu0
          %v1494 = vadd.f32 0.0, %v1493
          %v1495 = vpop.f32.mrb[0].mxu0
          %v1496 = vpop.f32.mrb[0].mxu0
          %v1497 = vadd.f32 0.0, %v1496
          %v1498 = vpop.f32.mrb[0].mxu0
          %1499 = vmatprep.mubr.bf16.mxu0 0
          %1500 = vmatmul.mubr.bf16.gmra.mrb[0].mxu0 %v1439
          %v1501 = vpop.f32.mrb[0].mxu0
          %v1502 = vadd.f32 0.0, %v1501
          %v1503 = vpop.f32.mrb[0].mxu0
          %v1504 = vpop.f32.mrb[0].mxu0
          %v1505 = vadd.f32 0.0, %v1504
          %v1506 = vpop.f32.mrb[0].mxu0
          %1507 = vmatprep.mubr.bf16.mxu0 0
          %1508 = vmatmul.mubr.bf16.gmra.mrb[0].mxu0 %v1442
          %v1509 = vpop.f32.mrb[0].mxu0
          %v1510 = vadd.f32 0.0, %v1509
          %v1511 = vpop.f32.mrb[0].mxu0
          %v1512 = vpop.f32.mrb[0].mxu0
          %v1513 = vadd.f32 0.0, %v1512
          %v1514 = vpop.f32.mrb[0].mxu0
          %1515 = vmatprep.mubr.bf16.mxu0 0
          %1516 = vmatmul.mubr.bf16.gmra.mrb[0].mxu0 %v1445
          %v1517 = vpop.f32.mrb[0].mxu0
          %v1518 = vadd.f32 0.0, %v1517
          %v1519 = vpop.f32.mrb[0].mxu0
          %v1520 = vpop.f32.mrb[0].mxu0
          %v1521 = vadd.f32 0.0, %v1520
          %v1522 = vpop.f32.mrb[0].mxu0
          %1523 = vmatprep.mubr.bf16.mxu0 0
          %1524 = vmatmul.mubr.bf16.gmra.mrb[0].mxu0 %v1448
          %v1525 = vpop.f32.mrb[0].mxu0
          %v1526 = vadd.f32 0.0, %v1525
          %v1527 = vpop.f32.mrb[0].mxu0
          %v1528 = vpop.f32.mrb[0].mxu0
          %v1529 = vadd.f32 0.0, %v1528
          %v1530 = vpop.f32.mrb[0].mxu0
          %1531 = vmatprep.mubr.bf16.mxu0 0
          %1532 = vmatmul.mubr.bf16.gmra.mrb[0].mxu0 %v1451
          %v1533 = vpop.f32.mrb[0].mxu0
          %v1534 = vadd.f32 0.0, %v1533
          %v1535 = vpop.f32.mrb[0].mxu0
          %v1536 = vpop.f32.mrb[0].mxu0
          %v1537 = vadd.f32 0.0, %v1536
          %v1538 = vpop.f32.mrb[0].mxu0
          %1539 = vmatprep.mubr.bf16.mxu0 0
          %1540 = vmatmul.mubr.bf16.gmra.mrb[0].mxu0 %v1454
          %v1541 = vpop.f32.mrb[0].mxu0
          %v1542 = vadd.f32 0.0, %v1541
          %v1543 = vpop.f32.mrb[0].mxu0
          %v1544 = vpop.f32.mrb[0].mxu0
          %v1545 = vadd.f32 0.0, %v1544
          %v1546 = vpop.f32.mrb[0].mxu0
          %1547 = vmatprep.mubr.bf16.mxu0 0
          %1548 = vmatmul.mubr.bf16.gmra.mrb[0].mxu0 %v1457
          %v1549 = vpop.f32.mrb[0].mxu0
          %v1550 = vadd.f32 0.0, %v1549
          %v1551 = vpop.f32.mrb[0].mxu0
          %v1552 = vpop.f32.mrb[0].mxu0
          %v1553 = vadd.f32 0.0, %v1552
          %v1554 = vpop.f32.mrb[0].mxu0
          %1555 = vdwg.mxu0
          %v1556 = vunpack.c.l.b16 %v1189
          %v1557 = vunpack.c.l.b16 %v1198
          %v1558 = vunpack.c.l.b16 %v1211
          %v1559 = vunpack.c.l.b16 %v1220
          %v1560 = vunpack.c.l.b16 %v1233
          %v1561 = vunpack.c.l.b16 %v1242
          %v1562 = vunpack.c.l.b16 %v1255
          %v1563 = vunpack.c.l.b16 %v1264
          %v1564 = vunpack.c.l.b16 %v1277
          %v1565 = vunpack.c.l.b16 %v1286
          %v1566 = vunpack.c.l.b16 %v1299
          %v1567 = vunpack.c.l.b16 %v1308
          %v1568 = vunpack.c.l.b16 %v1321
          %v1569 = vunpack.c.l.b16 %v1330
          %v1570 = vunpack.c.l.b16 %v1343
          %v1571 = vunpack.c.l.b16 %v1352
          %v1572 = vpack.c.b16 %v1557, %v1556
          %v1573 = vpack.c.b16 %v1559, %v1558
          %v1574 = vpack.c.b16 %v1561, %v1560
          %v1575 = vpack.c.b16 %v1563, %v1562
          %v1576 = vpack.c.b16 %v1565, %v1564
          %v1577 = vpack.c.b16 %v1567, %v1566
          %v1578 = vpack.c.b16 %v1569, %v1568
          %v1579 = vpack.c.b16 %v1571, %v1570
          %v1588 = vunpack.c.l.b16 %v1353
          %v1589 = vunpack.c.l.b16 %v1354
          %v1590 = vunpack.c.l.b16 %v1355
          %v1591 = vunpack.c.l.b16 %v1356
          %v1592 = vunpack.c.l.b16 %v1357
          %v1593 = vunpack.c.l.b16 %v1358
          %v1594 = vunpack.c.l.b16 %v1359
          %v1595 = vunpack.c.l.b16 %v1360
          %v1596 = vpack.c.b16 %v1589, %v1588
          %v1597 = vpack.c.b16 %v1591, %v1590
          %v1598 = vpack.c.b16 %v1593, %v1592
          %v1599 = vpack.c.b16 %v1595, %v1594
          %v1605 = vsel %vm1434, %v1572, 0
          %v1608 = vsel %vm1434, %v1573, 0
          %v1611 = vsel %vm1434, %v1574, 0
          %v1614 = vsel %vm1434, %v1575, 0
          %v1617 = vsel %vm1434, %v1576, 0
          %v1620 = vsel %vm1434, %v1577, 0
          %v1623 = vsel %vm1434, %v1578, 0
          %v1626 = vsel %vm1434, %v1579, 0
          %1628 = vmatprep.subr.bf16.mxu0 0
          %1629 = vmatpush1.bf16.msra.mxu0 %v1596
          %1630 = vmatprep.subr.bf16.mxu0 0
          %1631 = vmatpush1.bf16.msra.mxu0 %v1597
          %1632 = vmatprep.subr.bf16.mxu0 0
          %1633 = vmatpush1.bf16.msra.mxu0 %v1598
          %1634 = vmatprep.subr.bf16.mxu0 0
          %1635 = vmatpush1.bf16.msra.mxu0 %v1599
          %1636 = vmatprep.subr.bf16.mxu0 0
          %1637 = vmatpush1.bf16.msra.mxu0 0
          %1638 = vmatprep.subr.bf16.mxu0 0
          %1639 = vmatpush1.bf16.msra.mxu0 0
          %1640 = vmatprep.subr.bf16.mxu0 0
          %1641 = vmatpush1.bf16.msra.mxu0 0
          %1642 = vmatprep.subr.bf16.mxu0 0
          %1643 = vmatpush1.bf16.msra.mxu0 0
          %1644 = vmatprep.subr.bf16.mxu0 0
          %1645 = vmatpush1.bf16.msra.mxu0 0
          %1646 = vmatprep.subr.bf16.mxu0 0
          %1647 = vmatpush1.bf16.msra.mxu0 0
          %1648 = vmatprep.subr.bf16.mxu0 0
          %1649 = vmatpush1.bf16.msra.mxu0 0
          %1650 = vmatprep.subr.bf16.mxu0 0
          %1651 = vmatpush1.bf16.msra.mxu0 0
          %1652 = vmatprep.subr.bf16.mxu0 0
          %1653 = vmatpush1.bf16.msra.mxu0 0
          %1654 = vmatprep.subr.bf16.mxu0 0
          %1655 = vmatpush1.bf16.msra.mxu0 0
          %1656 = vmatprep.subr.bf16.mxu0 0
          %1657 = vmatpush1.bf16.msra.mxu0 0
          %1658 = vmatprep.subr.bf16.mxu0 0
          %1659 = vmatpush1.bf16.msra.mxu0 0
          %1660 = vmatprep.mubr.bf16.mxu0 0
          %1661 = vmatmul.mubr.bf16.gmra.mrb[0].mxu0 %v1605
          %v1662 = vpop.f32.mrb[0].mxu0
          %v1663 = vadd.f32 %v1494, %v1662
          %v1664 = vpop.f32.mrb[0].mxu0
          %v1665 = vpop.f32.mrb[0].mxu0
          %v1666 = vadd.f32 %v1497, %v1665
          %v1667 = vpop.f32.mrb[0].mxu0
          %1668 = vmatprep.mubr.bf16.mxu0 0
          %1669 = vmatmul.mubr.bf16.gmra.mrb[0].mxu0 %v1608
          %v1670 = vpop.f32.mrb[0].mxu0
          %v1671 = vadd.f32 %v1502, %v1670
          %v1672 = vpop.f32.mrb[0].mxu0
          %v1673 = vpop.f32.mrb[0].mxu0
          %v1674 = vadd.f32 %v1505, %v1673
          %v1675 = vpop.f32.mrb[0].mxu0
          %1676 = vmatprep.mubr.bf16.mxu0 0
          %1677 = vmatmul.mubr.bf16.gmra.mrb[0].mxu0 %v1611
          %v1678 = vpop.f32.mrb[0].mxu0
          %v1679 = vadd.f32 %v1510, %v1678
          %v1680 = vpop.f32.mrb[0].mxu0
          %v1681 = vpop.f32.mrb[0].mxu0
          %v1682 = vadd.f32 %v1513, %v1681
          %v1683 = vpop.f32.mrb[0].mxu0
          %1684 = vmatprep.mubr.bf16.mxu0 0
          %1685 = vmatmul.mubr.bf16.gmra.mrb[0].mxu0 %v1614
          %v1686 = vpop.f32.mrb[0].mxu0
          %v1687 = vadd.f32 %v1518, %v1686
          %v1688 = vpop.f32.mrb[0].mxu0
          %v1689 = vpop.f32.mrb[0].mxu0
          %v1690 = vadd.f32 %v1521, %v1689
          %v1691 = vpop.f32.mrb[0].mxu0
          %1692 = vmatprep.mubr.bf16.mxu0 0
          %1693 = vmatmul.mubr.bf16.gmra.mrb[0].mxu0 %v1617
          %v1694 = vpop.f32.mrb[0].mxu0
          %v1695 = vadd.f32 %v1526, %v1694
          %v1696 = vpop.f32.mrb[0].mxu0
          %v1697 = vpop.f32.mrb[0].mxu0
          %v1698 = vadd.f32 %v1529, %v1697
          %v1699 = vpop.f32.mrb[0].mxu0
          %1700 = vmatprep.mubr.bf16.mxu0 0
          %1701 = vmatmul.mubr.bf16.gmra.mrb[0].mxu0 %v1620
          %v1702 = vpop.f32.mrb[0].mxu0
          %v1703 = vadd.f32 %v1534, %v1702
          %v1704 = vpop.f32.mrb[0].mxu0
          %v1705 = vpop.f32.mrb[0].mxu0
          %v1706 = vadd.f32 %v1537, %v1705
          %v1707 = vpop.f32.mrb[0].mxu0
          %1708 = vmatprep.mubr.bf16.mxu0 0
          %1709 = vmatmul.mubr.bf16.gmra.mrb[0].mxu0 %v1623
          %v1710 = vpop.f32.mrb[0].mxu0
          %v1711 = vadd.f32 %v1542, %v1710
          %v1712 = vpop.f32.mrb[0].mxu0
          %v1713 = vpop.f32.mrb[0].mxu0
          %v1714 = vadd.f32 %v1545, %v1713
          %v1715 = vpop.f32.mrb[0].mxu0
          %1716 = vmatprep.mubr.bf16.mxu0 0
          %1717 = vmatmul.mubr.bf16.gmra.mrb[0].mxu0 %v1626
          %v1718 = vpop.f32.mrb[0].mxu0
          %v1719 = vadd.f32 %v1550, %v1718
          %v1720 = vpop.f32.mrb[0].mxu0
          %v1721 = vpop.f32.mrb[0].mxu0
          %v1722 = vadd.f32 %v1553, %v1721
          %v1723 = vpop.f32.mrb[0].mxu0
          %1724 = vdwg.mxu0
          %v1725 = vld [vmem:[%s1150 + $0x4] sm:$0xf]
          %v1726 = vld [vmem:[%s1150 + $0x8] sm:$0xf]
          %v1727 = vld [vmem:[%s1150 + $0xc] sm:$0x1]
          %v1728 = vld [vmem:[%s1150 + $0x14] sm:$0xf]
          %v1729 = vld [vmem:[%s1150 + $0x18] sm:$0xf]
          %v1730 = vld [vmem:[%s1150 + $0x1c] sm:$0x1]
          %v1731 = vld [vmem:[%s1150 + $0x24] sm:$0xf]
          %v1732 = vld [vmem:[%s1150 + $0x28] sm:$0xf]
          %v1733 = vld [vmem:[%s1150 + $0x2c] sm:$0x1]
          %v1734 = vld [vmem:[%s1150 + $0x34] sm:$0xf]
          %v1735 = vld [vmem:[%s1150 + $0x38] sm:$0xf]
          %v1736 = vld [vmem:[%s1150 + $0x3c] sm:$0x1]
          %v1737 = vld [vmem:[%s1150 + $0x44] sm:$0xf]
          %v1738 = vld [vmem:[%s1150 + $0x48] sm:$0xf]
          %v1739 = vld [vmem:[%s1150 + $0x4c] sm:$0x1]
          %v1740 = vld [vmem:[%s1150 + $0x54] sm:$0xf]
          %v1741 = vld [vmem:[%s1150 + $0x58] sm:$0xf]
          %v1742 = vld [vmem:[%s1150 + $0x5c] sm:$0x1]
          %v1743 = vld [vmem:[%s1150 + $0x64] sm:$0xf]
          %v1744 = vld [vmem:[%s1150 + $0x68] sm:$0xf]
          %v1745 = vld [vmem:[%s1150 + $0x6c] sm:$0x1]
          %v1746 = vld [vmem:[%s1150 + $0x74] sm:$0xf]
          %v1747 = vld [vmem:[%s1150 + $0x78] sm:$0xf]
          %v1748 = vld [vmem:[%s1150 + $0x7c] sm:$0x1]
          %vm1749 = vsmask.f32 3328
          %vm1750 = vsmask.f32 7440
          %vm1751 = vmor %vm1749, %vm1750
          %v1753 = vshrl.u32 %v1725, 16
          %v1755 = vrot.slane %v1753, 4
          %v1756 = vshll.u32 %v1725, 16
          %v1758 = vrot.slane %v1756, 5
          %v1759 = vor.u32 %v1755, %v1758
          %v1760 = vrot.slane %v1759, 4
          %v1762 = vshll.u32 %v1726, 16
          %v1764 = vrot.slane %v1762, 5
          %v1765 = vsel %vm1751, %v1760, %v1764
          %v1766 = vshrl.u32 %v1726, 16
          %v1768 = vrot.slane %v1766, 4
          %v1769 = vor.u32 %v1768, %v1764
          %v1770 = vrot.slane %v1769, 4
          %v1772 = vshll.u32 %v1727, 16
          %v1774 = vrot.slane %v1772, 5
          %v1775 = vsel %vm1751, %v1770, %v1774
          %v1777 = vshrl.u32 %v1728, 16
          %v1779 = vrot.slane %v1777, 4
          %v1780 = vshll.u32 %v1728, 16
          %v1782 = vrot.slane %v1780, 5
          %v1783 = vor.u32 %v1779, %v1782
          %v1784 = vrot.slane %v1783, 4
          %v1786 = vshll.u32 %v1729, 16
          %v1788 = vrot.slane %v1786, 5
          %v1789 = vsel %vm1751, %v1784, %v1788
          %v1790 = vshrl.u32 %v1729, 16
          %v1792 = vrot.slane %v1790, 4
          %v1793 = vor.u32 %v1792, %v1788
          %v1794 = vrot.slane %v1793, 4
          %v1796 = vshll.u32 %v1730, 16
          %v1798 = vrot.slane %v1796, 5
          %v1799 = vsel %vm1751, %v1794, %v1798
          %v1801 = vshrl.u32 %v1731, 16
          %v1803 = vrot.slane %v1801, 4
          %v1804 = vshll.u32 %v1731, 16
          %v1806 = vrot.slane %v1804, 5
          %v1807 = vor.u32 %v1803, %v1806
          %v1808 = vrot.slane %v1807, 4
          %v1810 = vshll.u32 %v1732, 16
          %v1812 = vrot.slane %v1810, 5
          %v1813 = vsel %vm1751, %v1808, %v1812
          %v1814 = vshrl.u32 %v1732, 16
          %v1816 = vrot.slane %v1814, 4
          %v1817 = vor.u32 %v1816, %v1812
          %v1818 = vrot.slane %v1817, 4
          %v1820 = vshll.u32 %v1733, 16
          %v1822 = vrot.slane %v1820, 5
          %v1823 = vsel %vm1751, %v1818, %v1822
          %v1825 = vshrl.u32 %v1734, 16
          %v1827 = vrot.slane %v1825, 4
          %v1828 = vshll.u32 %v1734, 16
          %v1830 = vrot.slane %v1828, 5
          %v1831 = vor.u32 %v1827, %v1830
          %v1832 = vrot.slane %v1831, 4
          %v1834 = vshll.u32 %v1735, 16
          %v1836 = vrot.slane %v1834, 5
          %v1837 = vsel %vm1751, %v1832, %v1836
          %v1838 = vshrl.u32 %v1735, 16
          %v1840 = vrot.slane %v1838, 4
          %v1841 = vor.u32 %v1840, %v1836
          %v1842 = vrot.slane %v1841, 4
          %v1844 = vshll.u32 %v1736, 16
          %v1846 = vrot.slane %v1844, 5
          %v1847 = vsel %vm1751, %v1842, %v1846
          %v1849 = vshrl.u32 %v1737, 16
          %v1851 = vrot.slane %v1849, 4
          %v1852 = vshll.u32 %v1737, 16
          %v1854 = vrot.slane %v1852, 5
          %v1855 = vor.u32 %v1851, %v1854
          %v1856 = vrot.slane %v1855, 4
          %v1858 = vshll.u32 %v1738, 16
          %v1860 = vrot.slane %v1858, 5
          %v1861 = vsel %vm1751, %v1856, %v1860
          %v1862 = vshrl.u32 %v1738, 16
          %v1864 = vrot.slane %v1862, 4
          %v1865 = vor.u32 %v1864, %v1860
          %v1866 = vrot.slane %v1865, 4
          %v1868 = vshll.u32 %v1739, 16
          %v1870 = vrot.slane %v1868, 5
          %v1871 = vsel %vm1751, %v1866, %v1870
          %v1873 = vshrl.u32 %v1740, 16
          %v1875 = vrot.slane %v1873, 4
          %v1876 = vshll.u32 %v1740, 16
          %v1878 = vrot.slane %v1876, 5
          %v1879 = vor.u32 %v1875, %v1878
          %v1880 = vrot.slane %v1879, 4
          %v1882 = vshll.u32 %v1741, 16
          %v1884 = vrot.slane %v1882, 5
          %v1885 = vsel %vm1751, %v1880, %v1884
          %v1886 = vshrl.u32 %v1741, 16
          %v1888 = vrot.slane %v1886, 4
          %v1889 = vor.u32 %v1888, %v1884
          %v1890 = vrot.slane %v1889, 4
          %v1892 = vshll.u32 %v1742, 16
          %v1894 = vrot.slane %v1892, 5
          %v1895 = vsel %vm1751, %v1890, %v1894
          %v1897 = vshrl.u32 %v1743, 16
          %v1899 = vrot.slane %v1897, 4
          %v1900 = vshll.u32 %v1743, 16
          %v1902 = vrot.slane %v1900, 5
          %v1903 = vor.u32 %v1899, %v1902
          %v1904 = vrot.slane %v1903, 4
          %v1906 = vshll.u32 %v1744, 16
          %v1908 = vrot.slane %v1906, 5
          %v1909 = vsel %vm1751, %v1904, %v1908
          %v1910 = vshrl.u32 %v1744, 16
          %v1912 = vrot.slane %v1910, 4
          %v1913 = vor.u32 %v1912, %v1908
          %v1914 = vrot.slane %v1913, 4
          %v1916 = vshll.u32 %v1745, 16
          %v1918 = vrot.slane %v1916, 5
          %v1919 = vsel %vm1751, %v1914, %v1918
          %v1921 = vshrl.u32 %v1746, 16
          %v1923 = vrot.slane %v1921, 4
          %v1924 = vshll.u32 %v1746, 16
          %v1926 = vrot.slane %v1924, 5
          %v1927 = vor.u32 %v1923, %v1926
          %v1928 = vrot.slane %v1927, 4
          %v1930 = vshll.u32 %v1747, 16
          %v1932 = vrot.slane %v1930, 5
          %v1933 = vsel %vm1751, %v1928, %v1932
          %v1934 = vshrl.u32 %v1747, 16
          %v1936 = vrot.slane %v1934, 4
          %v1937 = vor.u32 %v1936, %v1932
          %v1938 = vrot.slane %v1937, 4
          %v1940 = vshll.u32 %v1748, 16
          %v1942 = vrot.slane %v1940, 5
          %v1943 = vsel %vm1751, %v1938, %v1942
          %s1944 = scalar_lea.vmem %s3, 64
          %v1945 = vld [vmem:[%s1944] sm:$0xf]
          %v1946 = vld [vmem:[%s1944 + $0x4] sm:$0xf]
          %v1947 = vld [vmem:[%s1944 + $0x8] sm:$0xf]
          %v1948 = vld [vmem:[%s1944 + $0xc] sm:$0xf]
          %v1949 = vld [vmem:[%s1944 + $0x10] sm:$0xf]
          %v1950 = vld [vmem:[%s1944 + $0x14] sm:$0xf]
          %v1951 = vld [vmem:[%s1944 + $0x18] sm:$0xf]
          %v1952 = vld [vmem:[%s1944 + $0x1c] sm:$0xf]
          %v1953 = vunpack.c.l.b16 %v1765
          %v1954 = vunpack.c.l.b16 %v1775
          %v1955 = vunpack.c.l.b16 %v1789
          %v1956 = vunpack.c.l.b16 %v1799
          %v1957 = vunpack.c.l.b16 %v1813
          %v1958 = vunpack.c.l.b16 %v1823
          %v1959 = vunpack.c.l.b16 %v1837
          %v1960 = vunpack.c.l.b16 %v1847
          %v1961 = vunpack.c.l.b16 %v1861
          %v1962 = vunpack.c.l.b16 %v1871
          %v1963 = vunpack.c.l.b16 %v1885
          %v1964 = vunpack.c.l.b16 %v1895
          %v1965 = vunpack.c.l.b16 %v1909
          %v1966 = vunpack.c.l.b16 %v1919
          %v1967 = vunpack.c.l.b16 %v1933
          %v1968 = vunpack.c.l.b16 %v1943
          %v1969 = vpack.c.b16 %v1954, %v1953
          %v1970 = vpack.c.b16 %v1956, %v1955
          %v1971 = vpack.c.b16 %v1958, %v1957
          %v1972 = vpack.c.b16 %v1960, %v1959
          %v1973 = vpack.c.b16 %v1962, %v1961
          %v1974 = vpack.c.b16 %v1964, %v1963
          %v1975 = vpack.c.b16 %v1966, %v1965
          %v1976 = vpack.c.b16 %v1968, %v1967
          %v1985 = vunpack.c.l.b16 %v1945
          %v1986 = vunpack.c.l.b16 %v1946
          %v1987 = vunpack.c.l.b16 %v1947
          %v1988 = vunpack.c.l.b16 %v1948
          %v1989 = vunpack.c.l.b16 %v1949
          %v1990 = vunpack.c.l.b16 %v1950
          %v1991 = vunpack.c.l.b16 %v1951
          %v1992 = vunpack.c.l.b16 %v1952
          %v1993 = vpack.c.b16 %v1986, %v1985
          %v1994 = vpack.c.b16 %v1988, %v1987
          %v1995 = vpack.c.b16 %v1990, %v1989
          %v1996 = vpack.c.b16 %v1992, %v1991
          %v2002 = vsel %vm1434, %v1969, 0
          %v2005 = vsel %vm1434, %v1970, 0
          %v2008 = vsel %vm1434, %v1971, 0
          %v2011 = vsel %vm1434, %v1972, 0
          %v2014 = vsel %vm1434, %v1973, 0
          %v2017 = vsel %vm1434, %v1974, 0
          %v2020 = vsel %vm1434, %v1975, 0
          %v2023 = vsel %vm1434, %v1976, 0
          %2025 = vmatprep.subr.bf16.mxu0 0
          %2026 = vmatpush1.bf16.msra.mxu0 %v1993
          %2027 = vmatprep.subr.bf16.mxu0 0
          %2028 = vmatpush1.bf16.msra.mxu0 %v1994
          %2029 = vmatprep.subr.bf16.mxu0 0
          %2030 = vmatpush1.bf16.msra.mxu0 %v1995
          %2031 = vmatprep.subr.bf16.mxu0 0
          %2032 = vmatpush1.bf16.msra.mxu0 %v1996
          %2033 = vmatprep.subr.bf16.mxu0 0
          %2034 = vmatpush1.bf16.msra.mxu0 0
          %2035 = vmatprep.subr.bf16.mxu0 0
          %2036 = vmatpush1.bf16.msra.mxu0 0
          %2037 = vmatprep.subr.bf16.mxu0 0
          %2038 = vmatpush1.bf16.msra.mxu0 0
          %2039 = vmatprep.subr.bf16.mxu0 0
          %2040 = vmatpush1.bf16.msra.mxu0 0
          %2041 = vmatprep.subr.bf16.mxu0 0
          %2042 = vmatpush1.bf16.msra.mxu0 0
          %2043 = vmatprep.subr.bf16.mxu0 0
          %2044 = vmatpush1.bf16.msra.mxu0 0
          %2045 = vmatprep.subr.bf16.mxu0 0
          %2046 = vmatpush1.bf16.msra.mxu0 0
          %2047 = vmatprep.subr.bf16.mxu0 0
          %2048 = vmatpush1.bf16.msra.mxu0 0
          %2049 = vmatprep.subr.bf16.mxu0 0
          %2050 = vmatpush1.bf16.msra.mxu0 0
          %2051 = vmatprep.subr.bf16.mxu0 0
          %2052 = vmatpush1.bf16.msra.mxu0 0
          %2053 = vmatprep.subr.bf16.mxu0 0
          %2054 = vmatpush1.bf16.msra.mxu0 0
          %2055 = vmatprep.subr.bf16.mxu0 0
          %2056 = vmatpush1.bf16.msra.mxu0 0
          %2057 = vmatprep.mubr.bf16.mxu0 0
          %2058 = vmatmul.mubr.bf16.gmra.mrb[0].mxu0 %v2002
          %v2059 = vpop.f32.mrb[0].mxu0
          %v2060 = vadd.f32 0.0, %v2059
          %v2061 = vpop.f32.mrb[0].mxu0
          %v2062 = vpop.f32.mrb[0].mxu0
          %v2063 = vadd.f32 0.0, %v2062
          %v2064 = vpop.f32.mrb[0].mxu0
          %2065 = vmatprep.mubr.bf16.mxu0 0
          %2066 = vmatmul.mubr.bf16.gmra.mrb[0].mxu0 %v2005
          %v2067 = vpop.f32.mrb[0].mxu0
          %v2068 = vadd.f32 0.0, %v2067
          %v2069 = vpop.f32.mrb[0].mxu0
          %v2070 = vpop.f32.mrb[0].mxu0
          %v2071 = vadd.f32 0.0, %v2070
          %v2072 = vpop.f32.mrb[0].mxu0
          %2073 = vmatprep.mubr.bf16.mxu0 0
          %2074 = vmatmul.mubr.bf16.gmra.mrb[0].mxu0 %v2008
          %v2075 = vpop.f32.mrb[0].mxu0
          %v2076 = vadd.f32 0.0, %v2075
          %v2077 = vpop.f32.mrb[0].mxu0
          %v2078 = vpop.f32.mrb[0].mxu0
          %v2079 = vadd.f32 0.0, %v2078
          %v2080 = vpop.f32.mrb[0].mxu0
          %2081 = vmatprep.mubr.bf16.mxu0 0
          %2082 = vmatmul.mubr.bf16.gmra.mrb[0].mxu0 %v2011
          %v2083 = vpop.f32.mrb[0].mxu0
          %v2084 = vadd.f32 0.0, %v2083
          %v2085 = vpop.f32.mrb[0].mxu0
          %v2086 = vpop.f32.mrb[0].mxu0
          %v2087 = vadd.f32 0.0, %v2086
          %v2088 = vpop.f32.mrb[0].mxu0
          %2089 = vmatprep.mubr.bf16.mxu0 0
          %2090 = vmatmul.mubr.bf16.gmra.mrb[0].mxu0 %v2014
          %v2091 = vpop.f32.mrb[0].mxu0
          %v2092 = vadd.f32 0.0, %v2091
          %v2093 = vpop.f32.mrb[0].mxu0
          %v2094 = vpop.f32.mrb[0].mxu0
          %v2095 = vadd.f32 0.0, %v2094
          %v2096 = vpop.f32.mrb[0].mxu0
          %2097 = vmatprep.mubr.bf16.mxu0 0
          %2098 = vmatmul.mubr.bf16.gmra.mrb[0].mxu0 %v2017
          %v2099 = vpop.f32.mrb[0].mxu0
          %v2100 = vadd.f32 0.0, %v2099
          %v2101 = vpop.f32.mrb[0].mxu0
          %v2102 = vpop.f32.mrb[0].mxu0
          %v2103 = vadd.f32 0.0, %v2102
          %v2104 = vpop.f32.mrb[0].mxu0
          %2105 = vmatprep.mubr.bf16.mxu0 0
          %2106 = vmatmul.mubr.bf16.gmra.mrb[0].mxu0 %v2020
          %v2107 = vpop.f32.mrb[0].mxu0
          %v2108 = vadd.f32 0.0, %v2107
          %v2109 = vpop.f32.mrb[0].mxu0
          %v2110 = vpop.f32.mrb[0].mxu0
          %v2111 = vadd.f32 0.0, %v2110
          %v2112 = vpop.f32.mrb[0].mxu0
          %2113 = vmatprep.mubr.bf16.mxu0 0
          %2114 = vmatmul.mubr.bf16.gmra.mrb[0].mxu0 %v2023
          %v2115 = vpop.f32.mrb[0].mxu0
          %v2116 = vadd.f32 0.0, %v2115
          %v2117 = vpop.f32.mrb[0].mxu0
          %v2118 = vpop.f32.mrb[0].mxu0
          %v2119 = vadd.f32 0.0, %v2118
          %v2120 = vpop.f32.mrb[0].mxu0
          %2121 = vdwg.mxu0
          %v2122 = vadd.f32 %v1663, %v2060
          %v2123 = vadd.f32 %v1666, %v2063
          %v2124 = vadd.f32 %v1671, %v2068
          %v2125 = vadd.f32 %v1674, %v2071
          %v2126 = vadd.f32 %v1679, %v2076
          %v2127 = vadd.f32 %v1682, %v2079
          %v2128 = vadd.f32 %v1687, %v2084
          %v2129 = vadd.f32 %v1690, %v2087
          %v2130 = vadd.f32 %v1695, %v2092
          %v2131 = vadd.f32 %v1698, %v2095
          %v2132 = vadd.f32 %v1703, %v2100
          %v2133 = vadd.f32 %v1706, %v2103
          %v2134 = vadd.f32 %v1711, %v2108
          %v2135 = vadd.f32 %v1714, %v2111
          %v2136 = vadd.f32 %v1719, %v2116
          %v2137 = vadd.f32 %v1722, %v2119
          %s2138 = sadd.s32 %s1147, 1
          %s2139 = smul.u32 %s2138, 4
          %s2140 = smul.addr %s2139, 4
          %s2141 = scalar_lea.vmem [#allocation2], %s2140
          %v2142 = vld [vmem:[%s2141] sm:$0x8]
          %v2143 = vld [vmem:[%s2141 + $0x4] sm:$0xf]
          %v2144 = vld [vmem:[%s2141 + $0x8] sm:$0xf]
          %v2145 = vld [vmem:[%s2141 + $0x10] sm:$0x8]
          %v2146 = vld [vmem:[%s2141 + $0x14] sm:$0xf]
          %v2147 = vld [vmem:[%s2141 + $0x18] sm:$0xf]
          %v2148 = vld [vmem:[%s2141 + $0x20] sm:$0x8]
          %v2149 = vld [vmem:[%s2141 + $0x24] sm:$0xf]
          %v2150 = vld [vmem:[%s2141 + $0x28] sm:$0xf]
          %v2151 = vld [vmem:[%s2141 + $0x30] sm:$0x8]
          %v2152 = vld [vmem:[%s2141 + $0x34] sm:$0xf]
          %v2153 = vld [vmem:[%s2141 + $0x38] sm:$0xf]
          %v2154 = vld [vmem:[%s2141 + $0x40] sm:$0x8]
          %v2155 = vld [vmem:[%s2141 + $0x44] sm:$0xf]
          %v2156 = vld [vmem:[%s2141 + $0x48] sm:$0xf]
          %v2157 = vld [vmem:[%s2141 + $0x50] sm:$0x8]
          %v2158 = vld [vmem:[%s2141 + $0x54] sm:$0xf]
          %v2159 = vld [vmem:[%s2141 + $0x58] sm:$0xf]
          %v2160 = vld [vmem:[%s2141 + $0x60] sm:$0x8]
          %v2161 = vld [vmem:[%s2141 + $0x64] sm:$0xf]
          %v2162 = vld [vmem:[%s2141 + $0x68] sm:$0xf]
          %v2163 = vld [vmem:[%s2141 + $0x70] sm:$0x8]
          %v2164 = vld [vmem:[%s2141 + $0x74] sm:$0xf]
          %v2165 = vld [vmem:[%s2141 + $0x78] sm:$0xf]
          %v2167 = vshrl.u32 %v2142, 16
          %v2169 = vrot.slane %v2167, 7
          %v2170 = vrot.slane %v2169, 4
          %v2172 = vshrl.u32 %v2143, 16
          %v2174 = vrot.slane %v2172, 7
          %v2175 = vshll.u32 %v2143, 16
          %v2177 = vor.u32 %v2174, %v2175
          %v2178 = vsel %vm1176, %v2170, %v2177
          %v2179 = vrot.slane %v2174, 4
          %v2181 = vshrl.u32 %v2144, 16
          %v2183 = vrot.slane %v2181, 7
          %v2184 = vshll.u32 %v2144, 16
          %v2186 = vor.u32 %v2183, %v2184
          %v2187 = vsel %vm1176, %v2179, %v2186
          %v2189 = vshrl.u32 %v2145, 16
          %v2191 = vrot.slane %v2189, 7
          %v2192 = vrot.slane %v2191, 4
          %v2194 = vshrl.u32 %v2146, 16
          %v2196 = vrot.slane %v2194, 7
          %v2197 = vshll.u32 %v2146, 16
          %v2199 = vor.u32 %v2196, %v2197
          %v2200 = vsel %vm1176, %v2192, %v2199
          %v2201 = vrot.slane %v2196, 4
          %v2203 = vshrl.u32 %v2147, 16
          %v2205 = vrot.slane %v2203, 7
          %v2206 = vshll.u32 %v2147, 16
          %v2208 = vor.u32 %v2205, %v2206
          %v2209 = vsel %vm1176, %v2201, %v2208
          %v2211 = vshrl.u32 %v2148, 16
          %v2213 = vrot.slane %v2211, 7
          %v2214 = vrot.slane %v2213, 4
          %v2216 = vshrl.u32 %v2149, 16
          %v2218 = vrot.slane %v2216, 7
          %v2219 = vshll.u32 %v2149, 16
          %v2221 = vor.u32 %v2218, %v2219
          %v2222 = vsel %vm1176, %v2214, %v2221
          %v2223 = vrot.slane %v2218, 4
          %v2225 = vshrl.u32 %v2150, 16
          %v2227 = vrot.slane %v2225, 7
          %v2228 = vshll.u32 %v2150, 16
          %v2230 = vor.u32 %v2227, %v2228
          %v2231 = vsel %vm1176, %v2223, %v2230
          %v2233 = vshrl.u32 %v2151, 16
          %v2235 = vrot.slane %v2233, 7
          %v2236 = vrot.slane %v2235, 4
          %v2238 = vshrl.u32 %v2152, 16
          %v2240 = vrot.slane %v2238, 7
          %v2241 = vshll.u32 %v2152, 16
          %v2243 = vor.u32 %v2240, %v2241
          %v2244 = vsel %vm1176, %v2236, %v2243
          %v2245 = vrot.slane %v2240, 4
          %v2247 = vshrl.u32 %v2153, 16
          %v2249 = vrot.slane %v2247, 7
          %v2250 = vshll.u32 %v2153, 16
          %v2252 = vor.u32 %v2249, %v2250
          %v2253 = vsel %vm1176, %v2245, %v2252
          %v2255 = vshrl.u32 %v2154, 16
          %v2257 = vrot.slane %v2255, 7
          %v2258 = vrot.slane %v2257, 4
          %v2260 = vshrl.u32 %v2155, 16
          %v2262 = vrot.slane %v2260, 7
          %v2263 = vshll.u32 %v2155, 16
          %v2265 = vor.u32 %v2262, %v2263
          %v2266 = vsel %vm1176, %v2258, %v2265
          %v2267 = vrot.slane %v2262, 4
          %v2269 = vshrl.u32 %v2156, 16
          %v2271 = vrot.slane %v2269, 7
          %v2272 = vshll.u32 %v2156, 16
          %v2274 = vor.u32 %v2271, %v2272
          %v2275 = vsel %vm1176, %v2267, %v2274
          %v2277 = vshrl.u32 %v2157, 16
          %v2279 = vrot.slane %v2277, 7
          %v2280 = vrot.slane %v2279, 4
          %v2282 = vshrl.u32 %v2158, 16
          %v2284 = vrot.slane %v2282, 7
          %v2285 = vshll.u32 %v2158, 16
          %v2287 = vor.u32 %v2284, %v2285
          %v2288 = vsel %vm1176, %v2280, %v2287
          %v2289 = vrot.slane %v2284, 4
          %v2291 = vshrl.u32 %v2159, 16
          %v2293 = vrot.slane %v2291, 7
          %v2294 = vshll.u32 %v2159, 16
          %v2296 = vor.u32 %v2293, %v2294
          %v2297 = vsel %vm1176, %v2289, %v2296
          %v2299 = vshrl.u32 %v2160, 16
          %v2301 = vrot.slane %v2299, 7
          %v2302 = vrot.slane %v2301, 4
          %v2304 = vshrl.u32 %v2161, 16
          %v2306 = vrot.slane %v2304, 7
          %v2307 = vshll.u32 %v2161, 16
          %v2309 = vor.u32 %v2306, %v2307
          %v2310 = vsel %vm1176, %v2302, %v2309
          %v2311 = vrot.slane %v2306, 4
          %v2313 = vshrl.u32 %v2162, 16
          %v2315 = vrot.slane %v2313, 7
          %v2316 = vshll.u32 %v2162, 16
          %v2318 = vor.u32 %v2315, %v2316
          %v2319 = vsel %vm1176, %v2311, %v2318
          %v2321 = vshrl.u32 %v2163, 16
          %v2323 = vrot.slane %v2321, 7
          %v2324 = vrot.slane %v2323, 4
          %v2326 = vshrl.u32 %v2164, 16
          %v2328 = vrot.slane %v2326, 7
          %v2329 = vshll.u32 %v2164, 16
          %v2331 = vor.u32 %v2328, %v2329
          %v2332 = vsel %vm1176, %v2324, %v2331
          %v2333 = vrot.slane %v2328, 4
          %v2335 = vshrl.u32 %v2165, 16
          %v2337 = vrot.slane %v2335, 7
          %v2338 = vshll.u32 %v2165, 16
          %v2340 = vor.u32 %v2337, %v2338
          %v2341 = vsel %vm1176, %v2333, %v2340
          %s2342 = scalar_lea.vmem %s3, 96
          %v2343 = vld [vmem:[%s2342] sm:$0xf]
          %v2344 = vld [vmem:[%s2342 + $0x4] sm:$0xf]
          %v2345 = vld [vmem:[%s2342 + $0x8] sm:$0xf]
          %v2346 = vld [vmem:[%s2342 + $0xc] sm:$0xf]
          %v2347 = vld [vmem:[%s2342 + $0x10] sm:$0xf]
          %v2348 = vld [vmem:[%s2342 + $0x14] sm:$0xf]
          %v2349 = vld [vmem:[%s2342 + $0x18] sm:$0xf]
          %v2350 = vld [vmem:[%s2342 + $0x1c] sm:$0xf]
          %v2351 = vunpack.c.l.b16 %v2178
          %v2352 = vunpack.c.l.b16 %v2187
          %v2353 = vunpack.c.l.b16 %v2200
          %v2354 = vunpack.c.l.b16 %v2209
          %v2355 = vunpack.c.l.b16 %v2222
          %v2356 = vunpack.c.l.b16 %v2231
          %v2357 = vunpack.c.l.b16 %v2244
          %v2358 = vunpack.c.l.b16 %v2253
          %v2359 = vunpack.c.l.b16 %v2266
          %v2360 = vunpack.c.l.b16 %v2275
          %v2361 = vunpack.c.l.b16 %v2288
          %v2362 = vunpack.c.l.b16 %v2297
          %v2363 = vunpack.c.l.b16 %v2310
          %v2364 = vunpack.c.l.b16 %v2319
          %v2365 = vunpack.c.l.b16 %v2332
          %v2366 = vunpack.c.l.b16 %v2341
          %v2367 = vpack.c.b16 %v2352, %v2351
          %v2368 = vpack.c.b16 %v2354, %v2353
          %v2369 = vpack.c.b16 %v2356, %v2355
          %v2370 = vpack.c.b16 %v2358, %v2357
          %v2371 = vpack.c.b16 %v2360, %v2359
          %v2372 = vpack.c.b16 %v2362, %v2361
          %v2373 = vpack.c.b16 %v2364, %v2363
          %v2374 = vpack.c.b16 %v2366, %v2365
          %v2383 = vunpack.c.l.b16 %v2343
          %v2384 = vunpack.c.l.b16 %v2344
          %v2385 = vunpack.c.l.b16 %v2345
          %v2386 = vunpack.c.l.b16 %v2346
          %v2387 = vunpack.c.l.b16 %v2347
          %v2388 = vunpack.c.l.b16 %v2348
          %v2389 = vunpack.c.l.b16 %v2349
          %v2390 = vunpack.c.l.b16 %v2350
          %v2391 = vpack.c.b16 %v2384, %v2383
          %v2392 = vpack.c.b16 %v2386, %v2385
          %v2393 = vpack.c.b16 %v2388, %v2387
          %v2394 = vpack.c.b16 %v2390, %v2389
          %v2400 = vsel %vm1434, %v2367, 0
          %v2403 = vsel %vm1434, %v2368, 0
          %v2406 = vsel %vm1434, %v2369, 0
          %v2409 = vsel %vm1434, %v2370, 0
          %v2412 = vsel %vm1434, %v2371, 0
          %v2415 = vsel %vm1434, %v2372, 0
          %v2418 = vsel %vm1434, %v2373, 0
          %v2421 = vsel %vm1434, %v2374, 0
          %2423 = vmatprep.subr.bf16.mxu0 0
          %2424 = vmatpush1.bf16.msra.mxu0 %v2391
          %2425 = vmatprep.subr.bf16.mxu0 0
          %2426 = vmatpush1.bf16.msra.mxu0 %v2392
          %2427 = vmatprep.subr.bf16.mxu0 0
          %2428 = vmatpush1.bf16.msra.mxu0 %v2393
          %2429 = vmatprep.subr.bf16.mxu0 0
          %2430 = vmatpush1.bf16.msra.mxu0 %v2394
          %2431 = vmatprep.subr.bf16.mxu0 0
          %2432 = vmatpush1.bf16.msra.mxu0 0
          %2433 = vmatprep.subr.bf16.mxu0 0
          %2434 = vmatpush1.bf16.msra.mxu0 0
          %2435 = vmatprep.subr.bf16.mxu0 0
          %2436 = vmatpush1.bf16.msra.mxu0 0
          %2437 = vmatprep.subr.bf16.mxu0 0
          %2438 = vmatpush1.bf16.msra.mxu0 0
          %2439 = vmatprep.subr.bf16.mxu0 0
          %2440 = vmatpush1.bf16.msra.mxu0 0
          %2441 = vmatprep.subr.bf16.mxu0 0
          %2442 = vmatpush1.bf16.msra.mxu0 0
          %2443 = vmatprep.subr.bf16.mxu0 0
          %2444 = vmatpush1.bf16.msra.mxu0 0
          %2445 = vmatprep.subr.bf16.mxu0 0
          %2446 = vmatpush1.bf16.msra.mxu0 0
          %2447 = vmatprep.subr.bf16.mxu0 0
          %2448 = vmatpush1.bf16.msra.mxu0 0
          %2449 = vmatprep.subr.bf16.mxu0 0
          %2450 = vmatpush1.bf16.msra.mxu0 0
          %2451 = vmatprep.subr.bf16.mxu0 0
          %2452 = vmatpush1.bf16.msra.mxu0 0
          %2453 = vmatprep.subr.bf16.mxu0 0
          %2454 = vmatpush1.bf16.msra.mxu0 0
          %2455 = vmatprep.mubr.bf16.mxu0 0
          %2456 = vmatmul.mubr.bf16.gmra.mrb[0].mxu0 %v2400
          %v2457 = vpop.f32.mrb[0].mxu0
          %v2458 = vadd.f32 0.0, %v2457
          %v2459 = vpop.f32.mrb[0].mxu0
          %v2460 = vpop.f32.mrb[0].mxu0
          %v2461 = vadd.f32 0.0, %v2460
          %v2462 = vpop.f32.mrb[0].mxu0
          %2463 = vmatprep.mubr.bf16.mxu0 0
          %2464 = vmatmul.mubr.bf16.gmra.mrb[0].mxu0 %v2403
          %v2465 = vpop.f32.mrb[0].mxu0
          %v2466 = vadd.f32 0.0, %v2465
          %v2467 = vpop.f32.mrb[0].mxu0
          %v2468 = vpop.f32.mrb[0].mxu0
          %v2469 = vadd.f32 0.0, %v2468
          %v2470 = vpop.f32.mrb[0].mxu0
          %2471 = vmatprep.mubr.bf16.mxu0 0
          %2472 = vmatmul.mubr.bf16.gmra.mrb[0].mxu0 %v2406
          %v2473 = vpop.f32.mrb[0].mxu0
          %v2474 = vadd.f32 0.0, %v2473
          %v2475 = vpop.f32.mrb[0].mxu0
          %v2476 = vpop.f32.mrb[0].mxu0
          %v2477 = vadd.f32 0.0, %v2476
          %v2478 = vpop.f32.mrb[0].mxu0
          %2479 = vmatprep.mubr.bf16.mxu0 0
          %2480 = vmatmul.mubr.bf16.gmra.mrb[0].mxu0 %v2409
          %v2481 = vpop.f32.mrb[0].mxu0
          %v2482 = vadd.f32 0.0, %v2481
          %v2483 = vpop.f32.mrb[0].mxu0
          %v2484 = vpop.f32.mrb[0].mxu0
          %v2485 = vadd.f32 0.0, %v2484
          %v2486 = vpop.f32.mrb[0].mxu0
          %2487 = vmatprep.mubr.bf16.mxu0 0
          %2488 = vmatmul.mubr.bf16.gmra.mrb[0].mxu0 %v2412
          %v2489 = vpop.f32.mrb[0].mxu0
          %v2490 = vadd.f32 0.0, %v2489
          %v2491 = vpop.f32.mrb[0].mxu0
          %v2492 = vpop.f32.mrb[0].mxu0
          %v2493 = vadd.f32 0.0, %v2492
          %v2494 = vpop.f32.mrb[0].mxu0
          %2495 = vmatprep.mubr.bf16.mxu0 0
          %2496 = vmatmul.mubr.bf16.gmra.mrb[0].mxu0 %v2415
          %v2497 = vpop.f32.mrb[0].mxu0
          %v2498 = vadd.f32 0.0, %v2497
          %v2499 = vpop.f32.mrb[0].mxu0
          %v2500 = vpop.f32.mrb[0].mxu0
          %v2501 = vadd.f32 0.0, %v2500
          %v2502 = vpop.f32.mrb[0].mxu0
          %2503 = vmatprep.mubr.bf16.mxu0 0
          %2504 = vmatmul.mubr.bf16.gmra.mrb[0].mxu0 %v2418
          %v2505 = vpop.f32.mrb[0].mxu0
          %v2506 = vadd.f32 0.0, %v2505
          %v2507 = vpop.f32.mrb[0].mxu0
          %v2508 = vpop.f32.mrb[0].mxu0
          %v2509 = vadd.f32 0.0, %v2508
          %v2510 = vpop.f32.mrb[0].mxu0
          %2511 = vmatprep.mubr.bf16.mxu0 0
          %2512 = vmatmul.mubr.bf16.gmra.mrb[0].mxu0 %v2421
          %v2513 = vpop.f32.mrb[0].mxu0
          %v2514 = vadd.f32 0.0, %v2513
          %v2515 = vpop.f32.mrb[0].mxu0
          %v2516 = vpop.f32.mrb[0].mxu0
          %v2517 = vadd.f32 0.0, %v2516
          %v2518 = vpop.f32.mrb[0].mxu0
          %2519 = vdwg.mxu0
          %v2520 = vadd.f32 %v2122, %v2458
          %v2521 = vadd.f32 %v2123, %v2461
          %v2522 = vadd.f32 %v2124, %v2466
          %v2523 = vadd.f32 %v2125, %v2469
          %v2524 = vadd.f32 %v2126, %v2474
          %v2525 = vadd.f32 %v2127, %v2477
          %v2526 = vadd.f32 %v2128, %v2482
          %v2527 = vadd.f32 %v2129, %v2485
          %v2528 = vadd.f32 %v2130, %v2490
          %v2529 = vadd.f32 %v2131, %v2493
          %v2530 = vadd.f32 %v2132, %v2498
          %v2531 = vadd.f32 %v2133, %v2501
          %v2532 = vadd.f32 %v2134, %v2506
          %v2533 = vadd.f32 %v2135, %v2509
          %v2534 = vadd.f32 %v2136, %v2514
          %v2535 = vadd.f32 %v2137, %v2517
          %s2536 = scalar_lea.vmem %s3, 128
          %v2537 = vld [vmem:[%s2536] sm:$0xf]
          %v2538 = vld [vmem:[%s2536 + $0x4] sm:$0xf]
          %v2539 = vld [vmem:[%s2536 + $0x8] sm:$0xf]
          %v2540 = vld [vmem:[%s2536 + $0xc] sm:$0xf]
          %v2541 = vld [vmem:[%s2536 + $0x10] sm:$0xf]
          %v2542 = vld [vmem:[%s2536 + $0x14] sm:$0xf]
          %v2543 = vld [vmem:[%s2536 + $0x18] sm:$0xf]
          %v2544 = vld [vmem:[%s2536 + $0x1c] sm:$0xf]
          %v2561 = vunpack.c.l.b16 %v2143
          %v2562 = vunpack.c.l.b16 %v2144
          %v2563 = vunpack.c.l.b16 %v2146
          %v2564 = vunpack.c.l.b16 %v2147
          %v2565 = vunpack.c.l.b16 %v2149
          %v2566 = vunpack.c.l.b16 %v2150
          %v2567 = vunpack.c.l.b16 %v2152
          %v2568 = vunpack.c.l.b16 %v2153
          %v2569 = vunpack.c.l.b16 %v2155
          %v2570 = vunpack.c.l.b16 %v2156
          %v2571 = vunpack.c.l.b16 %v2158
          %v2572 = vunpack.c.l.b16 %v2159
          %v2573 = vunpack.c.l.b16 %v2161
          %v2574 = vunpack.c.l.b16 %v2162
          %v2575 = vunpack.c.l.b16 %v2164
          %v2576 = vunpack.c.l.b16 %v2165
          %v2577 = vpack.c.b16 %v2562, %v2561
          %v2578 = vpack.c.b16 %v2564, %v2563
          %v2579 = vpack.c.b16 %v2566, %v2565
          %v2580 = vpack.c.b16 %v2568, %v2567
          %v2581 = vpack.c.b16 %v2570, %v2569
          %v2582 = vpack.c.b16 %v2572, %v2571
          %v2583 = vpack.c.b16 %v2574, %v2573
          %v2584 = vpack.c.b16 %v2576, %v2575
          %v2593 = vunpack.c.l.b16 %v2537
          %v2594 = vunpack.c.l.b16 %v2538
          %v2595 = vunpack.c.l.b16 %v2539
          %v2596 = vunpack.c.l.b16 %v2540
          %v2597 = vunpack.c.l.b16 %v2541
          %v2598 = vunpack.c.l.b16 %v2542
          %v2599 = vunpack.c.l.b16 %v2543
          %v2600 = vunpack.c.l.b16 %v2544
          %v2601 = vpack.c.b16 %v2594, %v2593
          %v2602 = vpack.c.b16 %v2596, %v2595
          %v2603 = vpack.c.b16 %v2598, %v2597
          %v2604 = vpack.c.b16 %v2600, %v2599
          %v2610 = vsel %vm1434, %v2577, 0
          %v2613 = vsel %vm1434, %v2578, 0
          %v2616 = vsel %vm1434, %v2579, 0
          %v2619 = vsel %vm1434, %v2580, 0
          %v2622 = vsel %vm1434, %v2581, 0
          %v2625 = vsel %vm1434, %v2582, 0
          %v2628 = vsel %vm1434, %v2583, 0
          %v2631 = vsel %vm1434, %v2584, 0
          %2633 = vmatprep.subr.bf16.mxu0 0
          %2634 = vmatpush1.bf16.msra.mxu0 %v2601
          %2635 = vmatprep.subr.bf16.mxu0 0
          %2636 = vmatpush1.bf16.msra.mxu0 %v2602
          %2637 = vmatprep.subr.bf16.mxu0 0
          %2638 = vmatpush1.bf16.msra.mxu0 %v2603
          %2639 = vmatprep.subr.bf16.mxu0 0
          %2640 = vmatpush1.bf16.msra.mxu0 %v2604
          %2641 = vmatprep.subr.bf16.mxu0 0
          %2642 = vmatpush1.bf16.msra.mxu0 0
          %2643 = vmatprep.subr.bf16.mxu0 0
          %2644 = vmatpush1.bf16.msra.mxu0 0
          %2645 = vmatprep.subr.bf16.mxu0 0
          %2646 = vmatpush1.bf16.msra.mxu0 0
          %2647 = vmatprep.subr.bf16.mxu0 0
          %2648 = vmatpush1.bf16.msra.mxu0 0
          %2649 = vmatprep.subr.bf16.mxu0 0
          %2650 = vmatpush1.bf16.msra.mxu0 0
          %2651 = vmatprep.subr.bf16.mxu0 0
          %2652 = vmatpush1.bf16.msra.mxu0 0
          %2653 = vmatprep.subr.bf16.mxu0 0
          %2654 = vmatpush1.bf16.msra.mxu0 0
          %2655 = vmatprep.subr.bf16.mxu0 0
          %2656 = vmatpush1.bf16.msra.mxu0 0
          %2657 = vmatprep.subr.bf16.mxu0 0
          %2658 = vmatpush1.bf16.msra.mxu0 0
          %2659 = vmatprep.subr.bf16.mxu0 0
          %2660 = vmatpush1.bf16.msra.mxu0 0
          %2661 = vmatprep.subr.bf16.mxu0 0
          %2662 = vmatpush1.bf16.msra.mxu0 0
          %2663 = vmatprep.subr.bf16.mxu0 0
          %2664 = vmatpush1.bf16.msra.mxu0 0
          %2665 = vmatprep.mubr.bf16.mxu0 0
          %2666 = vmatmul.mubr.bf16.gmra.mrb[0].mxu0 %v2610
          %v2667 = vpop.f32.mrb[0].mxu0
          %v2668 = vadd.f32 0.0, %v2667
          %v2669 = vpop.f32.mrb[0].mxu0
          %v2670 = vpop.f32.mrb[0].mxu0
          %v2671 = vadd.f32 0.0, %v2670
          %v2672 = vpop.f32.mrb[0].mxu0
          %2673 = vmatprep.mubr.bf16.mxu0 0
          %2674 = vmatmul.mubr.bf16.gmra.mrb[0].mxu0 %v2613
          %v2675 = vpop.f32.mrb[0].mxu0
          %v2676 = vadd.f32 0.0, %v2675
          %v2677 = vpop.f32.mrb[0].mxu0
          %v2678 = vpop.f32.mrb[0].mxu0
          %v2679 = vadd.f32 0.0, %v2678
          %v2680 = vpop.f32.mrb[0].mxu0
          %2681 = vmatprep.mubr.bf16.mxu0 0
          %2682 = vmatmul.mubr.bf16.gmra.mrb[0].mxu0 %v2616
          %v2683 = vpop.f32.mrb[0].mxu0
          %v2684 = vadd.f32 0.0, %v2683
          %v2685 = vpop.f32.mrb[0].mxu0
          %v2686 = vpop.f32.mrb[0].mxu0
          %v2687 = vadd.f32 0.0, %v2686
          %v2688 = vpop.f32.mrb[0].mxu0
          %2689 = vmatprep.mubr.bf16.mxu0 0
          %2690 = vmatmul.mubr.bf16.gmra.mrb[0].mxu0 %v2619
          %v2691 = vpop.f32.mrb[0].mxu0
          %v2692 = vadd.f32 0.0, %v2691
          %v2693 = vpop.f32.mrb[0].mxu0
          %v2694 = vpop.f32.mrb[0].mxu0
          %v2695 = vadd.f32 0.0, %v2694
          %v2696 = vpop.f32.mrb[0].mxu0
          %2697 = vmatprep.mubr.bf16.mxu0 0
          %2698 = vmatmul.mubr.bf16.gmra.mrb[0].mxu0 %v2622
          %v2699 = vpop.f32.mrb[0].mxu0
          %v2700 = vadd.f32 0.0, %v2699
          %v2701 = vpop.f32.mrb[0].mxu0
          %v2702 = vpop.f32.mrb[0].mxu0
          %v2703 = vadd.f32 0.0, %v2702
          %v2704 = vpop.f32.mrb[0].mxu0
          %2705 = vmatprep.mubr.bf16.mxu0 0
          %2706 = vmatmul.mubr.bf16.gmra.mrb[0].mxu0 %v2625
          %v2707 = vpop.f32.mrb[0].mxu0
          %v2708 = vadd.f32 0.0, %v2707
          %v2709 = vpop.f32.mrb[0].mxu0
          %v2710 = vpop.f32.mrb[0].mxu0
          %v2711 = vadd.f32 0.0, %v2710
          %v2712 = vpop.f32.mrb[0].mxu0
          %2713 = vmatprep.mubr.bf16.mxu0 0
          %2714 = vmatmul.mubr.bf16.gmra.mrb[0].mxu0 %v2628
          %v2715 = vpop.f32.mrb[0].mxu0
          %v2716 = vadd.f32 0.0, %v2715
          %v2717 = vpop.f32.mrb[0].mxu0
          %v2718 = vpop.f32.mrb[0].mxu0
          %v2719 = vadd.f32 0.0, %v2718
          %v2720 = vpop.f32.mrb[0].mxu0
          %2721 = vmatprep.mubr.bf16.mxu0 0
          %2722 = vmatmul.mubr.bf16.gmra.mrb[0].mxu0 %v2631
          %v2723 = vpop.f32.mrb[0].mxu0
          %v2724 = vadd.f32 0.0, %v2723
          %v2725 = vpop.f32.mrb[0].mxu0
          %v2726 = vpop.f32.mrb[0].mxu0
          %v2727 = vadd.f32 0.0, %v2726
          %v2728 = vpop.f32.mrb[0].mxu0
          %2729 = vdwg.mxu0
          %v2730 = vadd.f32 %v2520, %v2668
          %v2731 = vadd.f32 %v2521, %v2671
          %v2732 = vadd.f32 %v2522, %v2676
          %v2733 = vadd.f32 %v2523, %v2679
          %v2734 = vadd.f32 %v2524, %v2684
          %v2735 = vadd.f32 %v2525, %v2687
          %v2736 = vadd.f32 %v2526, %v2692
          %v2737 = vadd.f32 %v2527, %v2695
          %v2738 = vadd.f32 %v2528, %v2700
          %v2739 = vadd.f32 %v2529, %v2703
          %v2740 = vadd.f32 %v2530, %v2708
          %v2741 = vadd.f32 %v2531, %v2711
          %v2742 = vadd.f32 %v2532, %v2716
          %v2743 = vadd.f32 %v2533, %v2719
          %v2744 = vadd.f32 %v2534, %v2724
          %v2745 = vadd.f32 %v2535, %v2727
          %v2746 = vld [vmem:[%s2141 + $0x4] sm:$0xf]
          %v2747 = vld [vmem:[%s2141 + $0x8] sm:$0xf]
          %v2748 = vld [vmem:[%s2141 + $0xc] sm:$0x1]
          %v2749 = vld [vmem:[%s2141 + $0x14] sm:$0xf]
          %v2750 = vld [vmem:[%s2141 + $0x18] sm:$0xf]
          %v2751 = vld [vmem:[%s2141 + $0x1c] sm:$0x1]
          %v2752 = vld [vmem:[%s2141 + $0x24] sm:$0xf]
          %v2753 = vld [vmem:[%s2141 + $0x28] sm:$0xf]
          %v2754 = vld [vmem:[%s2141 + $0x2c] sm:$0x1]
          %v2755 = vld [vmem:[%s2141 + $0x34] sm:$0xf]
          %v2756 = vld [vmem:[%s2141 + $0x38] sm:$0xf]
          %v2757 = vld [vmem:[%s2141 + $0x3c] sm:$0x1]
          %v2758 = vld [vmem:[%s2141 + $0x44] sm:$0xf]
          %v2759 = vld [vmem:[%s2141 + $0x48] sm:$0xf]
          %v2760 = vld [vmem:[%s2141 + $0x4c] sm:$0x1]
          %v2761 = vld [vmem:[%s2141 + $0x54] sm:$0xf]
          %v2762 = vld [vmem:[%s2141 + $0x58] sm:$0xf]
          %v2763 = vld [vmem:[%s2141 + $0x5c] sm:$0x1]
          %v2764 = vld [vmem:[%s2141 + $0x64] sm:$0xf]
          %v2765 = vld [vmem:[%s2141 + $0x68] sm:$0xf]
          %v2766 = vld [vmem:[%s2141 + $0x6c] sm:$0x1]
          %v2767 = vld [vmem:[%s2141 + $0x74] sm:$0xf]
          %v2768 = vld [vmem:[%s2141 + $0x78] sm:$0xf]
          %v2769 = vld [vmem:[%s2141 + $0x7c] sm:$0x1]
          %v2771 = vshrl.u32 %v2746, 16
          %v2773 = vrot.slane %v2771, 4
          %v2774 = vshll.u32 %v2746, 16
          %v2776 = vrot.slane %v2774, 5
          %v2777 = vor.u32 %v2773, %v2776
          %v2778 = vrot.slane %v2777, 4
          %v2780 = vshll.u32 %v2747, 16
          %v2782 = vrot.slane %v2780, 5
          %v2783 = vsel %vm1751, %v2778, %v2782
          %v2784 = vshrl.u32 %v2747, 16
          %v2786 = vrot.slane %v2784, 4
          %v2787 = vor.u32 %v2786, %v2782
          %v2788 = vrot.slane %v2787, 4
          %v2790 = vshll.u32 %v2748, 16
          %v2792 = vrot.slane %v2790, 5
          %v2793 = vsel %vm1751, %v2788, %v2792
          %v2795 = vshrl.u32 %v2749, 16
          %v2797 = vrot.slane %v2795, 4
          %v2798 = vshll.u32 %v2749, 16
          %v2800 = vrot.slane %v2798, 5
          %v2801 = vor.u32 %v2797, %v2800
          %v2802 = vrot.slane %v2801, 4
          %v2804 = vshll.u32 %v2750, 16
          %v2806 = vrot.slane %v2804, 5
          %v2807 = vsel %vm1751, %v2802, %v2806
          %v2808 = vshrl.u32 %v2750, 16
          %v2810 = vrot.slane %v2808, 4
          %v2811 = vor.u32 %v2810, %v2806
          %v2812 = vrot.slane %v2811, 4
          %v2814 = vshll.u32 %v2751, 16
          %v2816 = vrot.slane %v2814, 5
          %v2817 = vsel %vm1751, %v2812, %v2816
          %v2819 = vshrl.u32 %v2752, 16
          %v2821 = vrot.slane %v2819, 4
          %v2822 = vshll.u32 %v2752, 16
          %v2824 = vrot.slane %v2822, 5
          %v2825 = vor.u32 %v2821, %v2824
          %v2826 = vrot.slane %v2825, 4
          %v2828 = vshll.u32 %v2753, 16
          %v2830 = vrot.slane %v2828, 5
          %v2831 = vsel %vm1751, %v2826, %v2830
          %v2832 = vshrl.u32 %v2753, 16
          %v2834 = vrot.slane %v2832, 4
          %v2835 = vor.u32 %v2834, %v2830
          %v2836 = vrot.slane %v2835, 4
          %v2838 = vshll.u32 %v2754, 16
          %v2840 = vrot.slane %v2838, 5
          %v2841 = vsel %vm1751, %v2836, %v2840
          %v2843 = vshrl.u32 %v2755, 16
          %v2845 = vrot.slane %v2843, 4
          %v2846 = vshll.u32 %v2755, 16
          %v2848 = vrot.slane %v2846, 5
          %v2849 = vor.u32 %v2845, %v2848
          %v2850 = vrot.slane %v2849, 4
          %v2852 = vshll.u32 %v2756, 16
          %v2854 = vrot.slane %v2852, 5
          %v2855 = vsel %vm1751, %v2850, %v2854
          %v2856 = vshrl.u32 %v2756, 16
          %v2858 = vrot.slane %v2856, 4
          %v2859 = vor.u32 %v2858, %v2854
          %v2860 = vrot.slane %v2859, 4
          %v2862 = vshll.u32 %v2757, 16
          %v2864 = vrot.slane %v2862, 5
          %v2865 = vsel %vm1751, %v2860, %v2864
          %v2867 = vshrl.u32 %v2758, 16
          %v2869 = vrot.slane %v2867, 4
          %v2870 = vshll.u32 %v2758, 16
          %v2872 = vrot.slane %v2870, 5
          %v2873 = vor.u32 %v2869, %v2872
          %v2874 = vrot.slane %v2873, 4
          %v2876 = vshll.u32 %v2759, 16
          %v2878 = vrot.slane %v2876, 5
          %v2879 = vsel %vm1751, %v2874, %v2878
          %v2880 = vshrl.u32 %v2759, 16
          %v2882 = vrot.slane %v2880, 4
          %v2883 = vor.u32 %v2882, %v2878
          %v2884 = vrot.slane %v2883, 4
          %v2886 = vshll.u32 %v2760, 16
          %v2888 = vrot.slane %v2886, 5
          %v2889 = vsel %vm1751, %v2884, %v2888
          %v2891 = vshrl.u32 %v2761, 16
          %v2893 = vrot.slane %v2891, 4
          %v2894 = vshll.u32 %v2761, 16
          %v2896 = vrot.slane %v2894, 5
          %v2897 = vor.u32 %v2893, %v2896
          %v2898 = vrot.slane %v2897, 4
          %v2900 = vshll.u32 %v2762, 16
          %v2902 = vrot.slane %v2900, 5
          %v2903 = vsel %vm1751, %v2898, %v2902
          %v2904 = vshrl.u32 %v2762, 16
          %v2906 = vrot.slane %v2904, 4
          %v2907 = vor.u32 %v2906, %v2902
          %v2908 = vrot.slane %v2907, 4
          %v2910 = vshll.u32 %v2763, 16
          %v2912 = vrot.slane %v2910, 5
          %v2913 = vsel %vm1751, %v2908, %v2912
          %v2915 = vshrl.u32 %v2764, 16
          %v2917 = vrot.slane %v2915, 4
          %v2918 = vshll.u32 %v2764, 16
          %v2920 = vrot.slane %v2918, 5
          %v2921 = vor.u32 %v2917, %v2920
          %v2922 = vrot.slane %v2921, 4
          %v2924 = vshll.u32 %v2765, 16
          %v2926 = vrot.slane %v2924, 5
          %v2927 = vsel %vm1751, %v2922, %v2926
          %v2928 = vshrl.u32 %v2765, 16
          %v2930 = vrot.slane %v2928, 4
          %v2931 = vor.u32 %v2930, %v2926
          %v2932 = vrot.slane %v2931, 4
          %v2934 = vshll.u32 %v2766, 16
          %v2936 = vrot.slane %v2934, 5
          %v2937 = vsel %vm1751, %v2932, %v2936
          %v2939 = vshrl.u32 %v2767, 16
          %v2941 = vrot.slane %v2939, 4
          %v2942 = vshll.u32 %v2767, 16
          %v2944 = vrot.slane %v2942, 5
          %v2945 = vor.u32 %v2941, %v2944
          %v2946 = vrot.slane %v2945, 4
          %v2948 = vshll.u32 %v2768, 16
          %v2950 = vrot.slane %v2948, 5
          %v2951 = vsel %vm1751, %v2946, %v2950
          %v2952 = vshrl.u32 %v2768, 16
          %v2954 = vrot.slane %v2952, 4
          %v2955 = vor.u32 %v2954, %v2950
          %v2956 = vrot.slane %v2955, 4
          %v2958 = vshll.u32 %v2769, 16
          %v2960 = vrot.slane %v2958, 5
          %v2961 = vsel %vm1751, %v2956, %v2960
          %s2962 = scalar_lea.vmem %s3, 160
          %v2963 = vld [vmem:[%s2962] sm:$0xf]
          %v2964 = vld [vmem:[%s2962 + $0x4] sm:$0xf]
          %v2965 = vld [vmem:[%s2962 + $0x8] sm:$0xf]
          %v2966 = vld [vmem:[%s2962 + $0xc] sm:$0xf]
          %v2967 = vld [vmem:[%s2962 + $0x10] sm:$0xf]
          %v2968 = vld [vmem:[%s2962 + $0x14] sm:$0xf]
          %v2969 = vld [vmem:[%s2962 + $0x18] sm:$0xf]
          %v2970 = vld [vmem:[%s2962 + $0x1c] sm:$0xf]
          %v2971 = vunpack.c.l.b16 %v2783
          %v2972 = vunpack.c.l.b16 %v2793
          %v2973 = vunpack.c.l.b16 %v2807
          %v2974 = vunpack.c.l.b16 %v2817
          %v2975 = vunpack.c.l.b16 %v2831
          %v2976 = vunpack.c.l.b16 %v2841
          %v2977 = vunpack.c.l.b16 %v2855
          %v2978 = vunpack.c.l.b16 %v2865
          %v2979 = vunpack.c.l.b16 %v2879
          %v2980 = vunpack.c.l.b16 %v2889
          %v2981 = vunpack.c.l.b16 %v2903
          %v2982 = vunpack.c.l.b16 %v2913
          %v2983 = vunpack.c.l.b16 %v2927
          %v2984 = vunpack.c.l.b16 %v2937
          %v2985 = vunpack.c.l.b16 %v2951
          %v2986 = vunpack.c.l.b16 %v2961
          %v2987 = vpack.c.b16 %v2972, %v2971
          %v2988 = vpack.c.b16 %v2974, %v2973
          %v2989 = vpack.c.b16 %v2976, %v2975
          %v2990 = vpack.c.b16 %v2978, %v2977
          %v2991 = vpack.c.b16 %v2980, %v2979
          %v2992 = vpack.c.b16 %v2982, %v2981
          %v2993 = vpack.c.b16 %v2984, %v2983
          %v2994 = vpack.c.b16 %v2986, %v2985
          %v3003 = vunpack.c.l.b16 %v2963
          %v3004 = vunpack.c.l.b16 %v2964
          %v3005 = vunpack.c.l.b16 %v2965
          %v3006 = vunpack.c.l.b16 %v2966
          %v3007 = vunpack.c.l.b16 %v2967
          %v3008 = vunpack.c.l.b16 %v2968
          %v3009 = vunpack.c.l.b16 %v2969
          %v3010 = vunpack.c.l.b16 %v2970
          %v3011 = vpack.c.b16 %v3004, %v3003
          %v3012 = vpack.c.b16 %v3006, %v3005
          %v3013 = vpack.c.b16 %v3008, %v3007
          %v3014 = vpack.c.b16 %v3010, %v3009
          %v3020 = vsel %vm1434, %v2987, 0
          %v3023 = vsel %vm1434, %v2988, 0
          %v3026 = vsel %vm1434, %v2989, 0
          %v3029 = vsel %vm1434, %v2990, 0
          %v3032 = vsel %vm1434, %v2991, 0
          %v3035 = vsel %vm1434, %v2992, 0
          %v3038 = vsel %vm1434, %v2993, 0
          %v3041 = vsel %vm1434, %v2994, 0
          %3043 = vmatprep.subr.bf16.mxu0 0
          %3044 = vmatpush1.bf16.msra.mxu0 %v3011
          %3045 = vmatprep.subr.bf16.mxu0 0
          %3046 = vmatpush1.bf16.msra.mxu0 %v3012
          %3047 = vmatprep.subr.bf16.mxu0 0
          %3048 = vmatpush1.bf16.msra.mxu0 %v3013
          %3049 = vmatprep.subr.bf16.mxu0 0
          %3050 = vmatpush1.bf16.msra.mxu0 %v3014
          %3051 = vmatprep.subr.bf16.mxu0 0
          %3052 = vmatpush1.bf16.msra.mxu0 0
          %3053 = vmatprep.subr.bf16.mxu0 0
          %3054 = vmatpush1.bf16.msra.mxu0 0
          %3055 = vmatprep.subr.bf16.mxu0 0
          %3056 = vmatpush1.bf16.msra.mxu0 0
          %3057 = vmatprep.subr.bf16.mxu0 0
          %3058 = vmatpush1.bf16.msra.mxu0 0
          %3059 = vmatprep.subr.bf16.mxu0 0
          %3060 = vmatpush1.bf16.msra.mxu0 0
          %3061 = vmatprep.subr.bf16.mxu0 0
          %3062 = vmatpush1.bf16.msra.mxu0 0
          %3063 = vmatprep.subr.bf16.mxu0 0
          %3064 = vmatpush1.bf16.msra.mxu0 0
          %3065 = vmatprep.subr.bf16.mxu0 0
          %3066 = vmatpush1.bf16.msra.mxu0 0
          %3067 = vmatprep.subr.bf16.mxu0 0
          %3068 = vmatpush1.bf16.msra.mxu0 0
          %3069 = vmatprep.subr.bf16.mxu0 0
          %3070 = vmatpush1.bf16.msra.mxu0 0
          %3071 = vmatprep.subr.bf16.mxu0 0
          %3072 = vmatpush1.bf16.msra.mxu0 0
          %3073 = vmatprep.subr.bf16.mxu0 0
          %3074 = vmatpush1.bf16.msra.mxu0 0
          %3075 = vmatprep.mubr.bf16.mxu0 0
          %3076 = vmatmul.mubr.bf16.gmra.mrb[0].mxu0 %v3020
          %v3077 = vpop.f32.mrb[0].mxu0
          %v3078 = vadd.f32 0.0, %v3077
          %v3079 = vpop.f32.mrb[0].mxu0
          %v3080 = vpop.f32.mrb[0].mxu0
          %v3081 = vadd.f32 0.0, %v3080
          %v3082 = vpop.f32.mrb[0].mxu0
          %3083 = vmatprep.mubr.bf16.mxu0 0
          %3084 = vmatmul.mubr.bf16.gmra.mrb[0].mxu0 %v3023
          %v3085 = vpop.f32.mrb[0].mxu0
          %v3086 = vadd.f32 0.0, %v3085
          %v3087 = vpop.f32.mrb[0].mxu0
          %v3088 = vpop.f32.mrb[0].mxu0
          %v3089 = vadd.f32 0.0, %v3088
          %v3090 = vpop.f32.mrb[0].mxu0
          %3091 = vmatprep.mubr.bf16.mxu0 0
          %3092 = vmatmul.mubr.bf16.gmra.mrb[0].mxu0 %v3026
          %v3093 = vpop.f32.mrb[0].mxu0
          %v3094 = vadd.f32 0.0, %v3093
          %v3095 = vpop.f32.mrb[0].mxu0
          %v3096 = vpop.f32.mrb[0].mxu0
          %v3097 = vadd.f32 0.0, %v3096
          %v3098 = vpop.f32.mrb[0].mxu0
          %3099 = vmatprep.mubr.bf16.mxu0 0
          %3100 = vmatmul.mubr.bf16.gmra.mrb[0].mxu0 %v3029
          %v3101 = vpop.f32.mrb[0].mxu0
          %v3102 = vadd.f32 0.0, %v3101
          %v3103 = vpop.f32.mrb[0].mxu0
          %v3104 = vpop.f32.mrb[0].mxu0
          %v3105 = vadd.f32 0.0, %v3104
          %v3106 = vpop.f32.mrb[0].mxu0
          %3107 = vmatprep.mubr.bf16.mxu0 0
          %3108 = vmatmul.mubr.bf16.gmra.mrb[0].mxu0 %v3032
          %v3109 = vpop.f32.mrb[0].mxu0
          %v3110 = vadd.f32 0.0, %v3109
          %v3111 = vpop.f32.mrb[0].mxu0
          %v3112 = vpop.f32.mrb[0].mxu0
          %v3113 = vadd.f32 0.0, %v3112
          %v3114 = vpop.f32.mrb[0].mxu0
          %3115 = vmatprep.mubr.bf16.mxu0 0
          %3116 = vmatmul.mubr.bf16.gmra.mrb[0].mxu0 %v3035
          %v3117 = vpop.f32.mrb[0].mxu0
          %v3118 = vadd.f32 0.0, %v3117
          %v3119 = vpop.f32.mrb[0].mxu0
          %v3120 = vpop.f32.mrb[0].mxu0
          %v3121 = vadd.f32 0.0, %v3120
          %v3122 = vpop.f32.mrb[0].mxu0
          %3123 = vmatprep.mubr.bf16.mxu0 0
          %3124 = vmatmul.mubr.bf16.gmra.mrb[0].mxu0 %v3038
          %v3125 = vpop.f32.mrb[0].mxu0
          %v3126 = vadd.f32 0.0, %v3125
          %v3127 = vpop.f32.mrb[0].mxu0
          %v3128 = vpop.f32.mrb[0].mxu0
          %v3129 = vadd.f32 0.0, %v3128
          %v3130 = vpop.f32.mrb[0].mxu0
          %3131 = vmatprep.mubr.bf16.mxu0 0
          %3132 = vmatmul.mubr.bf16.gmra.mrb[0].mxu0 %v3041
          %v3133 = vpop.f32.mrb[0].mxu0
          %v3134 = vadd.f32 0.0, %v3133
          %v3135 = vpop.f32.mrb[0].mxu0
          %v3136 = vpop.f32.mrb[0].mxu0
          %v3137 = vadd.f32 0.0, %v3136
          %v3138 = vpop.f32.mrb[0].mxu0
          %3139 = vdwg.mxu0
          %v3140 = vadd.f32 %v2730, %v3078
          %v3141 = vadd.f32 %v2731, %v3081
          %v3142 = vadd.f32 %v2732, %v3086
          %v3143 = vadd.f32 %v2733, %v3089
          %v3144 = vadd.f32 %v2734, %v3094
          %v3145 = vadd.f32 %v2735, %v3097
          %v3146 = vadd.f32 %v2736, %v3102
          %v3147 = vadd.f32 %v2737, %v3105
          %v3148 = vadd.f32 %v2738, %v3110
          %v3149 = vadd.f32 %v2739, %v3113
          %v3150 = vadd.f32 %v2740, %v3118
          %v3151 = vadd.f32 %v2741, %v3121
          %v3152 = vadd.f32 %v2742, %v3126
          %v3153 = vadd.f32 %v2743, %v3129
          %v3154 = vadd.f32 %v2744, %v3134
          %v3155 = vadd.f32 %v2745, %v3137
          %s3156 = sadd.s32 %s1147, 2
          %s3157 = smul.u32 %s3156, 4
          %s3158 = smul.addr %s3157, 4
          %s3159 = scalar_lea.vmem [#allocation2], %s3158
          %v3160 = vld [vmem:[%s3159] sm:$0x8]
          %v3161 = vld [vmem:[%s3159 + $0x4] sm:$0xf]
          %v3162 = vld [vmem:[%s3159 + $0x8] sm:$0xf]
          %v3163 = vld [vmem:[%s3159 + $0x10] sm:$0x8]
          %v3164 = vld [vmem:[%s3159 + $0x14] sm:$0xf]
          %v3165 = vld [vmem:[%s3159 + $0x18] sm:$0xf]
          %v3166 = vld [vmem:[%s3159 + $0x20] sm:$0x8]
          %v3167 = vld [vmem:[%s3159 + $0x24] sm:$0xf]
          %v3168 = vld [vmem:[%s3159 + $0x28] sm:$0xf]
          %v3169 = vld [vmem:[%s3159 + $0x30] sm:$0x8]
          %v3170 = vld [vmem:[%s3159 + $0x34] sm:$0xf]
          %v3171 = vld [vmem:[%s3159 + $0x38] sm:$0xf]
          %v3172 = vld [vmem:[%s3159 + $0x40] sm:$0x8]
          %v3173 = vld [vmem:[%s3159 + $0x44] sm:$0xf]
          %v3174 = vld [vmem:[%s3159 + $0x48] sm:$0xf]
          %v3175 = vld [vmem:[%s3159 + $0x50] sm:$0x8]
          %v3176 = vld [vmem:[%s3159 + $0x54] sm:$0xf]
          %v3177 = vld [vmem:[%s3159 + $0x58] sm:$0xf]
          %v3178 = vld [vmem:[%s3159 + $0x60] sm:$0x8]
          %v3179 = vld [vmem:[%s3159 + $0x64] sm:$0xf]
          %v3180 = vld [vmem:[%s3159 + $0x68] sm:$0xf]
          %v3181 = vld [vmem:[%s3159 + $0x70] sm:$0x8]
          %v3182 = vld [vmem:[%s3159 + $0x74] sm:$0xf]
          %v3183 = vld [vmem:[%s3159 + $0x78] sm:$0xf]
          %v3185 = vshrl.u32 %v3160, 16
          %v3187 = vrot.slane %v3185, 7
          %v3188 = vrot.slane %v3187, 4
          %v3190 = vshrl.u32 %v3161, 16
          %v3192 = vrot.slane %v3190, 7
          %v3193 = vshll.u32 %v3161, 16
          %v3195 = vor.u32 %v3192, %v3193
          %v3196 = vsel %vm1176, %v3188, %v3195
          %v3197 = vrot.slane %v3192, 4
          %v3199 = vshrl.u32 %v3162, 16
          %v3201 = vrot.slane %v3199, 7
          %v3202 = vshll.u32 %v3162, 16
          %v3204 = vor.u32 %v3201, %v3202
          %v3205 = vsel %vm1176, %v3197, %v3204
          %v3207 = vshrl.u32 %v3163, 16
          %v3209 = vrot.slane %v3207, 7
          %v3210 = vrot.slane %v3209, 4
          %v3212 = vshrl.u32 %v3164, 16
          %v3214 = vrot.slane %v3212, 7
          %v3215 = vshll.u32 %v3164, 16
          %v3217 = vor.u32 %v3214, %v3215
          %v3218 = vsel %vm1176, %v3210, %v3217
          %v3219 = vrot.slane %v3214, 4
          %v3221 = vshrl.u32 %v3165, 16
          %v3223 = vrot.slane %v3221, 7
          %v3224 = vshll.u32 %v3165, 16
          %v3226 = vor.u32 %v3223, %v3224
          %v3227 = vsel %vm1176, %v3219, %v3226
          %v3229 = vshrl.u32 %v3166, 16
          %v3231 = vrot.slane %v3229, 7
          %v3232 = vrot.slane %v3231, 4
          %v3234 = vshrl.u32 %v3167, 16
          %v3236 = vrot.slane %v3234, 7
          %v3237 = vshll.u32 %v3167, 16
          %v3239 = vor.u32 %v3236, %v3237
          %v3240 = vsel %vm1176, %v3232, %v3239
          %v3241 = vrot.slane %v3236, 4
          %v3243 = vshrl.u32 %v3168, 16
          %v3245 = vrot.slane %v3243, 7
          %v3246 = vshll.u32 %v3168, 16
          %v3248 = vor.u32 %v3245, %v3246
          %v3249 = vsel %vm1176, %v3241, %v3248
          %v3251 = vshrl.u32 %v3169, 16
          %v3253 = vrot.slane %v3251, 7
          %v3254 = vrot.slane %v3253, 4
          %v3256 = vshrl.u32 %v3170, 16
          %v3258 = vrot.slane %v3256, 7
          %v3259 = vshll.u32 %v3170, 16
          %v3261 = vor.u32 %v3258, %v3259
          %v3262 = vsel %vm1176, %v3254, %v3261
          %v3263 = vrot.slane %v3258, 4
          %v3265 = vshrl.u32 %v3171, 16
          %v3267 = vrot.slane %v3265, 7
          %v3268 = vshll.u32 %v3171, 16
          %v3270 = vor.u32 %v3267, %v3268
          %v3271 = vsel %vm1176, %v3263, %v3270
          %v3273 = vshrl.u32 %v3172, 16
          %v3275 = vrot.slane %v3273, 7
          %v3276 = vrot.slane %v3275, 4
          %v3278 = vshrl.u32 %v3173, 16
          %v3280 = vrot.slane %v3278, 7
          %v3281 = vshll.u32 %v3173, 16
          %v3283 = vor.u32 %v3280, %v3281
          %v3284 = vsel %vm1176, %v3276, %v3283
          %v3285 = vrot.slane %v3280, 4
          %v3287 = vshrl.u32 %v3174, 16
          %v3289 = vrot.slane %v3287, 7
          %v3290 = vshll.u32 %v3174, 16
          %v3292 = vor.u32 %v3289, %v3290
          %v3293 = vsel %vm1176, %v3285, %v3292
          %v3295 = vshrl.u32 %v3175, 16
          %v3297 = vrot.slane %v3295, 7
          %v3298 = vrot.slane %v3297, 4
          %v3300 = vshrl.u32 %v3176, 16
          %v3302 = vrot.slane %v3300, 7
          %v3303 = vshll.u32 %v3176, 16
          %v3305 = vor.u32 %v3302, %v3303
          %v3306 = vsel %vm1176, %v3298, %v3305
          %v3307 = vrot.slane %v3302, 4
          %v3309 = vshrl.u32 %v3177, 16
          %v3311 = vrot.slane %v3309, 7
          %v3312 = vshll.u32 %v3177, 16
          %v3314 = vor.u32 %v3311, %v3312
          %v3315 = vsel %vm1176, %v3307, %v3314
          %v3317 = vshrl.u32 %v3178, 16
          %v3319 = vrot.slane %v3317, 7
          %v3320 = vrot.slane %v3319, 4
          %v3322 = vshrl.u32 %v3179, 16
          %v3324 = vrot.slane %v3322, 7
          %v3325 = vshll.u32 %v3179, 16
          %v3327 = vor.u32 %v3324, %v3325
          %v3328 = vsel %vm1176, %v3320, %v3327
          %v3329 = vrot.slane %v3324, 4
          %v3331 = vshrl.u32 %v3180, 16
          %v3333 = vrot.slane %v3331, 7
          %v3334 = vshll.u32 %v3180, 16
          %v3336 = vor.u32 %v3333, %v3334
          %v3337 = vsel %vm1176, %v3329, %v3336
          %v3339 = vshrl.u32 %v3181, 16
          %v3341 = vrot.slane %v3339, 7
          %v3342 = vrot.slane %v3341, 4
          %v3344 = vshrl.u32 %v3182, 16
          %v3346 = vrot.slane %v3344, 7
          %v3347 = vshll.u32 %v3182, 16
          %v3349 = vor.u32 %v3346, %v3347
          %v3350 = vsel %vm1176, %v3342, %v3349
          %v3351 = vrot.slane %v3346, 4
          %v3353 = vshrl.u32 %v3183, 16
          %v3355 = vrot.slane %v3353, 7
          %v3356 = vshll.u32 %v3183, 16
          %v3358 = vor.u32 %v3355, %v3356
          %v3359 = vsel %vm1176, %v3351, %v3358
          %s3360 = scalar_lea.vmem %s3, 192
          %v3361 = vld [vmem:[%s3360] sm:$0xf]
          %v3362 = vld [vmem:[%s3360 + $0x4] sm:$0xf]
          %v3363 = vld [vmem:[%s3360 + $0x8] sm:$0xf]
          %v3364 = vld [vmem:[%s3360 + $0xc] sm:$0xf]
          %v3365 = vld [vmem:[%s3360 + $0x10] sm:$0xf]
          %v3366 = vld [vmem:[%s3360 + $0x14] sm:$0xf]
          %v3367 = vld [vmem:[%s3360 + $0x18] sm:$0xf]
          %v3368 = vld [vmem:[%s3360 + $0x1c] sm:$0xf]
          %v3369 = vunpack.c.l.b16 %v3196
          %v3370 = vunpack.c.l.b16 %v3205
          %v3371 = vunpack.c.l.b16 %v3218
          %v3372 = vunpack.c.l.b16 %v3227
          %v3373 = vunpack.c.l.b16 %v3240
          %v3374 = vunpack.c.l.b16 %v3249
          %v3375 = vunpack.c.l.b16 %v3262
          %v3376 = vunpack.c.l.b16 %v3271
          %v3377 = vunpack.c.l.b16 %v3284
          %v3378 = vunpack.c.l.b16 %v3293
          %v3379 = vunpack.c.l.b16 %v3306
          %v3380 = vunpack.c.l.b16 %v3315
          %v3381 = vunpack.c.l.b16 %v3328
          %v3382 = vunpack.c.l.b16 %v3337
          %v3383 = vunpack.c.l.b16 %v3350
          %v3384 = vunpack.c.l.b16 %v3359
          %v3385 = vpack.c.b16 %v3370, %v3369
          %v3386 = vpack.c.b16 %v3372, %v3371
          %v3387 = vpack.c.b16 %v3374, %v3373
          %v3388 = vpack.c.b16 %v3376, %v3375
          %v3389 = vpack.c.b16 %v3378, %v3377
          %v3390 = vpack.c.b16 %v3380, %v3379
          %v3391 = vpack.c.b16 %v3382, %v3381
          %v3392 = vpack.c.b16 %v3384, %v3383
          %v3401 = vunpack.c.l.b16 %v3361
          %v3402 = vunpack.c.l.b16 %v3362
          %v3403 = vunpack.c.l.b16 %v3363
          %v3404 = vunpack.c.l.b16 %v3364
          %v3405 = vunpack.c.l.b16 %v3365
          %v3406 = vunpack.c.l.b16 %v3366
          %v3407 = vunpack.c.l.b16 %v3367
          %v3408 = vunpack.c.l.b16 %v3368
          %v3409 = vpack.c.b16 %v3402, %v3401
          %v3410 = vpack.c.b16 %v3404, %v3403
          %v3411 = vpack.c.b16 %v3406, %v3405
          %v3412 = vpack.c.b16 %v3408, %v3407
          %v3418 = vsel %vm1434, %v3385, 0
          %v3421 = vsel %vm1434, %v3386, 0
          %v3424 = vsel %vm1434, %v3387, 0
          %v3427 = vsel %vm1434, %v3388, 0
          %v3430 = vsel %vm1434, %v3389, 0
          %v3433 = vsel %vm1434, %v3390, 0
          %v3436 = vsel %vm1434, %v3391, 0
          %v3439 = vsel %vm1434, %v3392, 0
          %3441 = vmatprep.subr.bf16.mxu0 0
          %3442 = vmatpush1.bf16.msra.mxu0 %v3409
          %3443 = vmatprep.subr.bf16.mxu0 0
          %3444 = vmatpush1.bf16.msra.mxu0 %v3410
          %3445 = vmatprep.subr.bf16.mxu0 0
          %3446 = vmatpush1.bf16.msra.mxu0 %v3411
          %3447 = vmatprep.subr.bf16.mxu0 0
          %3448 = vmatpush1.bf16.msra.mxu0 %v3412
          %3449 = vmatprep.subr.bf16.mxu0 0
          %3450 = vmatpush1.bf16.msra.mxu0 0
          %3451 = vmatprep.subr.bf16.mxu0 0
          %3452 = vmatpush1.bf16.msra.mxu0 0
          %3453 = vmatprep.subr.bf16.mxu0 0
          %3454 = vmatpush1.bf16.msra.mxu0 0
          %3455 = vmatprep.subr.bf16.mxu0 0
          %3456 = vmatpush1.bf16.msra.mxu0 0
          %3457 = vmatprep.subr.bf16.mxu0 0
          %3458 = vmatpush1.bf16.msra.mxu0 0
          %3459 = vmatprep.subr.bf16.mxu0 0
          %3460 = vmatpush1.bf16.msra.mxu0 0
          %3461 = vmatprep.subr.bf16.mxu0 0
          %3462 = vmatpush1.bf16.msra.mxu0 0
          %3463 = vmatprep.subr.bf16.mxu0 0
          %3464 = vmatpush1.bf16.msra.mxu0 0
          %3465 = vmatprep.subr.bf16.mxu0 0
          %3466 = vmatpush1.bf16.msra.mxu0 0
          %3467 = vmatprep.subr.bf16.mxu0 0
          %3468 = vmatpush1.bf16.msra.mxu0 0
          %3469 = vmatprep.subr.bf16.mxu0 0
          %3470 = vmatpush1.bf16.msra.mxu0 0
          %3471 = vmatprep.subr.bf16.mxu0 0
          %3472 = vmatpush1.bf16.msra.mxu0 0
          %3473 = vmatprep.mubr.bf16.mxu0 0
          %3474 = vmatmul.mubr.bf16.gmra.mrb[0].mxu0 %v3418
          %v3475 = vpop.f32.mrb[0].mxu0
          %v3476 = vadd.f32 0.0, %v3475
          %v3477 = vpop.f32.mrb[0].mxu0
          %v3478 = vpop.f32.mrb[0].mxu0
          %v3479 = vadd.f32 0.0, %v3478
          %v3480 = vpop.f32.mrb[0].mxu0
          %3481 = vmatprep.mubr.bf16.mxu0 0
          %3482 = vmatmul.mubr.bf16.gmra.mrb[0].mxu0 %v3421
          %v3483 = vpop.f32.mrb[0].mxu0
          %v3484 = vadd.f32 0.0, %v3483
          %v3485 = vpop.f32.mrb[0].mxu0
          %v3486 = vpop.f32.mrb[0].mxu0
          %v3487 = vadd.f32 0.0, %v3486
          %v3488 = vpop.f32.mrb[0].mxu0
          %3489 = vmatprep.mubr.bf16.mxu0 0
          %3490 = vmatmul.mubr.bf16.gmra.mrb[0].mxu0 %v3424
          %v3491 = vpop.f32.mrb[0].mxu0
          %v3492 = vadd.f32 0.0, %v3491
          %v3493 = vpop.f32.mrb[0].mxu0
          %v3494 = vpop.f32.mrb[0].mxu0
          %v3495 = vadd.f32 0.0, %v3494
          %v3496 = vpop.f32.mrb[0].mxu0
          %3497 = vmatprep.mubr.bf16.mxu0 0
          %3498 = vmatmul.mubr.bf16.gmra.mrb[0].mxu0 %v3427
          %v3499 = vpop.f32.mrb[0].mxu0
          %v3500 = vadd.f32 0.0, %v3499
          %v3501 = vpop.f32.mrb[0].mxu0
          %v3502 = vpop.f32.mrb[0].mxu0
          %v3503 = vadd.f32 0.0, %v3502
          %v3504 = vpop.f32.mrb[0].mxu0
          %3505 = vmatprep.mubr.bf16.mxu0 0
          %3506 = vmatmul.mubr.bf16.gmra.mrb[0].mxu0 %v3430
          %v3507 = vpop.f32.mrb[0].mxu0
          %v3508 = vadd.f32 0.0, %v3507
          %v3509 = vpop.f32.mrb[0].mxu0
          %v3510 = vpop.f32.mrb[0].mxu0
          %v3511 = vadd.f32 0.0, %v3510
          %v3512 = vpop.f32.mrb[0].mxu0
          %3513 = vmatprep.mubr.bf16.mxu0 0
          %3514 = vmatmul.mubr.bf16.gmra.mrb[0].mxu0 %v3433
          %v3515 = vpop.f32.mrb[0].mxu0
          %v3516 = vadd.f32 0.0, %v3515
          %v3517 = vpop.f32.mrb[0].mxu0
          %v3518 = vpop.f32.mrb[0].mxu0
          %v3519 = vadd.f32 0.0, %v3518
          %v3520 = vpop.f32.mrb[0].mxu0
          %3521 = vmatprep.mubr.bf16.mxu0 0
          %3522 = vmatmul.mubr.bf16.gmra.mrb[0].mxu0 %v3436
          %v3523 = vpop.f32.mrb[0].mxu0
          %v3524 = vadd.f32 0.0, %v3523
          %v3525 = vpop.f32.mrb[0].mxu0
          %v3526 = vpop.f32.mrb[0].mxu0
          %v3527 = vadd.f32 0.0, %v3526
          %v3528 = vpop.f32.mrb[0].mxu0
          %3529 = vmatprep.mubr.bf16.mxu0 0
          %3530 = vmatmul.mubr.bf16.gmra.mrb[0].mxu0 %v3439
          %v3531 = vpop.f32.mrb[0].mxu0
          %v3532 = vadd.f32 0.0, %v3531
          %v3533 = vpop.f32.mrb[0].mxu0
          %v3534 = vpop.f32.mrb[0].mxu0
          %v3535 = vadd.f32 0.0, %v3534
          %v3536 = vpop.f32.mrb[0].mxu0
          %3537 = vdwg.mxu0
          %v3538 = vadd.f32 %v3140, %v3476
          %v3539 = vadd.f32 %v3141, %v3479
          %v3540 = vadd.f32 %v3142, %v3484
          %v3541 = vadd.f32 %v3143, %v3487
          %v3542 = vadd.f32 %v3144, %v3492
          %v3543 = vadd.f32 %v3145, %v3495
          %v3544 = vadd.f32 %v3146, %v3500
          %v3545 = vadd.f32 %v3147, %v3503
          %v3546 = vadd.f32 %v3148, %v3508
          %v3547 = vadd.f32 %v3149, %v3511
          %v3548 = vadd.f32 %v3150, %v3516
          %v3549 = vadd.f32 %v3151, %v3519
          %v3550 = vadd.f32 %v3152, %v3524
          %v3551 = vadd.f32 %v3153, %v3527
          %v3552 = vadd.f32 %v3154, %v3532
          %v3553 = vadd.f32 %v3155, %v3535
          %s3554 = scalar_lea.vmem %s3, 224
          %v3555 = vld [vmem:[%s3554] sm:$0xf]
          %v3556 = vld [vmem:[%s3554 + $0x4] sm:$0xf]
          %v3557 = vld [vmem:[%s3554 + $0x8] sm:$0xf]
          %v3558 = vld [vmem:[%s3554 + $0xc] sm:$0xf]
          %v3559 = vld [vmem:[%s3554 + $0x10] sm:$0xf]
          %v3560 = vld [vmem:[%s3554 + $0x14] sm:$0xf]
          %v3561 = vld [vmem:[%s3554 + $0x18] sm:$0xf]
          %v3562 = vld [vmem:[%s3554 + $0x1c] sm:$0xf]
          %v3579 = vunpack.c.l.b16 %v3161
          %v3580 = vunpack.c.l.b16 %v3162
          %v3581 = vunpack.c.l.b16 %v3164
          %v3582 = vunpack.c.l.b16 %v3165
          %v3583 = vunpack.c.l.b16 %v3167
          %v3584 = vunpack.c.l.b16 %v3168
          %v3585 = vunpack.c.l.b16 %v3170
          %v3586 = vunpack.c.l.b16 %v3171
          %v3587 = vunpack.c.l.b16 %v3173
          %v3588 = vunpack.c.l.b16 %v3174
          %v3589 = vunpack.c.l.b16 %v3176
          %v3590 = vunpack.c.l.b16 %v3177
          %v3591 = vunpack.c.l.b16 %v3179
          %v3592 = vunpack.c.l.b16 %v3180
          %v3593 = vunpack.c.l.b16 %v3182
          %v3594 = vunpack.c.l.b16 %v3183
          %v3595 = vpack.c.b16 %v3580, %v3579
          %v3596 = vpack.c.b16 %v3582, %v3581
          %v3597 = vpack.c.b16 %v3584, %v3583
          %v3598 = vpack.c.b16 %v3586, %v3585
          %v3599 = vpack.c.b16 %v3588, %v3587
          %v3600 = vpack.c.b16 %v3590, %v3589
          %v3601 = vpack.c.b16 %v3592, %v3591
          %v3602 = vpack.c.b16 %v3594, %v3593
          %v3611 = vunpack.c.l.b16 %v3555
          %v3612 = vunpack.c.l.b16 %v3556
          %v3613 = vunpack.c.l.b16 %v3557
          %v3614 = vunpack.c.l.b16 %v3558
          %v3615 = vunpack.c.l.b16 %v3559
          %v3616 = vunpack.c.l.b16 %v3560
          %v3617 = vunpack.c.l.b16 %v3561
          %v3618 = vunpack.c.l.b16 %v3562
          %v3619 = vpack.c.b16 %v3612, %v3611
          %v3620 = vpack.c.b16 %v3614, %v3613
          %v3621 = vpack.c.b16 %v3616, %v3615
          %v3622 = vpack.c.b16 %v3618, %v3617
          %v3628 = vsel %vm1434, %v3595, 0
          %v3631 = vsel %vm1434, %v3596, 0
          %v3634 = vsel %vm1434, %v3597, 0
          %v3637 = vsel %vm1434, %v3598, 0
          %v3640 = vsel %vm1434, %v3599, 0
          %v3643 = vsel %vm1434, %v3600, 0
          %v3646 = vsel %vm1434, %v3601, 0
          %v3649 = vsel %vm1434, %v3602, 0
          %3651 = vmatprep.subr.bf16.mxu0 0
          %3652 = vmatpush1.bf16.msra.mxu0 %v3619
          %3653 = vmatprep.subr.bf16.mxu0 0
          %3654 = vmatpush1.bf16.msra.mxu0 %v3620
          %3655 = vmatprep.subr.bf16.mxu0 0
          %3656 = vmatpush1.bf16.msra.mxu0 %v3621
          %3657 = vmatprep.subr.bf16.mxu0 0
          %3658 = vmatpush1.bf16.msra.mxu0 %v3622
          %3659 = vmatprep.subr.bf16.mxu0 0
          %3660 = vmatpush1.bf16.msra.mxu0 0
          %3661 = vmatprep.subr.bf16.mxu0 0
          %3662 = vmatpush1.bf16.msra.mxu0 0
          %3663 = vmatprep.subr.bf16.mxu0 0
          %3664 = vmatpush1.bf16.msra.mxu0 0
          %3665 = vmatprep.subr.bf16.mxu0 0
          %3666 = vmatpush1.bf16.msra.mxu0 0
          %3667 = vmatprep.subr.bf16.mxu0 0
          %3668 = vmatpush1.bf16.msra.mxu0 0
          %3669 = vmatprep.subr.bf16.mxu0 0
          %3670 = vmatpush1.bf16.msra.mxu0 0
          %3671 = vmatprep.subr.bf16.mxu0 0
          %3672 = vmatpush1.bf16.msra.mxu0 0
          %3673 = vmatprep.subr.bf16.mxu0 0
          %3674 = vmatpush1.bf16.msra.mxu0 0
          %3675 = vmatprep.subr.bf16.mxu0 0
          %3676 = vmatpush1.bf16.msra.mxu0 0
          %3677 = vmatprep.subr.bf16.mxu0 0
          %3678 = vmatpush1.bf16.msra.mxu0 0
          %3679 = vmatprep.subr.bf16.mxu0 0
          %3680 = vmatpush1.bf16.msra.mxu0 0
          %3681 = vmatprep.subr.bf16.mxu0 0
          %3682 = vmatpush1.bf16.msra.mxu0 0
          %3683 = vmatprep.mubr.bf16.mxu0 0
          %3684 = vmatmul.mubr.bf16.gmra.mrb[0].mxu0 %v3628
          %v3685 = vpop.f32.mrb[0].mxu0
          %v3686 = vadd.f32 0.0, %v3685
          %v3687 = vpop.f32.mrb[0].mxu0
          %v3688 = vpop.f32.mrb[0].mxu0
          %v3689 = vadd.f32 0.0, %v3688
          %v3690 = vpop.f32.mrb[0].mxu0
          %3691 = vmatprep.mubr.bf16.mxu0 0
          %3692 = vmatmul.mubr.bf16.gmra.mrb[0].mxu0 %v3631
          %v3693 = vpop.f32.mrb[0].mxu0
          %v3694 = vadd.f32 0.0, %v3693
          %v3695 = vpop.f32.mrb[0].mxu0
          %v3696 = vpop.f32.mrb[0].mxu0
          %v3697 = vadd.f32 0.0, %v3696
          %v3698 = vpop.f32.mrb[0].mxu0
          %3699 = vmatprep.mubr.bf16.mxu0 0
          %3700 = vmatmul.mubr.bf16.gmra.mrb[0].mxu0 %v3634
          %v3701 = vpop.f32.mrb[0].mxu0
          %v3702 = vadd.f32 0.0, %v3701
          %v3703 = vpop.f32.mrb[0].mxu0
          %v3704 = vpop.f32.mrb[0].mxu0
          %v3705 = vadd.f32 0.0, %v3704
          %v3706 = vpop.f32.mrb[0].mxu0
          %3707 = vmatprep.mubr.bf16.mxu0 0
          %3708 = vmatmul.mubr.bf16.gmra.mrb[0].mxu0 %v3637
          %v3709 = vpop.f32.mrb[0].mxu0
          %v3710 = vadd.f32 0.0, %v3709
          %v3711 = vpop.f32.mrb[0].mxu0
          %v3712 = vpop.f32.mrb[0].mxu0
          %v3713 = vadd.f32 0.0, %v3712
          %v3714 = vpop.f32.mrb[0].mxu0
          %3715 = vmatprep.mubr.bf16.mxu0 0
          %3716 = vmatmul.mubr.bf16.gmra.mrb[0].mxu0 %v3640
          %v3717 = vpop.f32.mrb[0].mxu0
          %v3718 = vadd.f32 0.0, %v3717
          %v3719 = vpop.f32.mrb[0].mxu0
          %v3720 = vpop.f32.mrb[0].mxu0
          %v3721 = vadd.f32 0.0, %v3720
          %v3722 = vpop.f32.mrb[0].mxu0
          %3723 = vmatprep.mubr.bf16.mxu0 0
          %3724 = vmatmul.mubr.bf16.gmra.mrb[0].mxu0 %v3643
          %v3725 = vpop.f32.mrb[0].mxu0
          %v3726 = vadd.f32 0.0, %v3725
          %v3727 = vpop.f32.mrb[0].mxu0
          %v3728 = vpop.f32.mrb[0].mxu0
          %v3729 = vadd.f32 0.0, %v3728
          %v3730 = vpop.f32.mrb[0].mxu0
          %3731 = vmatprep.mubr.bf16.mxu0 0
          %3732 = vmatmul.mubr.bf16.gmra.mrb[0].mxu0 %v3646
          %v3733 = vpop.f32.mrb[0].mxu0
          %v3734 = vadd.f32 0.0, %v3733
          %v3735 = vpop.f32.mrb[0].mxu0
          %v3736 = vpop.f32.mrb[0].mxu0
          %v3737 = vadd.f32 0.0, %v3736
          %v3738 = vpop.f32.mrb[0].mxu0
          %3739 = vmatprep.mubr.bf16.mxu0 0
          %3740 = vmatmul.mubr.bf16.gmra.mrb[0].mxu0 %v3649
          %v3741 = vpop.f32.mrb[0].mxu0
          %v3742 = vadd.f32 0.0, %v3741
          %v3743 = vpop.f32.mrb[0].mxu0
          %v3744 = vpop.f32.mrb[0].mxu0
          %v3745 = vadd.f32 0.0, %v3744
          %v3746 = vpop.f32.mrb[0].mxu0
          %3747 = vdwg.mxu0
          %v3748 = vadd.f32 %v3538, %v3686
          %v3749 = vadd.f32 %v3539, %v3689
          %v3750 = vadd.f32 %v3540, %v3694
          %v3751 = vadd.f32 %v3541, %v3697
          %v3752 = vadd.f32 %v3542, %v3702
          %v3753 = vadd.f32 %v3543, %v3705
          %v3754 = vadd.f32 %v3544, %v3710
          %v3755 = vadd.f32 %v3545, %v3713
          %v3756 = vadd.f32 %v3546, %v3718
          %v3757 = vadd.f32 %v3547, %v3721
          %v3758 = vadd.f32 %v3548, %v3726
          %v3759 = vadd.f32 %v3549, %v3729
          %v3760 = vadd.f32 %v3550, %v3734
          %v3761 = vadd.f32 %v3551, %v3737
          %v3762 = vadd.f32 %v3552, %v3742
          %v3763 = vadd.f32 %v3553, %v3745
          %v3764 = vld [vmem:[%s3159 + $0x4] sm:$0xf]
          %v3765 = vld [vmem:[%s3159 + $0x8] sm:$0xf]
          %v3766 = vld [vmem:[%s3159 + $0xc] sm:$0x1]
          %v3767 = vld [vmem:[%s3159 + $0x14] sm:$0xf]
          %v3768 = vld [vmem:[%s3159 + $0x18] sm:$0xf]
          %v3769 = vld [vmem:[%s3159 + $0x1c] sm:$0x1]
          %v3770 = vld [vmem:[%s3159 + $0x24] sm:$0xf]
          %v3771 = vld [vmem:[%s3159 + $0x28] sm:$0xf]
          %v3772 = vld [vmem:[%s3159 + $0x2c] sm:$0x1]
          %v3773 = vld [vmem:[%s3159 + $0x34] sm:$0xf]
          %v3774 = vld [vmem:[%s3159 + $0x38] sm:$0xf]
          %v3775 = vld [vmem:[%s3159 + $0x3c] sm:$0x1]
          %v3776 = vld [vmem:[%s3159 + $0x44] sm:$0xf]
          %v3777 = vld [vmem:[%s3159 + $0x48] sm:$0xf]
          %v3778 = vld [vmem:[%s3159 + $0x4c] sm:$0x1]
          %v3779 = vld [vmem:[%s3159 + $0x54] sm:$0xf]
          %v3780 = vld [vmem:[%s3159 + $0x58] sm:$0xf]
          %v3781 = vld [vmem:[%s3159 + $0x5c] sm:$0x1]
          %v3782 = vld [vmem:[%s3159 + $0x64] sm:$0xf]
          %v3783 = vld [vmem:[%s3159 + $0x68] sm:$0xf]
          %v3784 = vld [vmem:[%s3159 + $0x6c] sm:$0x1]
          %v3785 = vld [vmem:[%s3159 + $0x74] sm:$0xf]
          %v3786 = vld [vmem:[%s3159 + $0x78] sm:$0xf]
          %v3787 = vld [vmem:[%s3159 + $0x7c] sm:$0x1]
          %v3789 = vshrl.u32 %v3764, 16
          %v3791 = vrot.slane %v3789, 4
          %v3792 = vshll.u32 %v3764, 16
          %v3794 = vrot.slane %v3792, 5
          %v3795 = vor.u32 %v3791, %v3794
          %v3796 = vrot.slane %v3795, 4
          %v3798 = vshll.u32 %v3765, 16
          %v3800 = vrot.slane %v3798, 5
          %v3801 = vsel %vm1751, %v3796, %v3800
          %v3802 = vshrl.u32 %v3765, 16
          %v3804 = vrot.slane %v3802, 4
          %v3805 = vor.u32 %v3804, %v3800
          %v3806 = vrot.slane %v3805, 4
          %v3808 = vshll.u32 %v3766, 16
          %v3810 = vrot.slane %v3808, 5
          %v3811 = vsel %vm1751, %v3806, %v3810
          %v3813 = vshrl.u32 %v3767, 16
          %v3815 = vrot.slane %v3813, 4
          %v3816 = vshll.u32 %v3767, 16
          %v3818 = vrot.slane %v3816, 5
          %v3819 = vor.u32 %v3815, %v3818
          %v3820 = vrot.slane %v3819, 4
          %v3822 = vshll.u32 %v3768, 16
          %v3824 = vrot.slane %v3822, 5
          %v3825 = vsel %vm1751, %v3820, %v3824
          %v3826 = vshrl.u32 %v3768, 16
          %v3828 = vrot.slane %v3826, 4
          %v3829 = vor.u32 %v3828, %v3824
          %v3830 = vrot.slane %v3829, 4
          %v3832 = vshll.u32 %v3769, 16
          %v3834 = vrot.slane %v3832, 5
          %v3835 = vsel %vm1751, %v3830, %v3834
          %v3837 = vshrl.u32 %v3770, 16
          %v3839 = vrot.slane %v3837, 4
          %v3840 = vshll.u32 %v3770, 16
          %v3842 = vrot.slane %v3840, 5
          %v3843 = vor.u32 %v3839, %v3842
          %v3844 = vrot.slane %v3843, 4
          %v3846 = vshll.u32 %v3771, 16
          %v3848 = vrot.slane %v3846, 5
          %v3849 = vsel %vm1751, %v3844, %v3848
          %v3850 = vshrl.u32 %v3771, 16
          %v3852 = vrot.slane %v3850, 4
          %v3853 = vor.u32 %v3852, %v3848
          %v3854 = vrot.slane %v3853, 4
          %v3856 = vshll.u32 %v3772, 16
          %v3858 = vrot.slane %v3856, 5
          %v3859 = vsel %vm1751, %v3854, %v3858
          %v3861 = vshrl.u32 %v3773, 16
          %v3863 = vrot.slane %v3861, 4
          %v3864 = vshll.u32 %v3773, 16
          %v3866 = vrot.slane %v3864, 5
          %v3867 = vor.u32 %v3863, %v3866
          %v3868 = vrot.slane %v3867, 4
          %v3870 = vshll.u32 %v3774, 16
          %v3872 = vrot.slane %v3870, 5
          %v3873 = vsel %vm1751, %v3868, %v3872
          %v3874 = vshrl.u32 %v3774, 16
          %v3876 = vrot.slane %v3874, 4
          %v3877 = vor.u32 %v3876, %v3872
          %v3878 = vrot.slane %v3877, 4
          %v3880 = vshll.u32 %v3775, 16
          %v3882 = vrot.slane %v3880, 5
          %v3883 = vsel %vm1751, %v3878, %v3882
          %v3885 = vshrl.u32 %v3776, 16
          %v3887 = vrot.slane %v3885, 4
          %v3888 = vshll.u32 %v3776, 16
          %v3890 = vrot.slane %v3888, 5
          %v3891 = vor.u32 %v3887, %v3890
          %v3892 = vrot.slane %v3891, 4
          %v3894 = vshll.u32 %v3777, 16
          %v3896 = vrot.slane %v3894, 5
          %v3897 = vsel %vm1751, %v3892, %v3896
          %v3898 = vshrl.u32 %v3777, 16
          %v3900 = vrot.slane %v3898, 4
          %v3901 = vor.u32 %v3900, %v3896
          %v3902 = vrot.slane %v3901, 4
          %v3904 = vshll.u32 %v3778, 16
          %v3906 = vrot.slane %v3904, 5
          %v3907 = vsel %vm1751, %v3902, %v3906
          %v3909 = vshrl.u32 %v3779, 16
          %v3911 = vrot.slane %v3909, 4
          %v3912 = vshll.u32 %v3779, 16
          %v3914 = vrot.slane %v3912, 5
          %v3915 = vor.u32 %v3911, %v3914
          %v3916 = vrot.slane %v3915, 4
          %v3918 = vshll.u32 %v3780, 16
          %v3920 = vrot.slane %v3918, 5
          %v3921 = vsel %vm1751, %v3916, %v3920
          %v3922 = vshrl.u32 %v3780, 16
          %v3924 = vrot.slane %v3922, 4
          %v3925 = vor.u32 %v3924, %v3920
          %v3926 = vrot.slane %v3925, 4
          %v3928 = vshll.u32 %v3781, 16
          %v3930 = vrot.slane %v3928, 5
          %v3931 = vsel %vm1751, %v3926, %v3930
          %v3933 = vshrl.u32 %v3782, 16
          %v3935 = vrot.slane %v3933, 4
          %v3936 = vshll.u32 %v3782, 16
          %v3938 = vrot.slane %v3936, 5
          %v3939 = vor.u32 %v3935, %v3938
          %v3940 = vrot.slane %v3939, 4
          %v3942 = vshll.u32 %v3783, 16
          %v3944 = vrot.slane %v3942, 5
          %v3945 = vsel %vm1751, %v3940, %v3944
          %v3946 = vshrl.u32 %v3783, 16
          %v3948 = vrot.slane %v3946, 4
          %v3949 = vor.u32 %v3948, %v3944
          %v3950 = vrot.slane %v3949, 4
          %v3952 = vshll.u32 %v3784, 16
          %v3954 = vrot.slane %v3952, 5
          %v3955 = vsel %vm1751, %v3950, %v3954
          %v3957 = vshrl.u32 %v3785, 16
          %v3959 = vrot.slane %v3957, 4
          %v3960 = vshll.u32 %v3785, 16
          %v3962 = vrot.slane %v3960, 5
          %v3963 = vor.u32 %v3959, %v3962
          %v3964 = vrot.slane %v3963, 4
          %v3966 = vshll.u32 %v3786, 16
          %v3968 = vrot.slane %v3966, 5
          %v3969 = vsel %vm1751, %v3964, %v3968
          %v3970 = vshrl.u32 %v3786, 16
          %v3972 = vrot.slane %v3970, 4
          %v3973 = vor.u32 %v3972, %v3968
          %v3974 = vrot.slane %v3973, 4
          %v3976 = vshll.u32 %v3787, 16
          %v3978 = vrot.slane %v3976, 5
          %v3979 = vsel %vm1751, %v3974, %v3978
          %s3980 = scalar_lea.vmem %s3, 256
          %v3981 = vld [vmem:[%s3980] sm:$0xf]
          %v3982 = vld [vmem:[%s3980 + $0x4] sm:$0xf]
          %v3983 = vld [vmem:[%s3980 + $0x8] sm:$0xf]
          %v3984 = vld [vmem:[%s3980 + $0xc] sm:$0xf]
          %v3985 = vld [vmem:[%s3980 + $0x10] sm:$0xf]
          %v3986 = vld [vmem:[%s3980 + $0x14] sm:$0xf]
          %v3987 = vld [vmem:[%s3980 + $0x18] sm:$0xf]
          %v3988 = vld [vmem:[%s3980 + $0x1c] sm:$0xf]
          %v3989 = vunpack.c.l.b16 %v3801
          %v3990 = vunpack.c.l.b16 %v3811
          %v3991 = vunpack.c.l.b16 %v3825
          %v3992 = vunpack.c.l.b16 %v3835
          %v3993 = vunpack.c.l.b16 %v3849
          %v3994 = vunpack.c.l.b16 %v3859
          %v3995 = vunpack.c.l.b16 %v3873
          %v3996 = vunpack.c.l.b16 %v3883
          %v3997 = vunpack.c.l.b16 %v3897
          %v3998 = vunpack.c.l.b16 %v3907
          %v3999 = vunpack.c.l.b16 %v3921
          %v4000 = vunpack.c.l.b16 %v3931
          %v4001 = vunpack.c.l.b16 %v3945
          %v4002 = vunpack.c.l.b16 %v3955
          %v4003 = vunpack.c.l.b16 %v3969
          %v4004 = vunpack.c.l.b16 %v3979
          %v4005 = vpack.c.b16 %v3990, %v3989
          %v4006 = vpack.c.b16 %v3992, %v3991
          %v4007 = vpack.c.b16 %v3994, %v3993
          %v4008 = vpack.c.b16 %v3996, %v3995
          %v4009 = vpack.c.b16 %v3998, %v3997
          %v4010 = vpack.c.b16 %v4000, %v3999
          %v4011 = vpack.c.b16 %v4002, %v4001
          %v4012 = vpack.c.b16 %v4004, %v4003
          %v4021 = vunpack.c.l.b16 %v3981
          %v4022 = vunpack.c.l.b16 %v3982
          %v4023 = vunpack.c.l.b16 %v3983
          %v4024 = vunpack.c.l.b16 %v3984
          %v4025 = vunpack.c.l.b16 %v3985
          %v4026 = vunpack.c.l.b16 %v3986
          %v4027 = vunpack.c.l.b16 %v3987
          %v4028 = vunpack.c.l.b16 %v3988
          %v4029 = vpack.c.b16 %v4022, %v4021
          %v4030 = vpack.c.b16 %v4024, %v4023
          %v4031 = vpack.c.b16 %v4026, %v4025
          %v4032 = vpack.c.b16 %v4028, %v4027
          %v4038 = vsel %vm1434, %v4005, 0
          %v4041 = vsel %vm1434, %v4006, 0
          %v4044 = vsel %vm1434, %v4007, 0
          %v4047 = vsel %vm1434, %v4008, 0
          %v4050 = vsel %vm1434, %v4009, 0
          %v4053 = vsel %vm1434, %v4010, 0
          %v4056 = vsel %vm1434, %v4011, 0
          %v4059 = vsel %vm1434, %v4012, 0
          %4061 = vmatprep.subr.bf16.mxu0 0
          %4062 = vmatpush1.bf16.msra.mxu0 %v4029
          %4063 = vmatprep.subr.bf16.mxu0 0
          %4064 = vmatpush1.bf16.msra.mxu0 %v4030
          %4065 = vmatprep.subr.bf16.mxu0 0
          %4066 = vmatpush1.bf16.msra.mxu0 %v4031
          %4067 = vmatprep.subr.bf16.mxu0 0
          %4068 = vmatpush1.bf16.msra.mxu0 %v4032
          %4069 = vmatprep.subr.bf16.mxu0 0
          %4070 = vmatpush1.bf16.msra.mxu0 0
          %4071 = vmatprep.subr.bf16.mxu0 0
          %4072 = vmatpush1.bf16.msra.mxu0 0
          %4073 = vmatprep.subr.bf16.mxu0 0
          %4074 = vmatpush1.bf16.msra.mxu0 0
          %4075 = vmatprep.subr.bf16.mxu0 0
          %4076 = vmatpush1.bf16.msra.mxu0 0
          %4077 = vmatprep.subr.bf16.mxu0 0
          %4078 = vmatpush1.bf16.msra.mxu0 0
          %4079 = vmatprep.subr.bf16.mxu0 0
          %4080 = vmatpush1.bf16.msra.mxu0 0
          %4081 = vmatprep.subr.bf16.mxu0 0
          %4082 = vmatpush1.bf16.msra.mxu0 0
          %4083 = vmatprep.subr.bf16.mxu0 0
          %4084 = vmatpush1.bf16.msra.mxu0 0
          %4085 = vmatprep.subr.bf16.mxu0 0
          %4086 = vmatpush1.bf16.msra.mxu0 0
          %4087 = vmatprep.subr.bf16.mxu0 0
          %4088 = vmatpush1.bf16.msra.mxu0 0
          %4089 = vmatprep.subr.bf16.mxu0 0
          %4090 = vmatpush1.bf16.msra.mxu0 0
          %4091 = vmatprep.subr.bf16.mxu0 0
          %4092 = vmatpush1.bf16.msra.mxu0 0
          %4093 = vmatprep.mubr.bf16.mxu0 0
          %4094 = vmatmul.mubr.bf16.gmra.mrb[0].mxu0 %v4038
          %v4095 = vpop.f32.mrb[0].mxu0
          %v4096 = vadd.f32 0.0, %v4095
          %v4097 = vpop.f32.mrb[0].mxu0
          %v4098 = vpop.f32.mrb[0].mxu0
          %v4099 = vadd.f32 0.0, %v4098
          %v4100 = vpop.f32.mrb[0].mxu0
          %4101 = vmatprep.mubr.bf16.mxu0 0
          %4102 = vmatmul.mubr.bf16.gmra.mrb[0].mxu0 %v4041
          %v4103 = vpop.f32.mrb[0].mxu0
          %v4104 = vadd.f32 0.0, %v4103
          %v4105 = vpop.f32.mrb[0].mxu0
          %v4106 = vpop.f32.mrb[0].mxu0
          %v4107 = vadd.f32 0.0, %v4106
          %v4108 = vpop.f32.mrb[0].mxu0
          %4109 = vmatprep.mubr.bf16.mxu0 0
          %4110 = vmatmul.mubr.bf16.gmra.mrb[0].mxu0 %v4044
          %v4111 = vpop.f32.mrb[0].mxu0
          %v4112 = vadd.f32 0.0, %v4111
          %v4113 = vpop.f32.mrb[0].mxu0
          %v4114 = vpop.f32.mrb[0].mxu0
          %v4115 = vadd.f32 0.0, %v4114
          %v4116 = vpop.f32.mrb[0].mxu0
          %4117 = vmatprep.mubr.bf16.mxu0 0
          %4118 = vmatmul.mubr.bf16.gmra.mrb[0].mxu0 %v4047
          %v4119 = vpop.f32.mrb[0].mxu0
          %v4120 = vadd.f32 0.0, %v4119
          %v4121 = vpop.f32.mrb[0].mxu0
          %v4122 = vpop.f32.mrb[0].mxu0
          %v4123 = vadd.f32 0.0, %v4122
          %v4124 = vpop.f32.mrb[0].mxu0
          %4125 = vmatprep.mubr.bf16.mxu0 0
          %4126 = vmatmul.mubr.bf16.gmra.mrb[0].mxu0 %v4050
          %v4127 = vpop.f32.mrb[0].mxu0
          %v4128 = vadd.f32 0.0, %v4127
          %v4129 = vpop.f32.mrb[0].mxu0
          %v4130 = vpop.f32.mrb[0].mxu0
          %v4131 = vadd.f32 0.0, %v4130
          %v4132 = vpop.f32.mrb[0].mxu0
          %4133 = vmatprep.mubr.bf16.mxu0 0
          %4134 = vmatmul.mubr.bf16.gmra.mrb[0].mxu0 %v4053
          %v4135 = vpop.f32.mrb[0].mxu0
          %v4136 = vadd.f32 0.0, %v4135
          %v4137 = vpop.f32.mrb[0].mxu0
          %v4138 = vpop.f32.mrb[0].mxu0
          %v4139 = vadd.f32 0.0, %v4138
          %v4140 = vpop.f32.mrb[0].mxu0
          %4141 = vmatprep.mubr.bf16.mxu0 0
          %4142 = vmatmul.mubr.bf16.gmra.mrb[0].mxu0 %v4056
          %v4143 = vpop.f32.mrb[0].mxu0
          %v4144 = vadd.f32 0.0, %v4143
          %v4145 = vpop.f32.mrb[0].mxu0
          %v4146 = vpop.f32.mrb[0].mxu0
          %v4147 = vadd.f32 0.0, %v4146
          %v4148 = vpop.f32.mrb[0].mxu0
          %4149 = vmatprep.mubr.bf16.mxu0 0
          %4150 = vmatmul.mubr.bf16.gmra.mrb[0].mxu0 %v4059
          %v4151 = vpop.f32.mrb[0].mxu0
          %v4152 = vadd.f32 0.0, %v4151
          %v4153 = vpop.f32.mrb[0].mxu0
          %v4154 = vpop.f32.mrb[0].mxu0
          %v4155 = vadd.f32 0.0, %v4154
          %v4156 = vpop.f32.mrb[0].mxu0
          %4157 = vdwg.mxu0
          %v4158 = vadd.f32 %v3748, %v4096
          %v4159 = vadd.f32 %v3749, %v4099
          %v4160 = vadd.f32 %v3750, %v4104
          %v4161 = vadd.f32 %v3751, %v4107
          %v4162 = vadd.f32 %v3752, %v4112
          %v4163 = vadd.f32 %v3753, %v4115
          %v4164 = vadd.f32 %v3754, %v4120
          %v4165 = vadd.f32 %v3755, %v4123
          %v4166 = vadd.f32 %v3756, %v4128
          %v4167 = vadd.f32 %v3757, %v4131
          %v4168 = vadd.f32 %v3758, %v4136
          %v4169 = vadd.f32 %v3759, %v4139
          %v4170 = vadd.f32 %v3760, %v4144
          %v4171 = vadd.f32 %v3761, %v4147
          %v4172 = vadd.f32 %v3762, %v4152
          %v4173 = vadd.f32 %v3763, %v4155
          %v4174 = vld [vmem:[%s4] sm:$0x1]
          %v4176 = vlaneseq
          %v4177 = vshrl.u32 %v4176, 7
          %v4178 = vsub.s32 0, %v4177
          %v4179 = vrot.slane %v4174, %v4178
          %v4181 = vadd.f32 %v4158, %v4179
          %v4182 = vadd.f32 %v4159, %v4179
          %v4183 = vadd.f32 %v4160, %v4179
          %v4184 = vadd.f32 %v4161, %v4179
          %v4185 = vadd.f32 %v4162, %v4179
          %v4186 = vadd.f32 %v4163, %v4179
          %v4187 = vadd.f32 %v4164, %v4179
          %v4188 = vadd.f32 %v4165, %v4179
          %v4189 = vadd.f32 %v4166, %v4179
          %v4190 = vadd.f32 %v4167, %v4179
          %v4191 = vadd.f32 %v4168, %v4179
          %v4192 = vadd.f32 %v4169, %v4179
          %v4193 = vadd.f32 %v4170, %v4179
          %v4194 = vadd.f32 %v4171, %v4179
          %v4195 = vadd.f32 %v4172, %v4179
          %v4196 = vadd.f32 %v4173, %v4179
          %v4197 = vmul.f32 %v4181, 0.1
          %v4198 = vmul.f32 %v4182, 0.1
          %v4199 = vmul.f32 %v4183, 0.1
          %v4200 = vmul.f32 %v4184, 0.1
          %v4201 = vmul.f32 %v4185, 0.1
          %v4202 = vmul.f32 %v4186, 0.1
          %v4203 = vmul.f32 %v4187, 0.1
          %v4204 = vmul.f32 %v4188, 0.1
          %v4205 = vmul.f32 %v4189, 0.1
          %v4206 = vmul.f32 %v4190, 0.1
          %v4207 = vmul.f32 %v4191, 0.1
          %v4208 = vmul.f32 %v4192, 0.1
          %v4209 = vmul.f32 %v4193, 0.1
          %v4210 = vmul.f32 %v4194, 0.1
          %v4211 = vmul.f32 %v4195, 0.1
          %v4212 = vmul.f32 %v4196, 0.1
          %v4213 = vmax.f32 %v4181, %v4197
          %v4214 = vmax.f32 %v4182, %v4198
          %v4215 = vmax.f32 %v4183, %v4199
          %v4216 = vmax.f32 %v4184, %v4200
          %v4217 = vmax.f32 %v4185, %v4201
          %v4218 = vmax.f32 %v4186, %v4202
          %v4219 = vmax.f32 %v4187, %v4203
          %v4220 = vmax.f32 %v4188, %v4204
          %v4221 = vmax.f32 %v4189, %v4205
          %v4222 = vmax.f32 %v4190, %v4206
          %v4223 = vmax.f32 %v4191, %v4207
          %v4224 = vmax.f32 %v4192, %v4208
          %v4225 = vmax.f32 %v4193, %v4209
          %v4226 = vmax.f32 %v4194, %v4210
          %v4227 = vmax.f32 %v4195, %v4211
          %v4228 = vmax.f32 %v4196, %v4212
          %v4229 = vpack.c.bf16 %v4214, %v4213
          %v4230 = vpack.c.bf16 %v4216, %v4215
          %v4231 = vpack.c.bf16 %v4218, %v4217
          %v4232 = vpack.c.bf16 %v4220, %v4219
          %v4233 = vpack.c.bf16 %v4222, %v4221
          %v4234 = vpack.c.bf16 %v4224, %v4223
          %v4235 = vpack.c.bf16 %v4226, %v4225
          %v4236 = vpack.c.bf16 %v4228, %v4227
          %v4237 = vld [vmem:[%s5] sm:$0xf]
          %v4238 = vld [vmem:[%s5 + $0x4] sm:$0xf]
          %v4239 = vld [vmem:[%s5 + $0x8] sm:$0xf]
          %v4240 = vld [vmem:[%s5 + $0xc] sm:$0xf]
          %v4241 = vld [vmem:[%s5 + $0x10] sm:$0xf]
          %v4242 = vld [vmem:[%s5 + $0x14] sm:$0xf]
          %v4243 = vld [vmem:[%s5 + $0x18] sm:$0xf]
          %v4244 = vld [vmem:[%s5 + $0x1c] sm:$0xf]
          %v4245 = vld [vmem:[%s5 + $0x20] sm:$0xf]
          %v4246 = vld [vmem:[%s5 + $0x24] sm:$0xf]
          %v4247 = vld [vmem:[%s5 + $0x28] sm:$0xf]
          %v4248 = vld [vmem:[%s5 + $0x2c] sm:$0xf]
          %v4249 = vld [vmem:[%s5 + $0x30] sm:$0xf]
          %v4250 = vld [vmem:[%s5 + $0x34] sm:$0xf]
          %v4251 = vld [vmem:[%s5 + $0x38] sm:$0xf]
          %v4252 = vld [vmem:[%s5 + $0x3c] sm:$0xf]
          %v4253 = vld [vmem:[%s6] sm:$0x1]
          %v4255 = vlaneseq
          %v4256 = vshrl.u32 %v4255, 7
          %v4257 = vsub.s32 0, %v4256
          %v4258 = vrot.slane %v4253, %v4257
          %v4276 = vunpack.c.l.b16 %v4237
          %v4277 = vunpack.c.l.b16 %v4238
          %v4278 = vunpack.c.l.b16 %v4239
          %v4279 = vunpack.c.l.b16 %v4240
          %v4280 = vunpack.c.l.b16 %v4241
          %v4281 = vunpack.c.l.b16 %v4242
          %v4282 = vunpack.c.l.b16 %v4243
          %v4283 = vunpack.c.l.b16 %v4244
          %v4284 = vunpack.c.l.b16 %v4245
          %v4285 = vunpack.c.l.b16 %v4246
          %v4286 = vunpack.c.l.b16 %v4247
          %v4287 = vunpack.c.l.b16 %v4248
          %v4288 = vunpack.c.l.b16 %v4249
          %v4289 = vunpack.c.l.b16 %v4250
          %v4290 = vunpack.c.l.b16 %v4251
          %v4291 = vunpack.c.l.b16 %v4252
          %v4292 = vpack.c.b16 %v4277, %v4276
          %v4293 = vpack.c.b16 %v4279, %v4278
          %v4294 = vpack.c.b16 %v4281, %v4280
          %v4295 = vpack.c.b16 %v4283, %v4282
          %v4296 = vpack.c.b16 %v4285, %v4284
          %v4297 = vpack.c.b16 %v4287, %v4286
          %v4298 = vpack.c.b16 %v4289, %v4288
          %v4299 = vpack.c.b16 %v4291, %v4290
          %4308 = vmatprep.subr.bf16.mxu0 0
          %4309 = vmatpush1.bf16.msra.mxu0 %v4292
          %4310 = vmatprep.subr.bf16.mxu0 0
          %4311 = vmatpush1.bf16.msra.mxu0 %v4293
          %4312 = vmatprep.subr.bf16.mxu0 0
          %4313 = vmatpush1.bf16.msra.mxu0 %v4294
          %4314 = vmatprep.subr.bf16.mxu0 0
          %4315 = vmatpush1.bf16.msra.mxu0 %v4295
          %4316 = vmatprep.subr.bf16.mxu0 0
          %4317 = vmatpush1.bf16.msra.mxu0 %v4296
          %4318 = vmatprep.subr.bf16.mxu0 0
          %4319 = vmatpush1.bf16.msra.mxu0 %v4297
          %4320 = vmatprep.subr.bf16.mxu0 0
          %4321 = vmatpush1.bf16.msra.mxu0 %v4298
          %4322 = vmatprep.subr.bf16.mxu0 0
          %4323 = vmatpush1.bf16.msra.mxu0 %v4299
          %4324 = vmatprep.subr.bf16.mxu0 0
          %4325 = vmatpush1.bf16.msra.mxu0 0
          %4326 = vmatprep.subr.bf16.mxu0 0
          %4327 = vmatpush1.bf16.msra.mxu0 0
          %4328 = vmatprep.subr.bf16.mxu0 0
          %4329 = vmatpush1.bf16.msra.mxu0 0
          %4330 = vmatprep.subr.bf16.mxu0 0
          %4331 = vmatpush1.bf16.msra.mxu0 0
          %4332 = vmatprep.subr.bf16.mxu0 0
          %4333 = vmatpush1.bf16.msra.mxu0 0
          %4334 = vmatprep.subr.bf16.mxu0 0
          %4335 = vmatpush1.bf16.msra.mxu0 0
          %4336 = vmatprep.subr.bf16.mxu0 0
          %4337 = vmatpush1.bf16.msra.mxu0 0
          %4338 = vmatprep.subr.bf16.mxu0 0
          %4339 = vmatpush1.bf16.msra.mxu0 0
          %4340 = vmatprep.mubr.bf16.mxu0 0
          %4341 = vmatmul.mubr.bf16.gmra.mrb[0].mxu0 %v4229
          %v4342 = vpop.f32.mrb[0].mxu0
          %v4343 = vadd.f32 %v4258, %v4342
          %v4344 = vpop.f32.mrb[0].mxu0
          %v4345 = vpop.f32.mrb[0].mxu0
          %v4346 = vadd.f32 %v4258, %v4345
          %v4347 = vpop.f32.mrb[0].mxu0
          %4348 = vmatprep.mubr.bf16.mxu0 0
          %4349 = vmatmul.mubr.bf16.gmra.mrb[0].mxu0 %v4230
          %v4350 = vpop.f32.mrb[0].mxu0
          %v4351 = vadd.f32 %v4258, %v4350
          %v4352 = vpop.f32.mrb[0].mxu0
          %v4353 = vpop.f32.mrb[0].mxu0
          %v4354 = vadd.f32 %v4258, %v4353
          %v4355 = vpop.f32.mrb[0].mxu0
          %4356 = vmatprep.mubr.bf16.mxu0 0
          %4357 = vmatmul.mubr.bf16.gmra.mrb[0].mxu0 %v4231
          %v4358 = vpop.f32.mrb[0].mxu0
          %v4359 = vadd.f32 %v4258, %v4358
          %v4360 = vpop.f32.mrb[0].mxu0
          %v4361 = vpop.f32.mrb[0].mxu0
          %v4362 = vadd.f32 %v4258, %v4361
          %v4363 = vpop.f32.mrb[0].mxu0
          %4364 = vmatprep.mubr.bf16.mxu0 0
          %4365 = vmatmul.mubr.bf16.gmra.mrb[0].mxu0 %v4232
          %v4366 = vpop.f32.mrb[0].mxu0
          %v4367 = vadd.f32 %v4258, %v4366
          %v4368 = vpop.f32.mrb[0].mxu0
          %v4369 = vpop.f32.mrb[0].mxu0
          %v4370 = vadd.f32 %v4258, %v4369
          %v4371 = vpop.f32.mrb[0].mxu0
          %4372 = vmatprep.mubr.bf16.mxu0 0
          %4373 = vmatmul.mubr.bf16.gmra.mrb[0].mxu0 %v4233
          %v4374 = vpop.f32.mrb[0].mxu0
          %v4375 = vadd.f32 %v4258, %v4374
          %v4376 = vpop.f32.mrb[0].mxu0
          %v4377 = vpop.f32.mrb[0].mxu0
          %v4378 = vadd.f32 %v4258, %v4377
          %v4379 = vpop.f32.mrb[0].mxu0
          %4380 = vmatprep.mubr.bf16.mxu0 0
          %4381 = vmatmul.mubr.bf16.gmra.mrb[0].mxu0 %v4234
          %v4382 = vpop.f32.mrb[0].mxu0
          %v4383 = vadd.f32 %v4258, %v4382
          %v4384 = vpop.f32.mrb[0].mxu0
          %v4385 = vpop.f32.mrb[0].mxu0
          %v4386 = vadd.f32 %v4258, %v4385
          %v4387 = vpop.f32.mrb[0].mxu0
          %4388 = vmatprep.mubr.bf16.mxu0 0
          %4389 = vmatmul.mubr.bf16.gmra.mrb[0].mxu0 %v4235
          %v4390 = vpop.f32.mrb[0].mxu0
          %v4391 = vadd.f32 %v4258, %v4390
          %v4392 = vpop.f32.mrb[0].mxu0
          %v4393 = vpop.f32.mrb[0].mxu0
          %v4394 = vadd.f32 %v4258, %v4393
          %v4395 = vpop.f32.mrb[0].mxu0
          %4396 = vmatprep.mubr.bf16.mxu0 0
          %4397 = vmatmul.mubr.bf16.gmra.mrb[0].mxu0 %v4236
          %v4398 = vpop.f32.mrb[0].mxu0
          %v4399 = vadd.f32 %v4258, %v4398
          %v4400 = vpop.f32.mrb[0].mxu0
          %v4401 = vpop.f32.mrb[0].mxu0
          %v4402 = vadd.f32 %v4258, %v4401
          %v4403 = vpop.f32.mrb[0].mxu0
          %4404 = vdwg.mxu0
          %v4405 = vmul.f32 %v4343, 0.1
          %v4406 = vmul.f32 %v4346, 0.1
          %v4407 = vmul.f32 %v4351, 0.1
          %v4408 = vmul.f32 %v4354, 0.1
          %v4409 = vmul.f32 %v4359, 0.1
          %v4410 = vmul.f32 %v4362, 0.1
          %v4411 = vmul.f32 %v4367, 0.1
          %v4412 = vmul.f32 %v4370, 0.1
          %v4413 = vmul.f32 %v4375, 0.1
          %v4414 = vmul.f32 %v4378, 0.1
          %v4415 = vmul.f32 %v4383, 0.1
          %v4416 = vmul.f32 %v4386, 0.1
          %v4417 = vmul.f32 %v4391, 0.1
          %v4418 = vmul.f32 %v4394, 0.1
          %v4419 = vmul.f32 %v4399, 0.1
          %v4420 = vmul.f32 %v4402, 0.1
          %v4421 = vmax.f32 %v4343, %v4405
          %v4422 = vmax.f32 %v4346, %v4406
          %v4423 = vmax.f32 %v4351, %v4407
          %v4424 = vmax.f32 %v4354, %v4408
          %v4425 = vmax.f32 %v4359, %v4409
          %v4426 = vmax.f32 %v4362, %v4410
          %v4427 = vmax.f32 %v4367, %v4411
          %v4428 = vmax.f32 %v4370, %v4412
          %v4429 = vmax.f32 %v4375, %v4413
          %v4430 = vmax.f32 %v4378, %v4414
          %v4431 = vmax.f32 %v4383, %v4415
          %v4432 = vmax.f32 %v4386, %v4416
          %v4433 = vmax.f32 %v4391, %v4417
          %v4434 = vmax.f32 %v4394, %v4418
          %v4435 = vmax.f32 %v4399, %v4419
          %v4436 = vmax.f32 %v4402, %v4420
          %v4437 = vpack.c.bf16 %v4422, %v4421
          %v4438 = vpack.c.bf16 %v4424, %v4423
          %v4439 = vpack.c.bf16 %v4426, %v4425
          %v4440 = vpack.c.bf16 %v4428, %v4427
          %v4441 = vpack.c.bf16 %v4430, %v4429
          %v4442 = vpack.c.bf16 %v4432, %v4431
          %v4443 = vpack.c.bf16 %v4434, %v4433
          %v4444 = vpack.c.bf16 %v4436, %v4435
          %v4453 = vunpack.c.l.b16 %v4437
          %v4454 = vunpack.c.h.b16 %v4437
          %v4455 = vunpack.c.l.b16 %v4438
          %v4456 = vunpack.c.h.b16 %v4438
          %v4457 = vunpack.c.l.b16 %v4439
          %v4458 = vunpack.c.h.b16 %v4439
          %v4459 = vunpack.c.l.b16 %v4440
          %v4460 = vunpack.c.h.b16 %v4440
          %v4461 = vunpack.c.l.b16 %v4441
          %v4462 = vunpack.c.h.b16 %v4441
          %v4463 = vunpack.c.l.b16 %v4442
          %v4464 = vunpack.c.h.b16 %v4442
          %v4465 = vunpack.c.l.b16 %v4443
          %v4466 = vunpack.c.h.b16 %v4443
          %v4467 = vunpack.c.l.b16 %v4444
          %v4468 = vunpack.c.h.b16 %v4444
          %v4469 = vpack.c.b16 %v4453, %v4453
          %v4470 = vpack.c.b16 %v4454, %v4454
          %v4471 = vpack.c.b16 %v4455, %v4455
          %v4472 = vpack.c.b16 %v4456, %v4456
          %v4473 = vpack.c.b16 %v4457, %v4457
          %v4474 = vpack.c.b16 %v4458, %v4458
          %v4475 = vpack.c.b16 %v4459, %v4459
          %v4476 = vpack.c.b16 %v4460, %v4460
          %v4477 = vpack.c.b16 %v4461, %v4461
          %v4478 = vpack.c.b16 %v4462, %v4462
          %v4479 = vpack.c.b16 %v4463, %v4463
          %v4480 = vpack.c.b16 %v4464, %v4464
          %v4481 = vpack.c.b16 %v4465, %v4465
          %v4482 = vpack.c.b16 %v4466, %v4466
          %v4483 = vpack.c.b16 %v4467, %v4467
          %v4484 = vpack.c.b16 %v4468, %v4468
          %s4501 = smul.addr %s2139, 4
          %s4502 = scalar_lea.vmem [#allocation3], %s4501
          %4503 = vst.msk [vmem:[%s4502 + $0x4] sm:$0xf] %vm386, %v4469
          %4504 = vst.msk [vmem:[%s4502 + $0x8] sm:$0xf] %vm386, %v4470
          %4505 = vst.msk [vmem:[%s4502 + $0x14] sm:$0xf] %vm386, %v4471
          %4506 = vst.msk [vmem:[%s4502 + $0x18] sm:$0xf] %vm386, %v4472
          %4507 = vst.msk [vmem:[%s4502 + $0x24] sm:$0xf] %vm386, %v4473
          %4508 = vst.msk [vmem:[%s4502 + $0x28] sm:$0xf] %vm386, %v4474
          %4509 = vst.msk [vmem:[%s4502 + $0x34] sm:$0xf] %vm386, %v4475
          %4510 = vst.msk [vmem:[%s4502 + $0x38] sm:$0xf] %vm386, %v4476
          %4511 = vst.msk [vmem:[%s4502 + $0x44] sm:$0xf] %vm386, %v4477
          %4512 = vst.msk [vmem:[%s4502 + $0x48] sm:$0xf] %vm386, %v4478
          %4513 = vst.msk [vmem:[%s4502 + $0x54] sm:$0xf] %vm386, %v4479
          %4514 = vst.msk [vmem:[%s4502 + $0x58] sm:$0xf] %vm386, %v4480
          %4515 = vst.msk [vmem:[%s4502 + $0x64] sm:$0xf] %vm386, %v4481
          %4516 = vst.msk [vmem:[%s4502 + $0x68] sm:$0xf] %vm386, %v4482
          %4517 = vst.msk [vmem:[%s4502 + $0x74] sm:$0xf] %vm386, %v4483
          %4518 = vst.msk [vmem:[%s4502 + $0x78] sm:$0xf] %vm386, %v4484
        $region69: #{topdown_layer.1} parent=63 // loop_footer
          %s1146 = sadd.s32 1, %s1142
        $region70: #{topdown_layer.1} parent=63 // loop_footer_branch
          %1141 = sbr.rel target = $region66
        $region71: #{topdown_layer.1} parent=63 // loop_exit
          _
        loop: start=0, step=1, limit=2
        $region72: #{topdown_layer.1} parent=63 // loop_pre_header
          _
        $region73: #{topdown_layer.1} parent=63 // loop_header
          %s4520 = sphi 0, %s4524
          %p4521 = scmp.ge.s32.totalorder %s4520, 2
        $region74: #{topdown_layer.1} parent=63 // loop_header_branch
          %4523 = sbr.rel (%p4521) target = $region78
        $region75: #{topdown_layer.1} parent=63 // loop_body
          %s4525 = smul.u32 %s4520, 8
          %s4526 = smul.u32 %s4525, 4
          %s4527 = smul.addr %s4526, 4
          %s4528 = scalar_lea.vmem [#allocation3], %s4527
          %v4529 = vld [vmem:[%s4528] sm:$0x8]
          %v4530 = vld [vmem:[%s4528 + $0x4] sm:$0xf]
          %v4531 = vld [vmem:[%s4528 + $0x8] sm:$0xf]
          %v4532 = vld [vmem:[%s4528 + $0x10] sm:$0x8]
          %v4533 = vld [vmem:[%s4528 + $0x14] sm:$0xf]
          %v4534 = vld [vmem:[%s4528 + $0x18] sm:$0xf]
          %v4535 = vld [vmem:[%s4528 + $0x20] sm:$0x8]
          %v4536 = vld [vmem:[%s4528 + $0x24] sm:$0xf]
          %v4537 = vld [vmem:[%s4528 + $0x28] sm:$0xf]
          %v4538 = vld [vmem:[%s4528 + $0x30] sm:$0x8]
          %v4539 = vld [vmem:[%s4528 + $0x34] sm:$0xf]
          %v4540 = vld [vmem:[%s4528 + $0x38] sm:$0xf]
          %v4541 = vld [vmem:[%s4528 + $0x40] sm:$0x8]
          %v4542 = vld [vmem:[%s4528 + $0x44] sm:$0xf]
          %v4543 = vld [vmem:[%s4528 + $0x48] sm:$0xf]
          %v4544 = vld [vmem:[%s4528 + $0x50] sm:$0x8]
          %v4545 = vld [vmem:[%s4528 + $0x54] sm:$0xf]
          %v4546 = vld [vmem:[%s4528 + $0x58] sm:$0xf]
          %v4547 = vld [vmem:[%s4528 + $0x60] sm:$0x8]
          %v4548 = vld [vmem:[%s4528 + $0x64] sm:$0xf]
          %v4549 = vld [vmem:[%s4528 + $0x68] sm:$0xf]
          %v4550 = vld [vmem:[%s4528 + $0x70] sm:$0x8]
          %v4551 = vld [vmem:[%s4528 + $0x74] sm:$0xf]
          %v4552 = vld [vmem:[%s4528 + $0x78] sm:$0xf]
          %vm4553 = vsmask.f32 4368
          %vm4554 = vmor %vm391, %vm4553
          %v4556 = vshrl.u32 %v4529, 16
          %v4558 = vrot.slane %v4556, 7
          %v4559 = vrot.slane %v4558, 4
          %v4561 = vshrl.u32 %v4530, 16
          %v4563 = vrot.slane %v4561, 7
          %v4564 = vshll.u32 %v4530, 16
          %v4566 = vor.u32 %v4563, %v4564
          %v4567 = vsel %vm4554, %v4559, %v4566
          %v4568 = vrot.slane %v4563, 4
          %v4570 = vshrl.u32 %v4531, 16
          %v4572 = vrot.slane %v4570, 7
          %v4573 = vshll.u32 %v4531, 16
          %v4575 = vor.u32 %v4572, %v4573
          %v4576 = vsel %vm4554, %v4568, %v4575
          %v4578 = vshrl.u32 %v4532, 16
          %v4580 = vrot.slane %v4578, 7
          %v4581 = vrot.slane %v4580, 4
          %v4583 = vshrl.u32 %v4533, 16
          %v4585 = vrot.slane %v4583, 7
          %v4586 = vshll.u32 %v4533, 16
          %v4588 = vor.u32 %v4585, %v4586
          %v4589 = vsel %vm4554, %v4581, %v4588
          %v4590 = vrot.slane %v4585, 4
          %v4592 = vshrl.u32 %v4534, 16
          %v4594 = vrot.slane %v4592, 7
          %v4595 = vshll.u32 %v4534, 16
          %v4597 = vor.u32 %v4594, %v4595
          %v4598 = vsel %vm4554, %v4590, %v4597
          %v4600 = vshrl.u32 %v4535, 16
          %v4602 = vrot.slane %v4600, 7
          %v4603 = vrot.slane %v4602, 4
          %v4605 = vshrl.u32 %v4536, 16
          %v4607 = vrot.slane %v4605, 7
          %v4608 = vshll.u32 %v4536, 16
          %v4610 = vor.u32 %v4607, %v4608
          %v4611 = vsel %vm4554, %v4603, %v4610
          %v4612 = vrot.slane %v4607, 4
          %v4614 = vshrl.u32 %v4537, 16
          %v4616 = vrot.slane %v4614, 7
          %v4617 = vshll.u32 %v4537, 16
          %v4619 = vor.u32 %v4616, %v4617
          %v4620 = vsel %vm4554, %v4612, %v4619
          %v4622 = vshrl.u32 %v4538, 16
          %v4624 = vrot.slane %v4622, 7
          %v4625 = vrot.slane %v4624, 4
          %v4627 = vshrl.u32 %v4539, 16
          %v4629 = vrot.slane %v4627, 7
          %v4630 = vshll.u32 %v4539, 16
          %v4632 = vor.u32 %v4629, %v4630
          %v4633 = vsel %vm4554, %v4625, %v4632
          %v4634 = vrot.slane %v4629, 4
          %v4636 = vshrl.u32 %v4540, 16
          %v4638 = vrot.slane %v4636, 7
          %v4639 = vshll.u32 %v4540, 16
          %v4641 = vor.u32 %v4638, %v4639
          %v4642 = vsel %vm4554, %v4634, %v4641
          %v4644 = vshrl.u32 %v4541, 16
          %v4646 = vrot.slane %v4644, 7
          %v4647 = vrot.slane %v4646, 4
          %v4649 = vshrl.u32 %v4542, 16
          %v4651 = vrot.slane %v4649, 7
          %v4652 = vshll.u32 %v4542, 16
          %v4654 = vor.u32 %v4651, %v4652
          %v4655 = vsel %vm4554, %v4647, %v4654
          %v4656 = vrot.slane %v4651, 4
          %v4658 = vshrl.u32 %v4543, 16
          %v4660 = vrot.slane %v4658, 7
          %v4661 = vshll.u32 %v4543, 16
          %v4663 = vor.u32 %v4660, %v4661
          %v4664 = vsel %vm4554, %v4656, %v4663
          %v4666 = vshrl.u32 %v4544, 16
          %v4668 = vrot.slane %v4666, 7
          %v4669 = vrot.slane %v4668, 4
          %v4671 = vshrl.u32 %v4545, 16
          %v4673 = vrot.slane %v4671, 7
          %v4674 = vshll.u32 %v4545, 16
          %v4676 = vor.u32 %v4673, %v4674
          %v4677 = vsel %vm4554, %v4669, %v4676
          %v4678 = vrot.slane %v4673, 4
          %v4680 = vshrl.u32 %v4546, 16
          %v4682 = vrot.slane %v4680, 7
          %v4683 = vshll.u32 %v4546, 16
          %v4685 = vor.u32 %v4682, %v4683
          %v4686 = vsel %vm4554, %v4678, %v4685
          %v4688 = vshrl.u32 %v4547, 16
          %v4690 = vrot.slane %v4688, 7
          %v4691 = vrot.slane %v4690, 4
          %v4693 = vshrl.u32 %v4548, 16
          %v4695 = vrot.slane %v4693, 7
          %v4696 = vshll.u32 %v4548, 16
          %v4698 = vor.u32 %v4695, %v4696
          %v4699 = vsel %vm4554, %v4691, %v4698
          %v4700 = vrot.slane %v4695, 4
          %v4702 = vshrl.u32 %v4549, 16
          %v4704 = vrot.slane %v4702, 7
          %v4705 = vshll.u32 %v4549, 16
          %v4707 = vor.u32 %v4704, %v4705
          %v4708 = vsel %vm4554, %v4700, %v4707
          %v4710 = vshrl.u32 %v4550, 16
          %v4712 = vrot.slane %v4710, 7
          %v4713 = vrot.slane %v4712, 4
          %v4715 = vshrl.u32 %v4551, 16
          %v4717 = vrot.slane %v4715, 7
          %v4718 = vshll.u32 %v4551, 16
          %v4720 = vor.u32 %v4717, %v4718
          %v4721 = vsel %vm4554, %v4713, %v4720
          %v4722 = vrot.slane %v4717, 4
          %v4724 = vshrl.u32 %v4552, 16
          %v4726 = vrot.slane %v4724, 7
          %v4727 = vshll.u32 %v4552, 16
          %v4729 = vor.u32 %v4726, %v4727
          %v4730 = vsel %vm4554, %v4722, %v4729
          %v4731 = vld [vmem:[%s7] sm:$0xf]
          %v4732 = vld [vmem:[%s7 + $0x4] sm:$0xf]
          %v4733 = vld [vmem:[%s7 + $0x8] sm:$0xf]
          %v4734 = vld [vmem:[%s7 + $0xc] sm:$0xf]
          %v4735 = vld [vmem:[%s7 + $0x10] sm:$0xf]
          %v4736 = vld [vmem:[%s7 + $0x14] sm:$0xf]
          %v4737 = vld [vmem:[%s7 + $0x18] sm:$0xf]
          %v4738 = vld [vmem:[%s7 + $0x1c] sm:$0xf]
          %s4739 = scalar_lea.vmem %s7, 32
          %v4740 = vld [vmem:[%s4739] sm:$0xf]
          %v4741 = vld [vmem:[%s4739 + $0x4] sm:$0xf]
          %v4742 = vld [vmem:[%s4739 + $0x8] sm:$0xf]
          %v4743 = vld [vmem:[%s4739 + $0xc] sm:$0xf]
          %v4744 = vld [vmem:[%s4739 + $0x10] sm:$0xf]
          %v4745 = vld [vmem:[%s4739 + $0x14] sm:$0xf]
          %v4746 = vld [vmem:[%s4739 + $0x18] sm:$0xf]
          %v4747 = vld [vmem:[%s4739 + $0x1c] sm:$0xf]
          %v4764 = vunpack.c.l.b16 %v4530
          %v4765 = vunpack.c.l.b16 %v4531
          %v4766 = vunpack.c.l.b16 %v4533
          %v4767 = vunpack.c.l.b16 %v4534
          %v4768 = vunpack.c.l.b16 %v4536
          %v4769 = vunpack.c.l.b16 %v4537
          %v4770 = vunpack.c.l.b16 %v4539
          %v4771 = vunpack.c.l.b16 %v4540
          %v4772 = vunpack.c.l.b16 %v4542
          %v4773 = vunpack.c.l.b16 %v4543
          %v4774 = vunpack.c.l.b16 %v4545
          %v4775 = vunpack.c.l.b16 %v4546
          %v4776 = vunpack.c.l.b16 %v4548
          %v4777 = vunpack.c.l.b16 %v4549
          %v4778 = vunpack.c.l.b16 %v4551
          %v4779 = vunpack.c.l.b16 %v4552
          %v4780 = vpack.c.b16 %v4765, %v4764
          %v4781 = vpack.c.b16 %v4767, %v4766
          %v4782 = vpack.c.b16 %v4769, %v4768
          %v4783 = vpack.c.b16 %v4771, %v4770
          %v4784 = vpack.c.b16 %v4773, %v4772
          %v4785 = vpack.c.b16 %v4775, %v4774
          %v4786 = vpack.c.b16 %v4777, %v4776
          %v4787 = vpack.c.b16 %v4779, %v4778
          %v4796 = vunpack.c.l.b16 %v4740
          %v4797 = vunpack.c.l.b16 %v4741
          %v4798 = vunpack.c.l.b16 %v4742
          %v4799 = vunpack.c.l.b16 %v4743
          %v4800 = vunpack.c.l.b16 %v4744
          %v4801 = vunpack.c.l.b16 %v4745
          %v4802 = vunpack.c.l.b16 %v4746
          %v4803 = vunpack.c.l.b16 %v4747
          %v4804 = vpack.c.b16 %v4797, %v4796
          %v4805 = vpack.c.b16 %v4799, %v4798
          %v4806 = vpack.c.b16 %v4801, %v4800
          %v4807 = vpack.c.b16 %v4803, %v4802
          %vm4812 = vcmask 523264
          %v4814 = vsel %vm4812, %v4780, 0
          %v4817 = vsel %vm4812, %v4781, 0
          %v4820 = vsel %vm4812, %v4782, 0
          %v4823 = vsel %vm4812, %v4783, 0
          %v4826 = vsel %vm4812, %v4784, 0
          %v4829 = vsel %vm4812, %v4785, 0
          %v4832 = vsel %vm4812, %v4786, 0
          %v4835 = vsel %vm4812, %v4787, 0
          %4837 = vmatprep.subr.bf16.mxu0 0
          %4838 = vmatpush1.bf16.msra.mxu0 %v4804
          %4839 = vmatprep.subr.bf16.mxu0 0
          %4840 = vmatpush1.bf16.msra.mxu0 %v4805
          %4841 = vmatprep.subr.bf16.mxu0 0
          %4842 = vmatpush1.bf16.msra.mxu0 %v4806
          %4843 = vmatprep.subr.bf16.mxu0 0
          %4844 = vmatpush1.bf16.msra.mxu0 %v4807
          %4845 = vmatprep.subr.bf16.mxu0 0
          %4846 = vmatpush1.bf16.msra.mxu0 0
          %4847 = vmatprep.subr.bf16.mxu0 0
          %4848 = vmatpush1.bf16.msra.mxu0 0
          %4849 = vmatprep.subr.bf16.mxu0 0
          %4850 = vmatpush1.bf16.msra.mxu0 0
          %4851 = vmatprep.subr.bf16.mxu0 0
          %4852 = vmatpush1.bf16.msra.mxu0 0
          %4853 = vmatprep.subr.bf16.mxu0 0
          %4854 = vmatpush1.bf16.msra.mxu0 0
          %4855 = vmatprep.subr.bf16.mxu0 0
          %4856 = vmatpush1.bf16.msra.mxu0 0
          %4857 = vmatprep.subr.bf16.mxu0 0
          %4858 = vmatpush1.bf16.msra.mxu0 0
          %4859 = vmatprep.subr.bf16.mxu0 0
          %4860 = vmatpush1.bf16.msra.mxu0 0
          %4861 = vmatprep.subr.bf16.mxu0 0
          %4862 = vmatpush1.bf16.msra.mxu0 0
          %4863 = vmatprep.subr.bf16.mxu0 0
          %4864 = vmatpush1.bf16.msra.mxu0 0
          %4865 = vmatprep.subr.bf16.mxu0 0
          %4866 = vmatpush1.bf16.msra.mxu0 0
          %4867 = vmatprep.subr.bf16.mxu0 0
          %4868 = vmatpush1.bf16.msra.mxu0 0
          %4869 = vmatprep.mubr.bf16.mxu0 0
          %4870 = vmatmul.mubr.bf16.gmra.mrb[0].mxu0 %v4814
          %v4871 = vpop.f32.mrb[0].mxu0
          %v4872 = vadd.f32 0.0, %v4871
          %v4873 = vpop.f32.mrb[0].mxu0
          %v4874 = vpop.f32.mrb[0].mxu0
          %v4875 = vadd.f32 0.0, %v4874
          %v4876 = vpop.f32.mrb[0].mxu0
          %4877 = vmatprep.mubr.bf16.mxu0 0
          %4878 = vmatmul.mubr.bf16.gmra.mrb[0].mxu0 %v4817
          %v4879 = vpop.f32.mrb[0].mxu0
          %v4880 = vadd.f32 0.0, %v4879
          %v4881 = vpop.f32.mrb[0].mxu0
          %v4882 = vpop.f32.mrb[0].mxu0
          %v4883 = vadd.f32 0.0, %v4882
          %v4884 = vpop.f32.mrb[0].mxu0
          %4885 = vmatprep.mubr.bf16.mxu0 0
          %4886 = vmatmul.mubr.bf16.gmra.mrb[0].mxu0 %v4820
          %v4887 = vpop.f32.mrb[0].mxu0
          %v4888 = vadd.f32 0.0, %v4887
          %v4889 = vpop.f32.mrb[0].mxu0
          %v4890 = vpop.f32.mrb[0].mxu0
          %v4891 = vadd.f32 0.0, %v4890
          %v4892 = vpop.f32.mrb[0].mxu0
          %4893 = vmatprep.mubr.bf16.mxu0 0
          %4894 = vmatmul.mubr.bf16.gmra.mrb[0].mxu0 %v4823
          %v4895 = vpop.f32.mrb[0].mxu0
          %v4896 = vadd.f32 0.0, %v4895
          %v4897 = vpop.f32.mrb[0].mxu0
          %v4898 = vpop.f32.mrb[0].mxu0
          %v4899 = vadd.f32 0.0, %v4898
          %v4900 = vpop.f32.mrb[0].mxu0
          %4901 = vmatprep.mubr.bf16.mxu0 0
          %4902 = vmatmul.mubr.bf16.gmra.mrb[0].mxu0 %v4826
          %v4903 = vpop.f32.mrb[0].mxu0
          %v4904 = vadd.f32 0.0, %v4903
          %v4905 = vpop.f32.mrb[0].mxu0
          %v4906 = vpop.f32.mrb[0].mxu0
          %v4907 = vadd.f32 0.0, %v4906
          %v4908 = vpop.f32.mrb[0].mxu0
          %4909 = vmatprep.mubr.bf16.mxu0 0
          %4910 = vmatmul.mubr.bf16.gmra.mrb[0].mxu0 %v4829
          %v4911 = vpop.f32.mrb[0].mxu0
          %v4912 = vadd.f32 0.0, %v4911
          %v4913 = vpop.f32.mrb[0].mxu0
          %v4914 = vpop.f32.mrb[0].mxu0
          %v4915 = vadd.f32 0.0, %v4914
          %v4916 = vpop.f32.mrb[0].mxu0
          %4917 = vmatprep.mubr.bf16.mxu0 0
          %4918 = vmatmul.mubr.bf16.gmra.mrb[0].mxu0 %v4832
          %v4919 = vpop.f32.mrb[0].mxu0
          %v4920 = vadd.f32 0.0, %v4919
          %v4921 = vpop.f32.mrb[0].mxu0
          %v4922 = vpop.f32.mrb[0].mxu0
          %v4923 = vadd.f32 0.0, %v4922
          %v4924 = vpop.f32.mrb[0].mxu0
          %4925 = vmatprep.mubr.bf16.mxu0 0
          %4926 = vmatmul.mubr.bf16.gmra.mrb[0].mxu0 %v4835
          %v4927 = vpop.f32.mrb[0].mxu0
          %v4928 = vadd.f32 0.0, %v4927
          %v4929 = vpop.f32.mrb[0].mxu0
          %v4930 = vpop.f32.mrb[0].mxu0
          %v4931 = vadd.f32 0.0, %v4930
          %v4932 = vpop.f32.mrb[0].mxu0
          %4933 = vdwg.mxu0
          %v4934 = vunpack.c.l.b16 %v4567
          %v4935 = vunpack.c.l.b16 %v4576
          %v4936 = vunpack.c.l.b16 %v4589
          %v4937 = vunpack.c.l.b16 %v4598
          %v4938 = vunpack.c.l.b16 %v4611
          %v4939 = vunpack.c.l.b16 %v4620
          %v4940 = vunpack.c.l.b16 %v4633
          %v4941 = vunpack.c.l.b16 %v4642
          %v4942 = vunpack.c.l.b16 %v4655
          %v4943 = vunpack.c.l.b16 %v4664
          %v4944 = vunpack.c.l.b16 %v4677
          %v4945 = vunpack.c.l.b16 %v4686
          %v4946 = vunpack.c.l.b16 %v4699
          %v4947 = vunpack.c.l.b16 %v4708
          %v4948 = vunpack.c.l.b16 %v4721
          %v4949 = vunpack.c.l.b16 %v4730
          %v4950 = vpack.c.b16 %v4935, %v4934
          %v4951 = vpack.c.b16 %v4937, %v4936
          %v4952 = vpack.c.b16 %v4939, %v4938
          %v4953 = vpack.c.b16 %v4941, %v4940
          %v4954 = vpack.c.b16 %v4943, %v4942
          %v4955 = vpack.c.b16 %v4945, %v4944
          %v4956 = vpack.c.b16 %v4947, %v4946
          %v4957 = vpack.c.b16 %v4949, %v4948
          %v4966 = vunpack.c.l.b16 %v4731
          %v4967 = vunpack.c.l.b16 %v4732
          %v4968 = vunpack.c.l.b16 %v4733
          %v4969 = vunpack.c.l.b16 %v4734
          %v4970 = vunpack.c.l.b16 %v4735
          %v4971 = vunpack.c.l.b16 %v4736
          %v4972 = vunpack.c.l.b16 %v4737
          %v4973 = vunpack.c.l.b16 %v4738
          %v4974 = vpack.c.b16 %v4967, %v4966
          %v4975 = vpack.c.b16 %v4969, %v4968
          %v4976 = vpack.c.b16 %v4971, %v4970
          %v4977 = vpack.c.b16 %v4973, %v4972
          %v4983 = vsel %vm4812, %v4950, 0
          %v4986 = vsel %vm4812, %v4951, 0
          %v4989 = vsel %vm4812, %v4952, 0
          %v4992 = vsel %vm4812, %v4953, 0
          %v4995 = vsel %vm4812, %v4954, 0
          %v4998 = vsel %vm4812, %v4955, 0
          %v5001 = vsel %vm4812, %v4956, 0
          %v5004 = vsel %vm4812, %v4957, 0
          %5006 = vmatprep.subr.bf16.mxu0 0
          %5007 = vmatpush1.bf16.msra.mxu0 %v4974
          %5008 = vmatprep.subr.bf16.mxu0 0
          %5009 = vmatpush1.bf16.msra.mxu0 %v4975
          %5010 = vmatprep.subr.bf16.mxu0 0
          %5011 = vmatpush1.bf16.msra.mxu0 %v4976
          %5012 = vmatprep.subr.bf16.mxu0 0
          %5013 = vmatpush1.bf16.msra.mxu0 %v4977
          %5014 = vmatprep.subr.bf16.mxu0 0
          %5015 = vmatpush1.bf16.msra.mxu0 0
          %5016 = vmatprep.subr.bf16.mxu0 0
          %5017 = vmatpush1.bf16.msra.mxu0 0
          %5018 = vmatprep.subr.bf16.mxu0 0
          %5019 = vmatpush1.bf16.msra.mxu0 0
          %5020 = vmatprep.subr.bf16.mxu0 0
          %5021 = vmatpush1.bf16.msra.mxu0 0
          %5022 = vmatprep.subr.bf16.mxu0 0
          %5023 = vmatpush1.bf16.msra.mxu0 0
          %5024 = vmatprep.subr.bf16.mxu0 0
          %5025 = vmatpush1.bf16.msra.mxu0 0
          %5026 = vmatprep.subr.bf16.mxu0 0
          %5027 = vmatpush1.bf16.msra.mxu0 0
          %5028 = vmatprep.subr.bf16.mxu0 0
          %5029 = vmatpush1.bf16.msra.mxu0 0
          %5030 = vmatprep.subr.bf16.mxu0 0
          %5031 = vmatpush1.bf16.msra.mxu0 0
          %5032 = vmatprep.subr.bf16.mxu0 0
          %5033 = vmatpush1.bf16.msra.mxu0 0
          %5034 = vmatprep.subr.bf16.mxu0 0
          %5035 = vmatpush1.bf16.msra.mxu0 0
          %5036 = vmatprep.subr.bf16.mxu0 0
          %5037 = vmatpush1.bf16.msra.mxu0 0
          %5038 = vmatprep.mubr.bf16.mxu0 0
          %5039 = vmatmul.mubr.bf16.gmra.mrb[0].mxu0 %v4983
          %v5040 = vpop.f32.mrb[0].mxu0
          %v5041 = vadd.f32 %v4872, %v5040
          %v5042 = vpop.f32.mrb[0].mxu0
          %v5043 = vpop.f32.mrb[0].mxu0
          %v5044 = vadd.f32 %v4875, %v5043
          %v5045 = vpop.f32.mrb[0].mxu0
          %5046 = vmatprep.mubr.bf16.mxu0 0
          %5047 = vmatmul.mubr.bf16.gmra.mrb[0].mxu0 %v4986
          %v5048 = vpop.f32.mrb[0].mxu0
          %v5049 = vadd.f32 %v4880, %v5048
          %v5050 = vpop.f32.mrb[0].mxu0
          %v5051 = vpop.f32.mrb[0].mxu0
          %v5052 = vadd.f32 %v4883, %v5051
          %v5053 = vpop.f32.mrb[0].mxu0
          %5054 = vmatprep.mubr.bf16.mxu0 0
          %5055 = vmatmul.mubr.bf16.gmra.mrb[0].mxu0 %v4989
          %v5056 = vpop.f32.mrb[0].mxu0
          %v5057 = vadd.f32 %v4888, %v5056
          %v5058 = vpop.f32.mrb[0].mxu0
          %v5059 = vpop.f32.mrb[0].mxu0
          %v5060 = vadd.f32 %v4891, %v5059
          %v5061 = vpop.f32.mrb[0].mxu0
          %5062 = vmatprep.mubr.bf16.mxu0 0
          %5063 = vmatmul.mubr.bf16.gmra.mrb[0].mxu0 %v4992
          %v5064 = vpop.f32.mrb[0].mxu0
          %v5065 = vadd.f32 %v4896, %v5064
          %v5066 = vpop.f32.mrb[0].mxu0
          %v5067 = vpop.f32.mrb[0].mxu0
          %v5068 = vadd.f32 %v4899, %v5067
          %v5069 = vpop.f32.mrb[0].mxu0
          %5070 = vmatprep.mubr.bf16.mxu0 0
          %5071 = vmatmul.mubr.bf16.gmra.mrb[0].mxu0 %v4995
          %v5072 = vpop.f32.mrb[0].mxu0
          %v5073 = vadd.f32 %v4904, %v5072
          %v5074 = vpop.f32.mrb[0].mxu0
          %v5075 = vpop.f32.mrb[0].mxu0
          %v5076 = vadd.f32 %v4907, %v5075
          %v5077 = vpop.f32.mrb[0].mxu0
          %5078 = vmatprep.mubr.bf16.mxu0 0
          %5079 = vmatmul.mubr.bf16.gmra.mrb[0].mxu0 %v4998
          %v5080 = vpop.f32.mrb[0].mxu0
          %v5081 = vadd.f32 %v4912, %v5080
          %v5082 = vpop.f32.mrb[0].mxu0
          %v5083 = vpop.f32.mrb[0].mxu0
          %v5084 = vadd.f32 %v4915, %v5083
          %v5085 = vpop.f32.mrb[0].mxu0
          %5086 = vmatprep.mubr.bf16.mxu0 0
          %5087 = vmatmul.mubr.bf16.gmra.mrb[0].mxu0 %v5001
          %v5088 = vpop.f32.mrb[0].mxu0
          %v5089 = vadd.f32 %v4920, %v5088
          %v5090 = vpop.f32.mrb[0].mxu0
          %v5091 = vpop.f32.mrb[0].mxu0
          %v5092 = vadd.f32 %v4923, %v5091
          %v5093 = vpop.f32.mrb[0].mxu0
          %5094 = vmatprep.mubr.bf16.mxu0 0
          %5095 = vmatmul.mubr.bf16.gmra.mrb[0].mxu0 %v5004
          %v5096 = vpop.f32.mrb[0].mxu0
          %v5097 = vadd.f32 %v4928, %v5096
          %v5098 = vpop.f32.mrb[0].mxu0
          %v5099 = vpop.f32.mrb[0].mxu0
          %v5100 = vadd.f32 %v4931, %v5099
          %v5101 = vpop.f32.mrb[0].mxu0
          %5102 = vdwg.mxu0
          %v5103 = vld [vmem:[%s4528 + $0x4] sm:$0xf]
          %v5104 = vld [vmem:[%s4528 + $0x8] sm:$0xf]
          %v5105 = vld [vmem:[%s4528 + $0xc] sm:$0x1]
          %v5106 = vld [vmem:[%s4528 + $0x14] sm:$0xf]
          %v5107 = vld [vmem:[%s4528 + $0x18] sm:$0xf]
          %v5108 = vld [vmem:[%s4528 + $0x1c] sm:$0x1]
          %v5109 = vld [vmem:[%s4528 + $0x24] sm:$0xf]
          %v5110 = vld [vmem:[%s4528 + $0x28] sm:$0xf]
          %v5111 = vld [vmem:[%s4528 + $0x2c] sm:$0x1]
          %v5112 = vld [vmem:[%s4528 + $0x34] sm:$0xf]
          %v5113 = vld [vmem:[%s4528 + $0x38] sm:$0xf]
          %v5114 = vld [vmem:[%s4528 + $0x3c] sm:$0x1]
          %v5115 = vld [vmem:[%s4528 + $0x44] sm:$0xf]
          %v5116 = vld [vmem:[%s4528 + $0x48] sm:$0xf]
          %v5117 = vld [vmem:[%s4528 + $0x4c] sm:$0x1]
          %v5118 = vld [vmem:[%s4528 + $0x54] sm:$0xf]
          %v5119 = vld [vmem:[%s4528 + $0x58] sm:$0xf]
          %v5120 = vld [vmem:[%s4528 + $0x5c] sm:$0x1]
          %v5121 = vld [vmem:[%s4528 + $0x64] sm:$0xf]
          %v5122 = vld [vmem:[%s4528 + $0x68] sm:$0xf]
          %v5123 = vld [vmem:[%s4528 + $0x6c] sm:$0x1]
          %v5124 = vld [vmem:[%s4528 + $0x74] sm:$0xf]
          %v5125 = vld [vmem:[%s4528 + $0x78] sm:$0xf]
          %v5126 = vld [vmem:[%s4528 + $0x7c] sm:$0x1]
          %vm5127 = vsmask.f32 3328
          %vm5128 = vsmask.f32 7440
          %vm5129 = vmor %vm5127, %vm5128
          %v5131 = vshrl.u32 %v5103, 16
          %v5133 = vrot.slane %v5131, 4
          %v5134 = vshll.u32 %v5103, 16
          %v5136 = vrot.slane %v5134, 5
          %v5137 = vor.u32 %v5133, %v5136
          %v5138 = vrot.slane %v5137, 4
          %v5140 = vshll.u32 %v5104, 16
          %v5142 = vrot.slane %v5140, 5
          %v5143 = vsel %vm5129, %v5138, %v5142
          %v5144 = vshrl.u32 %v5104, 16
          %v5146 = vrot.slane %v5144, 4
          %v5147 = vor.u32 %v5146, %v5142
          %v5148 = vrot.slane %v5147, 4
          %v5150 = vshll.u32 %v5105, 16
          %v5152 = vrot.slane %v5150, 5
          %v5153 = vsel %vm5129, %v5148, %v5152
          %v5155 = vshrl.u32 %v5106, 16
          %v5157 = vrot.slane %v5155, 4
          %v5158 = vshll.u32 %v5106, 16
          %v5160 = vrot.slane %v5158, 5
          %v5161 = vor.u32 %v5157, %v5160
          %v5162 = vrot.slane %v5161, 4
          %v5164 = vshll.u32 %v5107, 16
          %v5166 = vrot.slane %v5164, 5
          %v5167 = vsel %vm5129, %v5162, %v5166
          %v5168 = vshrl.u32 %v5107, 16
          %v5170 = vrot.slane %v5168, 4
          %v5171 = vor.u32 %v5170, %v5166
          %v5172 = vrot.slane %v5171, 4
          %v5174 = vshll.u32 %v5108, 16
          %v5176 = vrot.slane %v5174, 5
          %v5177 = vsel %vm5129, %v5172, %v5176
          %v5179 = vshrl.u32 %v5109, 16
          %v5181 = vrot.slane %v5179, 4
          %v5182 = vshll.u32 %v5109, 16
          %v5184 = vrot.slane %v5182, 5
          %v5185 = vor.u32 %v5181, %v5184
          %v5186 = vrot.slane %v5185, 4
          %v5188 = vshll.u32 %v5110, 16
          %v5190 = vrot.slane %v5188, 5
          %v5191 = vsel %vm5129, %v5186, %v5190
          %v5192 = vshrl.u32 %v5110, 16
          %v5194 = vrot.slane %v5192, 4
          %v5195 = vor.u32 %v5194, %v5190
          %v5196 = vrot.slane %v5195, 4
          %v5198 = vshll.u32 %v5111, 16
          %v5200 = vrot.slane %v5198, 5
          %v5201 = vsel %vm5129, %v5196, %v5200
          %v5203 = vshrl.u32 %v5112, 16
          %v5205 = vrot.slane %v5203, 4
          %v5206 = vshll.u32 %v5112, 16
          %v5208 = vrot.slane %v5206, 5
          %v5209 = vor.u32 %v5205, %v5208
          %v5210 = vrot.slane %v5209, 4
          %v5212 = vshll.u32 %v5113, 16
          %v5214 = vrot.slane %v5212, 5
          %v5215 = vsel %vm5129, %v5210, %v5214
          %v5216 = vshrl.u32 %v5113, 16
          %v5218 = vrot.slane %v5216, 4
          %v5219 = vor.u32 %v5218, %v5214
          %v5220 = vrot.slane %v5219, 4
          %v5222 = vshll.u32 %v5114, 16
          %v5224 = vrot.slane %v5222, 5
          %v5225 = vsel %vm5129, %v5220, %v5224
          %v5227 = vshrl.u32 %v5115, 16
          %v5229 = vrot.slane %v5227, 4
          %v5230 = vshll.u32 %v5115, 16
          %v5232 = vrot.slane %v5230, 5
          %v5233 = vor.u32 %v5229, %v5232
          %v5234 = vrot.slane %v5233, 4
          %v5236 = vshll.u32 %v5116, 16
          %v5238 = vrot.slane %v5236, 5
          %v5239 = vsel %vm5129, %v5234, %v5238
          %v5240 = vshrl.u32 %v5116, 16
          %v5242 = vrot.slane %v5240, 4
          %v5243 = vor.u32 %v5242, %v5238
          %v5244 = vrot.slane %v5243, 4
          %v5246 = vshll.u32 %v5117, 16
          %v5248 = vrot.slane %v5246, 5
          %v5249 = vsel %vm5129, %v5244, %v5248
          %v5251 = vshrl.u32 %v5118, 16
          %v5253 = vrot.slane %v5251, 4
          %v5254 = vshll.u32 %v5118, 16
          %v5256 = vrot.slane %v5254, 5
          %v5257 = vor.u32 %v5253, %v5256
          %v5258 = vrot.slane %v5257, 4
          %v5260 = vshll.u32 %v5119, 16
          %v5262 = vrot.slane %v5260, 5
          %v5263 = vsel %vm5129, %v5258, %v5262
          %v5264 = vshrl.u32 %v5119, 16
          %v5266 = vrot.slane %v5264, 4
          %v5267 = vor.u32 %v5266, %v5262
          %v5268 = vrot.slane %v5267, 4
          %v5270 = vshll.u32 %v5120, 16
          %v5272 = vrot.slane %v5270, 5
          %v5273 = vsel %vm5129, %v5268, %v5272
          %v5275 = vshrl.u32 %v5121, 16
          %v5277 = vrot.slane %v5275, 4
          %v5278 = vshll.u32 %v5121, 16
          %v5280 = vrot.slane %v5278, 5
          %v5281 = vor.u32 %v5277, %v5280
          %v5282 = vrot.slane %v5281, 4
          %v5284 = vshll.u32 %v5122, 16
          %v5286 = vrot.slane %v5284, 5
          %v5287 = vsel %vm5129, %v5282, %v5286
          %v5288 = vshrl.u32 %v5122, 16
          %v5290 = vrot.slane %v5288, 4
          %v5291 = vor.u32 %v5290, %v5286
          %v5292 = vrot.slane %v5291, 4
          %v5294 = vshll.u32 %v5123, 16
          %v5296 = vrot.slane %v5294, 5
          %v5297 = vsel %vm5129, %v5292, %v5296
          %v5299 = vshrl.u32 %v5124, 16
          %v5301 = vrot.slane %v5299, 4
          %v5302 = vshll.u32 %v5124, 16
          %v5304 = vrot.slane %v5302, 5
          %v5305 = vor.u32 %v5301, %v5304
          %v5306 = vrot.slane %v5305, 4
          %v5308 = vshll.u32 %v5125, 16
          %v5310 = vrot.slane %v5308, 5
          %v5311 = vsel %vm5129, %v5306, %v5310
          %v5312 = vshrl.u32 %v5125, 16
          %v5314 = vrot.slane %v5312, 4
          %v5315 = vor.u32 %v5314, %v5310
          %v5316 = vrot.slane %v5315, 4
          %v5318 = vshll.u32 %v5126, 16
          %v5320 = vrot.slane %v5318, 5
          %v5321 = vsel %vm5129, %v5316, %v5320
          %s5322 = scalar_lea.vmem %s7, 64
          %v5323 = vld [vmem:[%s5322] sm:$0xf]
          %v5324 = vld [vmem:[%s5322 + $0x4] sm:$0xf]
          %v5325 = vld [vmem:[%s5322 + $0x8] sm:$0xf]
          %v5326 = vld [vmem:[%s5322 + $0xc] sm:$0xf]
          %v5327 = vld [vmem:[%s5322 + $0x10] sm:$0xf]
          %v5328 = vld [vmem:[%s5322 + $0x14] sm:$0xf]
          %v5329 = vld [vmem:[%s5322 + $0x18] sm:$0xf]
          %v5330 = vld [vmem:[%s5322 + $0x1c] sm:$0xf]
          %v5331 = vunpack.c.l.b16 %v5143
          %v5332 = vunpack.c.l.b16 %v5153
          %v5333 = vunpack.c.l.b16 %v5167
          %v5334 = vunpack.c.l.b16 %v5177
          %v5335 = vunpack.c.l.b16 %v5191
          %v5336 = vunpack.c.l.b16 %v5201
          %v5337 = vunpack.c.l.b16 %v5215
          %v5338 = vunpack.c.l.b16 %v5225
          %v5339 = vunpack.c.l.b16 %v5239
          %v5340 = vunpack.c.l.b16 %v5249
          %v5341 = vunpack.c.l.b16 %v5263
          %v5342 = vunpack.c.l.b16 %v5273
          %v5343 = vunpack.c.l.b16 %v5287
          %v5344 = vunpack.c.l.b16 %v5297
          %v5345 = vunpack.c.l.b16 %v5311
          %v5346 = vunpack.c.l.b16 %v5321
          %v5347 = vpack.c.b16 %v5332, %v5331
          %v5348 = vpack.c.b16 %v5334, %v5333
          %v5349 = vpack.c.b16 %v5336, %v5335
          %v5350 = vpack.c.b16 %v5338, %v5337
          %v5351 = vpack.c.b16 %v5340, %v5339
          %v5352 = vpack.c.b16 %v5342, %v5341
          %v5353 = vpack.c.b16 %v5344, %v5343
          %v5354 = vpack.c.b16 %v5346, %v5345
          %v5363 = vunpack.c.l.b16 %v5323
          %v5364 = vunpack.c.l.b16 %v5324
          %v5365 = vunpack.c.l.b16 %v5325
          %v5366 = vunpack.c.l.b16 %v5326
          %v5367 = vunpack.c.l.b16 %v5327
          %v5368 = vunpack.c.l.b16 %v5328
          %v5369 = vunpack.c.l.b16 %v5329
          %v5370 = vunpack.c.l.b16 %v5330
          %v5371 = vpack.c.b16 %v5364, %v5363
          %v5372 = vpack.c.b16 %v5366, %v5365
          %v5373 = vpack.c.b16 %v5368, %v5367
          %v5374 = vpack.c.b16 %v5370, %v5369
          %v5380 = vsel %vm4812, %v5347, 0
          %v5383 = vsel %vm4812, %v5348, 0
          %v5386 = vsel %vm4812, %v5349, 0
          %v5389 = vsel %vm4812, %v5350, 0
          %v5392 = vsel %vm4812, %v5351, 0
          %v5395 = vsel %vm4812, %v5352, 0
          %v5398 = vsel %vm4812, %v5353, 0
          %v5401 = vsel %vm4812, %v5354, 0
          %5403 = vmatprep.subr.bf16.mxu0 0
          %5404 = vmatpush1.bf16.msra.mxu0 %v5371
          %5405 = vmatprep.subr.bf16.mxu0 0
          %5406 = vmatpush1.bf16.msra.mxu0 %v5372
          %5407 = vmatprep.subr.bf16.mxu0 0
          %5408 = vmatpush1.bf16.msra.mxu0 %v5373
          %5409 = vmatprep.subr.bf16.mxu0 0
          %5410 = vmatpush1.bf16.msra.mxu0 %v5374
          %5411 = vmatprep.subr.bf16.mxu0 0
          %5412 = vmatpush1.bf16.msra.mxu0 0
          %5413 = vmatprep.subr.bf16.mxu0 0
          %5414 = vmatpush1.bf16.msra.mxu0 0
          %5415 = vmatprep.subr.bf16.mxu0 0
          %5416 = vmatpush1.bf16.msra.mxu0 0
          %5417 = vmatprep.subr.bf16.mxu0 0
          %5418 = vmatpush1.bf16.msra.mxu0 0
          %5419 = vmatprep.subr.bf16.mxu0 0
          %5420 = vmatpush1.bf16.msra.mxu0 0
          %5421 = vmatprep.subr.bf16.mxu0 0
          %5422 = vmatpush1.bf16.msra.mxu0 0
          %5423 = vmatprep.subr.bf16.mxu0 0
          %5424 = vmatpush1.bf16.msra.mxu0 0
          %5425 = vmatprep.subr.bf16.mxu0 0
          %5426 = vmatpush1.bf16.msra.mxu0 0
          %5427 = vmatprep.subr.bf16.mxu0 0
          %5428 = vmatpush1.bf16.msra.mxu0 0
          %5429 = vmatprep.subr.bf16.mxu0 0
          %5430 = vmatpush1.bf16.msra.mxu0 0
          %5431 = vmatprep.subr.bf16.mxu0 0
          %5432 = vmatpush1.bf16.msra.mxu0 0
          %5433 = vmatprep.subr.bf16.mxu0 0
          %5434 = vmatpush1.bf16.msra.mxu0 0
          %5435 = vmatprep.mubr.bf16.mxu0 0
          %5436 = vmatmul.mubr.bf16.gmra.mrb[0].mxu0 %v5380
          %v5437 = vpop.f32.mrb[0].mxu0
          %v5438 = vadd.f32 0.0, %v5437
          %v5439 = vpop.f32.mrb[0].mxu0
          %v5440 = vpop.f32.mrb[0].mxu0
          %v5441 = vadd.f32 0.0, %v5440
          %v5442 = vpop.f32.mrb[0].mxu0
          %5443 = vmatprep.mubr.bf16.mxu0 0
          %5444 = vmatmul.mubr.bf16.gmra.mrb[0].mxu0 %v5383
          %v5445 = vpop.f32.mrb[0].mxu0
          %v5446 = vadd.f32 0.0, %v5445
          %v5447 = vpop.f32.mrb[0].mxu0
          %v5448 = vpop.f32.mrb[0].mxu0
          %v5449 = vadd.f32 0.0, %v5448
          %v5450 = vpop.f32.mrb[0].mxu0
          %5451 = vmatprep.mubr.bf16.mxu0 0
          %5452 = vmatmul.mubr.bf16.gmra.mrb[0].mxu0 %v5386
          %v5453 = vpop.f32.mrb[0].mxu0
          %v5454 = vadd.f32 0.0, %v5453
          %v5455 = vpop.f32.mrb[0].mxu0
          %v5456 = vpop.f32.mrb[0].mxu0
          %v5457 = vadd.f32 0.0, %v5456
          %v5458 = vpop.f32.mrb[0].mxu0
          %5459 = vmatprep.mubr.bf16.mxu0 0
          %5460 = vmatmul.mubr.bf16.gmra.mrb[0].mxu0 %v5389
          %v5461 = vpop.f32.mrb[0].mxu0
          %v5462 = vadd.f32 0.0, %v5461
          %v5463 = vpop.f32.mrb[0].mxu0
          %v5464 = vpop.f32.mrb[0].mxu0
          %v5465 = vadd.f32 0.0, %v5464
          %v5466 = vpop.f32.mrb[0].mxu0
          %5467 = vmatprep.mubr.bf16.mxu0 0
          %5468 = vmatmul.mubr.bf16.gmra.mrb[0].mxu0 %v5392
          %v5469 = vpop.f32.mrb[0].mxu0
          %v5470 = vadd.f32 0.0, %v5469
          %v5471 = vpop.f32.mrb[0].mxu0
          %v5472 = vpop.f32.mrb[0].mxu0
          %v5473 = vadd.f32 0.0, %v5472
          %v5474 = vpop.f32.mrb[0].mxu0
          %5475 = vmatprep.mubr.bf16.mxu0 0
          %5476 = vmatmul.mubr.bf16.gmra.mrb[0].mxu0 %v5395
          %v5477 = vpop.f32.mrb[0].mxu0
          %v5478 = vadd.f32 0.0, %v5477
          %v5479 = vpop.f32.mrb[0].mxu0
          %v5480 = vpop.f32.mrb[0].mxu0
          %v5481 = vadd.f32 0.0, %v5480
          %v5482 = vpop.f32.mrb[0].mxu0
          %5483 = vmatprep.mubr.bf16.mxu0 0
          %5484 = vmatmul.mubr.bf16.gmra.mrb[0].mxu0 %v5398
          %v5485 = vpop.f32.mrb[0].mxu0
          %v5486 = vadd.f32 0.0, %v5485
          %v5487 = vpop.f32.mrb[0].mxu0
          %v5488 = vpop.f32.mrb[0].mxu0
          %v5489 = vadd.f32 0.0, %v5488
          %v5490 = vpop.f32.mrb[0].mxu0
          %5491 = vmatprep.mubr.bf16.mxu0 0
          %5492 = vmatmul.mubr.bf16.gmra.mrb[0].mxu0 %v5401
          %v5493 = vpop.f32.mrb[0].mxu0
          %v5494 = vadd.f32 0.0, %v5493
          %v5495 = vpop.f32.mrb[0].mxu0
          %v5496 = vpop.f32.mrb[0].mxu0
          %v5497 = vadd.f32 0.0, %v5496
          %v5498 = vpop.f32.mrb[0].mxu0
          %5499 = vdwg.mxu0
          %v5500 = vadd.f32 %v5041, %v5438
          %v5501 = vadd.f32 %v5044, %v5441
          %v5502 = vadd.f32 %v5049, %v5446
          %v5503 = vadd.f32 %v5052, %v5449
          %v5504 = vadd.f32 %v5057, %v5454
          %v5505 = vadd.f32 %v5060, %v5457
          %v5506 = vadd.f32 %v5065, %v5462
          %v5507 = vadd.f32 %v5068, %v5465
          %v5508 = vadd.f32 %v5073, %v5470
          %v5509 = vadd.f32 %v5076, %v5473
          %v5510 = vadd.f32 %v5081, %v5478
          %v5511 = vadd.f32 %v5084, %v5481
          %v5512 = vadd.f32 %v5089, %v5486
          %v5513 = vadd.f32 %v5092, %v5489
          %v5514 = vadd.f32 %v5097, %v5494
          %v5515 = vadd.f32 %v5100, %v5497
          %s5516 = sadd.s32 %s4525, 1
          %s5517 = smul.u32 %s5516, 4
          %s5518 = smul.addr %s5517, 4
          %s5519 = scalar_lea.vmem [#allocation3], %s5518
          %v5520 = vld [vmem:[%s5519] sm:$0x8]
          %v5521 = vld [vmem:[%s5519 + $0x4] sm:$0xf]
          %v5522 = vld [vmem:[%s5519 + $0x8] sm:$0xf]
          %v5523 = vld [vmem:[%s5519 + $0x10] sm:$0x8]
          %v5524 = vld [vmem:[%s5519 + $0x14] sm:$0xf]
          %v5525 = vld [vmem:[%s5519 + $0x18] sm:$0xf]
          %v5526 = vld [vmem:[%s5519 + $0x20] sm:$0x8]
          %v5527 = vld [vmem:[%s5519 + $0x24] sm:$0xf]
          %v5528 = vld [vmem:[%s5519 + $0x28] sm:$0xf]
          %v5529 = vld [vmem:[%s5519 + $0x30] sm:$0x8]
          %v5530 = vld [vmem:[%s5519 + $0x34] sm:$0xf]
          %v5531 = vld [vmem:[%s5519 + $0x38] sm:$0xf]
          %v5532 = vld [vmem:[%s5519 + $0x40] sm:$0x8]
          %v5533 = vld [vmem:[%s5519 + $0x44] sm:$0xf]
          %v5534 = vld [vmem:[%s5519 + $0x48] sm:$0xf]
          %v5535 = vld [vmem:[%s5519 + $0x50] sm:$0x8]
          %v5536 = vld [vmem:[%s5519 + $0x54] sm:$0xf]
          %v5537 = vld [vmem:[%s5519 + $0x58] sm:$0xf]
          %v5538 = vld [vmem:[%s5519 + $0x60] sm:$0x8]
          %v5539 = vld [vmem:[%s5519 + $0x64] sm:$0xf]
          %v5540 = vld [vmem:[%s5519 + $0x68] sm:$0xf]
          %v5541 = vld [vmem:[%s5519 + $0x70] sm:$0x8]
          %v5542 = vld [vmem:[%s5519 + $0x74] sm:$0xf]
          %v5543 = vld [vmem:[%s5519 + $0x78] sm:$0xf]
          %v5545 = vshrl.u32 %v5520, 16
          %v5547 = vrot.slane %v5545, 7
          %v5548 = vrot.slane %v5547, 4
          %v5550 = vshrl.u32 %v5521, 16
          %v5552 = vrot.slane %v5550, 7
          %v5553 = vshll.u32 %v5521, 16
          %v5555 = vor.u32 %v5552, %v5553
          %v5556 = vsel %vm4554, %v5548, %v5555
          %v5557 = vrot.slane %v5552, 4
          %v5559 = vshrl.u32 %v5522, 16
          %v5561 = vrot.slane %v5559, 7
          %v5562 = vshll.u32 %v5522, 16
          %v5564 = vor.u32 %v5561, %v5562
          %v5565 = vsel %vm4554, %v5557, %v5564
          %v5567 = vshrl.u32 %v5523, 16
          %v5569 = vrot.slane %v5567, 7
          %v5570 = vrot.slane %v5569, 4
          %v5572 = vshrl.u32 %v5524, 16
          %v5574 = vrot.slane %v5572, 7
          %v5575 = vshll.u32 %v5524, 16
          %v5577 = vor.u32 %v5574, %v5575
          %v5578 = vsel %vm4554, %v5570, %v5577
          %v5579 = vrot.slane %v5574, 4
          %v5581 = vshrl.u32 %v5525, 16
          %v5583 = vrot.slane %v5581, 7
          %v5584 = vshll.u32 %v5525, 16
          %v5586 = vor.u32 %v5583, %v5584
          %v5587 = vsel %vm4554, %v5579, %v5586
          %v5589 = vshrl.u32 %v5526, 16
          %v5591 = vrot.slane %v5589, 7
          %v5592 = vrot.slane %v5591, 4
          %v5594 = vshrl.u32 %v5527, 16
          %v5596 = vrot.slane %v5594, 7
          %v5597 = vshll.u32 %v5527, 16
          %v5599 = vor.u32 %v5596, %v5597
          %v5600 = vsel %vm4554, %v5592, %v5599
          %v5601 = vrot.slane %v5596, 4
          %v5603 = vshrl.u32 %v5528, 16
          %v5605 = vrot.slane %v5603, 7
          %v5606 = vshll.u32 %v5528, 16
          %v5608 = vor.u32 %v5605, %v5606
          %v5609 = vsel %vm4554, %v5601, %v5608
          %v5611 = vshrl.u32 %v5529, 16
          %v5613 = vrot.slane %v5611, 7
          %v5614 = vrot.slane %v5613, 4
          %v5616 = vshrl.u32 %v5530, 16
          %v5618 = vrot.slane %v5616, 7
          %v5619 = vshll.u32 %v5530, 16
          %v5621 = vor.u32 %v5618, %v5619
          %v5622 = vsel %vm4554, %v5614, %v5621
          %v5623 = vrot.slane %v5618, 4
          %v5625 = vshrl.u32 %v5531, 16
          %v5627 = vrot.slane %v5625, 7
          %v5628 = vshll.u32 %v5531, 16
          %v5630 = vor.u32 %v5627, %v5628
          %v5631 = vsel %vm4554, %v5623, %v5630
          %v5633 = vshrl.u32 %v5532, 16
          %v5635 = vrot.slane %v5633, 7
          %v5636 = vrot.slane %v5635, 4
          %v5638 = vshrl.u32 %v5533, 16
          %v5640 = vrot.slane %v5638, 7
          %v5641 = vshll.u32 %v5533, 16
          %v5643 = vor.u32 %v5640, %v5641
          %v5644 = vsel %vm4554, %v5636, %v5643
          %v5645 = vrot.slane %v5640, 4
          %v5647 = vshrl.u32 %v5534, 16
          %v5649 = vrot.slane %v5647, 7
          %v5650 = vshll.u32 %v5534, 16
          %v5652 = vor.u32 %v5649, %v5650
          %v5653 = vsel %vm4554, %v5645, %v5652
          %v5655 = vshrl.u32 %v5535, 16
          %v5657 = vrot.slane %v5655, 7
          %v5658 = vrot.slane %v5657, 4
          %v5660 = vshrl.u32 %v5536, 16
          %v5662 = vrot.slane %v5660, 7
          %v5663 = vshll.u32 %v5536, 16
          %v5665 = vor.u32 %v5662, %v5663
          %v5666 = vsel %vm4554, %v5658, %v5665
          %v5667 = vrot.slane %v5662, 4
          %v5669 = vshrl.u32 %v5537, 16
          %v5671 = vrot.slane %v5669, 7
          %v5672 = vshll.u32 %v5537, 16
          %v5674 = vor.u32 %v5671, %v5672
          %v5675 = vsel %vm4554, %v5667, %v5674
          %v5677 = vshrl.u32 %v5538, 16
          %v5679 = vrot.slane %v5677, 7
          %v5680 = vrot.slane %v5679, 4
          %v5682 = vshrl.u32 %v5539, 16
          %v5684 = vrot.slane %v5682, 7
          %v5685 = vshll.u32 %v5539, 16
          %v5687 = vor.u32 %v5684, %v5685
          %v5688 = vsel %vm4554, %v5680, %v5687
          %v5689 = vrot.slane %v5684, 4
          %v5691 = vshrl.u32 %v5540, 16
          %v5693 = vrot.slane %v5691, 7
          %v5694 = vshll.u32 %v5540, 16
          %v5696 = vor.u32 %v5693, %v5694
          %v5697 = vsel %vm4554, %v5689, %v5696
          %v5699 = vshrl.u32 %v5541, 16
          %v5701 = vrot.slane %v5699, 7
          %v5702 = vrot.slane %v5701, 4
          %v5704 = vshrl.u32 %v5542, 16
          %v5706 = vrot.slane %v5704, 7
          %v5707 = vshll.u32 %v5542, 16
          %v5709 = vor.u32 %v5706, %v5707
          %v5710 = vsel %vm4554, %v5702, %v5709
          %v5711 = vrot.slane %v5706, 4
          %v5713 = vshrl.u32 %v5543, 16
          %v5715 = vrot.slane %v5713, 7
          %v5716 = vshll.u32 %v5543, 16
          %v5718 = vor.u32 %v5715, %v5716
          %v5719 = vsel %vm4554, %v5711, %v5718
          %s5720 = scalar_lea.vmem %s7, 96
          %v5721 = vld [vmem:[%s5720] sm:$0xf]
          %v5722 = vld [vmem:[%s5720 + $0x4] sm:$0xf]
          %v5723 = vld [vmem:[%s5720 + $0x8] sm:$0xf]
          %v5724 = vld [vmem:[%s5720 + $0xc] sm:$0xf]
          %v5725 = vld [vmem:[%s5720 + $0x10] sm:$0xf]
          %v5726 = vld [vmem:[%s5720 + $0x14] sm:$0xf]
          %v5727 = vld [vmem:[%s5720 + $0x18] sm:$0xf]
          %v5728 = vld [vmem:[%s5720 + $0x1c] sm:$0xf]
          %v5729 = vunpack.c.l.b16 %v5556
          %v5730 = vunpack.c.l.b16 %v5565
          %v5731 = vunpack.c.l.b16 %v5578
          %v5732 = vunpack.c.l.b16 %v5587
          %v5733 = vunpack.c.l.b16 %v5600
          %v5734 = vunpack.c.l.b16 %v5609
          %v5735 = vunpack.c.l.b16 %v5622
          %v5736 = vunpack.c.l.b16 %v5631
          %v5737 = vunpack.c.l.b16 %v5644
          %v5738 = vunpack.c.l.b16 %v5653
          %v5739 = vunpack.c.l.b16 %v5666
          %v5740 = vunpack.c.l.b16 %v5675
          %v5741 = vunpack.c.l.b16 %v5688
          %v5742 = vunpack.c.l.b16 %v5697
          %v5743 = vunpack.c.l.b16 %v5710
          %v5744 = vunpack.c.l.b16 %v5719
          %v5745 = vpack.c.b16 %v5730, %v5729
          %v5746 = vpack.c.b16 %v5732, %v5731
          %v5747 = vpack.c.b16 %v5734, %v5733
          %v5748 = vpack.c.b16 %v5736, %v5735
          %v5749 = vpack.c.b16 %v5738, %v5737
          %v5750 = vpack.c.b16 %v5740, %v5739
          %v5751 = vpack.c.b16 %v5742, %v5741
          %v5752 = vpack.c.b16 %v5744, %v5743
          %v5761 = vunpack.c.l.b16 %v5721
          %v5762 = vunpack.c.l.b16 %v5722
          %v5763 = vunpack.c.l.b16 %v5723
          %v5764 = vunpack.c.l.b16 %v5724
          %v5765 = vunpack.c.l.b16 %v5725
          %v5766 = vunpack.c.l.b16 %v5726
          %v5767 = vunpack.c.l.b16 %v5727
          %v5768 = vunpack.c.l.b16 %v5728
          %v5769 = vpack.c.b16 %v5762, %v5761
          %v5770 = vpack.c.b16 %v5764, %v5763
          %v5771 = vpack.c.b16 %v5766, %v5765
          %v5772 = vpack.c.b16 %v5768, %v5767
          %v5778 = vsel %vm4812, %v5745, 0
          %v5781 = vsel %vm4812, %v5746, 0
          %v5784 = vsel %vm4812, %v5747, 0
          %v5787 = vsel %vm4812, %v5748, 0
          %v5790 = vsel %vm4812, %v5749, 0
          %v5793 = vsel %vm4812, %v5750, 0
          %v5796 = vsel %vm4812, %v5751, 0
          %v5799 = vsel %vm4812, %v5752, 0
          %5801 = vmatprep.subr.bf16.mxu0 0
          %5802 = vmatpush1.bf16.msra.mxu0 %v5769
          %5803 = vmatprep.subr.bf16.mxu0 0
          %5804 = vmatpush1.bf16.msra.mxu0 %v5770
          %5805 = vmatprep.subr.bf16.mxu0 0
          %5806 = vmatpush1.bf16.msra.mxu0 %v5771
          %5807 = vmatprep.subr.bf16.mxu0 0
          %5808 = vmatpush1.bf16.msra.mxu0 %v5772
          %5809 = vmatprep.subr.bf16.mxu0 0
          %5810 = vmatpush1.bf16.msra.mxu0 0
          %5811 = vmatprep.subr.bf16.mxu0 0
          %5812 = vmatpush1.bf16.msra.mxu0 0
          %5813 = vmatprep.subr.bf16.mxu0 0
          %5814 = vmatpush1.bf16.msra.mxu0 0
          %5815 = vmatprep.subr.bf16.mxu0 0
          %5816 = vmatpush1.bf16.msra.mxu0 0
          %5817 = vmatprep.subr.bf16.mxu0 0
          %5818 = vmatpush1.bf16.msra.mxu0 0
          %5819 = vmatprep.subr.bf16.mxu0 0
          %5820 = vmatpush1.bf16.msra.mxu0 0
          %5821 = vmatprep.subr.bf16.mxu0 0
          %5822 = vmatpush1.bf16.msra.mxu0 0
          %5823 = vmatprep.subr.bf16.mxu0 0
          %5824 = vmatpush1.bf16.msra.mxu0 0
          %5825 = vmatprep.subr.bf16.mxu0 0
          %5826 = vmatpush1.bf16.msra.mxu0 0
          %5827 = vmatprep.subr.bf16.mxu0 0
          %5828 = vmatpush1.bf16.msra.mxu0 0
          %5829 = vmatprep.subr.bf16.mxu0 0
          %5830 = vmatpush1.bf16.msra.mxu0 0
          %5831 = vmatprep.subr.bf16.mxu0 0
          %5832 = vmatpush1.bf16.msra.mxu0 0
          %5833 = vmatprep.mubr.bf16.mxu0 0
          %5834 = vmatmul.mubr.bf16.gmra.mrb[0].mxu0 %v5778
          %v5835 = vpop.f32.mrb[0].mxu0
          %v5836 = vadd.f32 0.0, %v5835
          %v5837 = vpop.f32.mrb[0].mxu0
          %v5838 = vpop.f32.mrb[0].mxu0
          %v5839 = vadd.f32 0.0, %v5838
          %v5840 = vpop.f32.mrb[0].mxu0
          %5841 = vmatprep.mubr.bf16.mxu0 0
          %5842 = vmatmul.mubr.bf16.gmra.mrb[0].mxu0 %v5781
          %v5843 = vpop.f32.mrb[0].mxu0
          %v5844 = vadd.f32 0.0, %v5843
          %v5845 = vpop.f32.mrb[0].mxu0
          %v5846 = vpop.f32.mrb[0].mxu0
          %v5847 = vadd.f32 0.0, %v5846
          %v5848 = vpop.f32.mrb[0].mxu0
          %5849 = vmatprep.mubr.bf16.mxu0 0
          %5850 = vmatmul.mubr.bf16.gmra.mrb[0].mxu0 %v5784
          %v5851 = vpop.f32.mrb[0].mxu0
          %v5852 = vadd.f32 0.0, %v5851
          %v5853 = vpop.f32.mrb[0].mxu0
          %v5854 = vpop.f32.mrb[0].mxu0
          %v5855 = vadd.f32 0.0, %v5854
          %v5856 = vpop.f32.mrb[0].mxu0
          %5857 = vmatprep.mubr.bf16.mxu0 0
          %5858 = vmatmul.mubr.bf16.gmra.mrb[0].mxu0 %v5787
          %v5859 = vpop.f32.mrb[0].mxu0
          %v5860 = vadd.f32 0.0, %v5859
          %v5861 = vpop.f32.mrb[0].mxu0
          %v5862 = vpop.f32.mrb[0].mxu0
          %v5863 = vadd.f32 0.0, %v5862
          %v5864 = vpop.f32.mrb[0].mxu0
          %5865 = vmatprep.mubr.bf16.mxu0 0
          %5866 = vmatmul.mubr.bf16.gmra.mrb[0].mxu0 %v5790
          %v5867 = vpop.f32.mrb[0].mxu0
          %v5868 = vadd.f32 0.0, %v5867
          %v5869 = vpop.f32.mrb[0].mxu0
          %v5870 = vpop.f32.mrb[0].mxu0
          %v5871 = vadd.f32 0.0, %v5870
          %v5872 = vpop.f32.mrb[0].mxu0
          %5873 = vmatprep.mubr.bf16.mxu0 0
          %5874 = vmatmul.mubr.bf16.gmra.mrb[0].mxu0 %v5793
          %v5875 = vpop.f32.mrb[0].mxu0
          %v5876 = vadd.f32 0.0, %v5875
          %v5877 = vpop.f32.mrb[0].mxu0
          %v5878 = vpop.f32.mrb[0].mxu0
          %v5879 = vadd.f32 0.0, %v5878
          %v5880 = vpop.f32.mrb[0].mxu0
          %5881 = vmatprep.mubr.bf16.mxu0 0
          %5882 = vmatmul.mubr.bf16.gmra.mrb[0].mxu0 %v5796
          %v5883 = vpop.f32.mrb[0].mxu0
          %v5884 = vadd.f32 0.0, %v5883
          %v5885 = vpop.f32.mrb[0].mxu0
          %v5886 = vpop.f32.mrb[0].mxu0
          %v5887 = vadd.f32 0.0, %v5886
          %v5888 = vpop.f32.mrb[0].mxu0
          %5889 = vmatprep.mubr.bf16.mxu0 0
          %5890 = vmatmul.mubr.bf16.gmra.mrb[0].mxu0 %v5799
          %v5891 = vpop.f32.mrb[0].mxu0
          %v5892 = vadd.f32 0.0, %v5891
          %v5893 = vpop.f32.mrb[0].mxu0
          %v5894 = vpop.f32.mrb[0].mxu0
          %v5895 = vadd.f32 0.0, %v5894
          %v5896 = vpop.f32.mrb[0].mxu0
          %5897 = vdwg.mxu0
          %v5898 = vadd.f32 %v5500, %v5836
          %v5899 = vadd.f32 %v5501, %v5839
          %v5900 = vadd.f32 %v5502, %v5844
          %v5901 = vadd.f32 %v5503, %v5847
          %v5902 = vadd.f32 %v5504, %v5852
          %v5903 = vadd.f32 %v5505, %v5855
          %v5904 = vadd.f32 %v5506, %v5860
          %v5905 = vadd.f32 %v5507, %v5863
          %v5906 = vadd.f32 %v5508, %v5868
          %v5907 = vadd.f32 %v5509, %v5871
          %v5908 = vadd.f32 %v5510, %v5876
          %v5909 = vadd.f32 %v5511, %v5879
          %v5910 = vadd.f32 %v5512, %v5884
          %v5911 = vadd.f32 %v5513, %v5887
          %v5912 = vadd.f32 %v5514, %v5892
          %v5913 = vadd.f32 %v5515, %v5895
          %s5914 = scalar_lea.vmem %s7, 128
          %v5915 = vld [vmem:[%s5914] sm:$0xf]
          %v5916 = vld [vmem:[%s5914 + $0x4] sm:$0xf]
          %v5917 = vld [vmem:[%s5914 + $0x8] sm:$0xf]
          %v5918 = vld [vmem:[%s5914 + $0xc] sm:$0xf]
          %v5919 = vld [vmem:[%s5914 + $0x10] sm:$0xf]
          %v5920 = vld [vmem:[%s5914 + $0x14] sm:$0xf]
          %v5921 = vld [vmem:[%s5914 + $0x18] sm:$0xf]
          %v5922 = vld [vmem:[%s5914 + $0x1c] sm:$0xf]
          %v5939 = vunpack.c.l.b16 %v5521
          %v5940 = vunpack.c.l.b16 %v5522
          %v5941 = vunpack.c.l.b16 %v5524
          %v5942 = vunpack.c.l.b16 %v5525
          %v5943 = vunpack.c.l.b16 %v5527
          %v5944 = vunpack.c.l.b16 %v5528
          %v5945 = vunpack.c.l.b16 %v5530
          %v5946 = vunpack.c.l.b16 %v5531
          %v5947 = vunpack.c.l.b16 %v5533
          %v5948 = vunpack.c.l.b16 %v5534
          %v5949 = vunpack.c.l.b16 %v5536
          %v5950 = vunpack.c.l.b16 %v5537
          %v5951 = vunpack.c.l.b16 %v5539
          %v5952 = vunpack.c.l.b16 %v5540
          %v5953 = vunpack.c.l.b16 %v5542
          %v5954 = vunpack.c.l.b16 %v5543
          %v5955 = vpack.c.b16 %v5940, %v5939
          %v5956 = vpack.c.b16 %v5942, %v5941
          %v5957 = vpack.c.b16 %v5944, %v5943
          %v5958 = vpack.c.b16 %v5946, %v5945
          %v5959 = vpack.c.b16 %v5948, %v5947
          %v5960 = vpack.c.b16 %v5950, %v5949
          %v5961 = vpack.c.b16 %v5952, %v5951
          %v5962 = vpack.c.b16 %v5954, %v5953
          %v5971 = vunpack.c.l.b16 %v5915
          %v5972 = vunpack.c.l.b16 %v5916
          %v5973 = vunpack.c.l.b16 %v5917
          %v5974 = vunpack.c.l.b16 %v5918
          %v5975 = vunpack.c.l.b16 %v5919
          %v5976 = vunpack.c.l.b16 %v5920
          %v5977 = vunpack.c.l.b16 %v5921
          %v5978 = vunpack.c.l.b16 %v5922
          %v5979 = vpack.c.b16 %v5972, %v5971
          %v5980 = vpack.c.b16 %v5974, %v5973
          %v5981 = vpack.c.b16 %v5976, %v5975
          %v5982 = vpack.c.b16 %v5978, %v5977
          %v5988 = vsel %vm4812, %v5955, 0
          %v5991 = vsel %vm4812, %v5956, 0
          %v5994 = vsel %vm4812, %v5957, 0
          %v5997 = vsel %vm4812, %v5958, 0
          %v6000 = vsel %vm4812, %v5959, 0
          %v6003 = vsel %vm4812, %v5960, 0
          %v6006 = vsel %vm4812, %v5961, 0
          %v6009 = vsel %vm4812, %v5962, 0
          %6011 = vmatprep.subr.bf16.mxu0 0
          %6012 = vmatpush1.bf16.msra.mxu0 %v5979
          %6013 = vmatprep.subr.bf16.mxu0 0
          %6014 = vmatpush1.bf16.msra.mxu0 %v5980
          %6015 = vmatprep.subr.bf16.mxu0 0
          %6016 = vmatpush1.bf16.msra.mxu0 %v5981
          %6017 = vmatprep.subr.bf16.mxu0 0
          %6018 = vmatpush1.bf16.msra.mxu0 %v5982
          %6019 = vmatprep.subr.bf16.mxu0 0
          %6020 = vmatpush1.bf16.msra.mxu0 0
          %6021 = vmatprep.subr.bf16.mxu0 0
          %6022 = vmatpush1.bf16.msra.mxu0 0
          %6023 = vmatprep.subr.bf16.mxu0 0
          %6024 = vmatpush1.bf16.msra.mxu0 0
          %6025 = vmatprep.subr.bf16.mxu0 0
          %6026 = vmatpush1.bf16.msra.mxu0 0
          %6027 = vmatprep.subr.bf16.mxu0 0
          %6028 = vmatpush1.bf16.msra.mxu0 0
          %6029 = vmatprep.subr.bf16.mxu0 0
          %6030 = vmatpush1.bf16.msra.mxu0 0
          %6031 = vmatprep.subr.bf16.mxu0 0
          %6032 = vmatpush1.bf16.msra.mxu0 0
          %6033 = vmatprep.subr.bf16.mxu0 0
          %6034 = vmatpush1.bf16.msra.mxu0 0
          %6035 = vmatprep.subr.bf16.mxu0 0
          %6036 = vmatpush1.bf16.msra.mxu0 0
          %6037 = vmatprep.subr.bf16.mxu0 0
          %6038 = vmatpush1.bf16.msra.mxu0 0
          %6039 = vmatprep.subr.bf16.mxu0 0
          %6040 = vmatpush1.bf16.msra.mxu0 0
          %6041 = vmatprep.subr.bf16.mxu0 0
          %6042 = vmatpush1.bf16.msra.mxu0 0
          %6043 = vmatprep.mubr.bf16.mxu0 0
          %6044 = vmatmul.mubr.bf16.gmra.mrb[0].mxu0 %v5988
          %v6045 = vpop.f32.mrb[0].mxu0
          %v6046 = vadd.f32 0.0, %v6045
          %v6047 = vpop.f32.mrb[0].mxu0
          %v6048 = vpop.f32.mrb[0].mxu0
          %v6049 = vadd.f32 0.0, %v6048
          %v6050 = vpop.f32.mrb[0].mxu0
          %6051 = vmatprep.mubr.bf16.mxu0 0
          %6052 = vmatmul.mubr.bf16.gmra.mrb[0].mxu0 %v5991
          %v6053 = vpop.f32.mrb[0].mxu0
          %v6054 = vadd.f32 0.0, %v6053
          %v6055 = vpop.f32.mrb[0].mxu0
          %v6056 = vpop.f32.mrb[0].mxu0
          %v6057 = vadd.f32 0.0, %v6056
          %v6058 = vpop.f32.mrb[0].mxu0
          %6059 = vmatprep.mubr.bf16.mxu0 0
          %6060 = vmatmul.mubr.bf16.gmra.mrb[0].mxu0 %v5994
          %v6061 = vpop.f32.mrb[0].mxu0
          %v6062 = vadd.f32 0.0, %v6061
          %v6063 = vpop.f32.mrb[0].mxu0
          %v6064 = vpop.f32.mrb[0].mxu0
          %v6065 = vadd.f32 0.0, %v6064
          %v6066 = vpop.f32.mrb[0].mxu0
          %6067 = vmatprep.mubr.bf16.mxu0 0
          %6068 = vmatmul.mubr.bf16.gmra.mrb[0].mxu0 %v5997
          %v6069 = vpop.f32.mrb[0].mxu0
          %v6070 = vadd.f32 0.0, %v6069
          %v6071 = vpop.f32.mrb[0].mxu0
          %v6072 = vpop.f32.mrb[0].mxu0
          %v6073 = vadd.f32 0.0, %v6072
          %v6074 = vpop.f32.mrb[0].mxu0
          %6075 = vmatprep.mubr.bf16.mxu0 0
          %6076 = vmatmul.mubr.bf16.gmra.mrb[0].mxu0 %v6000
          %v6077 = vpop.f32.mrb[0].mxu0
          %v6078 = vadd.f32 0.0, %v6077
          %v6079 = vpop.f32.mrb[0].mxu0
          %v6080 = vpop.f32.mrb[0].mxu0
          %v6081 = vadd.f32 0.0, %v6080
          %v6082 = vpop.f32.mrb[0].mxu0
          %6083 = vmatprep.mubr.bf16.mxu0 0
          %6084 = vmatmul.mubr.bf16.gmra.mrb[0].mxu0 %v6003
          %v6085 = vpop.f32.mrb[0].mxu0
          %v6086 = vadd.f32 0.0, %v6085
          %v6087 = vpop.f32.mrb[0].mxu0
          %v6088 = vpop.f32.mrb[0].mxu0
          %v6089 = vadd.f32 0.0, %v6088
          %v6090 = vpop.f32.mrb[0].mxu0
          %6091 = vmatprep.mubr.bf16.mxu0 0
          %6092 = vmatmul.mubr.bf16.gmra.mrb[0].mxu0 %v6006
          %v6093 = vpop.f32.mrb[0].mxu0
          %v6094 = vadd.f32 0.0, %v6093
          %v6095 = vpop.f32.mrb[0].mxu0
          %v6096 = vpop.f32.mrb[0].mxu0
          %v6097 = vadd.f32 0.0, %v6096
          %v6098 = vpop.f32.mrb[0].mxu0
          %6099 = vmatprep.mubr.bf16.mxu0 0
          %6100 = vmatmul.mubr.bf16.gmra.mrb[0].mxu0 %v6009
          %v6101 = vpop.f32.mrb[0].mxu0
          %v6102 = vadd.f32 0.0, %v6101
          %v6103 = vpop.f32.mrb[0].mxu0
          %v6104 = vpop.f32.mrb[0].mxu0
          %v6105 = vadd.f32 0.0, %v6104
          %v6106 = vpop.f32.mrb[0].mxu0
          %6107 = vdwg.mxu0
          %v6108 = vadd.f32 %v5898, %v6046
          %v6109 = vadd.f32 %v5899, %v6049
          %v6110 = vadd.f32 %v5900, %v6054
          %v6111 = vadd.f32 %v5901, %v6057
          %v6112 = vadd.f32 %v5902, %v6062
          %v6113 = vadd.f32 %v5903, %v6065
          %v6114 = vadd.f32 %v5904, %v6070
          %v6115 = vadd.f32 %v5905, %v6073
          %v6116 = vadd.f32 %v5906, %v6078
          %v6117 = vadd.f32 %v5907, %v6081
          %v6118 = vadd.f32 %v5908, %v6086
          %v6119 = vadd.f32 %v5909, %v6089
          %v6120 = vadd.f32 %v5910, %v6094
          %v6121 = vadd.f32 %v5911, %v6097
          %v6122 = vadd.f32 %v5912, %v6102
          %v6123 = vadd.f32 %v5913, %v6105
          %v6124 = vld [vmem:[%s5519 + $0x4] sm:$0xf]
          %v6125 = vld [vmem:[%s5519 + $0x8] sm:$0xf]
          %v6126 = vld [vmem:[%s5519 + $0xc] sm:$0x1]
          %v6127 = vld [vmem:[%s5519 + $0x14] sm:$0xf]
          %v6128 = vld [vmem:[%s5519 + $0x18] sm:$0xf]
          %v6129 = vld [vmem:[%s5519 + $0x1c] sm:$0x1]
          %v6130 = vld [vmem:[%s5519 + $0x24] sm:$0xf]
          %v6131 = vld [vmem:[%s5519 + $0x28] sm:$0xf]
          %v6132 = vld [vmem:[%s5519 + $0x2c] sm:$0x1]
          %v6133 = vld [vmem:[%s5519 + $0x34] sm:$0xf]
          %v6134 = vld [vmem:[%s5519 + $0x38] sm:$0xf]
          %v6135 = vld [vmem:[%s5519 + $0x3c] sm:$0x1]
          %v6136 = vld [vmem:[%s5519 + $0x44] sm:$0xf]
          %v6137 = vld [vmem:[%s5519 + $0x48] sm:$0xf]
          %v6138 = vld [vmem:[%s5519 + $0x4c] sm:$0x1]
          %v6139 = vld [vmem:[%s5519 + $0x54] sm:$0xf]
          %v6140 = vld [vmem:[%s5519 + $0x58] sm:$0xf]
          %v6141 = vld [vmem:[%s5519 + $0x5c] sm:$0x1]
          %v6142 = vld [vmem:[%s5519 + $0x64] sm:$0xf]
          %v6143 = vld [vmem:[%s5519 + $0x68] sm:$0xf]
          %v6144 = vld [vmem:[%s5519 + $0x6c] sm:$0x1]
          %v6145 = vld [vmem:[%s5519 + $0x74] sm:$0xf]
          %v6146 = vld [vmem:[%s5519 + $0x78] sm:$0xf]
          %v6147 = vld [vmem:[%s5519 + $0x7c] sm:$0x1]
          %v6149 = vshrl.u32 %v6124, 16
          %v6151 = vrot.slane %v6149, 4
          %v6152 = vshll.u32 %v6124, 16
          %v6154 = vrot.slane %v6152, 5
          %v6155 = vor.u32 %v6151, %v6154
          %v6156 = vrot.slane %v6155, 4
          %v6158 = vshll.u32 %v6125, 16
          %v6160 = vrot.slane %v6158, 5
          %v6161 = vsel %vm5129, %v6156, %v6160
          %v6162 = vshrl.u32 %v6125, 16
          %v6164 = vrot.slane %v6162, 4
          %v6165 = vor.u32 %v6164, %v6160
          %v6166 = vrot.slane %v6165, 4
          %v6168 = vshll.u32 %v6126, 16
          %v6170 = vrot.slane %v6168, 5
          %v6171 = vsel %vm5129, %v6166, %v6170
          %v6173 = vshrl.u32 %v6127, 16
          %v6175 = vrot.slane %v6173, 4
          %v6176 = vshll.u32 %v6127, 16
          %v6178 = vrot.slane %v6176, 5
          %v6179 = vor.u32 %v6175, %v6178
          %v6180 = vrot.slane %v6179, 4
          %v6182 = vshll.u32 %v6128, 16
          %v6184 = vrot.slane %v6182, 5
          %v6185 = vsel %vm5129, %v6180, %v6184
          %v6186 = vshrl.u32 %v6128, 16
          %v6188 = vrot.slane %v6186, 4
          %v6189 = vor.u32 %v6188, %v6184
          %v6190 = vrot.slane %v6189, 4
          %v6192 = vshll.u32 %v6129, 16
          %v6194 = vrot.slane %v6192, 5
          %v6195 = vsel %vm5129, %v6190, %v6194
          %v6197 = vshrl.u32 %v6130, 16
          %v6199 = vrot.slane %v6197, 4
          %v6200 = vshll.u32 %v6130, 16
          %v6202 = vrot.slane %v6200, 5
          %v6203 = vor.u32 %v6199, %v6202
          %v6204 = vrot.slane %v6203, 4
          %v6206 = vshll.u32 %v6131, 16
          %v6208 = vrot.slane %v6206, 5
          %v6209 = vsel %vm5129, %v6204, %v6208
          %v6210 = vshrl.u32 %v6131, 16
          %v6212 = vrot.slane %v6210, 4
          %v6213 = vor.u32 %v6212, %v6208
          %v6214 = vrot.slane %v6213, 4
          %v6216 = vshll.u32 %v6132, 16
          %v6218 = vrot.slane %v6216, 5
          %v6219 = vsel %vm5129, %v6214, %v6218
          %v6221 = vshrl.u32 %v6133, 16
          %v6223 = vrot.slane %v6221, 4
          %v6224 = vshll.u32 %v6133, 16
          %v6226 = vrot.slane %v6224, 5
          %v6227 = vor.u32 %v6223, %v6226
          %v6228 = vrot.slane %v6227, 4
          %v6230 = vshll.u32 %v6134, 16
          %v6232 = vrot.slane %v6230, 5
          %v6233 = vsel %vm5129, %v6228, %v6232
          %v6234 = vshrl.u32 %v6134, 16
          %v6236 = vrot.slane %v6234, 4
          %v6237 = vor.u32 %v6236, %v6232
          %v6238 = vrot.slane %v6237, 4
          %v6240 = vshll.u32 %v6135, 16
          %v6242 = vrot.slane %v6240, 5
          %v6243 = vsel %vm5129, %v6238, %v6242
          %v6245 = vshrl.u32 %v6136, 16
          %v6247 = vrot.slane %v6245, 4
          %v6248 = vshll.u32 %v6136, 16
          %v6250 = vrot.slane %v6248, 5
          %v6251 = vor.u32 %v6247, %v6250
          %v6252 = vrot.slane %v6251, 4
          %v6254 = vshll.u32 %v6137, 16
          %v6256 = vrot.slane %v6254, 5
          %v6257 = vsel %vm5129, %v6252, %v6256
          %v6258 = vshrl.u32 %v6137, 16
          %v6260 = vrot.slane %v6258, 4
          %v6261 = vor.u32 %v6260, %v6256
          %v6262 = vrot.slane %v6261, 4
          %v6264 = vshll.u32 %v6138, 16
          %v6266 = vrot.slane %v6264, 5
          %v6267 = vsel %vm5129, %v6262, %v6266
          %v6269 = vshrl.u32 %v6139, 16
          %v6271 = vrot.slane %v6269, 4
          %v6272 = vshll.u32 %v6139, 16
          %v6274 = vrot.slane %v6272, 5
          %v6275 = vor.u32 %v6271, %v6274
          %v6276 = vrot.slane %v6275, 4
          %v6278 = vshll.u32 %v6140, 16
          %v6280 = vrot.slane %v6278, 5
          %v6281 = vsel %vm5129, %v6276, %v6280
          %v6282 = vshrl.u32 %v6140, 16
          %v6284 = vrot.slane %v6282, 4
          %v6285 = vor.u32 %v6284, %v6280
          %v6286 = vrot.slane %v6285, 4
          %v6288 = vshll.u32 %v6141, 16
          %v6290 = vrot.slane %v6288, 5
          %v6291 = vsel %vm5129, %v6286, %v6290
          %v6293 = vshrl.u32 %v6142, 16
          %v6295 = vrot.slane %v6293, 4
          %v6296 = vshll.u32 %v6142, 16
          %v6298 = vrot.slane %v6296, 5
          %v6299 = vor.u32 %v6295, %v6298
          %v6300 = vrot.slane %v6299, 4
          %v6302 = vshll.u32 %v6143, 16
          %v6304 = vrot.slane %v6302, 5
          %v6305 = vsel %vm5129, %v6300, %v6304
          %v6306 = vshrl.u32 %v6143, 16
          %v6308 = vrot.slane %v6306, 4
          %v6309 = vor.u32 %v6308, %v6304
          %v6310 = vrot.slane %v6309, 4
          %v6312 = vshll.u32 %v6144, 16
          %v6314 = vrot.slane %v6312, 5
          %v6315 = vsel %vm5129, %v6310, %v6314
          %v6317 = vshrl.u32 %v6145, 16
          %v6319 = vrot.slane %v6317, 4
          %v6320 = vshll.u32 %v6145, 16
          %v6322 = vrot.slane %v6320, 5
          %v6323 = vor.u32 %v6319, %v6322
          %v6324 = vrot.slane %v6323, 4
          %v6326 = vshll.u32 %v6146, 16
          %v6328 = vrot.slane %v6326, 5
          %v6329 = vsel %vm5129, %v6324, %v6328
          %v6330 = vshrl.u32 %v6146, 16
          %v6332 = vrot.slane %v6330, 4
          %v6333 = vor.u32 %v6332, %v6328
          %v6334 = vrot.slane %v6333, 4
          %v6336 = vshll.u32 %v6147, 16
          %v6338 = vrot.slane %v6336, 5
          %v6339 = vsel %vm5129, %v6334, %v6338
          %s6340 = scalar_lea.vmem %s7, 160
          %v6341 = vld [vmem:[%s6340] sm:$0xf]
          %v6342 = vld [vmem:[%s6340 + $0x4] sm:$0xf]
          %v6343 = vld [vmem:[%s6340 + $0x8] sm:$0xf]
          %v6344 = vld [vmem:[%s6340 + $0xc] sm:$0xf]
          %v6345 = vld [vmem:[%s6340 + $0x10] sm:$0xf]
          %v6346 = vld [vmem:[%s6340 + $0x14] sm:$0xf]
          %v6347 = vld [vmem:[%s6340 + $0x18] sm:$0xf]
          %v6348 = vld [vmem:[%s6340 + $0x1c] sm:$0xf]
          %v6349 = vunpack.c.l.b16 %v6161
          %v6350 = vunpack.c.l.b16 %v6171
          %v6351 = vunpack.c.l.b16 %v6185
          %v6352 = vunpack.c.l.b16 %v6195
          %v6353 = vunpack.c.l.b16 %v6209
          %v6354 = vunpack.c.l.b16 %v6219
          %v6355 = vunpack.c.l.b16 %v6233
          %v6356 = vunpack.c.l.b16 %v6243
          %v6357 = vunpack.c.l.b16 %v6257
          %v6358 = vunpack.c.l.b16 %v6267
          %v6359 = vunpack.c.l.b16 %v6281
          %v6360 = vunpack.c.l.b16 %v6291
          %v6361 = vunpack.c.l.b16 %v6305
          %v6362 = vunpack.c.l.b16 %v6315
          %v6363 = vunpack.c.l.b16 %v6329
          %v6364 = vunpack.c.l.b16 %v6339
          %v6365 = vpack.c.b16 %v6350, %v6349
          %v6366 = vpack.c.b16 %v6352, %v6351
          %v6367 = vpack.c.b16 %v6354, %v6353
          %v6368 = vpack.c.b16 %v6356, %v6355
          %v6369 = vpack.c.b16 %v6358, %v6357
          %v6370 = vpack.c.b16 %v6360, %v6359
          %v6371 = vpack.c.b16 %v6362, %v6361
          %v6372 = vpack.c.b16 %v6364, %v6363
          %v6381 = vunpack.c.l.b16 %v6341
          %v6382 = vunpack.c.l.b16 %v6342
          %v6383 = vunpack.c.l.b16 %v6343
          %v6384 = vunpack.c.l.b16 %v6344
          %v6385 = vunpack.c.l.b16 %v6345
          %v6386 = vunpack.c.l.b16 %v6346
          %v6387 = vunpack.c.l.b16 %v6347
          %v6388 = vunpack.c.l.b16 %v6348
          %v6389 = vpack.c.b16 %v6382, %v6381
          %v6390 = vpack.c.b16 %v6384, %v6383
          %v6391 = vpack.c.b16 %v6386, %v6385
          %v6392 = vpack.c.b16 %v6388, %v6387
          %v6398 = vsel %vm4812, %v6365, 0
          %v6401 = vsel %vm4812, %v6366, 0
          %v6404 = vsel %vm4812, %v6367, 0
          %v6407 = vsel %vm4812, %v6368, 0
          %v6410 = vsel %vm4812, %v6369, 0
          %v6413 = vsel %vm4812, %v6370, 0
          %v6416 = vsel %vm4812, %v6371, 0
          %v6419 = vsel %vm4812, %v6372, 0
          %6421 = vmatprep.subr.bf16.mxu0 0
          %6422 = vmatpush1.bf16.msra.mxu0 %v6389
          %6423 = vmatprep.subr.bf16.mxu0 0
          %6424 = vmatpush1.bf16.msra.mxu0 %v6390
          %6425 = vmatprep.subr.bf16.mxu0 0
          %6426 = vmatpush1.bf16.msra.mxu0 %v6391
          %6427 = vmatprep.subr.bf16.mxu0 0
          %6428 = vmatpush1.bf16.msra.mxu0 %v6392
          %6429 = vmatprep.subr.bf16.mxu0 0
          %6430 = vmatpush1.bf16.msra.mxu0 0
          %6431 = vmatprep.subr.bf16.mxu0 0
          %6432 = vmatpush1.bf16.msra.mxu0 0
          %6433 = vmatprep.subr.bf16.mxu0 0
          %6434 = vmatpush1.bf16.msra.mxu0 0
          %6435 = vmatprep.subr.bf16.mxu0 0
          %6436 = vmatpush1.bf16.msra.mxu0 0
          %6437 = vmatprep.subr.bf16.mxu0 0
          %6438 = vmatpush1.bf16.msra.mxu0 0
          %6439 = vmatprep.subr.bf16.mxu0 0
          %6440 = vmatpush1.bf16.msra.mxu0 0
          %6441 = vmatprep.subr.bf16.mxu0 0
          %6442 = vmatpush1.bf16.msra.mxu0 0
          %6443 = vmatprep.subr.bf16.mxu0 0
          %6444 = vmatpush1.bf16.msra.mxu0 0
          %6445 = vmatprep.subr.bf16.mxu0 0
          %6446 = vmatpush1.bf16.msra.mxu0 0
          %6447 = vmatprep.subr.bf16.mxu0 0
          %6448 = vmatpush1.bf16.msra.mxu0 0
          %6449 = vmatprep.subr.bf16.mxu0 0
          %6450 = vmatpush1.bf16.msra.mxu0 0
          %6451 = vmatprep.subr.bf16.mxu0 0
          %6452 = vmatpush1.bf16.msra.mxu0 0
          %6453 = vmatprep.mubr.bf16.mxu0 0
          %6454 = vmatmul.mubr.bf16.gmra.mrb[0].mxu0 %v6398
          %v6455 = vpop.f32.mrb[0].mxu0
          %v6456 = vadd.f32 0.0, %v6455
          %v6457 = vpop.f32.mrb[0].mxu0
          %v6458 = vpop.f32.mrb[0].mxu0
          %v6459 = vadd.f32 0.0, %v6458
          %v6460 = vpop.f32.mrb[0].mxu0
          %6461 = vmatprep.mubr.bf16.mxu0 0
          %6462 = vmatmul.mubr.bf16.gmra.mrb[0].mxu0 %v6401
          %v6463 = vpop.f32.mrb[0].mxu0
          %v6464 = vadd.f32 0.0, %v6463
          %v6465 = vpop.f32.mrb[0].mxu0
          %v6466 = vpop.f32.mrb[0].mxu0
          %v6467 = vadd.f32 0.0, %v6466
          %v6468 = vpop.f32.mrb[0].mxu0
          %6469 = vmatprep.mubr.bf16.mxu0 0
          %6470 = vmatmul.mubr.bf16.gmra.mrb[0].mxu0 %v6404
          %v6471 = vpop.f32.mrb[0].mxu0
          %v6472 = vadd.f32 0.0, %v6471
          %v6473 = vpop.f32.mrb[0].mxu0
          %v6474 = vpop.f32.mrb[0].mxu0
          %v6475 = vadd.f32 0.0, %v6474
          %v6476 = vpop.f32.mrb[0].mxu0
          %6477 = vmatprep.mubr.bf16.mxu0 0
          %6478 = vmatmul.mubr.bf16.gmra.mrb[0].mxu0 %v6407
          %v6479 = vpop.f32.mrb[0].mxu0
          %v6480 = vadd.f32 0.0, %v6479
          %v6481 = vpop.f32.mrb[0].mxu0
          %v6482 = vpop.f32.mrb[0].mxu0
          %v6483 = vadd.f32 0.0, %v6482
          %v6484 = vpop.f32.mrb[0].mxu0
          %6485 = vmatprep.mubr.bf16.mxu0 0
          %6486 = vmatmul.mubr.bf16.gmra.mrb[0].mxu0 %v6410
          %v6487 = vpop.f32.mrb[0].mxu0
          %v6488 = vadd.f32 0.0, %v6487
          %v6489 = vpop.f32.mrb[0].mxu0
          %v6490 = vpop.f32.mrb[0].mxu0
          %v6491 = vadd.f32 0.0, %v6490
          %v6492 = vpop.f32.mrb[0].mxu0
          %6493 = vmatprep.mubr.bf16.mxu0 0
          %6494 = vmatmul.mubr.bf16.gmra.mrb[0].mxu0 %v6413
          %v6495 = vpop.f32.mrb[0].mxu0
          %v6496 = vadd.f32 0.0, %v6495
          %v6497 = vpop.f32.mrb[0].mxu0
          %v6498 = vpop.f32.mrb[0].mxu0
          %v6499 = vadd.f32 0.0, %v6498
          %v6500 = vpop.f32.mrb[0].mxu0
          %6501 = vmatprep.mubr.bf16.mxu0 0
          %6502 = vmatmul.mubr.bf16.gmra.mrb[0].mxu0 %v6416
          %v6503 = vpop.f32.mrb[0].mxu0
          %v6504 = vadd.f32 0.0, %v6503
          %v6505 = vpop.f32.mrb[0].mxu0
          %v6506 = vpop.f32.mrb[0].mxu0
          %v6507 = vadd.f32 0.0, %v6506
          %v6508 = vpop.f32.mrb[0].mxu0
          %6509 = vmatprep.mubr.bf16.mxu0 0
          %6510 = vmatmul.mubr.bf16.gmra.mrb[0].mxu0 %v6419
          %v6511 = vpop.f32.mrb[0].mxu0
          %v6512 = vadd.f32 0.0, %v6511
          %v6513 = vpop.f32.mrb[0].mxu0
          %v6514 = vpop.f32.mrb[0].mxu0
          %v6515 = vadd.f32 0.0, %v6514
          %v6516 = vpop.f32.mrb[0].mxu0
          %6517 = vdwg.mxu0
          %v6518 = vadd.f32 %v6108, %v6456
          %v6519 = vadd.f32 %v6109, %v6459
          %v6520 = vadd.f32 %v6110, %v6464
          %v6521 = vadd.f32 %v6111, %v6467
          %v6522 = vadd.f32 %v6112, %v6472
          %v6523 = vadd.f32 %v6113, %v6475
          %v6524 = vadd.f32 %v6114, %v6480
          %v6525 = vadd.f32 %v6115, %v6483
          %v6526 = vadd.f32 %v6116, %v6488
          %v6527 = vadd.f32 %v6117, %v6491
          %v6528 = vadd.f32 %v6118, %v6496
          %v6529 = vadd.f32 %v6119, %v6499
          %v6530 = vadd.f32 %v6120, %v6504
          %v6531 = vadd.f32 %v6121, %v6507
          %v6532 = vadd.f32 %v6122, %v6512
          %v6533 = vadd.f32 %v6123, %v6515
          %s6534 = sadd.s32 %s4525, 2
          %s6535 = smul.u32 %s6534, 4
          %s6536 = smul.addr %s6535, 4
          %s6537 = scalar_lea.vmem [#allocation3], %s6536
          %v6538 = vld [vmem:[%s6537] sm:$0x8]
          %v6539 = vld [vmem:[%s6537 + $0x4] sm:$0xf]
          %v6540 = vld [vmem:[%s6537 + $0x8] sm:$0xf]
          %v6541 = vld [vmem:[%s6537 + $0x10] sm:$0x8]
          %v6542 = vld [vmem:[%s6537 + $0x14] sm:$0xf]
          %v6543 = vld [vmem:[%s6537 + $0x18] sm:$0xf]
          %v6544 = vld [vmem:[%s6537 + $0x20] sm:$0x8]
          %v6545 = vld [vmem:[%s6537 + $0x24] sm:$0xf]
          %v6546 = vld [vmem:[%s6537 + $0x28] sm:$0xf]
          %v6547 = vld [vmem:[%s6537 + $0x30] sm:$0x8]
          %v6548 = vld [vmem:[%s6537 + $0x34] sm:$0xf]
          %v6549 = vld [vmem:[%s6537 + $0x38] sm:$0xf]
          %v6550 = vld [vmem:[%s6537 + $0x40] sm:$0x8]
          %v6551 = vld [vmem:[%s6537 + $0x44] sm:$0xf]
          %v6552 = vld [vmem:[%s6537 + $0x48] sm:$0xf]
          %v6553 = vld [vmem:[%s6537 + $0x50] sm:$0x8]
          %v6554 = vld [vmem:[%s6537 + $0x54] sm:$0xf]
          %v6555 = vld [vmem:[%s6537 + $0x58] sm:$0xf]
          %v6556 = vld [vmem:[%s6537 + $0x60] sm:$0x8]
          %v6557 = vld [vmem:[%s6537 + $0x64] sm:$0xf]
          %v6558 = vld [vmem:[%s6537 + $0x68] sm:$0xf]
          %v6559 = vld [vmem:[%s6537 + $0x70] sm:$0x8]
          %v6560 = vld [vmem:[%s6537 + $0x74] sm:$0xf]
          %v6561 = vld [vmem:[%s6537 + $0x78] sm:$0xf]
          %v6563 = vshrl.u32 %v6538, 16
          %v6565 = vrot.slane %v6563, 7
          %v6566 = vrot.slane %v6565, 4
          %v6568 = vshrl.u32 %v6539, 16
          %v6570 = vrot.slane %v6568, 7
          %v6571 = vshll.u32 %v6539, 16
          %v6573 = vor.u32 %v6570, %v6571
          %v6574 = vsel %vm4554, %v6566, %v6573
          %v6575 = vrot.slane %v6570, 4
          %v6577 = vshrl.u32 %v6540, 16
          %v6579 = vrot.slane %v6577, 7
          %v6580 = vshll.u32 %v6540, 16
          %v6582 = vor.u32 %v6579, %v6580
          %v6583 = vsel %vm4554, %v6575, %v6582
          %v6585 = vshrl.u32 %v6541, 16
          %v6587 = vrot.slane %v6585, 7
          %v6588 = vrot.slane %v6587, 4
          %v6590 = vshrl.u32 %v6542, 16
          %v6592 = vrot.slane %v6590, 7
          %v6593 = vshll.u32 %v6542, 16
          %v6595 = vor.u32 %v6592, %v6593
          %v6596 = vsel %vm4554, %v6588, %v6595
          %v6597 = vrot.slane %v6592, 4
          %v6599 = vshrl.u32 %v6543, 16
          %v6601 = vrot.slane %v6599, 7
          %v6602 = vshll.u32 %v6543, 16
          %v6604 = vor.u32 %v6601, %v6602
          %v6605 = vsel %vm4554, %v6597, %v6604
          %v6607 = vshrl.u32 %v6544, 16
          %v6609 = vrot.slane %v6607, 7
          %v6610 = vrot.slane %v6609, 4
          %v6612 = vshrl.u32 %v6545, 16
          %v6614 = vrot.slane %v6612, 7
          %v6615 = vshll.u32 %v6545, 16
          %v6617 = vor.u32 %v6614, %v6615
          %v6618 = vsel %vm4554, %v6610, %v6617
          %v6619 = vrot.slane %v6614, 4
          %v6621 = vshrl.u32 %v6546, 16
          %v6623 = vrot.slane %v6621, 7
          %v6624 = vshll.u32 %v6546, 16
          %v6626 = vor.u32 %v6623, %v6624
          %v6627 = vsel %vm4554, %v6619, %v6626
          %v6629 = vshrl.u32 %v6547, 16
          %v6631 = vrot.slane %v6629, 7
          %v6632 = vrot.slane %v6631, 4
          %v6634 = vshrl.u32 %v6548, 16
          %v6636 = vrot.slane %v6634, 7
          %v6637 = vshll.u32 %v6548, 16
          %v6639 = vor.u32 %v6636, %v6637
          %v6640 = vsel %vm4554, %v6632, %v6639
          %v6641 = vrot.slane %v6636, 4
          %v6643 = vshrl.u32 %v6549, 16
          %v6645 = vrot.slane %v6643, 7
          %v6646 = vshll.u32 %v6549, 16
          %v6648 = vor.u32 %v6645, %v6646
          %v6649 = vsel %vm4554, %v6641, %v6648
          %v6651 = vshrl.u32 %v6550, 16
          %v6653 = vrot.slane %v6651, 7
          %v6654 = vrot.slane %v6653, 4
          %v6656 = vshrl.u32 %v6551, 16
          %v6658 = vrot.slane %v6656, 7
          %v6659 = vshll.u32 %v6551, 16
          %v6661 = vor.u32 %v6658, %v6659
          %v6662 = vsel %vm4554, %v6654, %v6661
          %v6663 = vrot.slane %v6658, 4
          %v6665 = vshrl.u32 %v6552, 16
          %v6667 = vrot.slane %v6665, 7
          %v6668 = vshll.u32 %v6552, 16
          %v6670 = vor.u32 %v6667, %v6668
          %v6671 = vsel %vm4554, %v6663, %v6670
          %v6673 = vshrl.u32 %v6553, 16
          %v6675 = vrot.slane %v6673, 7
          %v6676 = vrot.slane %v6675, 4
          %v6678 = vshrl.u32 %v6554, 16
          %v6680 = vrot.slane %v6678, 7
          %v6681 = vshll.u32 %v6554, 16
          %v6683 = vor.u32 %v6680, %v6681
          %v6684 = vsel %vm4554, %v6676, %v6683
          %v6685 = vrot.slane %v6680, 4
          %v6687 = vshrl.u32 %v6555, 16
          %v6689 = vrot.slane %v6687, 7
          %v6690 = vshll.u32 %v6555, 16
          %v6692 = vor.u32 %v6689, %v6690
          %v6693 = vsel %vm4554, %v6685, %v6692
          %v6695 = vshrl.u32 %v6556, 16
          %v6697 = vrot.slane %v6695, 7
          %v6698 = vrot.slane %v6697, 4
          %v6700 = vshrl.u32 %v6557, 16
          %v6702 = vrot.slane %v6700, 7
          %v6703 = vshll.u32 %v6557, 16
          %v6705 = vor.u32 %v6702, %v6703
          %v6706 = vsel %vm4554, %v6698, %v6705
          %v6707 = vrot.slane %v6702, 4
          %v6709 = vshrl.u32 %v6558, 16
          %v6711 = vrot.slane %v6709, 7
          %v6712 = vshll.u32 %v6558, 16
          %v6714 = vor.u32 %v6711, %v6712
          %v6715 = vsel %vm4554, %v6707, %v6714
          %v6717 = vshrl.u32 %v6559, 16
          %v6719 = vrot.slane %v6717, 7
          %v6720 = vrot.slane %v6719, 4
          %v6722 = vshrl.u32 %v6560, 16
          %v6724 = vrot.slane %v6722, 7
          %v6725 = vshll.u32 %v6560, 16
          %v6727 = vor.u32 %v6724, %v6725
          %v6728 = vsel %vm4554, %v6720, %v6727
          %v6729 = vrot.slane %v6724, 4
          %v6731 = vshrl.u32 %v6561, 16
          %v6733 = vrot.slane %v6731, 7
          %v6734 = vshll.u32 %v6561, 16
          %v6736 = vor.u32 %v6733, %v6734
          %v6737 = vsel %vm4554, %v6729, %v6736
          %s6738 = scalar_lea.vmem %s7, 192
          %v6739 = vld [vmem:[%s6738] sm:$0xf]
          %v6740 = vld [vmem:[%s6738 + $0x4] sm:$0xf]
          %v6741 = vld [vmem:[%s6738 + $0x8] sm:$0xf]
          %v6742 = vld [vmem:[%s6738 + $0xc] sm:$0xf]
          %v6743 = vld [vmem:[%s6738 + $0x10] sm:$0xf]
          %v6744 = vld [vmem:[%s6738 + $0x14] sm:$0xf]
          %v6745 = vld [vmem:[%s6738 + $0x18] sm:$0xf]
          %v6746 = vld [vmem:[%s6738 + $0x1c] sm:$0xf]
          %v6747 = vunpack.c.l.b16 %v6574
          %v6748 = vunpack.c.l.b16 %v6583
          %v6749 = vunpack.c.l.b16 %v6596
          %v6750 = vunpack.c.l.b16 %v6605
          %v6751 = vunpack.c.l.b16 %v6618
          %v6752 = vunpack.c.l.b16 %v6627
          %v6753 = vunpack.c.l.b16 %v6640
          %v6754 = vunpack.c.l.b16 %v6649
          %v6755 = vunpack.c.l.b16 %v6662
          %v6756 = vunpack.c.l.b16 %v6671
          %v6757 = vunpack.c.l.b16 %v6684
          %v6758 = vunpack.c.l.b16 %v6693
          %v6759 = vunpack.c.l.b16 %v6706
          %v6760 = vunpack.c.l.b16 %v6715
          %v6761 = vunpack.c.l.b16 %v6728
          %v6762 = vunpack.c.l.b16 %v6737
          %v6763 = vpack.c.b16 %v6748, %v6747
          %v6764 = vpack.c.b16 %v6750, %v6749
          %v6765 = vpack.c.b16 %v6752, %v6751
          %v6766 = vpack.c.b16 %v6754, %v6753
          %v6767 = vpack.c.b16 %v6756, %v6755
          %v6768 = vpack.c.b16 %v6758, %v6757
          %v6769 = vpack.c.b16 %v6760, %v6759
          %v6770 = vpack.c.b16 %v6762, %v6761
          %v6779 = vunpack.c.l.b16 %v6739
          %v6780 = vunpack.c.l.b16 %v6740
          %v6781 = vunpack.c.l.b16 %v6741
          %v6782 = vunpack.c.l.b16 %v6742
          %v6783 = vunpack.c.l.b16 %v6743
          %v6784 = vunpack.c.l.b16 %v6744
          %v6785 = vunpack.c.l.b16 %v6745
          %v6786 = vunpack.c.l.b16 %v6746
          %v6787 = vpack.c.b16 %v6780, %v6779
          %v6788 = vpack.c.b16 %v6782, %v6781
          %v6789 = vpack.c.b16 %v6784, %v6783
          %v6790 = vpack.c.b16 %v6786, %v6785
          %v6796 = vsel %vm4812, %v6763, 0
          %v6799 = vsel %vm4812, %v6764, 0
          %v6802 = vsel %vm4812, %v6765, 0
          %v6805 = vsel %vm4812, %v6766, 0
          %v6808 = vsel %vm4812, %v6767, 0
          %v6811 = vsel %vm4812, %v6768, 0
          %v6814 = vsel %vm4812, %v6769, 0
          %v6817 = vsel %vm4812, %v6770, 0
          %6819 = vmatprep.subr.bf16.mxu0 0
          %6820 = vmatpush1.bf16.msra.mxu0 %v6787
          %6821 = vmatprep.subr.bf16.mxu0 0
          %6822 = vmatpush1.bf16.msra.mxu0 %v6788
          %6823 = vmatprep.subr.bf16.mxu0 0
          %6824 = vmatpush1.bf16.msra.mxu0 %v6789
          %6825 = vmatprep.subr.bf16.mxu0 0
          %6826 = vmatpush1.bf16.msra.mxu0 %v6790
          %6827 = vmatprep.subr.bf16.mxu0 0
          %6828 = vmatpush1.bf16.msra.mxu0 0
          %6829 = vmatprep.subr.bf16.mxu0 0
          %6830 = vmatpush1.bf16.msra.mxu0 0
          %6831 = vmatprep.subr.bf16.mxu0 0
          %6832 = vmatpush1.bf16.msra.mxu0 0
          %6833 = vmatprep.subr.bf16.mxu0 0
          %6834 = vmatpush1.bf16.msra.mxu0 0
          %6835 = vmatprep.subr.bf16.mxu0 0
          %6836 = vmatpush1.bf16.msra.mxu0 0
          %6837 = vmatprep.subr.bf16.mxu0 0
          %6838 = vmatpush1.bf16.msra.mxu0 0
          %6839 = vmatprep.subr.bf16.mxu0 0
          %6840 = vmatpush1.bf16.msra.mxu0 0
          %6841 = vmatprep.subr.bf16.mxu0 0
          %6842 = vmatpush1.bf16.msra.mxu0 0
          %6843 = vmatprep.subr.bf16.mxu0 0
          %6844 = vmatpush1.bf16.msra.mxu0 0
          %6845 = vmatprep.subr.bf16.mxu0 0
          %6846 = vmatpush1.bf16.msra.mxu0 0
          %6847 = vmatprep.subr.bf16.mxu0 0
          %6848 = vmatpush1.bf16.msra.mxu0 0
          %6849 = vmatprep.subr.bf16.mxu0 0
          %6850 = vmatpush1.bf16.msra.mxu0 0
          %6851 = vmatprep.mubr.bf16.mxu0 0
          %6852 = vmatmul.mubr.bf16.gmra.mrb[0].mxu0 %v6796
          %v6853 = vpop.f32.mrb[0].mxu0
          %v6854 = vadd.f32 0.0, %v6853
          %v6855 = vpop.f32.mrb[0].mxu0
          %v6856 = vpop.f32.mrb[0].mxu0
          %v6857 = vadd.f32 0.0, %v6856
          %v6858 = vpop.f32.mrb[0].mxu0
          %6859 = vmatprep.mubr.bf16.mxu0 0
          %6860 = vmatmul.mubr.bf16.gmra.mrb[0].mxu0 %v6799
          %v6861 = vpop.f32.mrb[0].mxu0
          %v6862 = vadd.f32 0.0, %v6861
          %v6863 = vpop.f32.mrb[0].mxu0
          %v6864 = vpop.f32.mrb[0].mxu0
          %v6865 = vadd.f32 0.0, %v6864
          %v6866 = vpop.f32.mrb[0].mxu0
          %6867 = vmatprep.mubr.bf16.mxu0 0
          %6868 = vmatmul.mubr.bf16.gmra.mrb[0].mxu0 %v6802
          %v6869 = vpop.f32.mrb[0].mxu0
          %v6870 = vadd.f32 0.0, %v6869
          %v6871 = vpop.f32.mrb[0].mxu0
          %v6872 = vpop.f32.mrb[0].mxu0
          %v6873 = vadd.f32 0.0, %v6872
          %v6874 = vpop.f32.mrb[0].mxu0
          %6875 = vmatprep.mubr.bf16.mxu0 0
          %6876 = vmatmul.mubr.bf16.gmra.mrb[0].mxu0 %v6805
          %v6877 = vpop.f32.mrb[0].mxu0
          %v6878 = vadd.f32 0.0, %v6877
          %v6879 = vpop.f32.mrb[0].mxu0
          %v6880 = vpop.f32.mrb[0].mxu0
          %v6881 = vadd.f32 0.0, %v6880
          %v6882 = vpop.f32.mrb[0].mxu0
          %6883 = vmatprep.mubr.bf16.mxu0 0
          %6884 = vmatmul.mubr.bf16.gmra.mrb[0].mxu0 %v6808
          %v6885 = vpop.f32.mrb[0].mxu0
          %v6886 = vadd.f32 0.0, %v6885
          %v6887 = vpop.f32.mrb[0].mxu0
          %v6888 = vpop.f32.mrb[0].mxu0
          %v6889 = vadd.f32 0.0, %v6888
          %v6890 = vpop.f32.mrb[0].mxu0
          %6891 = vmatprep.mubr.bf16.mxu0 0
          %6892 = vmatmul.mubr.bf16.gmra.mrb[0].mxu0 %v6811
          %v6893 = vpop.f32.mrb[0].mxu0
          %v6894 = vadd.f32 0.0, %v6893
          %v6895 = vpop.f32.mrb[0].mxu0
          %v6896 = vpop.f32.mrb[0].mxu0
          %v6897 = vadd.f32 0.0, %v6896
          %v6898 = vpop.f32.mrb[0].mxu0
          %6899 = vmatprep.mubr.bf16.mxu0 0
          %6900 = vmatmul.mubr.bf16.gmra.mrb[0].mxu0 %v6814
          %v6901 = vpop.f32.mrb[0].mxu0
          %v6902 = vadd.f32 0.0, %v6901
          %v6903 = vpop.f32.mrb[0].mxu0
          %v6904 = vpop.f32.mrb[0].mxu0
          %v6905 = vadd.f32 0.0, %v6904
          %v6906 = vpop.f32.mrb[0].mxu0
          %6907 = vmatprep.mubr.bf16.mxu0 0
          %6908 = vmatmul.mubr.bf16.gmra.mrb[0].mxu0 %v6817
          %v6909 = vpop.f32.mrb[0].mxu0
          %v6910 = vadd.f32 0.0, %v6909
          %v6911 = vpop.f32.mrb[0].mxu0
          %v6912 = vpop.f32.mrb[0].mxu0
          %v6913 = vadd.f32 0.0, %v6912
          %v6914 = vpop.f32.mrb[0].mxu0
          %6915 = vdwg.mxu0
          %v6916 = vadd.f32 %v6518, %v6854
          %v6917 = vadd.f32 %v6519, %v6857
          %v6918 = vadd.f32 %v6520, %v6862
          %v6919 = vadd.f32 %v6521, %v6865
          %v6920 = vadd.f32 %v6522, %v6870
          %v6921 = vadd.f32 %v6523, %v6873
          %v6922 = vadd.f32 %v6524, %v6878
          %v6923 = vadd.f32 %v6525, %v6881
          %v6924 = vadd.f32 %v6526, %v6886
          %v6925 = vadd.f32 %v6527, %v6889
          %v6926 = vadd.f32 %v6528, %v6894
          %v6927 = vadd.f32 %v6529, %v6897
          %v6928 = vadd.f32 %v6530, %v6902
          %v6929 = vadd.f32 %v6531, %v6905
          %v6930 = vadd.f32 %v6532, %v6910
          %v6931 = vadd.f32 %v6533, %v6913
          %s6932 = scalar_lea.vmem %s7, 224
          %v6933 = vld [vmem:[%s6932] sm:$0xf]
          %v6934 = vld [vmem:[%s6932 + $0x4] sm:$0xf]
          %v6935 = vld [vmem:[%s6932 + $0x8] sm:$0xf]
          %v6936 = vld [vmem:[%s6932 + $0xc] sm:$0xf]
          %v6937 = vld [vmem:[%s6932 + $0x10] sm:$0xf]
          %v6938 = vld [vmem:[%s6932 + $0x14] sm:$0xf]
          %v6939 = vld [vmem:[%s6932 + $0x18] sm:$0xf]
          %v6940 = vld [vmem:[%s6932 + $0x1c] sm:$0xf]
          %v6957 = vunpack.c.l.b16 %v6539
          %v6958 = vunpack.c.l.b16 %v6540
          %v6959 = vunpack.c.l.b16 %v6542
          %v6960 = vunpack.c.l.b16 %v6543
          %v6961 = vunpack.c.l.b16 %v6545
          %v6962 = vunpack.c.l.b16 %v6546
          %v6963 = vunpack.c.l.b16 %v6548
          %v6964 = vunpack.c.l.b16 %v6549
          %v6965 = vunpack.c.l.b16 %v6551
          %v6966 = vunpack.c.l.b16 %v6552
          %v6967 = vunpack.c.l.b16 %v6554
          %v6968 = vunpack.c.l.b16 %v6555
          %v6969 = vunpack.c.l.b16 %v6557
          %v6970 = vunpack.c.l.b16 %v6558
          %v6971 = vunpack.c.l.b16 %v6560
          %v6972 = vunpack.c.l.b16 %v6561
          %v6973 = vpack.c.b16 %v6958, %v6957
          %v6974 = vpack.c.b16 %v6960, %v6959
          %v6975 = vpack.c.b16 %v6962, %v6961
          %v6976 = vpack.c.b16 %v6964, %v6963
          %v6977 = vpack.c.b16 %v6966, %v6965
          %v6978 = vpack.c.b16 %v6968, %v6967
          %v6979 = vpack.c.b16 %v6970, %v6969
          %v6980 = vpack.c.b16 %v6972, %v6971
          %v6989 = vunpack.c.l.b16 %v6933
          %v6990 = vunpack.c.l.b16 %v6934
          %v6991 = vunpack.c.l.b16 %v6935
          %v6992 = vunpack.c.l.b16 %v6936
          %v6993 = vunpack.c.l.b16 %v6937
          %v6994 = vunpack.c.l.b16 %v6938
          %v6995 = vunpack.c.l.b16 %v6939
          %v6996 = vunpack.c.l.b16 %v6940
          %v6997 = vpack.c.b16 %v6990, %v6989
          %v6998 = vpack.c.b16 %v6992, %v6991
          %v6999 = vpack.c.b16 %v6994, %v6993
          %v7000 = vpack.c.b16 %v6996, %v6995
          %v7006 = vsel %vm4812, %v6973, 0
          %v7009 = vsel %vm4812, %v6974, 0
          %v7012 = vsel %vm4812, %v6975, 0
          %v7015 = vsel %vm4812, %v6976, 0
          %v7018 = vsel %vm4812, %v6977, 0
          %v7021 = vsel %vm4812, %v6978, 0
          %v7024 = vsel %vm4812, %v6979, 0
          %v7027 = vsel %vm4812, %v6980, 0
          %7029 = vmatprep.subr.bf16.mxu0 0
          %7030 = vmatpush1.bf16.msra.mxu0 %v6997
          %7031 = vmatprep.subr.bf16.mxu0 0
          %7032 = vmatpush1.bf16.msra.mxu0 %v6998
          %7033 = vmatprep.subr.bf16.mxu0 0
          %7034 = vmatpush1.bf16.msra.mxu0 %v6999
          %7035 = vmatprep.subr.bf16.mxu0 0
          %7036 = vmatpush1.bf16.msra.mxu0 %v7000
          %7037 = vmatprep.subr.bf16.mxu0 0
          %7038 = vmatpush1.bf16.msra.mxu0 0
          %7039 = vmatprep.subr.bf16.mxu0 0
          %7040 = vmatpush1.bf16.msra.mxu0 0
          %7041 = vmatprep.subr.bf16.mxu0 0
          %7042 = vmatpush1.bf16.msra.mxu0 0
          %7043 = vmatprep.subr.bf16.mxu0 0
          %7044 = vmatpush1.bf16.msra.mxu0 0
          %7045 = vmatprep.subr.bf16.mxu0 0
          %7046 = vmatpush1.bf16.msra.mxu0 0
          %7047 = vmatprep.subr.bf16.mxu0 0
          %7048 = vmatpush1.bf16.msra.mxu0 0
          %7049 = vmatprep.subr.bf16.mxu0 0
          %7050 = vmatpush1.bf16.msra.mxu0 0
          %7051 = vmatprep.subr.bf16.mxu0 0
          %7052 = vmatpush1.bf16.msra.mxu0 0
          %7053 = vmatprep.subr.bf16.mxu0 0
          %7054 = vmatpush1.bf16.msra.mxu0 0
          %7055 = vmatprep.subr.bf16.mxu0 0
          %7056 = vmatpush1.bf16.msra.mxu0 0
          %7057 = vmatprep.subr.bf16.mxu0 0
          %7058 = vmatpush1.bf16.msra.mxu0 0
          %7059 = vmatprep.subr.bf16.mxu0 0
          %7060 = vmatpush1.bf16.msra.mxu0 0
          %7061 = vmatprep.mubr.bf16.mxu0 0
          %7062 = vmatmul.mubr.bf16.gmra.mrb[0].mxu0 %v7006
          %v7063 = vpop.f32.mrb[0].mxu0
          %v7064 = vadd.f32 0.0, %v7063
          %v7065 = vpop.f32.mrb[0].mxu0
          %v7066 = vpop.f32.mrb[0].mxu0
          %v7067 = vadd.f32 0.0, %v7066
          %v7068 = vpop.f32.mrb[0].mxu0
          %7069 = vmatprep.mubr.bf16.mxu0 0
          %7070 = vmatmul.mubr.bf16.gmra.mrb[0].mxu0 %v7009
          %v7071 = vpop.f32.mrb[0].mxu0
          %v7072 = vadd.f32 0.0, %v7071
          %v7073 = vpop.f32.mrb[0].mxu0
          %v7074 = vpop.f32.mrb[0].mxu0
          %v7075 = vadd.f32 0.0, %v7074
          %v7076 = vpop.f32.mrb[0].mxu0
          %7077 = vmatprep.mubr.bf16.mxu0 0
          %7078 = vmatmul.mubr.bf16.gmra.mrb[0].mxu0 %v7012
          %v7079 = vpop.f32.mrb[0].mxu0
          %v7080 = vadd.f32 0.0, %v7079
          %v7081 = vpop.f32.mrb[0].mxu0
          %v7082 = vpop.f32.mrb[0].mxu0
          %v7083 = vadd.f32 0.0, %v7082
          %v7084 = vpop.f32.mrb[0].mxu0
          %7085 = vmatprep.mubr.bf16.mxu0 0
          %7086 = vmatmul.mubr.bf16.gmra.mrb[0].mxu0 %v7015
          %v7087 = vpop.f32.mrb[0].mxu0
          %v7088 = vadd.f32 0.0, %v7087
          %v7089 = vpop.f32.mrb[0].mxu0
          %v7090 = vpop.f32.mrb[0].mxu0
          %v7091 = vadd.f32 0.0, %v7090
          %v7092 = vpop.f32.mrb[0].mxu0
          %7093 = vmatprep.mubr.bf16.mxu0 0
          %7094 = vmatmul.mubr.bf16.gmra.mrb[0].mxu0 %v7018
          %v7095 = vpop.f32.mrb[0].mxu0
          %v7096 = vadd.f32 0.0, %v7095
          %v7097 = vpop.f32.mrb[0].mxu0
          %v7098 = vpop.f32.mrb[0].mxu0
          %v7099 = vadd.f32 0.0, %v7098
          %v7100 = vpop.f32.mrb[0].mxu0
          %7101 = vmatprep.mubr.bf16.mxu0 0
          %7102 = vmatmul.mubr.bf16.gmra.mrb[0].mxu0 %v7021
          %v7103 = vpop.f32.mrb[0].mxu0
          %v7104 = vadd.f32 0.0, %v7103
          %v7105 = vpop.f32.mrb[0].mxu0
          %v7106 = vpop.f32.mrb[0].mxu0
          %v7107 = vadd.f32 0.0, %v7106
          %v7108 = vpop.f32.mrb[0].mxu0
          %7109 = vmatprep.mubr.bf16.mxu0 0
          %7110 = vmatmul.mubr.bf16.gmra.mrb[0].mxu0 %v7024
          %v7111 = vpop.f32.mrb[0].mxu0
          %v7112 = vadd.f32 0.0, %v7111
          %v7113 = vpop.f32.mrb[0].mxu0
          %v7114 = vpop.f32.mrb[0].mxu0
          %v7115 = vadd.f32 0.0, %v7114
          %v7116 = vpop.f32.mrb[0].mxu0
          %7117 = vmatprep.mubr.bf16.mxu0 0
          %7118 = vmatmul.mubr.bf16.gmra.mrb[0].mxu0 %v7027
          %v7119 = vpop.f32.mrb[0].mxu0
          %v7120 = vadd.f32 0.0, %v7119
          %v7121 = vpop.f32.mrb[0].mxu0
          %v7122 = vpop.f32.mrb[0].mxu0
          %v7123 = vadd.f32 0.0, %v7122
          %v7124 = vpop.f32.mrb[0].mxu0
          %7125 = vdwg.mxu0
          %v7126 = vadd.f32 %v6916, %v7064
          %v7127 = vadd.f32 %v6917, %v7067
          %v7128 = vadd.f32 %v6918, %v7072
          %v7129 = vadd.f32 %v6919, %v7075
          %v7130 = vadd.f32 %v6920, %v7080
          %v7131 = vadd.f32 %v6921, %v7083
          %v7132 = vadd.f32 %v6922, %v7088
          %v7133 = vadd.f32 %v6923, %v7091
          %v7134 = vadd.f32 %v6924, %v7096
          %v7135 = vadd.f32 %v6925, %v7099
          %v7136 = vadd.f32 %v6926, %v7104
          %v7137 = vadd.f32 %v6927, %v7107
          %v7138 = vadd.f32 %v6928, %v7112
          %v7139 = vadd.f32 %v6929, %v7115
          %v7140 = vadd.f32 %v6930, %v7120
          %v7141 = vadd.f32 %v6931, %v7123
          %v7142 = vld [vmem:[%s6537 + $0x4] sm:$0xf]
          %v7143 = vld [vmem:[%s6537 + $0x8] sm:$0xf]
          %v7144 = vld [vmem:[%s6537 + $0xc] sm:$0x1]
          %v7145 = vld [vmem:[%s6537 + $0x14] sm:$0xf]
          %v7146 = vld [vmem:[%s6537 + $0x18] sm:$0xf]
          %v7147 = vld [vmem:[%s6537 + $0x1c] sm:$0x1]
          %v7148 = vld [vmem:[%s6537 + $0x24] sm:$0xf]
          %v7149 = vld [vmem:[%s6537 + $0x28] sm:$0xf]
          %v7150 = vld [vmem:[%s6537 + $0x2c] sm:$0x1]
          %v7151 = vld [vmem:[%s6537 + $0x34] sm:$0xf]
          %v7152 = vld [vmem:[%s6537 + $0x38] sm:$0xf]
          %v7153 = vld [vmem:[%s6537 + $0x3c] sm:$0x1]
          %v7154 = vld [vmem:[%s6537 + $0x44] sm:$0xf]
          %v7155 = vld [vmem:[%s6537 + $0x48] sm:$0xf]
          %v7156 = vld [vmem:[%s6537 + $0x4c] sm:$0x1]
          %v7157 = vld [vmem:[%s6537 + $0x54] sm:$0xf]
          %v7158 = vld [vmem:[%s6537 + $0x58] sm:$0xf]
          %v7159 = vld [vmem:[%s6537 + $0x5c] sm:$0x1]
          %v7160 = vld [vmem:[%s6537 + $0x64] sm:$0xf]
          %v7161 = vld [vmem:[%s6537 + $0x68] sm:$0xf]
          %v7162 = vld [vmem:[%s6537 + $0x6c] sm:$0x1]
          %v7163 = vld [vmem:[%s6537 + $0x74] sm:$0xf]
          %v7164 = vld [vmem:[%s6537 + $0x78] sm:$0xf]
          %v7165 = vld [vmem:[%s6537 + $0x7c] sm:$0x1]
          %v7167 = vshrl.u32 %v7142, 16
          %v7169 = vrot.slane %v7167, 4
          %v7170 = vshll.u32 %v7142, 16
          %v7172 = vrot.slane %v7170, 5
          %v7173 = vor.u32 %v7169, %v7172
          %v7174 = vrot.slane %v7173, 4
          %v7176 = vshll.u32 %v7143, 16
          %v7178 = vrot.slane %v7176, 5
          %v7179 = vsel %vm5129, %v7174, %v7178
          %v7180 = vshrl.u32 %v7143, 16
          %v7182 = vrot.slane %v7180, 4
          %v7183 = vor.u32 %v7182, %v7178
          %v7184 = vrot.slane %v7183, 4
          %v7186 = vshll.u32 %v7144, 16
          %v7188 = vrot.slane %v7186, 5
          %v7189 = vsel %vm5129, %v7184, %v7188
          %v7191 = vshrl.u32 %v7145, 16
          %v7193 = vrot.slane %v7191, 4
          %v7194 = vshll.u32 %v7145, 16
          %v7196 = vrot.slane %v7194, 5
          %v7197 = vor.u32 %v7193, %v7196
          %v7198 = vrot.slane %v7197, 4
          %v7200 = vshll.u32 %v7146, 16
          %v7202 = vrot.slane %v7200, 5
          %v7203 = vsel %vm5129, %v7198, %v7202
          %v7204 = vshrl.u32 %v7146, 16
          %v7206 = vrot.slane %v7204, 4
          %v7207 = vor.u32 %v7206, %v7202
          %v7208 = vrot.slane %v7207, 4
          %v7210 = vshll.u32 %v7147, 16
          %v7212 = vrot.slane %v7210, 5
          %v7213 = vsel %vm5129, %v7208, %v7212
          %v7215 = vshrl.u32 %v7148, 16
          %v7217 = vrot.slane %v7215, 4
          %v7218 = vshll.u32 %v7148, 16
          %v7220 = vrot.slane %v7218, 5
          %v7221 = vor.u32 %v7217, %v7220
          %v7222 = vrot.slane %v7221, 4
          %v7224 = vshll.u32 %v7149, 16
          %v7226 = vrot.slane %v7224, 5
          %v7227 = vsel %vm5129, %v7222, %v7226
          %v7228 = vshrl.u32 %v7149, 16
          %v7230 = vrot.slane %v7228, 4
          %v7231 = vor.u32 %v7230, %v7226
          %v7232 = vrot.slane %v7231, 4
          %v7234 = vshll.u32 %v7150, 16
          %v7236 = vrot.slane %v7234, 5
          %v7237 = vsel %vm5129, %v7232, %v7236
          %v7239 = vshrl.u32 %v7151, 16
          %v7241 = vrot.slane %v7239, 4
          %v7242 = vshll.u32 %v7151, 16
          %v7244 = vrot.slane %v7242, 5
          %v7245 = vor.u32 %v7241, %v7244
          %v7246 = vrot.slane %v7245, 4
          %v7248 = vshll.u32 %v7152, 16
          %v7250 = vrot.slane %v7248, 5
          %v7251 = vsel %vm5129, %v7246, %v7250
          %v7252 = vshrl.u32 %v7152, 16
          %v7254 = vrot.slane %v7252, 4
          %v7255 = vor.u32 %v7254, %v7250
          %v7256 = vrot.slane %v7255, 4
          %v7258 = vshll.u32 %v7153, 16
          %v7260 = vrot.slane %v7258, 5
          %v7261 = vsel %vm5129, %v7256, %v7260
          %v7263 = vshrl.u32 %v7154, 16
          %v7265 = vrot.slane %v7263, 4
          %v7266 = vshll.u32 %v7154, 16
          %v7268 = vrot.slane %v7266, 5
          %v7269 = vor.u32 %v7265, %v7268
          %v7270 = vrot.slane %v7269, 4
          %v7272 = vshll.u32 %v7155, 16
          %v7274 = vrot.slane %v7272, 5
          %v7275 = vsel %vm5129, %v7270, %v7274
          %v7276 = vshrl.u32 %v7155, 16
          %v7278 = vrot.slane %v7276, 4
          %v7279 = vor.u32 %v7278, %v7274
          %v7280 = vrot.slane %v7279, 4
          %v7282 = vshll.u32 %v7156, 16
          %v7284 = vrot.slane %v7282, 5
          %v7285 = vsel %vm5129, %v7280, %v7284
          %v7287 = vshrl.u32 %v7157, 16
          %v7289 = vrot.slane %v7287, 4
          %v7290 = vshll.u32 %v7157, 16
          %v7292 = vrot.slane %v7290, 5
          %v7293 = vor.u32 %v7289, %v7292
          %v7294 = vrot.slane %v7293, 4
          %v7296 = vshll.u32 %v7158, 16
          %v7298 = vrot.slane %v7296, 5
          %v7299 = vsel %vm5129, %v7294, %v7298
          %v7300 = vshrl.u32 %v7158, 16
          %v7302 = vrot.slane %v7300, 4
          %v7303 = vor.u32 %v7302, %v7298
          %v7304 = vrot.slane %v7303, 4
          %v7306 = vshll.u32 %v7159, 16
          %v7308 = vrot.slane %v7306, 5
          %v7309 = vsel %vm5129, %v7304, %v7308
          %v7311 = vshrl.u32 %v7160, 16
          %v7313 = vrot.slane %v7311, 4
          %v7314 = vshll.u32 %v7160, 16
          %v7316 = vrot.slane %v7314, 5
          %v7317 = vor.u32 %v7313, %v7316
          %v7318 = vrot.slane %v7317, 4
          %v7320 = vshll.u32 %v7161, 16
          %v7322 = vrot.slane %v7320, 5
          %v7323 = vsel %vm5129, %v7318, %v7322
          %v7324 = vshrl.u32 %v7161, 16
          %v7326 = vrot.slane %v7324, 4
          %v7327 = vor.u32 %v7326, %v7322
          %v7328 = vrot.slane %v7327, 4
          %v7330 = vshll.u32 %v7162, 16
          %v7332 = vrot.slane %v7330, 5
          %v7333 = vsel %vm5129, %v7328, %v7332
          %v7335 = vshrl.u32 %v7163, 16
          %v7337 = vrot.slane %v7335, 4
          %v7338 = vshll.u32 %v7163, 16
          %v7340 = vrot.slane %v7338, 5
          %v7341 = vor.u32 %v7337, %v7340
          %v7342 = vrot.slane %v7341, 4
          %v7344 = vshll.u32 %v7164, 16
          %v7346 = vrot.slane %v7344, 5
          %v7347 = vsel %vm5129, %v7342, %v7346
          %v7348 = vshrl.u32 %v7164, 16
          %v7350 = vrot.slane %v7348, 4
          %v7351 = vor.u32 %v7350, %v7346
          %v7352 = vrot.slane %v7351, 4
          %v7354 = vshll.u32 %v7165, 16
          %v7356 = vrot.slane %v7354, 5
          %v7357 = vsel %vm5129, %v7352, %v7356
          %s7358 = scalar_lea.vmem %s7, 256
          %v7359 = vld [vmem:[%s7358] sm:$0xf]
          %v7360 = vld [vmem:[%s7358 + $0x4] sm:$0xf]
          %v7361 = vld [vmem:[%s7358 + $0x8] sm:$0xf]
          %v7362 = vld [vmem:[%s7358 + $0xc] sm:$0xf]
          %v7363 = vld [vmem:[%s7358 + $0x10] sm:$0xf]
          %v7364 = vld [vmem:[%s7358 + $0x14] sm:$0xf]
          %v7365 = vld [vmem:[%s7358 + $0x18] sm:$0xf]
          %v7366 = vld [vmem:[%s7358 + $0x1c] sm:$0xf]
          %v7367 = vunpack.c.l.b16 %v7179
          %v7368 = vunpack.c.l.b16 %v7189
          %v7369 = vunpack.c.l.b16 %v7203
          %v7370 = vunpack.c.l.b16 %v7213
          %v7371 = vunpack.c.l.b16 %v7227
          %v7372 = vunpack.c.l.b16 %v7237
          %v7373 = vunpack.c.l.b16 %v7251
          %v7374 = vunpack.c.l.b16 %v7261
          %v7375 = vunpack.c.l.b16 %v7275
          %v7376 = vunpack.c.l.b16 %v7285
          %v7377 = vunpack.c.l.b16 %v7299
          %v7378 = vunpack.c.l.b16 %v7309
          %v7379 = vunpack.c.l.b16 %v7323
          %v7380 = vunpack.c.l.b16 %v7333
          %v7381 = vunpack.c.l.b16 %v7347
          %v7382 = vunpack.c.l.b16 %v7357
          %v7383 = vpack.c.b16 %v7368, %v7367
          %v7384 = vpack.c.b16 %v7370, %v7369
          %v7385 = vpack.c.b16 %v7372, %v7371
          %v7386 = vpack.c.b16 %v7374, %v7373
          %v7387 = vpack.c.b16 %v7376, %v7375
          %v7388 = vpack.c.b16 %v7378, %v7377
          %v7389 = vpack.c.b16 %v7380, %v7379
          %v7390 = vpack.c.b16 %v7382, %v7381
          %v7399 = vunpack.c.l.b16 %v7359
          %v7400 = vunpack.c.l.b16 %v7360
          %v7401 = vunpack.c.l.b16 %v7361
          %v7402 = vunpack.c.l.b16 %v7362
          %v7403 = vunpack.c.l.b16 %v7363
          %v7404 = vunpack.c.l.b16 %v7364
          %v7405 = vunpack.c.l.b16 %v7365
          %v7406 = vunpack.c.l.b16 %v7366
          %v7407 = vpack.c.b16 %v7400, %v7399
          %v7408 = vpack.c.b16 %v7402, %v7401
          %v7409 = vpack.c.b16 %v7404, %v7403
          %v7410 = vpack.c.b16 %v7406, %v7405
          %v7416 = vsel %vm4812, %v7383, 0
          %v7419 = vsel %vm4812, %v7384, 0
          %v7422 = vsel %vm4812, %v7385, 0
          %v7425 = vsel %vm4812, %v7386, 0
          %v7428 = vsel %vm4812, %v7387, 0
          %v7431 = vsel %vm4812, %v7388, 0
          %v7434 = vsel %vm4812, %v7389, 0
          %v7437 = vsel %vm4812, %v7390, 0
          %7439 = vmatprep.subr.bf16.mxu0 0
          %7440 = vmatpush1.bf16.msra.mxu0 %v7407
          %7441 = vmatprep.subr.bf16.mxu0 0
          %7442 = vmatpush1.bf16.msra.mxu0 %v7408
          %7443 = vmatprep.subr.bf16.mxu0 0
          %7444 = vmatpush1.bf16.msra.mxu0 %v7409
          %7445 = vmatprep.subr.bf16.mxu0 0
          %7446 = vmatpush1.bf16.msra.mxu0 %v7410
          %7447 = vmatprep.subr.bf16.mxu0 0
          %7448 = vmatpush1.bf16.msra.mxu0 0
          %7449 = vmatprep.subr.bf16.mxu0 0
          %7450 = vmatpush1.bf16.msra.mxu0 0
          %7451 = vmatprep.subr.bf16.mxu0 0
          %7452 = vmatpush1.bf16.msra.mxu0 0
          %7453 = vmatprep.subr.bf16.mxu0 0
          %7454 = vmatpush1.bf16.msra.mxu0 0
          %7455 = vmatprep.subr.bf16.mxu0 0
          %7456 = vmatpush1.bf16.msra.mxu0 0
          %7457 = vmatprep.subr.bf16.mxu0 0
          %7458 = vmatpush1.bf16.msra.mxu0 0
          %7459 = vmatprep.subr.bf16.mxu0 0
          %7460 = vmatpush1.bf16.msra.mxu0 0
          %7461 = vmatprep.subr.bf16.mxu0 0
          %7462 = vmatpush1.bf16.msra.mxu0 0
          %7463 = vmatprep.subr.bf16.mxu0 0
          %7464 = vmatpush1.bf16.msra.mxu0 0
          %7465 = vmatprep.subr.bf16.mxu0 0
          %7466 = vmatpush1.bf16.msra.mxu0 0
          %7467 = vmatprep.subr.bf16.mxu0 0
          %7468 = vmatpush1.bf16.msra.mxu0 0
          %7469 = vmatprep.subr.bf16.mxu0 0
          %7470 = vmatpush1.bf16.msra.mxu0 0
          %7471 = vmatprep.mubr.bf16.mxu0 0
          %7472 = vmatmul.mubr.bf16.gmra.mrb[0].mxu0 %v7416
          %v7473 = vpop.f32.mrb[0].mxu0
          %v7474 = vadd.f32 0.0, %v7473
          %v7475 = vpop.f32.mrb[0].mxu0
          %v7476 = vpop.f32.mrb[0].mxu0
          %v7477 = vadd.f32 0.0, %v7476
          %v7478 = vpop.f32.mrb[0].mxu0
          %7479 = vmatprep.mubr.bf16.mxu0 0
          %7480 = vmatmul.mubr.bf16.gmra.mrb[0].mxu0 %v7419
          %v7481 = vpop.f32.mrb[0].mxu0
          %v7482 = vadd.f32 0.0, %v7481
          %v7483 = vpop.f32.mrb[0].mxu0
          %v7484 = vpop.f32.mrb[0].mxu0
          %v7485 = vadd.f32 0.0, %v7484
          %v7486 = vpop.f32.mrb[0].mxu0
          %7487 = vmatprep.mubr.bf16.mxu0 0
          %7488 = vmatmul.mubr.bf16.gmra.mrb[0].mxu0 %v7422
          %v7489 = vpop.f32.mrb[0].mxu0
          %v7490 = vadd.f32 0.0, %v7489
          %v7491 = vpop.f32.mrb[0].mxu0
          %v7492 = vpop.f32.mrb[0].mxu0
          %v7493 = vadd.f32 0.0, %v7492
          %v7494 = vpop.f32.mrb[0].mxu0
          %7495 = vmatprep.mubr.bf16.mxu0 0
          %7496 = vmatmul.mubr.bf16.gmra.mrb[0].mxu0 %v7425
          %v7497 = vpop.f32.mrb[0].mxu0
          %v7498 = vadd.f32 0.0, %v7497
          %v7499 = vpop.f32.mrb[0].mxu0
          %v7500 = vpop.f32.mrb[0].mxu0
          %v7501 = vadd.f32 0.0, %v7500
          %v7502 = vpop.f32.mrb[0].mxu0
          %7503 = vmatprep.mubr.bf16.mxu0 0
          %7504 = vmatmul.mubr.bf16.gmra.mrb[0].mxu0 %v7428
          %v7505 = vpop.f32.mrb[0].mxu0
          %v7506 = vadd.f32 0.0, %v7505
          %v7507 = vpop.f32.mrb[0].mxu0
          %v7508 = vpop.f32.mrb[0].mxu0
          %v7509 = vadd.f32 0.0, %v7508
          %v7510 = vpop.f32.mrb[0].mxu0
          %7511 = vmatprep.mubr.bf16.mxu0 0
          %7512 = vmatmul.mubr.bf16.gmra.mrb[0].mxu0 %v7431
          %v7513 = vpop.f32.mrb[0].mxu0
          %v7514 = vadd.f32 0.0, %v7513
          %v7515 = vpop.f32.mrb[0].mxu0
          %v7516 = vpop.f32.mrb[0].mxu0
          %v7517 = vadd.f32 0.0, %v7516
          %v7518 = vpop.f32.mrb[0].mxu0
          %7519 = vmatprep.mubr.bf16.mxu0 0
          %7520 = vmatmul.mubr.bf16.gmra.mrb[0].mxu0 %v7434
          %v7521 = vpop.f32.mrb[0].mxu0
          %v7522 = vadd.f32 0.0, %v7521
          %v7523 = vpop.f32.mrb[0].mxu0
          %v7524 = vpop.f32.mrb[0].mxu0
          %v7525 = vadd.f32 0.0, %v7524
          %v7526 = vpop.f32.mrb[0].mxu0
          %7527 = vmatprep.mubr.bf16.mxu0 0
          %7528 = vmatmul.mubr.bf16.gmra.mrb[0].mxu0 %v7437
          %v7529 = vpop.f32.mrb[0].mxu0
          %v7530 = vadd.f32 0.0, %v7529
          %v7531 = vpop.f32.mrb[0].mxu0
          %v7532 = vpop.f32.mrb[0].mxu0
          %v7533 = vadd.f32 0.0, %v7532
          %v7534 = vpop.f32.mrb[0].mxu0
          %7535 = vdwg.mxu0
          %v7536 = vadd.f32 %v7126, %v7474
          %v7537 = vadd.f32 %v7127, %v7477
          %v7538 = vadd.f32 %v7128, %v7482
          %v7539 = vadd.f32 %v7129, %v7485
          %v7540 = vadd.f32 %v7130, %v7490
          %v7541 = vadd.f32 %v7131, %v7493
          %v7542 = vadd.f32 %v7132, %v7498
          %v7543 = vadd.f32 %v7133, %v7501
          %v7544 = vadd.f32 %v7134, %v7506
          %v7545 = vadd.f32 %v7135, %v7509
          %v7546 = vadd.f32 %v7136, %v7514
          %v7547 = vadd.f32 %v7137, %v7517
          %v7548 = vadd.f32 %v7138, %v7522
          %v7549 = vadd.f32 %v7139, %v7525
          %v7550 = vadd.f32 %v7140, %v7530
          %v7551 = vadd.f32 %v7141, %v7533
          %v7552 = vld [vmem:[%s8] sm:$0x1]
          %v7554 = vlaneseq
          %v7555 = vshrl.u32 %v7554, 7
          %v7556 = vsub.s32 0, %v7555
          %v7557 = vrot.slane %v7552, %v7556
          %v7559 = vadd.f32 %v7536, %v7557
          %v7560 = vadd.f32 %v7537, %v7557
          %v7561 = vadd.f32 %v7538, %v7557
          %v7562 = vadd.f32 %v7539, %v7557
          %v7563 = vadd.f32 %v7540, %v7557
          %v7564 = vadd.f32 %v7541, %v7557
          %v7565 = vadd.f32 %v7542, %v7557
          %v7566 = vadd.f32 %v7543, %v7557
          %v7567 = vadd.f32 %v7544, %v7557
          %v7568 = vadd.f32 %v7545, %v7557
          %v7569 = vadd.f32 %v7546, %v7557
          %v7570 = vadd.f32 %v7547, %v7557
          %v7571 = vadd.f32 %v7548, %v7557
          %v7572 = vadd.f32 %v7549, %v7557
          %v7573 = vadd.f32 %v7550, %v7557
          %v7574 = vadd.f32 %v7551, %v7557
          %v7575 = vmul.f32 %v7559, 0.1
          %v7576 = vmul.f32 %v7560, 0.1
          %v7577 = vmul.f32 %v7561, 0.1
          %v7578 = vmul.f32 %v7562, 0.1
          %v7579 = vmul.f32 %v7563, 0.1
          %v7580 = vmul.f32 %v7564, 0.1
          %v7581 = vmul.f32 %v7565, 0.1
          %v7582 = vmul.f32 %v7566, 0.1
          %v7583 = vmul.f32 %v7567, 0.1
          %v7584 = vmul.f32 %v7568, 0.1
          %v7585 = vmul.f32 %v7569, 0.1
          %v7586 = vmul.f32 %v7570, 0.1
          %v7587 = vmul.f32 %v7571, 0.1
          %v7588 = vmul.f32 %v7572, 0.1
          %v7589 = vmul.f32 %v7573, 0.1
          %v7590 = vmul.f32 %v7574, 0.1
          %v7591 = vmax.f32 %v7559, %v7575
          %v7592 = vmax.f32 %v7560, %v7576
          %v7593 = vmax.f32 %v7561, %v7577
          %v7594 = vmax.f32 %v7562, %v7578
          %v7595 = vmax.f32 %v7563, %v7579
          %v7596 = vmax.f32 %v7564, %v7580
          %v7597 = vmax.f32 %v7565, %v7581
          %v7598 = vmax.f32 %v7566, %v7582
          %v7599 = vmax.f32 %v7567, %v7583
          %v7600 = vmax.f32 %v7568, %v7584
          %v7601 = vmax.f32 %v7569, %v7585
          %v7602 = vmax.f32 %v7570, %v7586
          %v7603 = vmax.f32 %v7571, %v7587
          %v7604 = vmax.f32 %v7572, %v7588
          %v7605 = vmax.f32 %v7573, %v7589
          %v7606 = vmax.f32 %v7574, %v7590
          %v7607 = vpack.c.bf16 %v7592, %v7591
          %v7608 = vpack.c.bf16 %v7594, %v7593
          %v7609 = vpack.c.bf16 %v7596, %v7595
          %v7610 = vpack.c.bf16 %v7598, %v7597
          %v7611 = vpack.c.bf16 %v7600, %v7599
          %v7612 = vpack.c.bf16 %v7602, %v7601
          %v7613 = vpack.c.bf16 %v7604, %v7603
          %v7614 = vpack.c.bf16 %v7606, %v7605
          %v7615 = vld [vmem:[%s9] sm:$0xf]
          %v7616 = vld [vmem:[%s9 + $0x4] sm:$0xf]
          %v7617 = vld [vmem:[%s9 + $0x8] sm:$0xf]
          %v7618 = vld [vmem:[%s9 + $0xc] sm:$0xf]
          %v7619 = vld [vmem:[%s9 + $0x10] sm:$0xf]
          %v7620 = vld [vmem:[%s9 + $0x14] sm:$0xf]
          %v7621 = vld [vmem:[%s9 + $0x18] sm:$0xf]
          %v7622 = vld [vmem:[%s9 + $0x1c] sm:$0xf]
          %v7623 = vld [vmem:[%s9 + $0x20] sm:$0xf]
          %v7624 = vld [vmem:[%s9 + $0x24] sm:$0xf]
          %v7625 = vld [vmem:[%s9 + $0x28] sm:$0xf]
          %v7626 = vld [vmem:[%s9 + $0x2c] sm:$0xf]
          %v7627 = vld [vmem:[%s9 + $0x30] sm:$0xf]
          %v7628 = vld [vmem:[%s9 + $0x34] sm:$0xf]
          %v7629 = vld [vmem:[%s9 + $0x38] sm:$0xf]
          %v7630 = vld [vmem:[%s9 + $0x3c] sm:$0xf]
          %v7631 = vld [vmem:[%s10] sm:$0x1]
          %v7633 = vlaneseq
          %v7634 = vshrl.u32 %v7633, 7
          %v7635 = vsub.s32 0, %v7634
          %v7636 = vrot.slane %v7631, %v7635
          %v7654 = vunpack.c.l.b16 %v7615
          %v7655 = vunpack.c.l.b16 %v7616
          %v7656 = vunpack.c.l.b16 %v7617
          %v7657 = vunpack.c.l.b16 %v7618
          %v7658 = vunpack.c.l.b16 %v7619
          %v7659 = vunpack.c.l.b16 %v7620
          %v7660 = vunpack.c.l.b16 %v7621
          %v7661 = vunpack.c.l.b16 %v7622
          %v7662 = vunpack.c.l.b16 %v7623
          %v7663 = vunpack.c.l.b16 %v7624
          %v7664 = vunpack.c.l.b16 %v7625
          %v7665 = vunpack.c.l.b16 %v7626
          %v7666 = vunpack.c.l.b16 %v7627
          %v7667 = vunpack.c.l.b16 %v7628
          %v7668 = vunpack.c.l.b16 %v7629
          %v7669 = vunpack.c.l.b16 %v7630
          %v7670 = vpack.c.b16 %v7655, %v7654
          %v7671 = vpack.c.b16 %v7657, %v7656
          %v7672 = vpack.c.b16 %v7659, %v7658
          %v7673 = vpack.c.b16 %v7661, %v7660
          %v7674 = vpack.c.b16 %v7663, %v7662
          %v7675 = vpack.c.b16 %v7665, %v7664
          %v7676 = vpack.c.b16 %v7667, %v7666
          %v7677 = vpack.c.b16 %v7669, %v7668
          %7686 = vmatprep.subr.bf16.mxu0 0
          %7687 = vmatpush1.bf16.msra.mxu0 %v7670
          %7688 = vmatprep.subr.bf16.mxu0 0
          %7689 = vmatpush1.bf16.msra.mxu0 %v7671
          %7690 = vmatprep.subr.bf16.mxu0 0
          %7691 = vmatpush1.bf16.msra.mxu0 %v7672
          %7692 = vmatprep.subr.bf16.mxu0 0
          %7693 = vmatpush1.bf16.msra.mxu0 %v7673
          %7694 = vmatprep.subr.bf16.mxu0 0
          %7695 = vmatpush1.bf16.msra.mxu0 %v7674
          %7696 = vmatprep.subr.bf16.mxu0 0
          %7697 = vmatpush1.bf16.msra.mxu0 %v7675
          %7698 = vmatprep.subr.bf16.mxu0 0
          %7699 = vmatpush1.bf16.msra.mxu0 %v7676
          %7700 = vmatprep.subr.bf16.mxu0 0
          %7701 = vmatpush1.bf16.msra.mxu0 %v7677
          %7702 = vmatprep.subr.bf16.mxu0 0
          %7703 = vmatpush1.bf16.msra.mxu0 0
          %7704 = vmatprep.subr.bf16.mxu0 0
          %7705 = vmatpush1.bf16.msra.mxu0 0
          %7706 = vmatprep.subr.bf16.mxu0 0
          %7707 = vmatpush1.bf16.msra.mxu0 0
          %7708 = vmatprep.subr.bf16.mxu0 0
          %7709 = vmatpush1.bf16.msra.mxu0 0
          %7710 = vmatprep.subr.bf16.mxu0 0
          %7711 = vmatpush1.bf16.msra.mxu0 0
          %7712 = vmatprep.subr.bf16.mxu0 0
          %7713 = vmatpush1.bf16.msra.mxu0 0
          %7714 = vmatprep.subr.bf16.mxu0 0
          %7715 = vmatpush1.bf16.msra.mxu0 0
          %7716 = vmatprep.subr.bf16.mxu0 0
          %7717 = vmatpush1.bf16.msra.mxu0 0
          %7718 = vmatprep.mubr.bf16.mxu0 0
          %7719 = vmatmul.mubr.bf16.gmra.mrb[0].mxu0 %v7607
          %v7720 = vpop.f32.mrb[0].mxu0
          %v7721 = vadd.f32 %v7636, %v7720
          %v7722 = vpop.f32.mrb[0].mxu0
          %v7723 = vpop.f32.mrb[0].mxu0
          %v7724 = vadd.f32 %v7636, %v7723
          %v7725 = vpop.f32.mrb[0].mxu0
          %7726 = vmatprep.mubr.bf16.mxu0 0
          %7727 = vmatmul.mubr.bf16.gmra.mrb[0].mxu0 %v7608
          %v7728 = vpop.f32.mrb[0].mxu0
          %v7729 = vadd.f32 %v7636, %v7728
          %v7730 = vpop.f32.mrb[0].mxu0
          %v7731 = vpop.f32.mrb[0].mxu0
          %v7732 = vadd.f32 %v7636, %v7731
          %v7733 = vpop.f32.mrb[0].mxu0
          %7734 = vmatprep.mubr.bf16.mxu0 0
          %7735 = vmatmul.mubr.bf16.gmra.mrb[0].mxu0 %v7609
          %v7736 = vpop.f32.mrb[0].mxu0
          %v7737 = vadd.f32 %v7636, %v7736
          %v7738 = vpop.f32.mrb[0].mxu0
          %v7739 = vpop.f32.mrb[0].mxu0
          %v7740 = vadd.f32 %v7636, %v7739
          %v7741 = vpop.f32.mrb[0].mxu0
          %7742 = vmatprep.mubr.bf16.mxu0 0
          %7743 = vmatmul.mubr.bf16.gmra.mrb[0].mxu0 %v7610
          %v7744 = vpop.f32.mrb[0].mxu0
          %v7745 = vadd.f32 %v7636, %v7744
          %v7746 = vpop.f32.mrb[0].mxu0
          %v7747 = vpop.f32.mrb[0].mxu0
          %v7748 = vadd.f32 %v7636, %v7747
          %v7749 = vpop.f32.mrb[0].mxu0
          %7750 = vmatprep.mubr.bf16.mxu0 0
          %7751 = vmatmul.mubr.bf16.gmra.mrb[0].mxu0 %v7611
          %v7752 = vpop.f32.mrb[0].mxu0
          %v7753 = vadd.f32 %v7636, %v7752
          %v7754 = vpop.f32.mrb[0].mxu0
          %v7755 = vpop.f32.mrb[0].mxu0
          %v7756 = vadd.f32 %v7636, %v7755
          %v7757 = vpop.f32.mrb[0].mxu0
          %7758 = vmatprep.mubr.bf16.mxu0 0
          %7759 = vmatmul.mubr.bf16.gmra.mrb[0].mxu0 %v7612
          %v7760 = vpop.f32.mrb[0].mxu0
          %v7761 = vadd.f32 %v7636, %v7760
          %v7762 = vpop.f32.mrb[0].mxu0
          %v7763 = vpop.f32.mrb[0].mxu0
          %v7764 = vadd.f32 %v7636, %v7763
          %v7765 = vpop.f32.mrb[0].mxu0
          %7766 = vmatprep.mubr.bf16.mxu0 0
          %7767 = vmatmul.mubr.bf16.gmra.mrb[0].mxu0 %v7613
          %v7768 = vpop.f32.mrb[0].mxu0
          %v7769 = vadd.f32 %v7636, %v7768
          %v7770 = vpop.f32.mrb[0].mxu0
          %v7771 = vpop.f32.mrb[0].mxu0
          %v7772 = vadd.f32 %v7636, %v7771
          %v7773 = vpop.f32.mrb[0].mxu0
          %7774 = vmatprep.mubr.bf16.mxu0 0
          %7775 = vmatmul.mubr.bf16.gmra.mrb[0].mxu0 %v7614
          %v7776 = vpop.f32.mrb[0].mxu0
          %v7777 = vadd.f32 %v7636, %v7776
          %v7778 = vpop.f32.mrb[0].mxu0
          %v7779 = vpop.f32.mrb[0].mxu0
          %v7780 = vadd.f32 %v7636, %v7779
          %v7781 = vpop.f32.mrb[0].mxu0
          %7782 = vdwg.mxu0
          %v7783 = vmul.f32 %v7721, 0.1
          %v7784 = vmul.f32 %v7724, 0.1
          %v7785 = vmul.f32 %v7729, 0.1
          %v7786 = vmul.f32 %v7732, 0.1
          %v7787 = vmul.f32 %v7737, 0.1
          %v7788 = vmul.f32 %v7740, 0.1
          %v7789 = vmul.f32 %v7745, 0.1
          %v7790 = vmul.f32 %v7748, 0.1
          %v7791 = vmul.f32 %v7753, 0.1
          %v7792 = vmul.f32 %v7756, 0.1
          %v7793 = vmul.f32 %v7761, 0.1
          %v7794 = vmul.f32 %v7764, 0.1
          %v7795 = vmul.f32 %v7769, 0.1
          %v7796 = vmul.f32 %v7772, 0.1
          %v7797 = vmul.f32 %v7777, 0.1
          %v7798 = vmul.f32 %v7780, 0.1
          %v7799 = vmax.f32 %v7721, %v7783
          %v7800 = vmax.f32 %v7724, %v7784
          %v7801 = vmax.f32 %v7729, %v7785
          %v7802 = vmax.f32 %v7732, %v7786
          %v7803 = vmax.f32 %v7737, %v7787
          %v7804 = vmax.f32 %v7740, %v7788
          %v7805 = vmax.f32 %v7745, %v7789
          %v7806 = vmax.f32 %v7748, %v7790
          %v7807 = vmax.f32 %v7753, %v7791
          %v7808 = vmax.f32 %v7756, %v7792
          %v7809 = vmax.f32 %v7761, %v7793
          %v7810 = vmax.f32 %v7764, %v7794
          %v7811 = vmax.f32 %v7769, %v7795
          %v7812 = vmax.f32 %v7772, %v7796
          %v7813 = vmax.f32 %v7777, %v7797
          %v7814 = vmax.f32 %v7780, %v7798
          %s7815 = smul.u32 %s4525, 16
          %s7816 = scalar_lea.vmem %s379, %s7815 [#allocation4]
          %7817 = vst.msk [vmem:[%s7816] sm:$0xff] %vm4812, %v7799
          %7818 = vst.msk [vmem:[%s7816 + $0x8] sm:$0xff] %vm4812, %v7800
          %7819 = vst.msk [vmem:[%s7816 + $0x10] sm:$0xff] %vm4812, %v7801
          %7820 = vst.msk [vmem:[%s7816 + $0x18] sm:$0xff] %vm4812, %v7802
          %7821 = vst.msk [vmem:[%s7816 + $0x20] sm:$0xff] %vm4812, %v7803
          %7822 = vst.msk [vmem:[%s7816 + $0x28] sm:$0xff] %vm4812, %v7804
          %7823 = vst.msk [vmem:[%s7816 + $0x30] sm:$0xff] %vm4812, %v7805
          %7824 = vst.msk [vmem:[%s7816 + $0x38] sm:$0xff] %vm4812, %v7806
          %7825 = vst.msk [vmem:[%s7816 + $0x40] sm:$0xff] %vm4812, %v7807
          %7826 = vst.msk [vmem:[%s7816 + $0x48] sm:$0xff] %vm4812, %v7808
          %7827 = vst.msk [vmem:[%s7816 + $0x50] sm:$0xff] %vm4812, %v7809
          %7828 = vst.msk [vmem:[%s7816 + $0x58] sm:$0xff] %vm4812, %v7810
          %7829 = vst.msk [vmem:[%s7816 + $0x60] sm:$0xff] %vm4812, %v7811
          %7830 = vst.msk [vmem:[%s7816 + $0x68] sm:$0xff] %vm4812, %v7812
          %7831 = vst.msk [vmem:[%s7816 + $0x70] sm:$0xff] %vm4812, %v7813
          %7832 = vst.msk [vmem:[%s7816 + $0x78] sm:$0xff] %vm4812, %v7814
        $region76: #{topdown_layer.1} parent=63 // loop_footer
          %s4524 = sadd.s32 1, %s4520
        $region77: #{topdown_layer.1} parent=63 // loop_footer_branch
          %4519 = sbr.rel target = $region73
        $region78: #{topdown_layer.1} parent=63 // loop_exit
          _
        %s7833 = sand.u32 %s269, 1
        %s7834 = scalar_lea.sflag [#allocation5], %s7833
        %s7835 = sand.u32 %s269, 1
        %s7836 = smul.addr %s7835, 256
        %s7837 = scalar_lea.vmem [#allocation4], %s7836
        // Predicated region
        $region79: #{topdown_layer.1} parent=63 // pred_check
          %p7838 = pneg %p279
        $region80: #{topdown_layer.1} parent=63 // pred_check_branch
          %7840 = sbr.rel (%p7838) target = $region82
        $region81: #{topdown_layer.1} parent=63 // pred_region
          %s7842 = ssub.s32 4096, 4096
          %7843 = vsyncadd %s7834, %s7842
          %s7844 = smul.addr %s25, 32
          %s7845 = smul.addr %s7844, 128
          %s7846 = scalar_lea.hbm %s11, %s7845
          %s7847 = sshll.u32 %s7837, 4
          %s7848 = int_to_ptr.vmem [resolvable:$true] %s7847
          %7853 = dma.vmem_to_hbm [thread:$0]  %s7848, 4096, %s7846, %s7834, 128, 128, 8
        $region82: #{topdown_layer.1} parent=63 // pred_fallthru
          _
      $region64: #{topdown_layer.1} parent=5 // pred_fallthru
        _
      %p7854 = scmp.le.s32.totalorder 2, %s20
      // Predicated region
      $region83: #{topdown_layer.1} parent=5 // pred_check
        %p7855 = pneg %p7854
      $region84: #{topdown_layer.1} parent=5 // pred_check_branch
        %7857 = sbr.rel (%p7855) target = $region86
      $region85: #{topdown_layer.1} parent=5 // pred_region
        %s7858 = ssub.s32 %s20, 2
        // Predicated region
        $region87: #{topdown_layer.1} parent=85 // pred_check
          %p7859 = pneg %p285
        $region88: #{topdown_layer.1} parent=85 // pred_check_branch
          %7861 = sbr.rel (%p7859) target = $region90
        $region89: #{topdown_layer.1} parent=85 // pred_region
          %s7862 = sand.u32 %s270, 1
          %s7863 = scalar_lea.sflag [#allocation5], %s7862
          %s7864 = sand.u32 %s270, 1
          %s7865 = smul.addr %s7864, 256
          %s7866 = scalar_lea.vmem [#allocation4], %s7865
          %7867 = dma.done %s7863, 4096
        $region90: #{topdown_layer.1} parent=85 // pred_fallthru
          _
      $region86: #{topdown_layer.1} parent=5 // pred_fallthru
        _
    $region6: #{topdown_layer.1} parent=1 // loop_footer
      %s24 = sadd.s32 1, %s20
    $region7: #{topdown_layer.1} parent=1 // loop_footer_branch
      %19 = sbr.rel target = $region3
    $region8: #{topdown_layer.1} parent=1 // loop_exit
      _
    %7868 = vsyncpa [#allocation5], 1
    %s7869 = scalar_lea.sflag [#allocation5], 1
    %7870 = vsyncpa %s7869, 1

</llo_original>
